<compile_context>
chip_gen: v7x
topology: tpu7x:2x2x1
jax: 0.10.0
libtpu: 0.0.40
codegen_flags: <defaults>
</compile_context>

<pallas_src>
import functools

import jax
import jax.numpy as jnp
from jax import lax
from jax.experimental import pallas as pl
from jax.experimental.pallas import tpu as pltpu


# ----------------------------------------------------------------------------
# VMEM sizing helpers
# ----------------------------------------------------------------------------
def _lane_pad(c):
    return ((int(c) + 127) // 128) * 128


def _vmem_limits():
    """(per-conv resident-VMEM budget, scoped vmem_limit_bytes) for this chip."""
    cap = 64 * 1024 * 1024          # conservative default = v7x physical VMEM
    try:
        cap = int(pltpu.get_tpu_info().vmem_capacity_bytes)
    except Exception:
        pass
    budget = max(8 << 20, min(int(cap * 0.30), 40 << 20))
    limit = max(32 << 20, min(int(cap * 0.60), 64 << 20))
    return budget, limit


# ----------------------------------------------------------------------------
# Pallas conv2d kernel (stride 1, K in {1, 3}), fused bias / ReLU / residual
# ----------------------------------------------------------------------------
def _make_conv_kernel(K, rows, W, Wp, fold, relu, has_residual):
    """fold=True : x block is an im2col patch matrix (M, K*K*Cin); one matmul.
       fold=False: x block is a flat padded tile (L, Cin); K*K shallow matmuls
                   (only used for the 408-channel SFE_First conv)."""
    KK = K * K
    M = rows * (W if fold else Wp)

    def kernel(x_ref, w_ref, b_ref, *rest):
        o_ref = rest[-1]
        res_ref = rest[0] if has_residual else None
        cout = o_ref.shape[-1]

        x = x_ref[0, 0]
        if fold:
            acc = jnp.dot(x, w_ref[...], preferred_element_type=jnp.float32)
        else:
            parts = []
            for t in range(KK):
                s = (t // K) * Wp + (t % K)            # static flat-tap shift
                parts.append(jnp.dot(x[s:s + M, :], w_ref[t],
                                     preferred_element_type=jnp.float32))
            acc = functools.reduce(lambda u, v: u + v, parts)

        acc = acc + b_ref[0][None, :]
        if relu:
            acc = jnp.maximum(acc, 0.0)

        if fold:
            out = acc.reshape(rows, W, cout)
        else:
            out = acc.reshape(rows, Wp, cout)[:, :W, :]   # drop junk columns
        if has_residual:
            out = out + res_ref[0].astype(jnp.float32)
        o_ref[0] = out.astype(o_ref.dtype)

    return kernel


def conv2d_pallas(x, w, b, *, K, relu=False, residual=None,
                  out_dtype=jnp.bfloat16):
    """NHWC conv2d (stride 1, 'same' for K=3) with fused bias/ReLU/residual.

    x: (N, H, W, Cin)   w: (K, K, Cin, Cout) HWIO   b: (Cout,)
    """
    assert K in (1, 3)
    N, H, W, Cin = (int(d) for d in x.shape)
    Cout = int(w.shape[-1])
    KKC = K * K * Cin
    pad = (K - 1) // 2
    Wp = W + 2 * pad
    # Fold taps into the contraction whenever the patch stays small; only the
    # 408-channel SFE_First conv keeps the per-tap loop.
    fold = (K == 1) or (KKC <= 512)
    out_isz = jnp.dtype(out_dtype).itemsize
    has_res = residual is not None

    budget, vmem_limit = _vmem_limits()

    def resident_bytes(rows):
        # All VMEM-resident buffers for one grid step: 128-lane padding and
        # double buffering of the pipelined blocks included.
        if fold:
            M = rows * W
            b_in = 2 * M * _lane_pad(KKC) * 2
            b_tmp = 0
        else:
            R = rows + (K - 1) + 1
            M = rows * Wp
            b_in = 2 * (R * Wp) * _lane_pad(Cin) * 2
            b_tmp = 2 * M * _lane_pad(Cin) * 2           # live tap slices
        b_out = 2 * rows * W * _lane_pad(Cout) * out_isz
        b_res = b_out if has_res else 0
        b_acc = M * _lane_pad(Cout) * 4                  # f32 accumulator
        b_w = 2 * KKC * _lane_pad(Cout) * 2
        return b_in + b_out + b_res + b_acc + b_tmp + b_w

    def pick_rows():
        cap = 512
        if N == 1 and H >= 16:
            cap = min(cap, -(-H // 2))   # >=2 grid steps (v7x has 2 TCs/chip)
        if H <= cap and resident_bytes(H) <= budget:
            return H
        r = max(8, min((H // 8) * 8, (cap // 8) * 8))
        while r > 8 and resident_bytes(r) > budget:
            r -= 8
        return min(r, H) if H >= 8 else H

    rows = pick_rows()
    T = -(-H // rows)
    Hc = T * rows

    xb = x.astype(jnp.bfloat16)
    if fold:
        if K == 3:
            xp = jnp.pad(xb, ((0, 0), (pad, Hc - H + pad), (pad, pad), (0, 0)))
            cols = [xp[:, ky:ky + Hc, kx:kx + W, :]
                    for ky in range(K) for kx in range(K)]
            col = jnp.concatenate(cols, axis=-1)         # (N, Hc, W, K*K*Cin)
        else:
            col = xb if Hc == H else jnp.pad(
                xb, ((0, 0), (0, Hc - H), (0, 0), (0, 0)))
        xt = col.reshape(N, T, rows * W, KKC)
        wt = w.astype(jnp.bfloat16).reshape(KKC, Cout)
        x_spec = pl.BlockSpec((1, 1, rows * W, KKC), lambda n, i: (n, i, 0, 0))
        w_spec = pl.BlockSpec((KKC, Cout), lambda n, i: (0, 0))
    else:
        R = rows + (K - 1) + 1        # halo + 1 extra zero row for flat taps
        L = R * Wp
        xp = jnp.pad(xb, ((0, 0), (pad, Hc - H + pad + 1), (pad, pad), (0, 0)))
        if T == 1:
            xt4 = xp[:, None]
        else:
            xt4 = jnp.stack(
                [lax.dynamic_slice_in_dim(xp, i * rows, R, axis=1)
                 for i in range(T)], axis=1)
        xt = xt4.reshape(N, T, L, Cin)
        wt = w.astype(jnp.bfloat16).reshape(K * K, Cin, Cout)
        x_spec = pl.BlockSpec((1, 1, L, Cin), lambda n, i: (n, i, 0, 0))
        w_spec = pl.BlockSpec((K * K, Cin, Cout), lambda n, i: (0, 0, 0))

    b2 = b.reshape(1, Cout).astype(jnp.float32)
    args = [xt, wt, b2]
    in_specs = [x_spec, w_spec, pl.BlockSpec((1, Cout), lambda n, i: (0, 0))]
    if has_res:
        r_ = residual.astype(jnp.bfloat16)
        if Hc != H:
            r_ = jnp.pad(r_, ((0, 0), (0, Hc - H), (0, 0), (0, 0)))
        args.append(r_)
        in_specs.append(
            pl.BlockSpec((1, rows, W, Cout), lambda n, i: (n, i, 0, 0)))

    kernel = _make_conv_kernel(K, rows, W, Wp, fold, relu, has_res)

    flops = 2 * N * H * W * K * K * Cin * Cout
    bytes_accessed = (int(xt.size) * 2 + int(wt.size) * 2 + int(b2.size) * 4
                      + N * Hc * W * Cout * out_isz
                      + (N * Hc * W * Cout * 2 if has_res else 0))

    out = pl.pallas_call(
        kernel,
        out_shape=jax.ShapeDtypeStruct((N, Hc, W, Cout), out_dtype),
        grid=(N, T),
        in_specs=in_specs,
        out_specs=pl.BlockSpec((1, rows, W, Cout), lambda n, i: (n, i, 0, 0)),
        compiler_params=pltpu.CompilerParams(
            dimension_semantics=("parallel", "parallel"),
            vmem_limit_bytes=vmem_limit),
        cost_estimate=pl.CostEstimate(flops=flops, transcendentals=0,
                                      bytes_accessed=bytes_accessed),
    )(*args)
    if Hc != H:
        out = out[:, :H]
    return out


# ----------------------------------------------------------------------------
# Deterministic parameter init (shapes follow the PyTorch module __init__)
# ----------------------------------------------------------------------------
def _init_conv(key, K, cin, cout, scale=0.05):
    kw, kb = jax.random.split(key)
    w = jax.random.normal(kw, (K, K, cin, cout), jnp.float32) * scale
    b = jax.random.normal(kb, (cout,), jnp.float32) * scale
    return w, b


def init_dfnet_params(key, fusion_feat, rdb_num, growth_rate, conv_num):
    in_ch = 67 * 6 + 3 * 2  # 408, fixed by SFE_First in the reference
    params = {}
    key, k1, k2 = jax.random.split(key, 3)
    params["sfe1"] = _init_conv(k1, 3, in_ch, fusion_feat)
    params["sfe2"] = _init_conv(k2, 3, fusion_feat, fusion_feat)

    params["rdb"] = []
    for _ in range(rdb_num):
        rdb = {"dense": []}
        for c in range(conv_num):
            key, kc = jax.random.split(key)
            cin = fusion_feat + c * growth_rate
            rdb["dense"].append(_init_conv(kc, 3, cin, growth_rate))
        key, kl = jax.random.split(key)
        rdb["lff"] = _init_conv(
            kl, 1, fusion_feat + conv_num * growth_rate, fusion_feat)
        params["rdb"].append(rdb)

    key, kg1, kg2, ko = jax.random.split(key, 4)
    params["gff1"] = _init_conv(kg1, 1, rdb_num * fusion_feat, fusion_feat)
    params["gff2"] = _init_conv(kg2, 3, fusion_feat, fusion_feat)
    params["out"] = _init_conv(ko, 3, fusion_feat, 5 ** 2 * 6)
    return params


# ----------------------------------------------------------------------------
# DFNet forward (NHWC, bf16 activations between layers)
# ----------------------------------------------------------------------------
def dfnet_forward(params, x, *, rdb_num, conv_num):
    x = x.astype(jnp.bfloat16)
    f_b1 = conv2d_pallas(x, *params["sfe1"], K=3)
    f_d = conv2d_pallas(f_b1, *params["sfe2"], K=3)

    rdb_outs = []
    for r in range(rdb_num):
        rdb_in = f_d
        feat = f_d
        for c in range(conv_num):
            wc, bc = params["rdb"][r]["dense"][c]
            d = conv2d_pallas(feat, wc, bc, K=3, relu=True)
            feat = jnp.concatenate([feat, d], axis=-1)   # <=128 total channels
        wl, bl = params["rdb"][r]["lff"]
        f_d = conv2d_pallas(feat, wl, bl, K=1, residual=rdb_in)
        rdb_outs.append(f_d)

    grp = rdb_outs[0] if len(rdb_outs) == 1 else jnp.concatenate(rdb_outs, -1)
    f_gf = conv2d_pallas(grp, *params["gff1"], K=1)
    f_df = conv2d_pallas(f_gf, *params["gff2"], K=3, residual=f_b1)
    return conv2d_pallas(f_df, *params["out"], K=3, out_dtype=jnp.float32)


# ----------------------------------------------------------------------------
# Pure-JAX reference with the same bf16-activation / f32-accum precision
# ----------------------------------------------------------------------------
def _conv_ref(x, w, b, *, padding, relu=False, residual=None,
              out_dtype=jnp.bfloat16):
    out = lax.conv_general_dilated(
        x.astype(jnp.bfloat16), w.astype(jnp.bfloat16),
        window_strides=(1, 1),
        padding=[(padding, padding), (padding, padding)],
        dimension_numbers=("NHWC", "HWIO", "NHWC"),
        preferred_element_type=jnp.float32)
    out = out + b[None, None, None, :].astype(jnp.float32)
    if relu:
        out = jnp.maximum(out, 0.0)
    if residual is not None:
        out = out + residual.astype(jnp.float32)
    return out.astype(out_dtype)


def dfnet_forward_ref(params, x, *, rdb_num, conv_num):
    x = x.astype(jnp.bfloat16)
    f_b1 = _conv_ref(x, *params["sfe1"], padding=1)
    f_d = _conv_ref(f_b1, *params["sfe2"], padding=1)
    rdb_outs = []
    for r in range(rdb_num):
        rdb_in = f_d
        feat = f_d
        for c in range(conv_num):
            d = _conv_ref(feat, *params["rdb"][r]["dense"][c],
                          padding=1, relu=True)
            feat = jnp.concatenate([feat, d], axis=-1)
        f_d = _conv_ref(feat, *params["rdb"][r]["lff"], padding=0,
                        residual=rdb_in)
        rdb_outs.append(f_d)
    grp = jnp.concatenate(rdb_outs, axis=-1)
    gf = _conv_ref(grp, *params["gff1"], padding=0)
    f_df = _conv_ref(gf, *params["gff2"], padding=1, residual=f_b1)
    return _conv_ref(f_df, *params["out"], padding=1, out_dtype=jnp.float32)


# ----------------------------------------------------------------------------
if __name__ == "__main__":
    # Small hyper-parameters (shapes consistent with the module definition)
    FUSION_FEAT = 8
    RDB_NUM = 2
    GROWTH_RATE = 4
    CONV_NUM = 2

    N, H, W = 2, 8, 8
    CIN = 67 * 6 + 3 * 2  # 408, required by SFE_First

    key = jax.random.PRNGKey(0)
    key, kx, kp = jax.random.split(key, 3)
    x = jax.random.normal(kx, (N, H, W, CIN), jnp.float32)
    params = init_dfnet_params(kp, FUSION_FEAT, RDB_NUM, GROWTH_RATE, CONV_NUM)

    fwd = functools.partial(dfnet_forward, rdb_num=RDB_NUM, conv_num=CONV_NUM)
    out = jax.block_until_ready(jax.jit(fwd)(params, x))
    assert out.shape == (N, H, W, 5 ** 2 * 6), out.shape

    ref_fn = functools.partial(dfnet_forward_ref, rdb_num=RDB_NUM,
                               conv_num=CONV_NUM)
    ref = jax.block_until_ready(jax.jit(ref_fn)(params, x))

    max_err = float(jnp.max(jnp.abs(out.astype(jnp.float32)
                                    - ref.astype(jnp.float32))))
    scale = float(jnp.max(jnp.abs(ref))) + 1e-6
    assert max_err / scale < 2e-2, (max_err, scale)

    print("KERNEL_OK")
</pallas_src>

<mosaic_0001>
module attributes {stable_mosaic.version = 11 : i64} {
  func.func @kernel(%arg0: i32, %arg1: i32, %arg2: memref<1x1x110x408xbf16, #tpu.memory_space<vmem>>, %arg3: memref<9x408x8xbf16, #tpu.memory_space<vmem>>, %arg4: memref<1x8xf32, #tpu.memory_space<vmem>>, %arg5: memref<1x8x8x8xbf16, #tpu.memory_space<vmem>>) attributes {dimension_semantics = [#tpu.dimension_semantics<parallel>, #tpu.dimension_semantics<parallel>], iteration_bounds = array<i64: 2, 1>, scalar_prefetch = 0 : i64, scratch_operands = 0 : i64, tpu.core_type = #tpu.core_type<tc>, window_params = [{transform_indices = @transform_0, window_bounds = array<i64: 1, 1, 110, 408>}, {pipeline_mode = #tpu.pipeline_mode<synchronous>, transform_indices = @transform_1, window_bounds = array<i64: 9, 408, 8>}, {pipeline_mode = #tpu.pipeline_mode<synchronous>, transform_indices = @transform_2, window_bounds = array<i64: 1, 8>}, {transform_indices = @transform_3, window_bounds = array<i64: 1, 8, 8, 8>}]} {
    %c0 = arith.constant 0 : index
    %c0_0 = arith.constant 0 : index
    %c0_1 = arith.constant 0 : index
    %c0_2 = arith.constant 0 : index
    %0 = vector.load %arg2[%c0, %c0_0, %c0_1, %c0_2] : memref<1x1x110x408xbf16, #tpu.memory_space<vmem>>, vector<1x1x110x408xbf16>
    %1 = vector.shape_cast %0 : vector<1x1x110x408xbf16> to vector<110x408xbf16>
    %2 = vector.extract_strided_slice %1 {offsets = [0, 0], sizes = [80, 408], strides = [1, 1]} : vector<110x408xbf16> to vector<80x408xbf16>
    %c0_3 = arith.constant 0 : index
    %c0_4 = arith.constant 0 : index
    %c0_5 = arith.constant 0 : index
    %3 = vector.load %arg3[%c0_3, %c0_4, %c0_5] : memref<9x408x8xbf16, #tpu.memory_space<vmem>>, vector<1x408x8xbf16>
    %4 = vector.shape_cast %3 : vector<1x408x8xbf16> to vector<408x8xbf16>
    %cst = arith.constant dense<0.000000e+00> : vector<80x8xf32>
    %5 = tpu.matmul %2, %4, %cst {dimension_numbers = #tpu.dot_dimension_numbers<[1], [0], [0], [1], [0, 0, 1, 1], [], []>} : vector<80x408xbf16>, vector<408x8xbf16>, vector<80x8xf32> -> vector<80x8xf32>
    %6 = vector.extract_strided_slice %1 {offsets = [1, 0], sizes = [80, 408], strides = [1, 1]} : vector<110x408xbf16> to vector<80x408xbf16>
    %c1 = arith.constant 1 : index
    %c0_6 = arith.constant 0 : index
    %c0_7 = arith.constant 0 : index
    %7 = vector.load %arg3[%c1, %c0_6, %c0_7] : memref<9x408x8xbf16, #tpu.memory_space<vmem>>, vector<1x408x8xbf16>
    %8 = vector.shape_cast %7 : vector<1x408x8xbf16> to vector<408x8xbf16>
    %cst_8 = arith.constant dense<0.000000e+00> : vector<80x8xf32>
    %9 = tpu.matmul %6, %8, %cst_8 {dimension_numbers = #tpu.dot_dimension_numbers<[1], [0], [0], [1], [0, 0, 1, 1], [], []>} : vector<80x408xbf16>, vector<408x8xbf16>, vector<80x8xf32> -> vector<80x8xf32>
    %10 = vector.extract_strided_slice %1 {offsets = [2, 0], sizes = [80, 408], strides = [1, 1]} : vector<110x408xbf16> to vector<80x408xbf16>
    %c2 = arith.constant 2 : index
    %c0_9 = arith.constant 0 : index
    %c0_10 = arith.constant 0 : index
    %11 = vector.load %arg3[%c2, %c0_9, %c0_10] : memref<9x408x8xbf16, #tpu.memory_space<vmem>>, vector<1x408x8xbf16>
    %12 = vector.shape_cast %11 : vector<1x408x8xbf16> to vector<408x8xbf16>
    %cst_11 = arith.constant dense<0.000000e+00> : vector<80x8xf32>
    %13 = tpu.matmul %10, %12, %cst_11 {dimension_numbers = #tpu.dot_dimension_numbers<[1], [0], [0], [1], [0, 0, 1, 1], [], []>} : vector<80x408xbf16>, vector<408x8xbf16>, vector<80x8xf32> -> vector<80x8xf32>
    %14 = vector.extract_strided_slice %1 {offsets = [10, 0], sizes = [80, 408], strides = [1, 1]} : vector<110x408xbf16> to vector<80x408xbf16>
    %c3 = arith.constant 3 : index
    %c0_12 = arith.constant 0 : index
    %c0_13 = arith.constant 0 : index
    %15 = vector.load %arg3[%c3, %c0_12, %c0_13] : memref<9x408x8xbf16, #tpu.memory_space<vmem>>, vector<1x408x8xbf16>
    %16 = vector.shape_cast %15 : vector<1x408x8xbf16> to vector<408x8xbf16>
    %cst_14 = arith.constant dense<0.000000e+00> : vector<80x8xf32>
    %17 = tpu.matmul %14, %16, %cst_14 {dimension_numbers = #tpu.dot_dimension_numbers<[1], [0], [0], [1], [0, 0, 1, 1], [], []>} : vector<80x408xbf16>, vector<408x8xbf16>, vector<80x8xf32> -> vector<80x8xf32>
    %18 = vector.extract_strided_slice %1 {offsets = [11, 0], sizes = [80, 408], strides = [1, 1]} : vector<110x408xbf16> to vector<80x408xbf16>
    %c4 = arith.constant 4 : index
    %c0_15 = arith.constant 0 : index
    %c0_16 = arith.constant 0 : index
    %19 = vector.load %arg3[%c4, %c0_15, %c0_16] : memref<9x408x8xbf16, #tpu.memory_space<vmem>>, vector<1x408x8xbf16>
    %20 = vector.shape_cast %19 : vector<1x408x8xbf16> to vector<408x8xbf16>
    %cst_17 = arith.constant dense<0.000000e+00> : vector<80x8xf32>
    %21 = tpu.matmul %18, %20, %cst_17 {dimension_numbers = #tpu.dot_dimension_numbers<[1], [0], [0], [1], [0, 0, 1, 1], [], []>} : vector<80x408xbf16>, vector<408x8xbf16>, vector<80x8xf32> -> vector<80x8xf32>
    %22 = vector.extract_strided_slice %1 {offsets = [12, 0], sizes = [80, 408], strides = [1, 1]} : vector<110x408xbf16> to vector<80x408xbf16>
    %c5 = arith.constant 5 : index
    %c0_18 = arith.constant 0 : index
    %c0_19 = arith.constant 0 : index
    %23 = vector.load %arg3[%c5, %c0_18, %c0_19] : memref<9x408x8xbf16, #tpu.memory_space<vmem>>, vector<1x408x8xbf16>
    %24 = vector.shape_cast %23 : vector<1x408x8xbf16> to vector<408x8xbf16>
    %cst_20 = arith.constant dense<0.000000e+00> : vector<80x8xf32>
    %25 = tpu.matmul %22, %24, %cst_20 {dimension_numbers = #tpu.dot_dimension_numbers<[1], [0], [0], [1], [0, 0, 1, 1], [], []>} : vector<80x408xbf16>, vector<408x8xbf16>, vector<80x8xf32> -> vector<80x8xf32>
    %26 = vector.extract_strided_slice %1 {offsets = [20, 0], sizes = [80, 408], strides = [1, 1]} : vector<110x408xbf16> to vector<80x408xbf16>
    %c6 = arith.constant 6 : index
    %c0_21 = arith.constant 0 : index
    %c0_22 = arith.constant 0 : index
    %27 = vector.load %arg3[%c6, %c0_21, %c0_22] : memref<9x408x8xbf16, #tpu.memory_space<vmem>>, vector<1x408x8xbf16>
    %28 = vector.shape_cast %27 : vector<1x408x8xbf16> to vector<408x8xbf16>
    %cst_23 = arith.constant dense<0.000000e+00> : vector<80x8xf32>
    %29 = tpu.matmul %26, %28, %cst_23 {dimension_numbers = #tpu.dot_dimension_numbers<[1], [0], [0], [1], [0, 0, 1, 1], [], []>} : vector<80x408xbf16>, vector<408x8xbf16>, vector<80x8xf32> -> vector<80x8xf32>
    %30 = vector.extract_strided_slice %1 {offsets = [21, 0], sizes = [80, 408], strides = [1, 1]} : vector<110x408xbf16> to vector<80x408xbf16>
    %c7 = arith.constant 7 : index
    %c0_24 = arith.constant 0 : index
    %c0_25 = arith.constant 0 : index
    %31 = vector.load %arg3[%c7, %c0_24, %c0_25] : memref<9x408x8xbf16, #tpu.memory_space<vmem>>, vector<1x408x8xbf16>
    %32 = vector.shape_cast %31 : vector<1x408x8xbf16> to vector<408x8xbf16>
    %cst_26 = arith.constant dense<0.000000e+00> : vector<80x8xf32>
    %33 = tpu.matmul %30, %32, %cst_26 {dimension_numbers = #tpu.dot_dimension_numbers<[1], [0], [0], [1], [0, 0, 1, 1], [], []>} : vector<80x408xbf16>, vector<408x8xbf16>, vector<80x8xf32> -> vector<80x8xf32>
    %34 = vector.extract_strided_slice %1 {offsets = [22, 0], sizes = [80, 408], strides = [1, 1]} : vector<110x408xbf16> to vector<80x408xbf16>
    %c8 = arith.constant 8 : index
    %c0_27 = arith.constant 0 : index
    %c0_28 = arith.constant 0 : index
    %35 = vector.load %arg3[%c8, %c0_27, %c0_28] : memref<9x408x8xbf16, #tpu.memory_space<vmem>>, vector<1x408x8xbf16>
    %36 = vector.shape_cast %35 : vector<1x408x8xbf16> to vector<408x8xbf16>
    %cst_29 = arith.constant dense<0.000000e+00> : vector<80x8xf32>
    %37 = tpu.matmul %34, %36, %cst_29 {dimension_numbers = #tpu.dot_dimension_numbers<[1], [0], [0], [1], [0, 0, 1, 1], [], []>} : vector<80x408xbf16>, vector<408x8xbf16>, vector<80x8xf32> -> vector<80x8xf32>
    %38 = arith.addf %5, %9 : vector<80x8xf32>
    %39 = arith.addf %38, %13 : vector<80x8xf32>
    %40 = arith.addf %39, %17 : vector<80x8xf32>
    %41 = arith.addf %40, %21 : vector<80x8xf32>
    %42 = arith.addf %41, %25 : vector<80x8xf32>
    %43 = arith.addf %42, %29 : vector<80x8xf32>
    %44 = arith.addf %43, %33 : vector<80x8xf32>
    %45 = arith.addf %44, %37 : vector<80x8xf32>
    %c0_30 = arith.constant 0 : index
    %c0_31 = arith.constant 0 : index
    %46 = vector.load %arg4[%c0_30, %c0_31] : memref<1x8xf32, #tpu.memory_space<vmem>>, vector<1x8xf32>
    %47 = vector.shape_cast %46 : vector<1x8xf32> to vector<8xf32>
    %48 = vector.shape_cast %47 : vector<8xf32> to vector<1x8xf32>
    %49 = vector.broadcast %48 : vector<1x8xf32> to vector<80x8xf32>
    %50 = arith.addf %45, %49 : vector<80x8xf32>
    %51 = vector.shape_cast %50 : vector<80x8xf32> to vector<8x10x8xf32>
    %52 = vector.extract_strided_slice %51 {offsets = [0, 0, 0], sizes = [8, 8, 8], strides = [1, 1, 1]} : vector<8x10x8xf32> to vector<8x8x8xf32>
    %53 = arith.truncf %52 : vector<8x8x8xf32> to vector<8x8x8xbf16>
    %c0_32 = arith.constant 0 : index
    %c0_33 = arith.constant 0 : index
    %c0_34 = arith.constant 0 : index
    %c0_35 = arith.constant 0 : index
    %54 = vector.load %arg5[%c0_32, %c0_33, %c0_34, %c0_35] : memref<1x8x8x8xbf16, #tpu.memory_space<vmem>>, vector<1x8x8x8xbf16>
    %55 = vector.shape_cast %54 : vector<1x8x8x8xbf16> to vector<8x8x8xbf16>
    %56 = vector.shape_cast %53 : vector<8x8x8xbf16> to vector<1x8x8x8xbf16>
    tpu.vector_store %arg5[%c0_32, %c0_33, %c0_34, %c0_35], %56 {strides = array<i32>} : memref<1x8x8x8xbf16, #tpu.memory_space<vmem>>, vector<1x8x8x8xbf16>,
    return
  }
  func.func @transform_0(%arg0: i32, %arg1: i32) -> (i32, i32, i32, i32) {
    %c0_i32 = arith.constant 0 : i32
    %c0_i32_0 = arith.constant 0 : i32
    %c0_i32_1 = arith.constant 0 : i32
    return %arg0, %arg1, %c0_i32, %c0_i32_0 : i32, i32, i32, i32
  }
  func.func @transform_1(%arg0: i32, %arg1: i32) -> (i32, i32, i32) {
    %c0_i32 = arith.constant 0 : i32
    %c0_i32_0 = arith.constant 0 : i32
    %c0_i32_1 = arith.constant 0 : i32
    %c0_i32_2 = arith.constant 0 : i32
    return %c0_i32, %c0_i32_0, %c0_i32_1 : i32, i32, i32
  }
  func.func @transform_2(%arg0: i32, %arg1: i32) -> (i32, i32) {
    %c0_i32 = arith.constant 0 : i32
    %c0_i32_0 = arith.constant 0 : i32
    %c0_i32_1 = arith.constant 0 : i32
    return %c0_i32, %c0_i32_0 : i32, i32
  }
  func.func @transform_3(%arg0: i32, %arg1: i32) -> (i32, i32, i32, i32) {
    %c0_i32 = arith.constant 0 : i32
    %c0_i32_0 = arith.constant 0 : i32
    %c0_i32_1 = arith.constant 0 : i32
    return %arg0, %arg1, %c0_i32, %c0_i32_0 : i32, i32, i32, i32
  }
}

module attributes {stable_mosaic.version = 11 : i64} {
  func.func @kernel(%arg0: i32, %arg1: i32, %arg2: memref<1x1x64x72xbf16, #tpu.memory_space<vmem>>, %arg3: memref<72x8xbf16, #tpu.memory_space<vmem>>, %arg4: memref<1x8xf32, #tpu.memory_space<vmem>>, %arg5: memref<1x8x8x8xbf16, #tpu.memory_space<vmem>>) attributes {dimension_semantics = [#tpu.dimension_semantics<parallel>, #tpu.dimension_semantics<parallel>], iteration_bounds = array<i64: 2, 1>, scalar_prefetch = 0 : i64, scratch_operands = 0 : i64, tpu.core_type = #tpu.core_type<tc>, window_params = [{transform_indices = @transform_0, window_bounds = array<i64: 1, 1, 64, 72>}, {pipeline_mode = #tpu.pipeline_mode<synchronous>, transform_indices = @transform_1, window_bounds = array<i64: 72, 8>}, {pipeline_mode = #tpu.pipeline_mode<synchronous>, transform_indices = @transform_2, window_bounds = array<i64: 1, 8>}, {transform_indices = @transform_3, window_bounds = array<i64: 1, 8, 8, 8>}]} {
    %c0 = arith.constant 0 : index
    %c0_0 = arith.constant 0 : index
    %c0_1 = arith.constant 0 : index
    %c0_2 = arith.constant 0 : index
    %0 = vector.load %arg2[%c0, %c0_0, %c0_1, %c0_2] : memref<1x1x64x72xbf16, #tpu.memory_space<vmem>>, vector<1x1x64x72xbf16>
    %1 = vector.shape_cast %0 : vector<1x1x64x72xbf16> to vector<64x72xbf16>
    %c0_3 = arith.constant 0 : index
    %c0_4 = arith.constant 0 : index
    %2 = vector.load %arg3[%c0_3, %c0_4] : memref<72x8xbf16, #tpu.memory_space<vmem>>, vector<72x8xbf16>
    %cst = arith.constant dense<0.000000e+00> : vector<64x8xf32>
    %3 = tpu.matmul %1, %2, %cst {dimension_numbers = #tpu.dot_dimension_numbers<[1], [0], [0], [1], [0, 0, 1, 1], [], []>} : vector<64x72xbf16>, vector<72x8xbf16>, vector<64x8xf32> -> vector<64x8xf32>
    %c0_5 = arith.constant 0 : index
    %c0_6 = arith.constant 0 : index
    %4 = vector.load %arg4[%c0_5, %c0_6] : memref<1x8xf32, #tpu.memory_space<vmem>>, vector<1x8xf32>
    %5 = vector.shape_cast %4 : vector<1x8xf32> to vector<8xf32>
    %6 = vector.shape_cast %5 : vector<8xf32> to vector<1x8xf32>
    %7 = vector.broadcast %6 : vector<1x8xf32> to vector<64x8xf32>
    %8 = arith.addf %3, %7 : vector<64x8xf32>
    %9 = vector.shape_cast %8 : vector<64x8xf32> to vector<8x8x8xf32>
    %10 = arith.truncf %9 : vector<8x8x8xf32> to vector<8x8x8xbf16>
    %c0_7 = arith.constant 0 : index
    %c0_8 = arith.constant 0 : index
    %c0_9 = arith.constant 0 : index
    %c0_10 = arith.constant 0 : index
    %11 = vector.load %arg5[%c0_7, %c0_8, %c0_9, %c0_10] : memref<1x8x8x8xbf16, #tpu.memory_space<vmem>>, vector<1x8x8x8xbf16>
    %12 = vector.shape_cast %11 : vector<1x8x8x8xbf16> to vector<8x8x8xbf16>
    %13 = vector.shape_cast %10 : vector<8x8x8xbf16> to vector<1x8x8x8xbf16>
    tpu.vector_store %arg5[%c0_7, %c0_8, %c0_9, %c0_10], %13 {strides = array<i32>} : memref<1x8x8x8xbf16, #tpu.memory_space<vmem>>, vector<1x8x8x8xbf16>,
    return
  }
  func.func @transform_0(%arg0: i32, %arg1: i32) -> (i32, i32, i32, i32) {
    %c0_i32 = arith.constant 0 : i32
    %c0_i32_0 = arith.constant 0 : i32
    %c0_i32_1 = arith.constant 0 : i32
    return %arg0, %arg1, %c0_i32, %c0_i32_0 : i32, i32, i32, i32
  }
  func.func @transform_1(%arg0: i32, %arg1: i32) -> (i32, i32) {
    %c0_i32 = arith.constant 0 : i32
    %c0_i32_0 = arith.constant 0 : i32
    %c0_i32_1 = arith.constant 0 : i32
    return %c0_i32, %c0_i32_0 : i32, i32
  }
  func.func @transform_2(%arg0: i32, %arg1: i32) -> (i32, i32) {
    %c0_i32 = arith.constant 0 : i32
    %c0_i32_0 = arith.constant 0 : i32
    %c0_i32_1 = arith.constant 0 : i32
    return %c0_i32, %c0_i32_0 : i32, i32
  }
  func.func @transform_3(%arg0: i32, %arg1: i32) -> (i32, i32, i32, i32) {
    %c0_i32 = arith.constant 0 : i32
    %c0_i32_0 = arith.constant 0 : i32
    %c0_i32_1 = arith.constant 0 : i32
    return %arg0, %arg1, %c0_i32, %c0_i32_0 : i32, i32, i32, i32
  }
}

module attributes {stable_mosaic.version = 11 : i64} {
  func.func @kernel(%arg0: i32, %arg1: i32, %arg2: memref<1x1x64x72xbf16, #tpu.memory_space<vmem>>, %arg3: memref<72x4xbf16, #tpu.memory_space<vmem>>, %arg4: memref<1x4xf32, #tpu.memory_space<vmem>>, %arg5: memref<1x8x8x4xbf16, #tpu.memory_space<vmem>>) attributes {dimension_semantics = [#tpu.dimension_semantics<parallel>, #tpu.dimension_semantics<parallel>], iteration_bounds = array<i64: 2, 1>, scalar_prefetch = 0 : i64, scratch_operands = 0 : i64, tpu.core_type = #tpu.core_type<tc>, window_params = [{transform_indices = @transform_0, window_bounds = array<i64: 1, 1, 64, 72>}, {pipeline_mode = #tpu.pipeline_mode<synchronous>, transform_indices = @transform_1, window_bounds = array<i64: 72, 4>}, {pipeline_mode = #tpu.pipeline_mode<synchronous>, transform_indices = @transform_2, window_bounds = array<i64: 1, 4>}, {transform_indices = @transform_3, window_bounds = array<i64: 1, 8, 8, 4>}]} {
    %c0 = arith.constant 0 : index
    %c0_0 = arith.constant 0 : index
    %c0_1 = arith.constant 0 : index
    %c0_2 = arith.constant 0 : index
    %0 = vector.load %arg2[%c0, %c0_0, %c0_1, %c0_2] : memref<1x1x64x72xbf16, #tpu.memory_space<vmem>>, vector<1x1x64x72xbf16>
    %1 = vector.shape_cast %0 : vector<1x1x64x72xbf16> to vector<64x72xbf16>
    %c0_3 = arith.constant 0 : index
    %c0_4 = arith.constant 0 : index
    %2 = vector.load %arg3[%c0_3, %c0_4] : memref<72x4xbf16, #tpu.memory_space<vmem>>, vector<72x4xbf16>
    %cst = arith.constant dense<0.000000e+00> : vector<64x4xf32>
    %3 = tpu.matmul %1, %2, %cst {dimension_numbers = #tpu.dot_dimension_numbers<[1], [0], [0], [1], [0, 0, 1, 1], [], []>} : vector<64x72xbf16>, vector<72x4xbf16>, vector<64x4xf32> -> vector<64x4xf32>
    %c0_5 = arith.constant 0 : index
    %c0_6 = arith.constant 0 : index
    %4 = vector.load %arg4[%c0_5, %c0_6] : memref<1x4xf32, #tpu.memory_space<vmem>>, vector<1x4xf32>
    %5 = vector.shape_cast %4 : vector<1x4xf32> to vector<4xf32>
    %6 = vector.shape_cast %5 : vector<4xf32> to vector<1x4xf32>
    %7 = vector.broadcast %6 : vector<1x4xf32> to vector<64x4xf32>
    %8 = arith.addf %3, %7 : vector<64x4xf32>
    %cst_7 = arith.constant 0.000000e+00 : f32
    %9 = vector.broadcast %cst_7 : f32 to vector<64x4xf32>
    %10 = arith.maximumf %8, %9 : vector<64x4xf32>
    %11 = vector.shape_cast %10 : vector<64x4xf32> to vector<8x8x4xf32>
    %12 = arith.truncf %11 : vector<8x8x4xf32> to vector<8x8x4xbf16>
    %c0_8 = arith.constant 0 : index
    %c0_9 = arith.constant 0 : index
    %c0_10 = arith.constant 0 : index
    %c0_11 = arith.constant 0 : index
    %13 = vector.load %arg5[%c0_8, %c0_9, %c0_10, %c0_11] : memref<1x8x8x4xbf16, #tpu.memory_space<vmem>>, vector<1x8x8x4xbf16>
    %14 = vector.shape_cast %13 : vector<1x8x8x4xbf16> to vector<8x8x4xbf16>
    %15 = vector.shape_cast %12 : vector<8x8x4xbf16> to vector<1x8x8x4xbf16>
    tpu.vector_store %arg5[%c0_8, %c0_9, %c0_10, %c0_11], %15 {strides = array<i32>} : memref<1x8x8x4xbf16, #tpu.memory_space<vmem>>, vector<1x8x8x4xbf16>,
    return
  }
  func.func @transform_0(%arg0: i32, %arg1: i32) -> (i32, i32, i32, i32) {
    %c0_i32 = arith.constant 0 : i32
    %c0_i32_0 = arith.constant 0 : i32
    %c0_i32_1 = arith.constant 0 : i32
    return %arg0, %arg1, %c0_i32, %c0_i32_0 : i32, i32, i32, i32
  }
  func.func @transform_1(%arg0: i32, %arg1: i32) -> (i32, i32) {
    %c0_i32 = arith.constant 0 : i32
    %c0_i32_0 = arith.constant 0 : i32
    %c0_i32_1 = arith.constant 0 : i32
    return %c0_i32, %c0_i32_0 : i32, i32
  }
  func.func @transform_2(%arg0: i32, %arg1: i32) -> (i32, i32) {
    %c0_i32 = arith.constant 0 : i32
    %c0_i32_0 = arith.constant 0 : i32
    %c0_i32_1 = arith.constant 0 : i32
    return %c0_i32, %c0_i32_0 : i32, i32
  }
  func.func @transform_3(%arg0: i32, %arg1: i32) -> (i32, i32, i32, i32) {
    %c0_i32 = arith.constant 0 : i32
    %c0_i32_0 = arith.constant 0 : i32
    %c0_i32_1 = arith.constant 0 : i32
    return %arg0, %arg1, %c0_i32, %c0_i32_0 : i32, i32, i32, i32
  }
}

module attributes {stable_mosaic.version = 11 : i64} {
  func.func @kernel(%arg0: i32, %arg1: i32, %arg2: memref<1x1x64x108xbf16, #tpu.memory_space<vmem>>, %arg3: memref<108x4xbf16, #tpu.memory_space<vmem>>, %arg4: memref<1x4xf32, #tpu.memory_space<vmem>>, %arg5: memref<1x8x8x4xbf16, #tpu.memory_space<vmem>>) attributes {dimension_semantics = [#tpu.dimension_semantics<parallel>, #tpu.dimension_semantics<parallel>], iteration_bounds = array<i64: 2, 1>, scalar_prefetch = 0 : i64, scratch_operands = 0 : i64, tpu.core_type = #tpu.core_type<tc>, window_params = [{transform_indices = @transform_0, window_bounds = array<i64: 1, 1, 64, 108>}, {pipeline_mode = #tpu.pipeline_mode<synchronous>, transform_indices = @transform_1, window_bounds = array<i64: 108, 4>}, {pipeline_mode = #tpu.pipeline_mode<synchronous>, transform_indices = @transform_2, window_bounds = array<i64: 1, 4>}, {transform_indices = @transform_3, window_bounds = array<i64: 1, 8, 8, 4>}]} {
    %c0 = arith.constant 0 : index
    %c0_0 = arith.constant 0 : index
    %c0_1 = arith.constant 0 : index
    %c0_2 = arith.constant 0 : index
    %0 = vector.load %arg2[%c0, %c0_0, %c0_1, %c0_2] : memref<1x1x64x108xbf16, #tpu.memory_space<vmem>>, vector<1x1x64x108xbf16>
    %1 = vector.shape_cast %0 : vector<1x1x64x108xbf16> to vector<64x108xbf16>
    %c0_3 = arith.constant 0 : index
    %c0_4 = arith.constant 0 : index
    %2 = vector.load %arg3[%c0_3, %c0_4] : memref<108x4xbf16, #tpu.memory_space<vmem>>, vector<108x4xbf16>
    %cst = arith.constant dense<0.000000e+00> : vector<64x4xf32>
    %3 = tpu.matmul %1, %2, %cst {dimension_numbers = #tpu.dot_dimension_numbers<[1], [0], [0], [1], [0, 0, 1, 1], [], []>} : vector<64x108xbf16>, vector<108x4xbf16>, vector<64x4xf32> -> vector<64x4xf32>
    %c0_5 = arith.constant 0 : index
    %c0_6 = arith.constant 0 : index
    %4 = vector.load %arg4[%c0_5, %c0_6] : memref<1x4xf32, #tpu.memory_space<vmem>>, vector<1x4xf32>
    %5 = vector.shape_cast %4 : vector<1x4xf32> to vector<4xf32>
    %6 = vector.shape_cast %5 : vector<4xf32> to vector<1x4xf32>
    %7 = vector.broadcast %6 : vector<1x4xf32> to vector<64x4xf32>
    %8 = arith.addf %3, %7 : vector<64x4xf32>
    %cst_7 = arith.constant 0.000000e+00 : f32
    %9 = vector.broadcast %cst_7 : f32 to vector<64x4xf32>
    %10 = arith.maximumf %8, %9 : vector<64x4xf32>
    %11 = vector.shape_cast %10 : vector<64x4xf32> to vector<8x8x4xf32>
    %12 = arith.truncf %11 : vector<8x8x4xf32> to vector<8x8x4xbf16>
    %c0_8 = arith.constant 0 : index
    %c0_9 = arith.constant 0 : index
    %c0_10 = arith.constant 0 : index
    %c0_11 = arith.constant 0 : index
    %13 = vector.load %arg5[%c0_8, %c0_9, %c0_10, %c0_11] : memref<1x8x8x4xbf16, #tpu.memory_space<vmem>>, vector<1x8x8x4xbf16>
    %14 = vector.shape_cast %13 : vector<1x8x8x4xbf16> to vector<8x8x4xbf16>
    %15 = vector.shape_cast %12 : vector<8x8x4xbf16> to vector<1x8x8x4xbf16>
    tpu.vector_store %arg5[%c0_8, %c0_9, %c0_10, %c0_11], %15 {strides = array<i32>} : memref<1x8x8x4xbf16, #tpu.memory_space<vmem>>, vector<1x8x8x4xbf16>,
    return
  }
  func.func @transform_0(%arg0: i32, %arg1: i32) -> (i32, i32, i32, i32) {
    %c0_i32 = arith.constant 0 : i32
    %c0_i32_0 = arith.constant 0 : i32
    %c0_i32_1 = arith.constant 0 : i32
    return %arg0, %arg1, %c0_i32, %c0_i32_0 : i32, i32, i32, i32
  }
  func.func @transform_1(%arg0: i32, %arg1: i32) -> (i32, i32) {
    %c0_i32 = arith.constant 0 : i32
    %c0_i32_0 = arith.constant 0 : i32
    %c0_i32_1 = arith.constant 0 : i32
    return %c0_i32, %c0_i32_0 : i32, i32
  }
  func.func @transform_2(%arg0: i32, %arg1: i32) -> (i32, i32) {
    %c0_i32 = arith.constant 0 : i32
    %c0_i32_0 = arith.constant 0 : i32
    %c0_i32_1 = arith.constant 0 : i32
    return %c0_i32, %c0_i32_0 : i32, i32
  }
  func.func @transform_3(%arg0: i32, %arg1: i32) -> (i32, i32, i32, i32) {
    %c0_i32 = arith.constant 0 : i32
    %c0_i32_0 = arith.constant 0 : i32
    %c0_i32_1 = arith.constant 0 : i32
    return %arg0, %arg1, %c0_i32, %c0_i32_0 : i32, i32, i32, i32
  }
}

module attributes {stable_mosaic.version = 11 : i64} {
  func.func @kernel(%arg0: i32, %arg1: i32, %arg2: memref<1x1x64x16xbf16, #tpu.memory_space<vmem>>, %arg3: memref<16x8xbf16, #tpu.memory_space<vmem>>, %arg4: memref<1x8xf32, #tpu.memory_space<vmem>>, %arg5: memref<1x8x8x8xbf16, #tpu.memory_space<vmem>>, %arg6: memref<1x8x8x8xbf16, #tpu.memory_space<vmem>>) attributes {dimension_semantics = [#tpu.dimension_semantics<parallel>, #tpu.dimension_semantics<parallel>], iteration_bounds = array<i64: 2, 1>, scalar_prefetch = 0 : i64, scratch_operands = 0 : i64, tpu.core_type = #tpu.core_type<tc>, window_params = [{transform_indices = @transform_0, window_bounds = array<i64: 1, 1, 64, 16>}, {pipeline_mode = #tpu.pipeline_mode<synchronous>, transform_indices = @transform_1, window_bounds = array<i64: 16, 8>}, {pipeline_mode = #tpu.pipeline_mode<synchronous>, transform_indices = @transform_2, window_bounds = array<i64: 1, 8>}, {transform_indices = @transform_3, window_bounds = array<i64: 1, 8, 8, 8>}, {transform_indices = @transform_4, window_bounds = array<i64: 1, 8, 8, 8>}]} {
    %c0 = arith.constant 0 : index
    %c0_0 = arith.constant 0 : index
    %c0_1 = arith.constant 0 : index
    %c0_2 = arith.constant 0 : index
    %0 = vector.load %arg2[%c0, %c0_0, %c0_1, %c0_2] : memref<1x1x64x16xbf16, #tpu.memory_space<vmem>>, vector<1x1x64x16xbf16>
    %1 = vector.shape_cast %0 : vector<1x1x64x16xbf16> to vector<64x16xbf16>
    %c0_3 = arith.constant 0 : index
    %c0_4 = arith.constant 0 : index
    %2 = vector.load %arg3[%c0_3, %c0_4] : memref<16x8xbf16, #tpu.memory_space<vmem>>, vector<16x8xbf16>
    %cst = arith.constant dense<0.000000e+00> : vector<64x8xf32>
    %3 = tpu.matmul %1, %2, %cst {dimension_numbers = #tpu.dot_dimension_numbers<[1], [0], [0], [1], [0, 0, 1, 1], [], []>} : vector<64x16xbf16>, vector<16x8xbf16>, vector<64x8xf32> -> vector<64x8xf32>
    %c0_5 = arith.constant 0 : index
    %c0_6 = arith.constant 0 : index
    %4 = vector.load %arg4[%c0_5, %c0_6] : memref<1x8xf32, #tpu.memory_space<vmem>>, vector<1x8xf32>
    %5 = vector.shape_cast %4 : vector<1x8xf32> to vector<8xf32>
    %6 = vector.shape_cast %5 : vector<8xf32> to vector<1x8xf32>
    %7 = vector.broadcast %6 : vector<1x8xf32> to vector<64x8xf32>
    %8 = arith.addf %3, %7 : vector<64x8xf32>
    %9 = vector.shape_cast %8 : vector<64x8xf32> to vector<8x8x8xf32>
    %c0_7 = arith.constant 0 : index
    %c0_8 = arith.constant 0 : index
    %c0_9 = arith.constant 0 : index
    %c0_10 = arith.constant 0 : index
    %10 = vector.load %arg5[%c0_7, %c0_8, %c0_9, %c0_10] : memref<1x8x8x8xbf16, #tpu.memory_space<vmem>>, vector<1x8x8x8xbf16>
    %11 = vector.shape_cast %10 : vector<1x8x8x8xbf16> to vector<8x8x8xbf16>
    %12 = arith.extf %11 : vector<8x8x8xbf16> to vector<8x8x8xf32>
    %13 = arith.addf %9, %12 : vector<8x8x8xf32>
    %14 = arith.truncf %13 : vector<8x8x8xf32> to vector<8x8x8xbf16>
    %c0_11 = arith.constant 0 : index
    %c0_12 = arith.constant 0 : index
    %c0_13 = arith.constant 0 : index
    %c0_14 = arith.constant 0 : index
    %15 = vector.load %arg6[%c0_11, %c0_12, %c0_13, %c0_14] : memref<1x8x8x8xbf16, #tpu.memory_space<vmem>>, vector<1x8x8x8xbf16>
    %16 = vector.shape_cast %15 : vector<1x8x8x8xbf16> to vector<8x8x8xbf16>
    %17 = vector.shape_cast %14 : vector<8x8x8xbf16> to vector<1x8x8x8xbf16>
    tpu.vector_store %arg6[%c0_11, %c0_12, %c0_13, %c0_14], %17 {strides = array<i32>} : memref<1x8x8x8xbf16, #tpu.memory_space<vmem>>, vector<1x8x8x8xbf16>,
    return
  }
  func.func @transform_0(%arg0: i32, %arg1: i32) -> (i32, i32, i32, i32) {
    %c0_i32 = arith.constant 0 : i32
    %c0_i32_0 = arith.constant 0 : i32
    %c0_i32_1 = arith.constant 0 : i32
    return %arg0, %arg1, %c0_i32, %c0_i32_0 : i32, i32, i32, i32
  }
  func.func @transform_1(%arg0: i32, %arg1: i32) -> (i32, i32) {
    %c0_i32 = arith.constant 0 : i32
    %c0_i32_0 = arith.constant 0 : i32
    %c0_i32_1 = arith.constant 0 : i32
    return %c0_i32, %c0_i32_0 : i32, i32
  }
  func.func @transform_2(%arg0: i32, %arg1: i32) -> (i32, i32) {
    %c0_i32 = arith.constant 0 : i32
    %c0_i32_0 = arith.constant 0 : i32
    %c0_i32_1 = arith.constant 0 : i32
    return %c0_i32, %c0_i32_0 : i32, i32
  }
  func.func @transform_3(%arg0: i32, %arg1: i32) -> (i32, i32, i32, i32) {
    %c0_i32 = arith.constant 0 : i32
    %c0_i32_0 = arith.constant 0 : i32
    %c0_i32_1 = arith.constant 0 : i32
    return %arg0, %arg1, %c0_i32, %c0_i32_0 : i32, i32, i32, i32
  }
  func.func @transform_4(%arg0: i32, %arg1: i32) -> (i32, i32, i32, i32) {
    %c0_i32 = arith.constant 0 : i32
    %c0_i32_0 = arith.constant 0 : i32
    %c0_i32_1 = arith.constant 0 : i32
    return %arg0, %arg1, %c0_i32, %c0_i32_0 : i32, i32, i32, i32
  }
}

module attributes {stable_mosaic.version = 11 : i64} {
  func.func @kernel(%arg0: i32, %arg1: i32, %arg2: memref<1x1x64x16xbf16, #tpu.memory_space<vmem>>, %arg3: memref<16x8xbf16, #tpu.memory_space<vmem>>, %arg4: memref<1x8xf32, #tpu.memory_space<vmem>>, %arg5: memref<1x8x8x8xbf16, #tpu.memory_space<vmem>>) attributes {dimension_semantics = [#tpu.dimension_semantics<parallel>, #tpu.dimension_semantics<parallel>], iteration_bounds = array<i64: 2, 1>, scalar_prefetch = 0 : i64, scratch_operands = 0 : i64, tpu.core_type = #tpu.core_type<tc>, window_params = [{transform_indices = @transform_0, window_bounds = array<i64: 1, 1, 64, 16>}, {pipeline_mode = #tpu.pipeline_mode<synchronous>, transform_indices = @transform_1, window_bounds = array<i64: 16, 8>}, {pipeline_mode = #tpu.pipeline_mode<synchronous>, transform_indices = @transform_2, window_bounds = array<i64: 1, 8>}, {transform_indices = @transform_3, window_bounds = array<i64: 1, 8, 8, 8>}]} {
    %c0 = arith.constant 0 : index
    %c0_0 = arith.constant 0 : index
    %c0_1 = arith.constant 0 : index
    %c0_2 = arith.constant 0 : index
    %0 = vector.load %arg2[%c0, %c0_0, %c0_1, %c0_2] : memref<1x1x64x16xbf16, #tpu.memory_space<vmem>>, vector<1x1x64x16xbf16>
    %1 = vector.shape_cast %0 : vector<1x1x64x16xbf16> to vector<64x16xbf16>
    %c0_3 = arith.constant 0 : index
    %c0_4 = arith.constant 0 : index
    %2 = vector.load %arg3[%c0_3, %c0_4] : memref<16x8xbf16, #tpu.memory_space<vmem>>, vector<16x8xbf16>
    %cst = arith.constant dense<0.000000e+00> : vector<64x8xf32>
    %3 = tpu.matmul %1, %2, %cst {dimension_numbers = #tpu.dot_dimension_numbers<[1], [0], [0], [1], [0, 0, 1, 1], [], []>} : vector<64x16xbf16>, vector<16x8xbf16>, vector<64x8xf32> -> vector<64x8xf32>
    %c0_5 = arith.constant 0 : index
    %c0_6 = arith.constant 0 : index
    %4 = vector.load %arg4[%c0_5, %c0_6] : memref<1x8xf32, #tpu.memory_space<vmem>>, vector<1x8xf32>
    %5 = vector.shape_cast %4 : vector<1x8xf32> to vector<8xf32>
    %6 = vector.shape_cast %5 : vector<8xf32> to vector<1x8xf32>
    %7 = vector.broadcast %6 : vector<1x8xf32> to vector<64x8xf32>
    %8 = arith.addf %3, %7 : vector<64x8xf32>
    %9 = vector.shape_cast %8 : vector<64x8xf32> to vector<8x8x8xf32>
    %10 = arith.truncf %9 : vector<8x8x8xf32> to vector<8x8x8xbf16>
    %c0_7 = arith.constant 0 : index
    %c0_8 = arith.constant 0 : index
    %c0_9 = arith.constant 0 : index
    %c0_10 = arith.constant 0 : index
    %11 = vector.load %arg5[%c0_7, %c0_8, %c0_9, %c0_10] : memref<1x8x8x8xbf16, #tpu.memory_space<vmem>>, vector<1x8x8x8xbf16>
    %12 = vector.shape_cast %11 : vector<1x8x8x8xbf16> to vector<8x8x8xbf16>
    %13 = vector.shape_cast %10 : vector<8x8x8xbf16> to vector<1x8x8x8xbf16>
    tpu.vector_store %arg5[%c0_7, %c0_8, %c0_9, %c0_10], %13 {strides = array<i32>} : memref<1x8x8x8xbf16, #tpu.memory_space<vmem>>, vector<1x8x8x8xbf16>,
    return
  }
  func.func @transform_0(%arg0: i32, %arg1: i32) -> (i32, i32, i32, i32) {
    %c0_i32 = arith.constant 0 : i32
    %c0_i32_0 = arith.constant 0 : i32
    %c0_i32_1 = arith.constant 0 : i32
    return %arg0, %arg1, %c0_i32, %c0_i32_0 : i32, i32, i32, i32
  }
  func.func @transform_1(%arg0: i32, %arg1: i32) -> (i32, i32) {
    %c0_i32 = arith.constant 0 : i32
    %c0_i32_0 = arith.constant 0 : i32
    %c0_i32_1 = arith.constant 0 : i32
    return %c0_i32, %c0_i32_0 : i32, i32
  }
  func.func @transform_2(%arg0: i32, %arg1: i32) -> (i32, i32) {
    %c0_i32 = arith.constant 0 : i32
    %c0_i32_0 = arith.constant 0 : i32
    %c0_i32_1 = arith.constant 0 : i32
    return %c0_i32, %c0_i32_0 : i32, i32
  }
  func.func @transform_3(%arg0: i32, %arg1: i32) -> (i32, i32, i32, i32) {
    %c0_i32 = arith.constant 0 : i32
    %c0_i32_0 = arith.constant 0 : i32
    %c0_i32_1 = arith.constant 0 : i32
    return %arg0, %arg1, %c0_i32, %c0_i32_0 : i32, i32, i32, i32
  }
}

module attributes {stable_mosaic.version = 11 : i64} {
  func.func @kernel(%arg0: i32, %arg1: i32, %arg2: memref<1x1x64x72xbf16, #tpu.memory_space<vmem>>, %arg3: memref<72x8xbf16, #tpu.memory_space<vmem>>, %arg4: memref<1x8xf32, #tpu.memory_space<vmem>>, %arg5: memref<1x8x8x8xbf16, #tpu.memory_space<vmem>>, %arg6: memref<1x8x8x8xbf16, #tpu.memory_space<vmem>>) attributes {dimension_semantics = [#tpu.dimension_semantics<parallel>, #tpu.dimension_semantics<parallel>], iteration_bounds = array<i64: 2, 1>, scalar_prefetch = 0 : i64, scratch_operands = 0 : i64, tpu.core_type = #tpu.core_type<tc>, window_params = [{transform_indices = @transform_0, window_bounds = array<i64: 1, 1, 64, 72>}, {pipeline_mode = #tpu.pipeline_mode<synchronous>, transform_indices = @transform_1, window_bounds = array<i64: 72, 8>}, {pipeline_mode = #tpu.pipeline_mode<synchronous>, transform_indices = @transform_2, window_bounds = array<i64: 1, 8>}, {transform_indices = @transform_3, window_bounds = array<i64: 1, 8, 8, 8>}, {transform_indices = @transform_4, window_bounds = array<i64: 1, 8, 8, 8>}]} {
    %c0 = arith.constant 0 : index
    %c0_0 = arith.constant 0 : index
    %c0_1 = arith.constant 0 : index
    %c0_2 = arith.constant 0 : index
    %0 = vector.load %arg2[%c0, %c0_0, %c0_1, %c0_2] : memref<1x1x64x72xbf16, #tpu.memory_space<vmem>>, vector<1x1x64x72xbf16>
    %1 = vector.shape_cast %0 : vector<1x1x64x72xbf16> to vector<64x72xbf16>
    %c0_3 = arith.constant 0 : index
    %c0_4 = arith.constant 0 : index
    %2 = vector.load %arg3[%c0_3, %c0_4] : memref<72x8xbf16, #tpu.memory_space<vmem>>, vector<72x8xbf16>
    %cst = arith.constant dense<0.000000e+00> : vector<64x8xf32>
    %3 = tpu.matmul %1, %2, %cst {dimension_numbers = #tpu.dot_dimension_numbers<[1], [0], [0], [1], [0, 0, 1, 1], [], []>} : vector<64x72xbf16>, vector<72x8xbf16>, vector<64x8xf32> -> vector<64x8xf32>
    %c0_5 = arith.constant 0 : index
    %c0_6 = arith.constant 0 : index
    %4 = vector.load %arg4[%c0_5, %c0_6] : memref<1x8xf32, #tpu.memory_space<vmem>>, vector<1x8xf32>
    %5 = vector.shape_cast %4 : vector<1x8xf32> to vector<8xf32>
    %6 = vector.shape_cast %5 : vector<8xf32> to vector<1x8xf32>
    %7 = vector.broadcast %6 : vector<1x8xf32> to vector<64x8xf32>
    %8 = arith.addf %3, %7 : vector<64x8xf32>
    %9 = vector.shape_cast %8 : vector<64x8xf32> to vector<8x8x8xf32>
    %c0_7 = arith.constant 0 : index
    %c0_8 = arith.constant 0 : index
    %c0_9 = arith.constant 0 : index
    %c0_10 = arith.constant 0 : index
    %10 = vector.load %arg5[%c0_7, %c0_8, %c0_9, %c0_10] : memref<1x8x8x8xbf16, #tpu.memory_space<vmem>>, vector<1x8x8x8xbf16>
    %11 = vector.shape_cast %10 : vector<1x8x8x8xbf16> to vector<8x8x8xbf16>
    %12 = arith.extf %11 : vector<8x8x8xbf16> to vector<8x8x8xf32>
    %13 = arith.addf %9, %12 : vector<8x8x8xf32>
    %14 = arith.truncf %13 : vector<8x8x8xf32> to vector<8x8x8xbf16>
    %c0_11 = arith.constant 0 : index
    %c0_12 = arith.constant 0 : index
    %c0_13 = arith.constant 0 : index
    %c0_14 = arith.constant 0 : index
    %15 = vector.load %arg6[%c0_11, %c0_12, %c0_13, %c0_14] : memref<1x8x8x8xbf16, #tpu.memory_space<vmem>>, vector<1x8x8x8xbf16>
    %16 = vector.shape_cast %15 : vector<1x8x8x8xbf16> to vector<8x8x8xbf16>
    %17 = vector.shape_cast %14 : vector<8x8x8xbf16> to vector<1x8x8x8xbf16>
    tpu.vector_store %arg6[%c0_11, %c0_12, %c0_13, %c0_14], %17 {strides = array<i32>} : memref<1x8x8x8xbf16, #tpu.memory_space<vmem>>, vector<1x8x8x8xbf16>,
    return
  }
  func.func @transform_0(%arg0: i32, %arg1: i32) -> (i32, i32, i32, i32) {
    %c0_i32 = arith.constant 0 : i32
    %c0_i32_0 = arith.constant 0 : i32
    %c0_i32_1 = arith.constant 0 : i32
    return %arg0, %arg1, %c0_i32, %c0_i32_0 : i32, i32, i32, i32
  }
  func.func @transform_1(%arg0: i32, %arg1: i32) -> (i32, i32) {
    %c0_i32 = arith.constant 0 : i32
    %c0_i32_0 = arith.constant 0 : i32
    %c0_i32_1 = arith.constant 0 : i32
    return %c0_i32, %c0_i32_0 : i32, i32
  }
  func.func @transform_2(%arg0: i32, %arg1: i32) -> (i32, i32) {
    %c0_i32 = arith.constant 0 : i32
    %c0_i32_0 = arith.constant 0 : i32
    %c0_i32_1 = arith.constant 0 : i32
    return %c0_i32, %c0_i32_0 : i32, i32
  }
  func.func @transform_3(%arg0: i32, %arg1: i32) -> (i32, i32, i32, i32) {
    %c0_i32 = arith.constant 0 : i32
    %c0_i32_0 = arith.constant 0 : i32
    %c0_i32_1 = arith.constant 0 : i32
    return %arg0, %arg1, %c0_i32, %c0_i32_0 : i32, i32, i32, i32
  }
  func.func @transform_4(%arg0: i32, %arg1: i32) -> (i32, i32, i32, i32) {
    %c0_i32 = arith.constant 0 : i32
    %c0_i32_0 = arith.constant 0 : i32
    %c0_i32_1 = arith.constant 0 : i32
    return %arg0, %arg1, %c0_i32, %c0_i32_0 : i32, i32, i32, i32
  }
}

module attributes {stable_mosaic.version = 11 : i64} {
  func.func @kernel(%arg0: i32, %arg1: i32, %arg2: memref<1x1x64x72xbf16, #tpu.memory_space<vmem>>, %arg3: memref<72x150xbf16, #tpu.memory_space<vmem>>, %arg4: memref<1x150xf32, #tpu.memory_space<vmem>>, %arg5: memref<1x8x8x150xf32, #tpu.memory_space<vmem>>) attributes {dimension_semantics = [#tpu.dimension_semantics<parallel>, #tpu.dimension_semantics<parallel>], iteration_bounds = array<i64: 2, 1>, scalar_prefetch = 0 : i64, scratch_operands = 0 : i64, tpu.core_type = #tpu.core_type<tc>, window_params = [{transform_indices = @transform_0, window_bounds = array<i64: 1, 1, 64, 72>}, {pipeline_mode = #tpu.pipeline_mode<synchronous>, transform_indices = @transform_1, window_bounds = array<i64: 72, 150>}, {pipeline_mode = #tpu.pipeline_mode<synchronous>, transform_indices = @transform_2, window_bounds = array<i64: 1, 150>}, {transform_indices = @transform_3, window_bounds = array<i64: 1, 8, 8, 150>}]} {
    %c0 = arith.constant 0 : index
    %c0_0 = arith.constant 0 : index
    %c0_1 = arith.constant 0 : index
    %c0_2 = arith.constant 0 : index
    %0 = vector.load %arg2[%c0, %c0_0, %c0_1, %c0_2] : memref<1x1x64x72xbf16, #tpu.memory_space<vmem>>, vector<1x1x64x72xbf16>
    %1 = vector.shape_cast %0 : vector<1x1x64x72xbf16> to vector<64x72xbf16>
    %c0_3 = arith.constant 0 : index
    %c0_4 = arith.constant 0 : index
    %2 = vector.load %arg3[%c0_3, %c0_4] : memref<72x150xbf16, #tpu.memory_space<vmem>>, vector<72x150xbf16>
    %cst = arith.constant dense<0.000000e+00> : vector<64x150xf32>
    %3 = tpu.matmul %1, %2, %cst {dimension_numbers = #tpu.dot_dimension_numbers<[1], [0], [0], [1], [0, 0, 1, 1], [], []>} : vector<64x72xbf16>, vector<72x150xbf16>, vector<64x150xf32> -> vector<64x150xf32>
    %c0_5 = arith.constant 0 : index
    %c0_6 = arith.constant 0 : index
    %4 = vector.load %arg4[%c0_5, %c0_6] : memref<1x150xf32, #tpu.memory_space<vmem>>, vector<1x150xf32>
    %5 = vector.shape_cast %4 : vector<1x150xf32> to vector<150xf32>
    %6 = vector.shape_cast %5 : vector<150xf32> to vector<1x150xf32>
    %7 = vector.broadcast %6 : vector<1x150xf32> to vector<64x150xf32>
    %8 = arith.addf %3, %7 : vector<64x150xf32>
    %9 = vector.shape_cast %8 : vector<64x150xf32> to vector<8x8x150xf32>
    %c0_7 = arith.constant 0 : index
    %c0_8 = arith.constant 0 : index
    %c0_9 = arith.constant 0 : index
    %c0_10 = arith.constant 0 : index
    %10 = vector.load %arg5[%c0_7, %c0_8, %c0_9, %c0_10] : memref<1x8x8x150xf32, #tpu.memory_space<vmem>>, vector<1x8x8x150xf32>
    %11 = vector.shape_cast %10 : vector<1x8x8x150xf32> to vector<8x8x150xf32>
    %12 = vector.shape_cast %9 : vector<8x8x150xf32> to vector<1x8x8x150xf32>
    tpu.vector_store %arg5[%c0_7, %c0_8, %c0_9, %c0_10], %12 {strides = array<i32>} : memref<1x8x8x150xf32, #tpu.memory_space<vmem>>, vector<1x8x8x150xf32>,
    return
  }
  func.func @transform_0(%arg0: i32, %arg1: i32) -> (i32, i32, i32, i32) {
    %c0_i32 = arith.constant 0 : i32
    %c0_i32_0 = arith.constant 0 : i32
    %c0_i32_1 = arith.constant 0 : i32
    return %arg0, %arg1, %c0_i32, %c0_i32_0 : i32, i32, i32, i32
  }
  func.func @transform_1(%arg0: i32, %arg1: i32) -> (i32, i32) {
    %c0_i32 = arith.constant 0 : i32
    %c0_i32_0 = arith.constant 0 : i32
    %c0_i32_1 = arith.constant 0 : i32
    return %c0_i32, %c0_i32_0 : i32, i32
  }
  func.func @transform_2(%arg0: i32, %arg1: i32) -> (i32, i32) {
    %c0_i32 = arith.constant 0 : i32
    %c0_i32_0 = arith.constant 0 : i32
    %c0_i32_1 = arith.constant 0 : i32
    return %c0_i32, %c0_i32_0 : i32, i32
  }
  func.func @transform_3(%arg0: i32, %arg1: i32) -> (i32, i32, i32, i32) {
    %c0_i32 = arith.constant 0 : i32
    %c0_i32_0 = arith.constant 0 : i32
    %c0_i32_1 = arith.constant 0 : i32
    return %arg0, %arg1, %c0_i32, %c0_i32_0 : i32, i32, i32, i32
  }
}

</mosaic_0001>

<llo_original>
// kernel: dfnet_forward.12
$region0: #{dfnet_forward.12}
  #allocation0 [shape = 'u32[]', space=smem, size = 0x4, offset = 0x4, fixed_abs, tag = 'smem constant byte address 0x4 - core index']
  #allocation1 [shape = 'u32[144,128]{1,0:T(1,128)}', space=vmem, size = 0x12000, scoped, tag = 'internal scratch']
  %s0 = inlined_call_operand.vmem [shape: bf16[2,1,64,72], index: 0, kind: input, shape index: {}]
  %s1 = inlined_call_operand.vmem [shape: bf16[72,8], index: 1, kind: input, shape index: {}]
  %s2 = inlined_call_operand.vmem [shape: f32[1,8], index: 2, kind: input, shape index: {}]
  %s3 = inlined_call_operand.vmem [shape: bf16[2,8,8,8], index: 3, kind: output, shape index: {}]
  %s4 = sld [smem:[#allocation0]]
  $region45: #{dfnet_forward.12} parent=0
    _
  %s6 = ssub.s32 1, %s4
  %s7 = scalar_select 0, %s6, %s4
  loop: start=0, step=1, limit=4
  $region2: #{dfnet_forward.12} parent=0 // loop_pre_header
    _
  $region3: #{dfnet_forward.12} parent=0 // loop_header
    %s9 = sphi 0, %s13
    %p10 = scmp.ge.s32.totalorder %s9, 4
    %s16 = sphi 0, %s28
    %s17 = sphi 0, %s24
    %s18 = sphi 0, %s16
    %s19 = sphi 0, %s17
    %s20 = sphi 0, %s18
    %s21 = sphi 0, %s19
    %s33 = sphi 0, %s35
    %s36 = sphi 0, %s33
    %s37 = sphi 0, %s36
    %s53 = sphi 0, %s37
    %s57 = sphi 0, %s57
    %s59 = sphi 0, %s57
    %s60 = sphi 0, %s59
    %s74 = sphi 0, %s60
    %s78 = sphi 0, %s78
    %s80 = sphi 0, %s78
    %s81 = sphi 0, %s80
    %s95 = sphi 0, %s81
    %s103 = sphi 0, %s105
    %s106 = sphi 0, %s103
    %s107 = sphi 0, %s106
    %s123 = sphi 0, %s107
  $region4: #{dfnet_forward.12} parent=0 // loop_header_branch
    %12 = sbr.rel (%p10) target = $region8
  $region5: #{dfnet_forward.12} parent=0 // loop_body
    %s14 = ssub.s32 %s9, 1
    %s15 = ssub.s32 %s9, 2
    %s22 = sadd.s32 1, %s17
    %p23 = scmp.ge.s32.totalorder %s22, 1
    %s24 = scalar_select %p23, 0, %s22
    %s25 = sadd.s32 1, %s16
    %s26 = scalar_select %p23, %s25, %s16
    %p27 = scmp.ge.s32.totalorder %s26, 2
    %s28 = scalar_select %p27, 0, %s26
    %s29 = ssub.s32 %s16, %s28
    %s30 = ssub.s32 %s17, %s24
    %s31 = sor.u32 %s29, %s30
    %p32 = scmp.eq.s32.totalorder %s31, 0
    %s34 = sadd.s32 %s33, 1
    %s35 = scalar_select %p32, %s33, %s34
    %p38 = pneg %p32
    %p39 = scmp.eq.s32.totalorder %s9, 1
    %p40 = por %p38, %p39
    %p41 = scmp.ne.s32.totalorder %s33, %s36
    %p42 = scmp.eq.s32.totalorder %s9, 0
    %p43 = por %p41, %p42
    %p44 = scmp.ne.s32.totalorder %s33, %s36
    %p45 = scmp.eq.s32.totalorder %s14, 1
    %p46 = por %p44, %p45
    %p47 = scmp.ne.s32.totalorder %s36, %s37
    %p48 = scmp.eq.s32.totalorder %s14, 0
    %p49 = por %p47, %p48
    %p50 = scmp.ne.s32.totalorder %s36, %s37
    %p51 = scmp.eq.s32.totalorder %s15, 1
    %p52 = por %p50, %p51
    %p54 = scmp.ne.s32.totalorder %s37, %s53
    %p55 = scmp.eq.s32.totalorder %s15, 0
    %p56 = por %p54, %p55
    %s58 = sadd.s32 %s57, 1
    %p61 = scmp.eq.s32.totalorder %s9, 1
    %p62 = scmp.ne.s32.totalorder %s57, %s59
    %p63 = scmp.eq.s32.totalorder %s9, 0
    %p64 = por %p62, %p63
    %p65 = scmp.ne.s32.totalorder %s57, %s59
    %p66 = scmp.eq.s32.totalorder %s14, 1
    %p67 = por %p65, %p66
    %p68 = scmp.ne.s32.totalorder %s59, %s60
    %p69 = scmp.eq.s32.totalorder %s14, 0
    %p70 = por %p68, %p69
    %p71 = scmp.ne.s32.totalorder %s59, %s60
    %p72 = scmp.eq.s32.totalorder %s15, 1
    %p73 = por %p71, %p72
    %p75 = scmp.ne.s32.totalorder %s60, %s74
    %p76 = scmp.eq.s32.totalorder %s15, 0
    %p77 = por %p75, %p76
    %s79 = sadd.s32 %s78, 1
    %p82 = scmp.eq.s32.totalorder %s9, 1
    %p83 = scmp.ne.s32.totalorder %s78, %s80
    %p84 = scmp.eq.s32.totalorder %s9, 0
    %p85 = por %p83, %p84
    %p86 = scmp.ne.s32.totalorder %s78, %s80
    %p87 = scmp.eq.s32.totalorder %s14, 1
    %p88 = por %p86, %p87
    %p89 = scmp.ne.s32.totalorder %s80, %s81
    %p90 = scmp.eq.s32.totalorder %s14, 0
    %p91 = por %p89, %p90
    %p92 = scmp.ne.s32.totalorder %s80, %s81
    %p93 = scmp.eq.s32.totalorder %s15, 1
    %p94 = por %p92, %p93
    %p96 = scmp.ne.s32.totalorder %s81, %s95
    %p97 = scmp.eq.s32.totalorder %s15, 0
    %p98 = por %p96, %p97
    %s99 = ssub.s32 %s16, %s28
    %s100 = ssub.s32 %s17, %s24
    %s101 = sor.u32 %s99, %s100
    %p102 = scmp.eq.s32.totalorder %s101, 0
    %s104 = sadd.s32 %s103, 1
    %s105 = scalar_select %p102, %s103, %s104
    %p108 = pneg %p102
    %p109 = scmp.eq.s32.totalorder %s9, 1
    %p110 = por %p108, %p109
    %p111 = scmp.ne.s32.totalorder %s103, %s106
    %p112 = scmp.eq.s32.totalorder %s9, 0
    %p113 = por %p111, %p112
    %p114 = scmp.ne.s32.totalorder %s103, %s106
    %p115 = scmp.eq.s32.totalorder %s14, 1
    %p116 = por %p114, %p115
    %p117 = scmp.ne.s32.totalorder %s106, %s107
    %p118 = scmp.eq.s32.totalorder %s14, 0
    %p119 = por %p117, %p118
    %p120 = scmp.ne.s32.totalorder %s106, %s107
    %p121 = scmp.eq.s32.totalorder %s15, 1
    %p122 = por %p120, %p121
    %p124 = scmp.ne.s32.totalorder %s107, %s123
    %p125 = scmp.eq.s32.totalorder %s15, 0
    %p126 = por %p124, %p125
    %p127 = scmp.le.s32.totalorder 1, %s9
    %p128 = scmp.lt.s32.totalorder %s9, 3
    %p129 = pnand %p127, %p128
    %p130 = pneg %p129
    // Predicated region
    $region9: #{dfnet_forward.12} parent=5 // pred_check
      _
    $region10: #{dfnet_forward.12} parent=5 // pred_check_branch
      %132 = sbr.rel (%p129) target = $region12
    $region11: #{dfnet_forward.12} parent=5 // pred_region
      %s133 = ssub.s32 %s9, 1
      // Predicated region
      $region13: #{dfnet_forward.12} parent=11 // pred_check
        %p134 = pneg %p70
      $region14: #{dfnet_forward.12} parent=11 // pred_check_branch
        %136 = sbr.rel (%p134) target = $region16
      $region15: #{dfnet_forward.12} parent=11 // pred_region
        _
      $region16: #{dfnet_forward.12} parent=11 // pred_fallthru
        _
      // Predicated region
      $region17: #{dfnet_forward.12} parent=11 // pred_check
        %p137 = pneg %p91
      $region18: #{dfnet_forward.12} parent=11 // pred_check_branch
        %139 = sbr.rel (%p137) target = $region20
      $region19: #{dfnet_forward.12} parent=11 // pred_region
        _
      $region20: #{dfnet_forward.12} parent=11 // pred_fallthru
        _
    $region12: #{dfnet_forward.12} parent=5 // pred_fallthru
      _
    %p140 = scmp.lt.s32.totalorder %s9, 2
    // Predicated region
    $region21: #{dfnet_forward.12} parent=5 // pred_check
      %p141 = pneg %p140
    $region22: #{dfnet_forward.12} parent=5 // pred_check_branch
      %143 = sbr.rel (%p141) target = $region24
    $region23: #{dfnet_forward.12} parent=5 // pred_region
      // Predicated region
      $region25: #{dfnet_forward.12} parent=23 // pred_check
        %p144 = pneg %p43
      $region26: #{dfnet_forward.12} parent=23 // pred_check_branch
        %146 = sbr.rel (%p144) target = $region28
      $region27: #{dfnet_forward.12} parent=23 // pred_region
        %p147 = scmp.lt.s32.totalorder %s16, 1
        %s148 = scalar_select %p147, %s16, 1
        %p149 = scmp.lt.s32.totalorder %s17, 0
        %s150 = scalar_select %p149, %s17, 0
        %s151 = smul.addr %s150, 8
        %s152 = smul.addr %s148, 8
        %s153 = sadd.s32 %s151, %s152
        %s154 = smul.addr %s153, 4
        %s155 = scalar_lea.vmem %s0, %s154
      $region28: #{dfnet_forward.12} parent=23 // pred_fallthru
        _
    $region24: #{dfnet_forward.12} parent=5 // pred_fallthru
      _
    %p156 = scmp.le.s32.totalorder 1, %s9
    %p157 = scmp.lt.s32.totalorder %s9, 3
    %p158 = pnand %p156, %p157
    %p159 = pneg %p158
    // Predicated region
    $region29: #{dfnet_forward.12} parent=5 // pred_check
      _
    $region30: #{dfnet_forward.12} parent=5 // pred_check_branch
      %161 = sbr.rel (%p158) target = $region32
    $region31: #{dfnet_forward.12} parent=5 // pred_region
      %s162 = ssub.s32 %s9, 1
      %p163 = scmp.lt.s32.totalorder %s18, 1
      %s164 = scalar_select %p163, %s18, 1
      %p165 = scmp.lt.s32.totalorder %s19, 0
      %s166 = scalar_select %p165, %s19, 0
      %s167 = smul.addr %s166, 8
      %s168 = smul.addr %s164, 8
      %s169 = sadd.s32 %s167, %s168
      %s170 = smul.addr %s169, 4
      %s171 = scalar_lea.vmem %s0, %s170
      %p172 = pneg %p49
      %p173 = pneg %p46
      %p174 = pneg %p70
      %p175 = pneg %p67
      %p176 = pneg %p91
      %p177 = pneg %p88
      %p178 = pneg %p119
      %p179 = pneg %p116
      %s180 = smul.u32 8, %s19
      %p181 = scmp.lt.s32.totalorder %s18, 1
      %s182 = scalar_select %p181, %s18, 1
      %p183 = scmp.lt.s32.totalorder %s180, 7
      %s184 = scalar_select %p183, %s180, 7
      %s185 = smul.addr %s182, 8
      %s186 = sadd.s32 %s184, %s185
      %s187 = smul.addr %s186, 4
      %s188 = scalar_lea.vmem %s3, %s187
      %p189 = scmp.lt.s32.totalorder %s18, 1
      %s190 = scalar_select %p189, %s18, 1
      %p191 = scmp.lt.s32.totalorder %s19, 0
      %s192 = scalar_select %p191, %s19, 0
      %s193 = smul.addr %s192, 8
      %s194 = smul.addr %s190, 8
      %s195 = sadd.s32 %s193, %s194
      %s196 = smul.addr %s195, 4
      %s197 = scalar_lea.vmem %s0, %s196
      %s198 = smul.u32 8, %s19
      %p199 = scmp.lt.s32.totalorder %s18, 1
      %s200 = scalar_select %p199, %s18, 1
      %p201 = scmp.lt.s32.totalorder %s198, 7
      %s202 = scalar_select %p201, %s198, 7
      %s203 = smul.addr %s200, 8
      %s204 = sadd.s32 %s202, %s203
      %s205 = smul.addr %s204, 4
      %s206 = scalar_lea.vmem %s3, %s205
      %s207 = smul.u32 8, %s19
      %v209 = vld [vmem:[%s197] sm:$0xf]
      %v210 = vld [vmem:[%s197 + $0x4] sm:$0xf]
      %v211 = vld [vmem:[%s197 + $0x8] sm:$0xf]
      %v212 = vld [vmem:[%s197 + $0xc] sm:$0xf]
      %v213 = vld [vmem:[%s197 + $0x10] sm:$0xf]
      %v214 = vld [vmem:[%s197 + $0x14] sm:$0xf]
      %v215 = vld [vmem:[%s197 + $0x18] sm:$0xf]
      %v216 = vld [vmem:[%s197 + $0x1c] sm:$0xf]
      %v217 = vld [vmem:[%s1] sm:$0xf]
      %v218 = vld [vmem:[%s1 + $0x4] sm:$0xf]
      %v219 = vld [vmem:[%s1 + $0x8] sm:$0xf]
      %v220 = vld [vmem:[%s1 + $0xc] sm:$0xf]
      %v221 = vld [vmem:[%s1 + $0x10] sm:$0xf]
      %v222 = vld [vmem:[%s1 + $0x14] sm:$0xf]
      %v223 = vld [vmem:[%s1 + $0x18] sm:$0xf]
      %v224 = vld [vmem:[%s1 + $0x1c] sm:$0xf]
      %v225 = vld [vmem:[%s1 + $0x20] sm:$0xf]
      %v226 = vld [vmem:[%s2] sm:$0x1]
      %v228 = vlaneseq
      %v229 = vshrl.u32 %v228, 7
      %v230 = vsub.s32 0, %v229
      %v231 = vrot.slane %v226, %v230
      %v241 = vunpack.c.l.b16 %v209
      %v242 = vunpack.c.l.b16 %v210
      %v243 = vunpack.c.l.b16 %v211
      %v244 = vunpack.c.l.b16 %v212
      %v245 = vunpack.c.l.b16 %v213
      %v246 = vunpack.c.l.b16 %v214
      %v247 = vunpack.c.l.b16 %v215
      %v248 = vunpack.c.l.b16 %v216
      %v249 = vpack.c.b16 %v242, %v241
      %v250 = vpack.c.b16 %v244, %v243
      %v251 = vpack.c.b16 %v246, %v245
      %v252 = vpack.c.b16 %v248, %v247
      %v262 = vunpack.c.l.b16 %v217
      %v263 = vunpack.c.l.b16 %v218
      %v264 = vunpack.c.l.b16 %v219
      %v265 = vunpack.c.l.b16 %v220
      %v266 = vunpack.c.l.b16 %v221
      %v267 = vunpack.c.l.b16 %v222
      %v268 = vunpack.c.l.b16 %v223
      %v269 = vunpack.c.l.b16 %v224
      %v270 = vunpack.c.l.b16 %v225
      %v271 = vpack.c.b16 %v263, %v262
      %v272 = vpack.c.b16 %v265, %v264
      %v273 = vpack.c.b16 %v267, %v266
      %v274 = vpack.c.b16 %v269, %v268
      %v275 = vpack.c.b16 %v270, %v270
      %vm280 = vcmask 588800
      %v282 = vsel %vm280, %v249, 0
      %v285 = vsel %vm280, %v250, 0
      %v288 = vsel %vm280, %v251, 0
      %v291 = vsel %vm280, %v252, 0
      %vm293 = vcmask 1043456
      %v295 = vsel %vm293, %v275, 0
      %297 = vmatprep.subr.bf16.mxu0 0
      %298 = vmatpush1.bf16.msra.mxu0 %v271
      %299 = vmatprep.subr.bf16.mxu0 0
      %300 = vmatpush1.bf16.msra.mxu0 %v272
      %301 = vmatprep.subr.bf16.mxu0 0
      %302 = vmatpush1.bf16.msra.mxu0 %v273
      %303 = vmatprep.subr.bf16.mxu0 0
      %304 = vmatpush1.bf16.msra.mxu0 %v274
      %305 = vmatprep.subr.bf16.mxu0 0
      %306 = vmatpush1.bf16.msra.mxu0 %v295
      %307 = vmatprep.subr.bf16.mxu0 0
      %308 = vmatpush1.bf16.msra.mxu0 0
      %309 = vmatprep.subr.bf16.mxu0 0
      %310 = vmatpush1.bf16.msra.mxu0 0
      %311 = vmatprep.subr.bf16.mxu0 0
      %312 = vmatpush1.bf16.msra.mxu0 0
      %313 = vmatprep.subr.bf16.mxu0 0
      %314 = vmatpush1.bf16.msra.mxu0 0
      %315 = vmatprep.subr.bf16.mxu0 0
      %316 = vmatpush1.bf16.msra.mxu0 0
      %317 = vmatprep.subr.bf16.mxu0 0
      %318 = vmatpush1.bf16.msra.mxu0 0
      %319 = vmatprep.subr.bf16.mxu0 0
      %320 = vmatpush1.bf16.msra.mxu0 0
      %321 = vmatprep.subr.bf16.mxu0 0
      %322 = vmatpush1.bf16.msra.mxu0 0
      %323 = vmatprep.subr.bf16.mxu0 0
      %324 = vmatpush1.bf16.msra.mxu0 0
      %325 = vmatprep.subr.bf16.mxu0 0
      %326 = vmatpush1.bf16.msra.mxu0 0
      %327 = vmatprep.subr.bf16.mxu0 0
      %328 = vmatpush1.bf16.msra.mxu0 0
      %329 = vmatprep.mubr.bf16.mxu0 0
      %330 = vmatmul.mubr.bf16.gmra.mrb[0].mxu0 %v282
      %v331 = vpop.f32.mrb[0].mxu0
      %v332 = vadd.f32 %v231, %v331
      %v333 = vpop.f32.mrb[0].mxu0
      %v334 = vpop.f32.mrb[0].mxu0
      %v335 = vadd.f32 %v231, %v334
      %v336 = vpop.f32.mrb[0].mxu0
      %337 = vmatprep.mubr.bf16.mxu0 0
      %338 = vmatmul.mubr.bf16.gmra.mrb[0].mxu0 %v285
      %v339 = vpop.f32.mrb[0].mxu0
      %v340 = vadd.f32 %v231, %v339
      %v341 = vpop.f32.mrb[0].mxu0
      %v342 = vpop.f32.mrb[0].mxu0
      %v343 = vadd.f32 %v231, %v342
      %v344 = vpop.f32.mrb[0].mxu0
      %345 = vmatprep.mubr.bf16.mxu0 0
      %346 = vmatmul.mubr.bf16.gmra.mrb[0].mxu0 %v288
      %v347 = vpop.f32.mrb[0].mxu0
      %v348 = vadd.f32 %v231, %v347
      %v349 = vpop.f32.mrb[0].mxu0
      %v350 = vpop.f32.mrb[0].mxu0
      %v351 = vadd.f32 %v231, %v350
      %v352 = vpop.f32.mrb[0].mxu0
      %353 = vmatprep.mubr.bf16.mxu0 0
      %354 = vmatmul.mubr.bf16.gmra.mrb[0].mxu0 %v291
      %v355 = vpop.f32.mrb[0].mxu0
      %v356 = vadd.f32 %v231, %v355
      %v357 = vpop.f32.mrb[0].mxu0
      %v358 = vpop.f32.mrb[0].mxu0
      %v359 = vadd.f32 %v231, %v358
      %v360 = vpop.f32.mrb[0].mxu0
      %361 = vdwg.mxu0
      %v362 = vpack.c.bf16 %v332, %v332
      %v363 = vpack.c.bf16 %v335, %v335
      %v364 = vpack.c.bf16 %v340, %v340
      %v365 = vpack.c.bf16 %v343, %v343
      %v366 = vpack.c.bf16 %v348, %v348
      %v367 = vpack.c.bf16 %v351, %v351
      %v368 = vpack.c.bf16 %v356, %v356
      %v369 = vpack.c.bf16 %v359, %v359
      %vm370 = vcmask 60416
      %371 = vst.msk [vmem:[%s206] sm:$0xf] %vm370, %v362
      %372 = vst.msk [vmem:[%s206 + $0x4] sm:$0xf] %vm370, %v363
      %373 = vst.msk [vmem:[%s206 + $0x8] sm:$0xf] %vm370, %v364
      %374 = vst.msk [vmem:[%s206 + $0xc] sm:$0xf] %vm370, %v365
      %375 = vst.msk [vmem:[%s206 + $0x10] sm:$0xf] %vm370, %v366
      %376 = vst.msk [vmem:[%s206 + $0x14] sm:$0xf] %vm370, %v367
      %377 = vst.msk [vmem:[%s206 + $0x18] sm:$0xf] %vm370, %v368
      %378 = vst.msk [vmem:[%s206 + $0x1c] sm:$0xf] %vm370, %v369
      %s379 = smul.u32 8, %s19
      %p380 = scmp.lt.s32.totalorder %s18, 1
      %s381 = scalar_select %p380, %s18, 1
      %p382 = scmp.lt.s32.totalorder %s379, 7
      %s383 = scalar_select %p382, %s379, 7
      %s384 = smul.addr %s381, 8
      %s385 = sadd.s32 %s383, %s384
      %s386 = smul.addr %s385, 4
      %s387 = scalar_lea.vmem %s3, %s386
      // Predicated region
      $region33: #{dfnet_forward.12} parent=31 // pred_check
        %p388 = pneg %p116
      $region34: #{dfnet_forward.12} parent=31 // pred_check_branch
        %390 = sbr.rel (%p388) target = $region36
      $region35: #{dfnet_forward.12} parent=31 // pred_region
        %s391 = smul.u32 8, %s19
      $region36: #{dfnet_forward.12} parent=31 // pred_fallthru
        _
    $region32: #{dfnet_forward.12} parent=5 // pred_fallthru
      _
    %p392 = scmp.le.s32.totalorder 2, %s9
    // Predicated region
    $region37: #{dfnet_forward.12} parent=5 // pred_check
      %p393 = pneg %p392
    $region38: #{dfnet_forward.12} parent=5 // pred_check_branch
      %395 = sbr.rel (%p393) target = $region40
    $region39: #{dfnet_forward.12} parent=5 // pred_region
      %s396 = ssub.s32 %s9, 2
      // Predicated region
      $region41: #{dfnet_forward.12} parent=39 // pred_check
        %p397 = pneg %p122
      $region42: #{dfnet_forward.12} parent=39 // pred_check_branch
        %399 = sbr.rel (%p397) target = $region44
      $region43: #{dfnet_forward.12} parent=39 // pred_region
        %s400 = smul.u32 8, %s21
        %p401 = scmp.lt.s32.totalorder %s20, 1
        %s402 = scalar_select %p401, %s20, 1
        %p403 = scmp.lt.s32.totalorder %s400, 7
        %s404 = scalar_select %p403, %s400, 7
        %s405 = smul.addr %s402, 8
        %s406 = sadd.s32 %s404, %s405
        %s407 = smul.addr %s406, 4
        %s408 = scalar_lea.vmem %s3, %s407
      $region44: #{dfnet_forward.12} parent=39 // pred_fallthru
        _
    $region40: #{dfnet_forward.12} parent=5 // pred_fallthru
      _
  $region6: #{dfnet_forward.12} parent=0 // loop_footer
    %s13 = sadd.s32 1, %s9
  $region7: #{dfnet_forward.12} parent=0 // loop_footer_branch
    %8 = sbr.rel target = $region3
  $region8: #{dfnet_forward.12} parent=0 // loop_exit
    _

// kernel: dfnet_forward.13
$region0: #{dfnet_forward.13}
  #allocation0 [shape = 'u32[]', space=smem, size = 0x4, offset = 0x4, fixed_abs, tag = 'smem constant byte address 0x4 - core index']
  #allocation1 [shape = 'u32[144,128]{1,0:T(1,128)}', space=vmem, size = 0x12000, scoped, tag = 'internal scratch']
  %s0 = inlined_call_operand.vmem [shape: bf16[2,1,64,72], index: 0, kind: input, shape index: {}]
  %s1 = inlined_call_operand.vmem [shape: bf16[72,4], index: 1, kind: input, shape index: {}]
  %s2 = inlined_call_operand.vmem [shape: f32[1,4], index: 2, kind: input, shape index: {}]
  %s3 = inlined_call_operand.vmem [shape: bf16[2,8,8,4], index: 3, kind: output, shape index: {}]
  %s4 = sld [smem:[#allocation0]]
  $region45: #{dfnet_forward.13} parent=0
    _
  %s6 = ssub.s32 1, %s4
  %s7 = scalar_select 0, %s6, %s4
  loop: start=0, step=1, limit=4
  $region2: #{dfnet_forward.13} parent=0 // loop_pre_header
    _
  $region3: #{dfnet_forward.13} parent=0 // loop_header
    %s9 = sphi 0, %s13
    %p10 = scmp.ge.s32.totalorder %s9, 4
    %s16 = sphi 0, %s28
    %s17 = sphi 0, %s24
    %s18 = sphi 0, %s16
    %s19 = sphi 0, %s17
    %s20 = sphi 0, %s18
    %s21 = sphi 0, %s19
    %s33 = sphi 0, %s35
    %s36 = sphi 0, %s33
    %s37 = sphi 0, %s36
    %s53 = sphi 0, %s37
    %s57 = sphi 0, %s57
    %s59 = sphi 0, %s57
    %s60 = sphi 0, %s59
    %s74 = sphi 0, %s60
    %s78 = sphi 0, %s78
    %s80 = sphi 0, %s78
    %s81 = sphi 0, %s80
    %s95 = sphi 0, %s81
    %s103 = sphi 0, %s105
    %s106 = sphi 0, %s103
    %s107 = sphi 0, %s106
    %s123 = sphi 0, %s107
  $region4: #{dfnet_forward.13} parent=0 // loop_header_branch
    %12 = sbr.rel (%p10) target = $region8
  $region5: #{dfnet_forward.13} parent=0 // loop_body
    %s14 = ssub.s32 %s9, 1
    %s15 = ssub.s32 %s9, 2
    %s22 = sadd.s32 1, %s17
    %p23 = scmp.ge.s32.totalorder %s22, 1
    %s24 = scalar_select %p23, 0, %s22
    %s25 = sadd.s32 1, %s16
    %s26 = scalar_select %p23, %s25, %s16
    %p27 = scmp.ge.s32.totalorder %s26, 2
    %s28 = scalar_select %p27, 0, %s26
    %s29 = ssub.s32 %s16, %s28
    %s30 = ssub.s32 %s17, %s24
    %s31 = sor.u32 %s29, %s30
    %p32 = scmp.eq.s32.totalorder %s31, 0
    %s34 = sadd.s32 %s33, 1
    %s35 = scalar_select %p32, %s33, %s34
    %p38 = pneg %p32
    %p39 = scmp.eq.s32.totalorder %s9, 1
    %p40 = por %p38, %p39
    %p41 = scmp.ne.s32.totalorder %s33, %s36
    %p42 = scmp.eq.s32.totalorder %s9, 0
    %p43 = por %p41, %p42
    %p44 = scmp.ne.s32.totalorder %s33, %s36
    %p45 = scmp.eq.s32.totalorder %s14, 1
    %p46 = por %p44, %p45
    %p47 = scmp.ne.s32.totalorder %s36, %s37
    %p48 = scmp.eq.s32.totalorder %s14, 0
    %p49 = por %p47, %p48
    %p50 = scmp.ne.s32.totalorder %s36, %s37
    %p51 = scmp.eq.s32.totalorder %s15, 1
    %p52 = por %p50, %p51
    %p54 = scmp.ne.s32.totalorder %s37, %s53
    %p55 = scmp.eq.s32.totalorder %s15, 0
    %p56 = por %p54, %p55
    %s58 = sadd.s32 %s57, 1
    %p61 = scmp.eq.s32.totalorder %s9, 1
    %p62 = scmp.ne.s32.totalorder %s57, %s59
    %p63 = scmp.eq.s32.totalorder %s9, 0
    %p64 = por %p62, %p63
    %p65 = scmp.ne.s32.totalorder %s57, %s59
    %p66 = scmp.eq.s32.totalorder %s14, 1
    %p67 = por %p65, %p66
    %p68 = scmp.ne.s32.totalorder %s59, %s60
    %p69 = scmp.eq.s32.totalorder %s14, 0
    %p70 = por %p68, %p69
    %p71 = scmp.ne.s32.totalorder %s59, %s60
    %p72 = scmp.eq.s32.totalorder %s15, 1
    %p73 = por %p71, %p72
    %p75 = scmp.ne.s32.totalorder %s60, %s74
    %p76 = scmp.eq.s32.totalorder %s15, 0
    %p77 = por %p75, %p76
    %s79 = sadd.s32 %s78, 1
    %p82 = scmp.eq.s32.totalorder %s9, 1
    %p83 = scmp.ne.s32.totalorder %s78, %s80
    %p84 = scmp.eq.s32.totalorder %s9, 0
    %p85 = por %p83, %p84
    %p86 = scmp.ne.s32.totalorder %s78, %s80
    %p87 = scmp.eq.s32.totalorder %s14, 1
    %p88 = por %p86, %p87
    %p89 = scmp.ne.s32.totalorder %s80, %s81
    %p90 = scmp.eq.s32.totalorder %s14, 0
    %p91 = por %p89, %p90
    %p92 = scmp.ne.s32.totalorder %s80, %s81
    %p93 = scmp.eq.s32.totalorder %s15, 1
    %p94 = por %p92, %p93
    %p96 = scmp.ne.s32.totalorder %s81, %s95
    %p97 = scmp.eq.s32.totalorder %s15, 0
    %p98 = por %p96, %p97
    %s99 = ssub.s32 %s16, %s28
    %s100 = ssub.s32 %s17, %s24
    %s101 = sor.u32 %s99, %s100
    %p102 = scmp.eq.s32.totalorder %s101, 0
    %s104 = sadd.s32 %s103, 1
    %s105 = scalar_select %p102, %s103, %s104
    %p108 = pneg %p102
    %p109 = scmp.eq.s32.totalorder %s9, 1
    %p110 = por %p108, %p109
    %p111 = scmp.ne.s32.totalorder %s103, %s106
    %p112 = scmp.eq.s32.totalorder %s9, 0
    %p113 = por %p111, %p112
    %p114 = scmp.ne.s32.totalorder %s103, %s106
    %p115 = scmp.eq.s32.totalorder %s14, 1
    %p116 = por %p114, %p115
    %p117 = scmp.ne.s32.totalorder %s106, %s107
    %p118 = scmp.eq.s32.totalorder %s14, 0
    %p119 = por %p117, %p118
    %p120 = scmp.ne.s32.totalorder %s106, %s107
    %p121 = scmp.eq.s32.totalorder %s15, 1
    %p122 = por %p120, %p121
    %p124 = scmp.ne.s32.totalorder %s107, %s123
    %p125 = scmp.eq.s32.totalorder %s15, 0
    %p126 = por %p124, %p125
    %p127 = scmp.le.s32.totalorder 1, %s9
    %p128 = scmp.lt.s32.totalorder %s9, 3
    %p129 = pnand %p127, %p128
    %p130 = pneg %p129
    // Predicated region
    $region9: #{dfnet_forward.13} parent=5 // pred_check
      _
    $region10: #{dfnet_forward.13} parent=5 // pred_check_branch
      %132 = sbr.rel (%p129) target = $region12
    $region11: #{dfnet_forward.13} parent=5 // pred_region
      %s133 = ssub.s32 %s9, 1
      // Predicated region
      $region13: #{dfnet_forward.13} parent=11 // pred_check
        %p134 = pneg %p70
      $region14: #{dfnet_forward.13} parent=11 // pred_check_branch
        %136 = sbr.rel (%p134) target = $region16
      $region15: #{dfnet_forward.13} parent=11 // pred_region
        _
      $region16: #{dfnet_forward.13} parent=11 // pred_fallthru
        _
      // Predicated region
      $region17: #{dfnet_forward.13} parent=11 // pred_check
        %p137 = pneg %p91
      $region18: #{dfnet_forward.13} parent=11 // pred_check_branch
        %139 = sbr.rel (%p137) target = $region20
      $region19: #{dfnet_forward.13} parent=11 // pred_region
        _
      $region20: #{dfnet_forward.13} parent=11 // pred_fallthru
        _
    $region12: #{dfnet_forward.13} parent=5 // pred_fallthru
      _
    %p140 = scmp.lt.s32.totalorder %s9, 2
    // Predicated region
    $region21: #{dfnet_forward.13} parent=5 // pred_check
      %p141 = pneg %p140
    $region22: #{dfnet_forward.13} parent=5 // pred_check_branch
      %143 = sbr.rel (%p141) target = $region24
    $region23: #{dfnet_forward.13} parent=5 // pred_region
      // Predicated region
      $region25: #{dfnet_forward.13} parent=23 // pred_check
        %p144 = pneg %p43
      $region26: #{dfnet_forward.13} parent=23 // pred_check_branch
        %146 = sbr.rel (%p144) target = $region28
      $region27: #{dfnet_forward.13} parent=23 // pred_region
        %p147 = scmp.lt.s32.totalorder %s16, 1
        %s148 = scalar_select %p147, %s16, 1
        %p149 = scmp.lt.s32.totalorder %s17, 0
        %s150 = scalar_select %p149, %s17, 0
        %s151 = smul.addr %s150, 8
        %s152 = smul.addr %s148, 8
        %s153 = sadd.s32 %s151, %s152
        %s154 = smul.addr %s153, 4
        %s155 = scalar_lea.vmem %s0, %s154
      $region28: #{dfnet_forward.13} parent=23 // pred_fallthru
        _
    $region24: #{dfnet_forward.13} parent=5 // pred_fallthru
      _
    %p156 = scmp.le.s32.totalorder 1, %s9
    %p157 = scmp.lt.s32.totalorder %s9, 3
    %p158 = pnand %p156, %p157
    %p159 = pneg %p158
    // Predicated region
    $region29: #{dfnet_forward.13} parent=5 // pred_check
      _
    $region30: #{dfnet_forward.13} parent=5 // pred_check_branch
      %161 = sbr.rel (%p158) target = $region32
    $region31: #{dfnet_forward.13} parent=5 // pred_region
      %s162 = ssub.s32 %s9, 1
      %p163 = scmp.lt.s32.totalorder %s18, 1
      %s164 = scalar_select %p163, %s18, 1
      %p165 = scmp.lt.s32.totalorder %s19, 0
      %s166 = scalar_select %p165, %s19, 0
      %s167 = smul.addr %s166, 8
      %s168 = smul.addr %s164, 8
      %s169 = sadd.s32 %s167, %s168
      %s170 = smul.addr %s169, 4
      %s171 = scalar_lea.vmem %s0, %s170
      %p172 = pneg %p49
      %p173 = pneg %p46
      %p174 = pneg %p70
      %p175 = pneg %p67
      %p176 = pneg %p91
      %p177 = pneg %p88
      %p178 = pneg %p119
      %p179 = pneg %p116
      %s180 = smul.u32 8, %s19
      %p181 = scmp.lt.s32.totalorder %s18, 1
      %s182 = scalar_select %p181, %s18, 1
      %p183 = scmp.lt.s32.totalorder %s180, 7
      %s184 = scalar_select %p183, %s180, 7
      %s185 = smul.addr %s182, 8
      %s186 = sadd.s32 %s184, %s185
      %s187 = smul.addr %s186, 4
      %s188 = scalar_lea.vmem %s3, %s187
      %p189 = scmp.lt.s32.totalorder %s18, 1
      %s190 = scalar_select %p189, %s18, 1
      %p191 = scmp.lt.s32.totalorder %s19, 0
      %s192 = scalar_select %p191, %s19, 0
      %s193 = smul.addr %s192, 8
      %s194 = smul.addr %s190, 8
      %s195 = sadd.s32 %s193, %s194
      %s196 = smul.addr %s195, 4
      %s197 = scalar_lea.vmem %s0, %s196
      %s198 = smul.u32 8, %s19
      %p199 = scmp.lt.s32.totalorder %s18, 1
      %s200 = scalar_select %p199, %s18, 1
      %p201 = scmp.lt.s32.totalorder %s198, 7
      %s202 = scalar_select %p201, %s198, 7
      %s203 = smul.addr %s200, 8
      %s204 = sadd.s32 %s202, %s203
      %s205 = smul.addr %s204, 4
      %s206 = scalar_lea.vmem %s3, %s205
      %s207 = smul.u32 8, %s19
      %v209 = vld [vmem:[%s197] sm:$0xf]
      %v210 = vld [vmem:[%s197 + $0x4] sm:$0xf]
      %v211 = vld [vmem:[%s197 + $0x8] sm:$0xf]
      %v212 = vld [vmem:[%s197 + $0xc] sm:$0xf]
      %v213 = vld [vmem:[%s197 + $0x10] sm:$0xf]
      %v214 = vld [vmem:[%s197 + $0x14] sm:$0xf]
      %v215 = vld [vmem:[%s197 + $0x18] sm:$0xf]
      %v216 = vld [vmem:[%s197 + $0x1c] sm:$0xf]
      %v217 = vld [vmem:[%s1] sm:$0xf]
      %v218 = vld [vmem:[%s1 + $0x4] sm:$0xf]
      %v219 = vld [vmem:[%s1 + $0x8] sm:$0xf]
      %v220 = vld [vmem:[%s1 + $0xc] sm:$0xf]
      %v221 = vld [vmem:[%s1 + $0x10] sm:$0xf]
      %v222 = vld [vmem:[%s1 + $0x14] sm:$0xf]
      %v223 = vld [vmem:[%s1 + $0x18] sm:$0xf]
      %v224 = vld [vmem:[%s1 + $0x1c] sm:$0xf]
      %v225 = vld [vmem:[%s1 + $0x20] sm:$0xf]
      %v226 = vld [vmem:[%s2] sm:$0x1]
      %v228 = vlaneseq
      %v229 = vshrl.u32 %v228, 7
      %v230 = vsub.s32 0, %v229
      %v231 = vrot.slane %v226, %v230
      %v241 = vunpack.c.l.b16 %v209
      %v242 = vunpack.c.l.b16 %v210
      %v243 = vunpack.c.l.b16 %v211
      %v244 = vunpack.c.l.b16 %v212
      %v245 = vunpack.c.l.b16 %v213
      %v246 = vunpack.c.l.b16 %v214
      %v247 = vunpack.c.l.b16 %v215
      %v248 = vunpack.c.l.b16 %v216
      %v249 = vpack.c.b16 %v242, %v241
      %v250 = vpack.c.b16 %v244, %v243
      %v251 = vpack.c.b16 %v246, %v245
      %v252 = vpack.c.b16 %v248, %v247
      %v262 = vunpack.c.l.b16 %v217
      %v263 = vunpack.c.l.b16 %v218
      %v264 = vunpack.c.l.b16 %v219
      %v265 = vunpack.c.l.b16 %v220
      %v266 = vunpack.c.l.b16 %v221
      %v267 = vunpack.c.l.b16 %v222
      %v268 = vunpack.c.l.b16 %v223
      %v269 = vunpack.c.l.b16 %v224
      %v270 = vunpack.c.l.b16 %v225
      %v271 = vpack.c.b16 %v263, %v262
      %v272 = vpack.c.b16 %v265, %v264
      %v273 = vpack.c.b16 %v267, %v266
      %v274 = vpack.c.b16 %v269, %v268
      %v275 = vpack.c.b16 %v270, %v270
      %vm280 = vcmask 588800
      %v282 = vsel %vm280, %v249, 0
      %v285 = vsel %vm280, %v250, 0
      %v288 = vsel %vm280, %v251, 0
      %v291 = vsel %vm280, %v252, 0
      %vm293 = vcmask 1043456
      %v295 = vsel %vm293, %v275, 0
      %297 = vmatprep.subr.bf16.mxu0 0
      %298 = vmatpush1.bf16.msra.mxu0 %v271
      %299 = vmatprep.subr.bf16.mxu0 0
      %300 = vmatpush1.bf16.msra.mxu0 %v272
      %301 = vmatprep.subr.bf16.mxu0 0
      %302 = vmatpush1.bf16.msra.mxu0 %v273
      %303 = vmatprep.subr.bf16.mxu0 0
      %304 = vmatpush1.bf16.msra.mxu0 %v274
      %305 = vmatprep.subr.bf16.mxu0 0
      %306 = vmatpush1.bf16.msra.mxu0 %v295
      %307 = vmatprep.subr.bf16.mxu0 0
      %308 = vmatpush1.bf16.msra.mxu0 0
      %309 = vmatprep.subr.bf16.mxu0 0
      %310 = vmatpush1.bf16.msra.mxu0 0
      %311 = vmatprep.subr.bf16.mxu0 0
      %312 = vmatpush1.bf16.msra.mxu0 0
      %313 = vmatprep.subr.bf16.mxu0 0
      %314 = vmatpush1.bf16.msra.mxu0 0
      %315 = vmatprep.subr.bf16.mxu0 0
      %316 = vmatpush1.bf16.msra.mxu0 0
      %317 = vmatprep.subr.bf16.mxu0 0
      %318 = vmatpush1.bf16.msra.mxu0 0
      %319 = vmatprep.subr.bf16.mxu0 0
      %320 = vmatpush1.bf16.msra.mxu0 0
      %321 = vmatprep.subr.bf16.mxu0 0
      %322 = vmatpush1.bf16.msra.mxu0 0
      %323 = vmatprep.subr.bf16.mxu0 0
      %324 = vmatpush1.bf16.msra.mxu0 0
      %325 = vmatprep.subr.bf16.mxu0 0
      %326 = vmatpush1.bf16.msra.mxu0 0
      %327 = vmatprep.subr.bf16.mxu0 0
      %328 = vmatpush1.bf16.msra.mxu0 0
      %329 = vmatprep.mubr.bf16.mxu0 0
      %330 = vmatmul.mubr.bf16.gmra.mrb[0].mxu0 %v282
      %v331 = vpop.f32.mrb[0].mxu0
      %v332 = vadd.f32 %v231, %v331
      %v333 = vpop.f32.mrb[0].mxu0
      %v334 = vpop.f32.mrb[0].mxu0
      %v335 = vadd.f32 %v231, %v334
      %v336 = vpop.f32.mrb[0].mxu0
      %337 = vmatprep.mubr.bf16.mxu0 0
      %338 = vmatmul.mubr.bf16.gmra.mrb[0].mxu0 %v285
      %v339 = vpop.f32.mrb[0].mxu0
      %v340 = vadd.f32 %v231, %v339
      %v341 = vpop.f32.mrb[0].mxu0
      %v342 = vpop.f32.mrb[0].mxu0
      %v343 = vadd.f32 %v231, %v342
      %v344 = vpop.f32.mrb[0].mxu0
      %345 = vmatprep.mubr.bf16.mxu0 0
      %346 = vmatmul.mubr.bf16.gmra.mrb[0].mxu0 %v288
      %v347 = vpop.f32.mrb[0].mxu0
      %v348 = vadd.f32 %v231, %v347
      %v349 = vpop.f32.mrb[0].mxu0
      %v350 = vpop.f32.mrb[0].mxu0
      %v351 = vadd.f32 %v231, %v350
      %v352 = vpop.f32.mrb[0].mxu0
      %353 = vmatprep.mubr.bf16.mxu0 0
      %354 = vmatmul.mubr.bf16.gmra.mrb[0].mxu0 %v291
      %v355 = vpop.f32.mrb[0].mxu0
      %v356 = vadd.f32 %v231, %v355
      %v357 = vpop.f32.mrb[0].mxu0
      %v358 = vpop.f32.mrb[0].mxu0
      %v359 = vadd.f32 %v231, %v358
      %v360 = vpop.f32.mrb[0].mxu0
      %361 = vdwg.mxu0
      %v362 = vmax.f32 %v332, 0.0
      %v363 = vmax.f32 %v335, 0.0
      %v364 = vmax.f32 %v340, 0.0
      %v365 = vmax.f32 %v343, 0.0
      %v366 = vmax.f32 %v348, 0.0
      %v367 = vmax.f32 %v351, 0.0
      %v368 = vmax.f32 %v356, 0.0
      %v369 = vmax.f32 %v359, 0.0
      %v370 = vpack.c.bf16 %v362, %v362
      %v371 = vpack.c.bf16 %v363, %v363
      %v372 = vpack.c.bf16 %v364, %v364
      %v373 = vpack.c.bf16 %v365, %v365
      %v374 = vpack.c.bf16 %v366, %v366
      %v375 = vpack.c.bf16 %v367, %v367
      %v376 = vpack.c.bf16 %v368, %v368
      %v377 = vpack.c.bf16 %v369, %v369
      %vm378 = vcmask 27648
      %379 = vst.msk [vmem:[%s206] sm:$0xf] %vm378, %v370
      %380 = vst.msk [vmem:[%s206 + $0x4] sm:$0xf] %vm378, %v371
      %381 = vst.msk [vmem:[%s206 + $0x8] sm:$0xf] %vm378, %v372
      %382 = vst.msk [vmem:[%s206 + $0xc] sm:$0xf] %vm378, %v373
      %383 = vst.msk [vmem:[%s206 + $0x10] sm:$0xf] %vm378, %v374
      %384 = vst.msk [vmem:[%s206 + $0x14] sm:$0xf] %vm378, %v375
      %385 = vst.msk [vmem:[%s206 + $0x18] sm:$0xf] %vm378, %v376
      %386 = vst.msk [vmem:[%s206 + $0x1c] sm:$0xf] %vm378, %v377
      %s387 = smul.u32 8, %s19
      %p388 = scmp.lt.s32.totalorder %s18, 1
      %s389 = scalar_select %p388, %s18, 1
      %p390 = scmp.lt.s32.totalorder %s387, 7
      %s391 = scalar_select %p390, %s387, 7
      %s392 = smul.addr %s389, 8
      %s393 = sadd.s32 %s391, %s392
      %s394 = smul.addr %s393, 4
      %s395 = scalar_lea.vmem %s3, %s394
      // Predicated region
      $region33: #{dfnet_forward.13} parent=31 // pred_check
        %p396 = pneg %p116
      $region34: #{dfnet_forward.13} parent=31 // pred_check_branch
        %398 = sbr.rel (%p396) target = $region36
      $region35: #{dfnet_forward.13} parent=31 // pred_region
        %s399 = smul.u32 8, %s19
      $region36: #{dfnet_forward.13} parent=31 // pred_fallthru
        _
    $region32: #{dfnet_forward.13} parent=5 // pred_fallthru
      _
    %p400 = scmp.le.s32.totalorder 2, %s9
    // Predicated region
    $region37: #{dfnet_forward.13} parent=5 // pred_check
      %p401 = pneg %p400
    $region38: #{dfnet_forward.13} parent=5 // pred_check_branch
      %403 = sbr.rel (%p401) target = $region40
    $region39: #{dfnet_forward.13} parent=5 // pred_region
      %s404 = ssub.s32 %s9, 2
      // Predicated region
      $region41: #{dfnet_forward.13} parent=39 // pred_check
        %p405 = pneg %p122
      $region42: #{dfnet_forward.13} parent=39 // pred_check_branch
        %407 = sbr.rel (%p405) target = $region44
      $region43: #{dfnet_forward.13} parent=39 // pred_region
        %s408 = smul.u32 8, %s21
        %p409 = scmp.lt.s32.totalorder %s20, 1
        %s410 = scalar_select %p409, %s20, 1
        %p411 = scmp.lt.s32.totalorder %s408, 7
        %s412 = scalar_select %p411, %s408, 7
        %s413 = smul.addr %s410, 8
        %s414 = sadd.s32 %s412, %s413
        %s415 = smul.addr %s414, 4
        %s416 = scalar_lea.vmem %s3, %s415
      $region44: #{dfnet_forward.13} parent=39 // pred_fallthru
        _
    $region40: #{dfnet_forward.13} parent=5 // pred_fallthru
      _
  $region6: #{dfnet_forward.13} parent=0 // loop_footer
    %s13 = sadd.s32 1, %s9
  $region7: #{dfnet_forward.13} parent=0 // loop_footer_branch
    %8 = sbr.rel target = $region3
  $region8: #{dfnet_forward.13} parent=0 // loop_exit
    _

// kernel: dfnet_forward.11
$region0: #{dfnet_forward.11}
  #allocation0 [shape = 'u32[]', space=smem, size = 0x4, offset = 0x4, fixed_abs, tag = 'smem constant byte address 0x4 - core index']
  #allocation1 [shape = 'u32[144,128]{1,0:T(1,128)}', space=vmem, size = 0x12000, scoped, tag = 'internal scratch']
  %s0 = inlined_call_operand.vmem [shape: bf16[2,1,110,408], index: 0, kind: input, shape index: {}]
  %s1 = inlined_call_operand.vmem [shape: bf16[9,408,8], index: 1, kind: input, shape index: {}]
  %s2 = inlined_call_operand.vmem [shape: f32[1,8], index: 2, kind: input, shape index: {}]
  %s3 = inlined_call_operand.vmem [shape: bf16[2,8,8,8], index: 3, kind: output, shape index: {}]
  %s4 = sld [smem:[#allocation0]]
  $region45: #{dfnet_forward.11} parent=0
    _
  %s6 = ssub.s32 1, %s4
  %s7 = scalar_select 0, %s6, %s4
  loop: start=0, step=1, limit=4
  $region2: #{dfnet_forward.11} parent=0 // loop_pre_header
    _
  $region3: #{dfnet_forward.11} parent=0 // loop_header
    %s9 = sphi 0, %s13
    %p10 = scmp.ge.s32.totalorder %s9, 4
    %s16 = sphi 0, %s28
    %s17 = sphi 0, %s24
    %s18 = sphi 0, %s16
    %s19 = sphi 0, %s17
    %s20 = sphi 0, %s18
    %s21 = sphi 0, %s19
    %s33 = sphi 0, %s35
    %s36 = sphi 0, %s33
    %s37 = sphi 0, %s36
    %s53 = sphi 0, %s37
    %s57 = sphi 0, %s57
    %s59 = sphi 0, %s57
    %s60 = sphi 0, %s59
    %s74 = sphi 0, %s60
    %s78 = sphi 0, %s78
    %s80 = sphi 0, %s78
    %s81 = sphi 0, %s80
    %s95 = sphi 0, %s81
    %s103 = sphi 0, %s105
    %s106 = sphi 0, %s103
    %s107 = sphi 0, %s106
    %s123 = sphi 0, %s107
  $region4: #{dfnet_forward.11} parent=0 // loop_header_branch
    %12 = sbr.rel (%p10) target = $region8
  $region5: #{dfnet_forward.11} parent=0 // loop_body
    %s14 = ssub.s32 %s9, 1
    %s15 = ssub.s32 %s9, 2
    %s22 = sadd.s32 1, %s17
    %p23 = scmp.ge.s32.totalorder %s22, 1
    %s24 = scalar_select %p23, 0, %s22
    %s25 = sadd.s32 1, %s16
    %s26 = scalar_select %p23, %s25, %s16
    %p27 = scmp.ge.s32.totalorder %s26, 2
    %s28 = scalar_select %p27, 0, %s26
    %s29 = ssub.s32 %s16, %s28
    %s30 = ssub.s32 %s17, %s24
    %s31 = sor.u32 %s29, %s30
    %p32 = scmp.eq.s32.totalorder %s31, 0
    %s34 = sadd.s32 %s33, 1
    %s35 = scalar_select %p32, %s33, %s34
    %p38 = pneg %p32
    %p39 = scmp.eq.s32.totalorder %s9, 1
    %p40 = por %p38, %p39
    %p41 = scmp.ne.s32.totalorder %s33, %s36
    %p42 = scmp.eq.s32.totalorder %s9, 0
    %p43 = por %p41, %p42
    %p44 = scmp.ne.s32.totalorder %s33, %s36
    %p45 = scmp.eq.s32.totalorder %s14, 1
    %p46 = por %p44, %p45
    %p47 = scmp.ne.s32.totalorder %s36, %s37
    %p48 = scmp.eq.s32.totalorder %s14, 0
    %p49 = por %p47, %p48
    %p50 = scmp.ne.s32.totalorder %s36, %s37
    %p51 = scmp.eq.s32.totalorder %s15, 1
    %p52 = por %p50, %p51
    %p54 = scmp.ne.s32.totalorder %s37, %s53
    %p55 = scmp.eq.s32.totalorder %s15, 0
    %p56 = por %p54, %p55
    %s58 = sadd.s32 %s57, 1
    %p61 = scmp.eq.s32.totalorder %s9, 1
    %p62 = scmp.ne.s32.totalorder %s57, %s59
    %p63 = scmp.eq.s32.totalorder %s9, 0
    %p64 = por %p62, %p63
    %p65 = scmp.ne.s32.totalorder %s57, %s59
    %p66 = scmp.eq.s32.totalorder %s14, 1
    %p67 = por %p65, %p66
    %p68 = scmp.ne.s32.totalorder %s59, %s60
    %p69 = scmp.eq.s32.totalorder %s14, 0
    %p70 = por %p68, %p69
    %p71 = scmp.ne.s32.totalorder %s59, %s60
    %p72 = scmp.eq.s32.totalorder %s15, 1
    %p73 = por %p71, %p72
    %p75 = scmp.ne.s32.totalorder %s60, %s74
    %p76 = scmp.eq.s32.totalorder %s15, 0
    %p77 = por %p75, %p76
    %s79 = sadd.s32 %s78, 1
    %p82 = scmp.eq.s32.totalorder %s9, 1
    %p83 = scmp.ne.s32.totalorder %s78, %s80
    %p84 = scmp.eq.s32.totalorder %s9, 0
    %p85 = por %p83, %p84
    %p86 = scmp.ne.s32.totalorder %s78, %s80
    %p87 = scmp.eq.s32.totalorder %s14, 1
    %p88 = por %p86, %p87
    %p89 = scmp.ne.s32.totalorder %s80, %s81
    %p90 = scmp.eq.s32.totalorder %s14, 0
    %p91 = por %p89, %p90
    %p92 = scmp.ne.s32.totalorder %s80, %s81
    %p93 = scmp.eq.s32.totalorder %s15, 1
    %p94 = por %p92, %p93
    %p96 = scmp.ne.s32.totalorder %s81, %s95
    %p97 = scmp.eq.s32.totalorder %s15, 0
    %p98 = por %p96, %p97
    %s99 = ssub.s32 %s16, %s28
    %s100 = ssub.s32 %s17, %s24
    %s101 = sor.u32 %s99, %s100
    %p102 = scmp.eq.s32.totalorder %s101, 0
    %s104 = sadd.s32 %s103, 1
    %s105 = scalar_select %p102, %s103, %s104
    %p108 = pneg %p102
    %p109 = scmp.eq.s32.totalorder %s9, 1
    %p110 = por %p108, %p109
    %p111 = scmp.ne.s32.totalorder %s103, %s106
    %p112 = scmp.eq.s32.totalorder %s9, 0
    %p113 = por %p111, %p112
    %p114 = scmp.ne.s32.totalorder %s103, %s106
    %p115 = scmp.eq.s32.totalorder %s14, 1
    %p116 = por %p114, %p115
    %p117 = scmp.ne.s32.totalorder %s106, %s107
    %p118 = scmp.eq.s32.totalorder %s14, 0
    %p119 = por %p117, %p118
    %p120 = scmp.ne.s32.totalorder %s106, %s107
    %p121 = scmp.eq.s32.totalorder %s15, 1
    %p122 = por %p120, %p121
    %p124 = scmp.ne.s32.totalorder %s107, %s123
    %p125 = scmp.eq.s32.totalorder %s15, 0
    %p126 = por %p124, %p125
    %p127 = scmp.le.s32.totalorder 1, %s9
    %p128 = scmp.lt.s32.totalorder %s9, 3
    %p129 = pnand %p127, %p128
    %p130 = pneg %p129
    // Predicated region
    $region9: #{dfnet_forward.11} parent=5 // pred_check
      _
    $region10: #{dfnet_forward.11} parent=5 // pred_check_branch
      %132 = sbr.rel (%p129) target = $region12
    $region11: #{dfnet_forward.11} parent=5 // pred_region
      %s133 = ssub.s32 %s9, 1
      // Predicated region
      $region13: #{dfnet_forward.11} parent=11 // pred_check
        %p134 = pneg %p70
      $region14: #{dfnet_forward.11} parent=11 // pred_check_branch
        %136 = sbr.rel (%p134) target = $region16
      $region15: #{dfnet_forward.11} parent=11 // pred_region
        _
      $region16: #{dfnet_forward.11} parent=11 // pred_fallthru
        _
      // Predicated region
      $region17: #{dfnet_forward.11} parent=11 // pred_check
        %p137 = pneg %p91
      $region18: #{dfnet_forward.11} parent=11 // pred_check_branch
        %139 = sbr.rel (%p137) target = $region20
      $region19: #{dfnet_forward.11} parent=11 // pred_region
        _
      $region20: #{dfnet_forward.11} parent=11 // pred_fallthru
        _
    $region12: #{dfnet_forward.11} parent=5 // pred_fallthru
      _
    %p140 = scmp.lt.s32.totalorder %s9, 2
    // Predicated region
    $region21: #{dfnet_forward.11} parent=5 // pred_check
      %p141 = pneg %p140
    $region22: #{dfnet_forward.11} parent=5 // pred_check_branch
      %143 = sbr.rel (%p141) target = $region24
    $region23: #{dfnet_forward.11} parent=5 // pred_region
      // Predicated region
      $region25: #{dfnet_forward.11} parent=23 // pred_check
        %p144 = pneg %p43
      $region26: #{dfnet_forward.11} parent=23 // pred_check_branch
        %146 = sbr.rel (%p144) target = $region28
      $region27: #{dfnet_forward.11} parent=23 // pred_region
        %p147 = scmp.lt.s32.totalorder %s16, 1
        %s148 = scalar_select %p147, %s16, 1
        %p149 = scmp.lt.s32.totalorder %s17, 0
        %s150 = scalar_select %p149, %s17, 0
        %s151 = smul.addr %s150, 56
        %s152 = smul.addr %s148, 56
        %s153 = sadd.s32 %s151, %s152
        %s154 = smul.addr %s153, 4
        %s155 = scalar_lea.vmem %s0, %s154
      $region28: #{dfnet_forward.11} parent=23 // pred_fallthru
        _
    $region24: #{dfnet_forward.11} parent=5 // pred_fallthru
      _
    %p156 = scmp.le.s32.totalorder 1, %s9
    %p157 = scmp.lt.s32.totalorder %s9, 3
    %p158 = pnand %p156, %p157
    %p159 = pneg %p158
    // Predicated region
    $region29: #{dfnet_forward.11} parent=5 // pred_check
      _
    $region30: #{dfnet_forward.11} parent=5 // pred_check_branch
      %161 = sbr.rel (%p158) target = $region32
    $region31: #{dfnet_forward.11} parent=5 // pred_region
      %s162 = ssub.s32 %s9, 1
      %p163 = scmp.lt.s32.totalorder %s18, 1
      %s164 = scalar_select %p163, %s18, 1
      %p165 = scmp.lt.s32.totalorder %s19, 0
      %s166 = scalar_select %p165, %s19, 0
      %s167 = smul.addr %s166, 56
      %s168 = smul.addr %s164, 56
      %s169 = sadd.s32 %s167, %s168
      %s170 = smul.addr %s169, 4
      %s171 = scalar_lea.vmem %s0, %s170
      %p172 = pneg %p49
      %p173 = pneg %p46
      %p174 = pneg %p70
      %p175 = pneg %p67
      %p176 = pneg %p91
      %p177 = pneg %p88
      %p178 = pneg %p119
      %p179 = pneg %p116
      %s180 = smul.u32 8, %s19
      %p181 = scmp.lt.s32.totalorder %s18, 1
      %s182 = scalar_select %p181, %s18, 1
      %p183 = scmp.lt.s32.totalorder %s180, 7
      %s184 = scalar_select %p183, %s180, 7
      %s185 = smul.addr %s182, 8
      %s186 = sadd.s32 %s184, %s185
      %s187 = smul.addr %s186, 4
      %s188 = scalar_lea.vmem %s3, %s187
      %p189 = scmp.lt.s32.totalorder %s18, 1
      %s190 = scalar_select %p189, %s18, 1
      %p191 = scmp.lt.s32.totalorder %s19, 0
      %s192 = scalar_select %p191, %s19, 0
      %s193 = smul.addr %s192, 56
      %s194 = smul.addr %s190, 56
      %s195 = sadd.s32 %s193, %s194
      %s196 = smul.addr %s195, 4
      %s197 = scalar_lea.vmem %s0, %s196
      %s198 = smul.u32 8, %s19
      %p199 = scmp.lt.s32.totalorder %s18, 1
      %s200 = scalar_select %p199, %s18, 1
      %p201 = scmp.lt.s32.totalorder %s198, 7
      %s202 = scalar_select %p201, %s198, 7
      %s203 = smul.addr %s200, 8
      %s204 = sadd.s32 %s202, %s203
      %s205 = smul.addr %s204, 4
      %s206 = scalar_lea.vmem %s3, %s205
      %s207 = smul.u32 8, %s19
      %v209 = vld [vmem:[%s197] sm:$0xff]
      %v210 = vld [vmem:[%s197 + $0x8] sm:$0xff]
      %v211 = vld [vmem:[%s197 + $0x10] sm:$0xff]
      %v212 = vld [vmem:[%s197 + $0x18] sm:$0xff]
      %v213 = vld [vmem:[%s197 + $0x20] sm:$0xff]
      %v214 = vld [vmem:[%s197 + $0x28] sm:$0xff]
      %v215 = vld [vmem:[%s197 + $0x30] sm:$0xff]
      %v216 = vld [vmem:[%s197 + $0x38] sm:$0xff]
      %v217 = vld [vmem:[%s197 + $0x40] sm:$0xff]
      %v218 = vld [vmem:[%s197 + $0x48] sm:$0xff]
      %v219 = vld [vmem:[%s197 + $0x50] sm:$0xff]
      %v220 = vld [vmem:[%s197 + $0x58] sm:$0xff]
      %v221 = vld [vmem:[%s197 + $0x60] sm:$0xff]
      %v222 = vld [vmem:[%s197 + $0x68] sm:$0xff]
      %v223 = vld [vmem:[%s197 + $0x70] sm:$0xff]
      %v224 = vld [vmem:[%s197 + $0x78] sm:$0xff]
      %v225 = vld [vmem:[%s197 + $0x80] sm:$0xff]
      %v226 = vld [vmem:[%s197 + $0x88] sm:$0xff]
      %v227 = vld [vmem:[%s197 + $0x90] sm:$0xff]
      %v228 = vld [vmem:[%s197 + $0x98] sm:$0xff]
      %v229 = vld [vmem:[%s197 + $0xa0] sm:$0xff]
      %v230 = vld [vmem:[%s197 + $0xa8] sm:$0xff]
      %v231 = vld [vmem:[%s197 + $0xb0] sm:$0xff]
      %v232 = vld [vmem:[%s197 + $0xb8] sm:$0xff]
      %v233 = vld [vmem:[%s197 + $0xc0] sm:$0xff]
      %v234 = vld [vmem:[%s197 + $0xc8] sm:$0xff]
      %v235 = vld [vmem:[%s1] sm:$0xf]
      %v236 = vld [vmem:[%s1 + $0x4] sm:$0xf]
      %v237 = vld [vmem:[%s1 + $0x8] sm:$0xf]
      %v238 = vld [vmem:[%s1 + $0xc] sm:$0xf]
      %v239 = vld [vmem:[%s1 + $0x10] sm:$0xf]
      %v240 = vld [vmem:[%s1 + $0x14] sm:$0xf]
      %v241 = vld [vmem:[%s1 + $0x18] sm:$0xf]
      %v242 = vld [vmem:[%s1 + $0x1c] sm:$0xf]
      %v243 = vld [vmem:[%s1 + $0x20] sm:$0xf]
      %v244 = vld [vmem:[%s1 + $0x24] sm:$0xf]
      %v245 = vld [vmem:[%s1 + $0x28] sm:$0xf]
      %v246 = vld [vmem:[%s1 + $0x2c] sm:$0xf]
      %v247 = vld [vmem:[%s1 + $0x30] sm:$0xf]
      %v248 = vld [vmem:[%s1 + $0x34] sm:$0xf]
      %v249 = vld [vmem:[%s1 + $0x38] sm:$0xf]
      %v250 = vld [vmem:[%s1 + $0x3c] sm:$0xf]
      %v251 = vld [vmem:[%s1 + $0x40] sm:$0xf]
      %v252 = vld [vmem:[%s1 + $0x44] sm:$0xf]
      %v253 = vld [vmem:[%s1 + $0x48] sm:$0xf]
      %v254 = vld [vmem:[%s1 + $0x4c] sm:$0xf]
      %v255 = vld [vmem:[%s1 + $0x50] sm:$0xf]
      %v256 = vld [vmem:[%s1 + $0x54] sm:$0xf]
      %v257 = vld [vmem:[%s1 + $0x58] sm:$0xf]
      %v258 = vld [vmem:[%s1 + $0x5c] sm:$0xf]
      %v259 = vld [vmem:[%s1 + $0x60] sm:$0xf]
      %v260 = vld [vmem:[%s1 + $0x64] sm:$0xf]
      %v261 = vld [vmem:[%s1 + $0x68] sm:$0xf]
      %v262 = vld [vmem:[%s1 + $0x6c] sm:$0xf]
      %v263 = vld [vmem:[%s1 + $0x70] sm:$0xf]
      %v264 = vld [vmem:[%s1 + $0x74] sm:$0xf]
      %v265 = vld [vmem:[%s1 + $0x78] sm:$0xf]
      %v266 = vld [vmem:[%s1 + $0x7c] sm:$0xf]
      %v267 = vld [vmem:[%s1 + $0x80] sm:$0xf]
      %v268 = vld [vmem:[%s1 + $0x84] sm:$0xf]
      %v269 = vld [vmem:[%s1 + $0x88] sm:$0xf]
      %v270 = vld [vmem:[%s1 + $0x8c] sm:$0xf]
      %v271 = vld [vmem:[%s1 + $0x90] sm:$0xf]
      %v272 = vld [vmem:[%s1 + $0x94] sm:$0xf]
      %v273 = vld [vmem:[%s1 + $0x98] sm:$0xf]
      %v274 = vld [vmem:[%s1 + $0x9c] sm:$0xf]
      %v275 = vld [vmem:[%s1 + $0xa0] sm:$0xf]
      %v276 = vld [vmem:[%s1 + $0xa4] sm:$0xf]
      %v277 = vld [vmem:[%s1 + $0xa8] sm:$0xf]
      %v278 = vld [vmem:[%s1 + $0xac] sm:$0xf]
      %v279 = vld [vmem:[%s1 + $0xb0] sm:$0xf]
      %v280 = vld [vmem:[%s1 + $0xb4] sm:$0xf]
      %v281 = vld [vmem:[%s1 + $0xb8] sm:$0xf]
      %v282 = vld [vmem:[%s1 + $0xbc] sm:$0xf]
      %v283 = vld [vmem:[%s1 + $0xc0] sm:$0xf]
      %v284 = vld [vmem:[%s1 + $0xc4] sm:$0xf]
      %v285 = vld [vmem:[%s1 + $0xc8] sm:$0xf]
      %s286 = scalar_lea.vmem %s1, 204
      %v287 = vld [vmem:[%s286] sm:$0xf]
      %v288 = vld [vmem:[%s286 + $0x4] sm:$0xf]
      %v289 = vld [vmem:[%s286 + $0x8] sm:$0xf]
      %v290 = vld [vmem:[%s286 + $0xc] sm:$0xf]
      %v291 = vld [vmem:[%s286 + $0x10] sm:$0xf]
      %v292 = vld [vmem:[%s286 + $0x14] sm:$0xf]
      %v293 = vld [vmem:[%s286 + $0x18] sm:$0xf]
      %v294 = vld [vmem:[%s286 + $0x1c] sm:$0xf]
      %v295 = vld [vmem:[%s286 + $0x20] sm:$0xf]
      %v296 = vld [vmem:[%s286 + $0x24] sm:$0xf]
      %v297 = vld [vmem:[%s286 + $0x28] sm:$0xf]
      %v298 = vld [vmem:[%s286 + $0x2c] sm:$0xf]
      %v299 = vld [vmem:[%s286 + $0x30] sm:$0xf]
      %v300 = vld [vmem:[%s286 + $0x34] sm:$0xf]
      %v301 = vld [vmem:[%s286 + $0x38] sm:$0xf]
      %v302 = vld [vmem:[%s286 + $0x3c] sm:$0xf]
      %v303 = vld [vmem:[%s286 + $0x40] sm:$0xf]
      %v304 = vld [vmem:[%s286 + $0x44] sm:$0xf]
      %v305 = vld [vmem:[%s286 + $0x48] sm:$0xf]
      %v306 = vld [vmem:[%s286 + $0x4c] sm:$0xf]
      %v307 = vld [vmem:[%s286 + $0x50] sm:$0xf]
      %v308 = vld [vmem:[%s286 + $0x54] sm:$0xf]
      %v309 = vld [vmem:[%s286 + $0x58] sm:$0xf]
      %v310 = vld [vmem:[%s286 + $0x5c] sm:$0xf]
      %v311 = vld [vmem:[%s286 + $0x60] sm:$0xf]
      %v312 = vld [vmem:[%s286 + $0x64] sm:$0xf]
      %v313 = vld [vmem:[%s286 + $0x68] sm:$0xf]
      %v314 = vld [vmem:[%s286 + $0x6c] sm:$0xf]
      %v315 = vld [vmem:[%s286 + $0x70] sm:$0xf]
      %v316 = vld [vmem:[%s286 + $0x74] sm:$0xf]
      %v317 = vld [vmem:[%s286 + $0x78] sm:$0xf]
      %v318 = vld [vmem:[%s286 + $0x7c] sm:$0xf]
      %v319 = vld [vmem:[%s286 + $0x80] sm:$0xf]
      %v320 = vld [vmem:[%s286 + $0x84] sm:$0xf]
      %v321 = vld [vmem:[%s286 + $0x88] sm:$0xf]
      %v322 = vld [vmem:[%s286 + $0x8c] sm:$0xf]
      %v323 = vld [vmem:[%s286 + $0x90] sm:$0xf]
      %v324 = vld [vmem:[%s286 + $0x94] sm:$0xf]
      %v325 = vld [vmem:[%s286 + $0x98] sm:$0xf]
      %v326 = vld [vmem:[%s286 + $0x9c] sm:$0xf]
      %v327 = vld [vmem:[%s286 + $0xa0] sm:$0xf]
      %v328 = vld [vmem:[%s286 + $0xa4] sm:$0xf]
      %v329 = vld [vmem:[%s286 + $0xa8] sm:$0xf]
      %v330 = vld [vmem:[%s286 + $0xac] sm:$0xf]
      %v331 = vld [vmem:[%s286 + $0xb0] sm:$0xf]
      %v332 = vld [vmem:[%s286 + $0xb4] sm:$0xf]
      %v333 = vld [vmem:[%s286 + $0xb8] sm:$0xf]
      %v334 = vld [vmem:[%s286 + $0xbc] sm:$0xf]
      %v335 = vld [vmem:[%s286 + $0xc0] sm:$0xf]
      %v336 = vld [vmem:[%s286 + $0xc4] sm:$0xf]
      %v337 = vld [vmem:[%s286 + $0xc8] sm:$0xf]
      %v360 = vunpack.c.l.b16 %v209
      %v361 = vunpack.c.h.b16 %v209
      %v362 = vunpack.c.l.b16 %v210
      %v363 = vunpack.c.h.b16 %v210
      %v364 = vunpack.c.l.b16 %v211
      %v365 = vunpack.c.h.b16 %v211
      %v366 = vunpack.c.l.b16 %v212
      %v367 = vunpack.c.h.b16 %v212
      %v368 = vunpack.c.l.b16 %v213
      %v369 = vunpack.c.h.b16 %v213
      %v370 = vunpack.c.l.b16 %v214
      %v371 = vunpack.c.h.b16 %v214
      %v372 = vunpack.c.l.b16 %v215
      %v373 = vunpack.c.h.b16 %v215
      %v374 = vunpack.c.l.b16 %v216
      %v375 = vunpack.c.h.b16 %v216
      %v376 = vunpack.c.l.b16 %v217
      %v377 = vunpack.c.h.b16 %v217
      %v378 = vunpack.c.l.b16 %v218
      %v379 = vunpack.c.h.b16 %v218
      %v380 = vunpack.c.l.b16 %v219
      %v381 = vunpack.c.h.b16 %v219
      %v382 = vunpack.c.l.b16 %v220
      %v383 = vunpack.c.h.b16 %v220
      %v384 = vunpack.c.l.b16 %v221
      %v385 = vunpack.c.h.b16 %v221
      %v386 = vunpack.c.l.b16 %v222
      %v387 = vunpack.c.h.b16 %v222
      %v388 = vunpack.c.l.b16 %v223
      %v389 = vunpack.c.h.b16 %v223
      %v390 = vunpack.c.l.b16 %v224
      %v391 = vunpack.c.h.b16 %v224
      %v392 = vunpack.c.l.b16 %v225
      %v393 = vunpack.c.h.b16 %v225
      %v394 = vunpack.c.l.b16 %v226
      %v395 = vunpack.c.h.b16 %v226
      %v396 = vunpack.c.l.b16 %v227
      %v397 = vunpack.c.h.b16 %v227
      %v398 = vunpack.c.l.b16 %v228
      %v399 = vunpack.c.h.b16 %v228
      %v400 = vunpack.c.l.b16 %v229
      %v401 = vunpack.c.h.b16 %v229
      %v402 = vunpack.c.l.b16 %v230
      %v403 = vunpack.c.h.b16 %v230
      %v404 = vpack.c.b16 %v364, %v360
      %v405 = vpack.c.b16 %v365, %v361
      %v406 = vpack.c.b16 %v366, %v362
      %v407 = vpack.c.b16 %v367, %v363
      %v408 = vpack.c.b16 %v372, %v368
      %v409 = vpack.c.b16 %v373, %v369
      %v410 = vpack.c.b16 %v374, %v370
      %v411 = vpack.c.b16 %v375, %v371
      %v412 = vpack.c.b16 %v380, %v376
      %v413 = vpack.c.b16 %v381, %v377
      %v414 = vpack.c.b16 %v382, %v378
      %v415 = vpack.c.b16 %v383, %v379
      %v416 = vpack.c.b16 %v388, %v384
      %v417 = vpack.c.b16 %v389, %v385
      %v418 = vpack.c.b16 %v390, %v386
      %v419 = vpack.c.b16 %v391, %v387
      %v420 = vpack.c.b16 %v396, %v392
      %v421 = vpack.c.b16 %v397, %v393
      %v422 = vpack.c.b16 %v398, %v394
      %v423 = vpack.c.b16 %v399, %v395
      %v424 = vpack.c.b16 %v400, %v400
      %v425 = vpack.c.b16 %v401, %v401
      %v426 = vpack.c.b16 %v402, %v402
      %v427 = vpack.c.b16 %v403, %v403
      %vm428 = vsmask.f32 7424
      %v430 = vshrl.u32 %v404, 16
      %v432 = vshll.u32 %v404, 16
      %v434 = vrot.slane %v432, 1
      %v435 = vor.u32 %v430, %v434
      %v437 = vshll.u32 %v408, 16
      %v439 = vrot.slane %v437, 1
      %v440 = vsel %vm428, %v435, %v439
      %v442 = vshrl.u32 %v405, 16
      %v444 = vshll.u32 %v405, 16
      %v446 = vrot.slane %v444, 1
      %v447 = vor.u32 %v442, %v446
      %v449 = vshll.u32 %v409, 16
      %v451 = vrot.slane %v449, 1
      %v452 = vsel %vm428, %v447, %v451
      %v454 = vshrl.u32 %v406, 16
      %v456 = vshll.u32 %v406, 16
      %v458 = vrot.slane %v456, 1
      %v459 = vor.u32 %v454, %v458
      %v461 = vshll.u32 %v410, 16
      %v463 = vrot.slane %v461, 1
      %v464 = vsel %vm428, %v459, %v463
      %v466 = vshrl.u32 %v407, 16
      %v468 = vshll.u32 %v407, 16
      %v470 = vrot.slane %v468, 1
      %v471 = vor.u32 %v466, %v470
      %v473 = vshll.u32 %v411, 16
      %v475 = vrot.slane %v473, 1
      %v476 = vsel %vm428, %v471, %v475
      %v477 = vshrl.u32 %v408, 16
      %v479 = vor.u32 %v477, %v439
      %v481 = vshll.u32 %v412, 16
      %v483 = vrot.slane %v481, 1
      %v484 = vsel %vm428, %v479, %v483
      %v485 = vshrl.u32 %v409, 16
      %v487 = vor.u32 %v485, %v451
      %v489 = vshll.u32 %v413, 16
      %v491 = vrot.slane %v489, 1
      %v492 = vsel %vm428, %v487, %v491
      %v493 = vshrl.u32 %v410, 16
      %v495 = vor.u32 %v493, %v463
      %v497 = vshll.u32 %v414, 16
      %v499 = vrot.slane %v497, 1
      %v500 = vsel %vm428, %v495, %v499
      %v501 = vshrl.u32 %v411, 16
      %v503 = vor.u32 %v501, %v475
      %v505 = vshll.u32 %v415, 16
      %v507 = vrot.slane %v505, 1
      %v508 = vsel %vm428, %v503, %v507
      %v509 = vshrl.u32 %v412, 16
      %v511 = vor.u32 %v509, %v483
      %v513 = vshll.u32 %v416, 16
      %v515 = vrot.slane %v513, 1
      %v516 = vsel %vm428, %v511, %v515
      %v517 = vshrl.u32 %v413, 16
      %v519 = vor.u32 %v517, %v491
      %v521 = vshll.u32 %v417, 16
      %v523 = vrot.slane %v521, 1
      %v524 = vsel %vm428, %v519, %v523
      %v525 = vshrl.u32 %v414, 16
      %v527 = vor.u32 %v525, %v499
      %v529 = vshll.u32 %v418, 16
      %v531 = vrot.slane %v529, 1
      %v532 = vsel %vm428, %v527, %v531
      %v533 = vshrl.u32 %v415, 16
      %v535 = vor.u32 %v533, %v507
      %v537 = vshll.u32 %v419, 16
      %v539 = vrot.slane %v537, 1
      %v540 = vsel %vm428, %v535, %v539
      %v541 = vshrl.u32 %v416, 16
      %v543 = vor.u32 %v541, %v515
      %v545 = vshll.u32 %v420, 16
      %v547 = vrot.slane %v545, 1
      %v548 = vsel %vm428, %v543, %v547
      %v549 = vshrl.u32 %v417, 16
      %v551 = vor.u32 %v549, %v523
      %v553 = vshll.u32 %v421, 16
      %v555 = vrot.slane %v553, 1
      %v556 = vsel %vm428, %v551, %v555
      %v557 = vshrl.u32 %v418, 16
      %v559 = vor.u32 %v557, %v531
      %v561 = vshll.u32 %v422, 16
      %v563 = vrot.slane %v561, 1
      %v564 = vsel %vm428, %v559, %v563
      %v565 = vshrl.u32 %v419, 16
      %v567 = vor.u32 %v565, %v539
      %v569 = vshll.u32 %v423, 16
      %v571 = vrot.slane %v569, 1
      %v572 = vsel %vm428, %v567, %v571
      %v573 = vshrl.u32 %v420, 16
      %v575 = vor.u32 %v573, %v547
      %v577 = vshll.u32 %v424, 16
      %v579 = vrot.slane %v577, 1
      %v580 = vsel %vm428, %v575, %v579
      %v581 = vshrl.u32 %v421, 16
      %v583 = vor.u32 %v581, %v555
      %v585 = vshll.u32 %v425, 16
      %v587 = vrot.slane %v585, 1
      %v588 = vsel %vm428, %v583, %v587
      %v589 = vshrl.u32 %v422, 16
      %v591 = vor.u32 %v589, %v563
      %v593 = vshll.u32 %v426, 16
      %v595 = vrot.slane %v593, 1
      %v596 = vsel %vm428, %v591, %v595
      %v597 = vshrl.u32 %v423, 16
      %v599 = vor.u32 %v597, %v571
      %v601 = vshll.u32 %v427, 16
      %v603 = vrot.slane %v601, 1
      %v604 = vsel %vm428, %v599, %v603
      %v671 = vunpack.c.l.b16 %v287
      %v672 = vunpack.c.l.b16 %v288
      %v673 = vunpack.c.l.b16 %v289
      %v674 = vunpack.c.l.b16 %v290
      %v675 = vunpack.c.l.b16 %v291
      %v676 = vunpack.c.l.b16 %v292
      %v677 = vunpack.c.l.b16 %v293
      %v678 = vunpack.c.l.b16 %v294
      %v679 = vunpack.c.l.b16 %v295
      %v680 = vunpack.c.l.b16 %v296
      %v681 = vunpack.c.l.b16 %v297
      %v682 = vunpack.c.l.b16 %v298
      %v683 = vunpack.c.l.b16 %v299
      %v684 = vunpack.c.l.b16 %v300
      %v685 = vunpack.c.l.b16 %v301
      %v686 = vunpack.c.l.b16 %v302
      %v687 = vunpack.c.l.b16 %v303
      %v688 = vunpack.c.l.b16 %v304
      %v689 = vunpack.c.l.b16 %v305
      %v690 = vunpack.c.l.b16 %v306
      %v691 = vunpack.c.l.b16 %v307
      %v692 = vunpack.c.l.b16 %v308
      %v693 = vunpack.c.l.b16 %v309
      %v694 = vunpack.c.l.b16 %v310
      %v695 = vunpack.c.l.b16 %v311
      %v696 = vunpack.c.l.b16 %v312
      %v697 = vunpack.c.l.b16 %v313
      %v698 = vunpack.c.l.b16 %v314
      %v699 = vunpack.c.l.b16 %v315
      %v700 = vunpack.c.l.b16 %v316
      %v701 = vunpack.c.l.b16 %v317
      %v702 = vunpack.c.l.b16 %v318
      %v703 = vunpack.c.l.b16 %v319
      %v704 = vunpack.c.l.b16 %v320
      %v705 = vunpack.c.l.b16 %v321
      %v706 = vunpack.c.l.b16 %v322
      %v707 = vunpack.c.l.b16 %v323
      %v708 = vunpack.c.l.b16 %v324
      %v709 = vunpack.c.l.b16 %v325
      %v710 = vunpack.c.l.b16 %v326
      %v711 = vunpack.c.l.b16 %v327
      %v712 = vunpack.c.l.b16 %v328
      %v713 = vunpack.c.l.b16 %v329
      %v714 = vunpack.c.l.b16 %v330
      %v715 = vunpack.c.l.b16 %v331
      %v716 = vunpack.c.l.b16 %v332
      %v717 = vunpack.c.l.b16 %v333
      %v718 = vunpack.c.l.b16 %v334
      %v719 = vunpack.c.l.b16 %v335
      %v720 = vunpack.c.l.b16 %v336
      %v721 = vunpack.c.l.b16 %v337
      %v722 = vpack.c.b16 %v672, %v671
      %v723 = vpack.c.b16 %v674, %v673
      %v724 = vpack.c.b16 %v676, %v675
      %v725 = vpack.c.b16 %v678, %v677
      %v726 = vpack.c.b16 %v680, %v679
      %v727 = vpack.c.b16 %v682, %v681
      %v728 = vpack.c.b16 %v684, %v683
      %v729 = vpack.c.b16 %v686, %v685
      %v730 = vpack.c.b16 %v688, %v687
      %v731 = vpack.c.b16 %v690, %v689
      %v732 = vpack.c.b16 %v692, %v691
      %v733 = vpack.c.b16 %v694, %v693
      %v734 = vpack.c.b16 %v696, %v695
      %v735 = vpack.c.b16 %v698, %v697
      %v736 = vpack.c.b16 %v700, %v699
      %v737 = vpack.c.b16 %v702, %v701
      %v738 = vpack.c.b16 %v704, %v703
      %v739 = vpack.c.b16 %v706, %v705
      %v740 = vpack.c.b16 %v708, %v707
      %v741 = vpack.c.b16 %v710, %v709
      %v742 = vpack.c.b16 %v712, %v711
      %v743 = vpack.c.b16 %v714, %v713
      %v744 = vpack.c.b16 %v716, %v715
      %v745 = vpack.c.b16 %v718, %v717
      %v746 = vpack.c.b16 %v720, %v719
      %v747 = vpack.c.b16 %v721, %v721
      %vm773 = vcmask 195584
      %v775 = vsel %vm773, %v476, 0
      %v778 = vsel %vm773, %v508, 0
      %v781 = vsel %vm773, %v540, 0
      %v784 = vsel %vm773, %v572, 0
      %v787 = vsel %vm773, %v604, 0
      %vm789 = vcmask 1043456
      %v791 = vsel %vm789, %v747, 0
      %793 = vmatprep.subr.bf16.mxu0 0
      %794 = vmatpush1.bf16.msra.mxu0 %v722
      %795 = vmatprep.subr.bf16.mxu0 0
      %796 = vmatpush1.bf16.msra.mxu0 %v723
      %797 = vmatprep.subr.bf16.mxu0 0
      %798 = vmatpush1.bf16.msra.mxu0 %v724
      %799 = vmatprep.subr.bf16.mxu0 0
      %800 = vmatpush1.bf16.msra.mxu0 %v725
      %801 = vmatprep.subr.bf16.mxu0 0
      %802 = vmatpush1.bf16.msra.mxu0 %v726
      %803 = vmatprep.subr.bf16.mxu0 0
      %804 = vmatpush1.bf16.msra.mxu0 %v727
      %805 = vmatprep.subr.bf16.mxu0 0
      %806 = vmatpush1.bf16.msra.mxu0 %v728
      %807 = vmatprep.subr.bf16.mxu0 0
      %808 = vmatpush1.bf16.msra.mxu0 %v729
      %809 = vmatprep.subr.bf16.mxu0 0
      %810 = vmatpush1.bf16.msra.mxu0 %v730
      %811 = vmatprep.subr.bf16.mxu0 0
      %812 = vmatpush1.bf16.msra.mxu0 %v731
      %813 = vmatprep.subr.bf16.mxu0 0
      %814 = vmatpush1.bf16.msra.mxu0 %v732
      %815 = vmatprep.subr.bf16.mxu0 0
      %816 = vmatpush1.bf16.msra.mxu0 %v733
      %817 = vmatprep.subr.bf16.mxu0 0
      %818 = vmatpush1.bf16.msra.mxu0 %v734
      %819 = vmatprep.subr.bf16.mxu0 0
      %820 = vmatpush1.bf16.msra.mxu0 %v735
      %821 = vmatprep.subr.bf16.mxu0 0
      %822 = vmatpush1.bf16.msra.mxu0 %v736
      %823 = vmatprep.subr.bf16.mxu0 0
      %824 = vmatpush1.bf16.msra.mxu0 %v737
      %825 = vmatprep.mubr.bf16.mxu0 %v452
      %826 = vmatmul.mubr.bf16.gmra.mrb[0].mxu0 %v440
      %v827 = vpop.f32.mrb[0].mxu0
      %v828 = vadd.f32 0.0, %v827
      %v829 = vpop.f32.mrb[0].mxu0
      %v830 = vpop.f32.mrb[0].mxu0
      %v831 = vadd.f32 0.0, %v830
      %v832 = vpop.f32.mrb[0].mxu0
      %833 = vmatprep.mubr.bf16.mxu0 %v492
      %834 = vmatmul.mubr.bf16.gmra.mrb[0].mxu0 %v484
      %v835 = vpop.f32.mrb[0].mxu0
      %v836 = vadd.f32 0.0, %v835
      %v837 = vpop.f32.mrb[0].mxu0
      %v838 = vpop.f32.mrb[0].mxu0
      %v839 = vadd.f32 0.0, %v838
      %v840 = vpop.f32.mrb[0].mxu0
      %841 = vmatprep.mubr.bf16.mxu0 %v524
      %842 = vmatmul.mubr.bf16.gmra.mrb[0].mxu0 %v516
      %v843 = vpop.f32.mrb[0].mxu0
      %v844 = vadd.f32 0.0, %v843
      %v845 = vpop.f32.mrb[0].mxu0
      %v846 = vpop.f32.mrb[0].mxu0
      %v847 = vadd.f32 0.0, %v846
      %v848 = vpop.f32.mrb[0].mxu0
      %849 = vmatprep.mubr.bf16.mxu0 %v556
      %850 = vmatmul.mubr.bf16.gmra.mrb[0].mxu0 %v548
      %v851 = vpop.f32.mrb[0].mxu0
      %v852 = vadd.f32 0.0, %v851
      %v853 = vpop.f32.mrb[0].mxu0
      %v854 = vpop.f32.mrb[0].mxu0
      %v855 = vadd.f32 0.0, %v854
      %v856 = vpop.f32.mrb[0].mxu0
      %857 = vmatprep.mubr.bf16.mxu0 %v588
      %858 = vmatmul.mubr.bf16.gmra.mrb[0].mxu0 %v580
      %v859 = vpop.f32.mrb[0].mxu0
      %v860 = vadd.f32 0.0, %v859
      %v861 = vpop.f32.mrb[0].mxu0
      %v862 = vpop.f32.mrb[0].mxu0
      %v863 = vadd.f32 0.0, %v862
      %v864 = vpop.f32.mrb[0].mxu0
      %865 = vdwg.mxu0
      %866 = vmatprep.subr.bf16.mxu0 0
      %867 = vmatpush1.bf16.msra.mxu0 %v738
      %868 = vmatprep.subr.bf16.mxu0 0
      %869 = vmatpush1.bf16.msra.mxu0 %v739
      %870 = vmatprep.subr.bf16.mxu0 0
      %871 = vmatpush1.bf16.msra.mxu0 %v740
      %872 = vmatprep.subr.bf16.mxu0 0
      %873 = vmatpush1.bf16.msra.mxu0 %v741
      %874 = vmatprep.subr.bf16.mxu0 0
      %875 = vmatpush1.bf16.msra.mxu0 %v742
      %876 = vmatprep.subr.bf16.mxu0 0
      %877 = vmatpush1.bf16.msra.mxu0 %v743
      %878 = vmatprep.subr.bf16.mxu0 0
      %879 = vmatpush1.bf16.msra.mxu0 %v744
      %880 = vmatprep.subr.bf16.mxu0 0
      %881 = vmatpush1.bf16.msra.mxu0 %v745
      %882 = vmatprep.subr.bf16.mxu0 0
      %883 = vmatpush1.bf16.msra.mxu0 %v746
      %884 = vmatprep.subr.bf16.mxu0 0
      %885 = vmatpush1.bf16.msra.mxu0 %v791
      %886 = vmatprep.subr.bf16.mxu0 0
      %887 = vmatpush1.bf16.msra.mxu0 0
      %888 = vmatprep.subr.bf16.mxu0 0
      %889 = vmatpush1.bf16.msra.mxu0 0
      %890 = vmatprep.subr.bf16.mxu0 0
      %891 = vmatpush1.bf16.msra.mxu0 0
      %892 = vmatprep.subr.bf16.mxu0 0
      %893 = vmatpush1.bf16.msra.mxu0 0
      %894 = vmatprep.subr.bf16.mxu0 0
      %895 = vmatpush1.bf16.msra.mxu0 0
      %896 = vmatprep.subr.bf16.mxu0 0
      %897 = vmatpush1.bf16.msra.mxu0 0
      %898 = vmatprep.mubr.bf16.mxu0 %v775
      %899 = vmatmul.mubr.bf16.gmra.mrb[0].mxu0 %v464
      %v900 = vpop.f32.mrb[0].mxu0
      %v901 = vadd.f32 %v828, %v900
      %v902 = vpop.f32.mrb[0].mxu0
      %v903 = vpop.f32.mrb[0].mxu0
      %v904 = vadd.f32 %v831, %v903
      %v905 = vpop.f32.mrb[0].mxu0
      %906 = vmatprep.mubr.bf16.mxu0 %v778
      %907 = vmatmul.mubr.bf16.gmra.mrb[0].mxu0 %v500
      %v908 = vpop.f32.mrb[0].mxu0
      %v909 = vadd.f32 %v836, %v908
      %v910 = vpop.f32.mrb[0].mxu0
      %v911 = vpop.f32.mrb[0].mxu0
      %v912 = vadd.f32 %v839, %v911
      %v913 = vpop.f32.mrb[0].mxu0
      %914 = vmatprep.mubr.bf16.mxu0 %v781
      %915 = vmatmul.mubr.bf16.gmra.mrb[0].mxu0 %v532
      %v916 = vpop.f32.mrb[0].mxu0
      %v917 = vadd.f32 %v844, %v916
      %v918 = vpop.f32.mrb[0].mxu0
      %v919 = vpop.f32.mrb[0].mxu0
      %v920 = vadd.f32 %v847, %v919
      %v921 = vpop.f32.mrb[0].mxu0
      %922 = vmatprep.mubr.bf16.mxu0 %v784
      %923 = vmatmul.mubr.bf16.gmra.mrb[0].mxu0 %v564
      %v924 = vpop.f32.mrb[0].mxu0
      %v925 = vadd.f32 %v852, %v924
      %v926 = vpop.f32.mrb[0].mxu0
      %v927 = vpop.f32.mrb[0].mxu0
      %v928 = vadd.f32 %v855, %v927
      %v929 = vpop.f32.mrb[0].mxu0
      %930 = vmatprep.mubr.bf16.mxu0 %v787
      %931 = vmatmul.mubr.bf16.gmra.mrb[0].mxu0 %v596
      %v932 = vpop.f32.mrb[0].mxu0
      %v933 = vadd.f32 %v860, %v932
      %v934 = vpop.f32.mrb[0].mxu0
      %v935 = vpop.f32.mrb[0].mxu0
      %v936 = vadd.f32 %v863, %v935
      %v937 = vpop.f32.mrb[0].mxu0
      %938 = vdwg.mxu0
      %s939 = scalar_lea.vmem %s1, 408
      %v940 = vld [vmem:[%s939] sm:$0xf]
      %v941 = vld [vmem:[%s939 + $0x4] sm:$0xf]
      %v942 = vld [vmem:[%s939 + $0x8] sm:$0xf]
      %v943 = vld [vmem:[%s939 + $0xc] sm:$0xf]
      %v944 = vld [vmem:[%s939 + $0x10] sm:$0xf]
      %v945 = vld [vmem:[%s939 + $0x14] sm:$0xf]
      %v946 = vld [vmem:[%s939 + $0x18] sm:$0xf]
      %v947 = vld [vmem:[%s939 + $0x1c] sm:$0xf]
      %v948 = vld [vmem:[%s939 + $0x20] sm:$0xf]
      %v949 = vld [vmem:[%s939 + $0x24] sm:$0xf]
      %v950 = vld [vmem:[%s939 + $0x28] sm:$0xf]
      %v951 = vld [vmem:[%s939 + $0x2c] sm:$0xf]
      %v952 = vld [vmem:[%s939 + $0x30] sm:$0xf]
      %v953 = vld [vmem:[%s939 + $0x34] sm:$0xf]
      %v954 = vld [vmem:[%s939 + $0x38] sm:$0xf]
      %v955 = vld [vmem:[%s939 + $0x3c] sm:$0xf]
      %v956 = vld [vmem:[%s939 + $0x40] sm:$0xf]
      %v957 = vld [vmem:[%s939 + $0x44] sm:$0xf]
      %v958 = vld [vmem:[%s939 + $0x48] sm:$0xf]
      %v959 = vld [vmem:[%s939 + $0x4c] sm:$0xf]
      %v960 = vld [vmem:[%s939 + $0x50] sm:$0xf]
      %v961 = vld [vmem:[%s939 + $0x54] sm:$0xf]
      %v962 = vld [vmem:[%s939 + $0x58] sm:$0xf]
      %v963 = vld [vmem:[%s939 + $0x5c] sm:$0xf]
      %v964 = vld [vmem:[%s939 + $0x60] sm:$0xf]
      %v965 = vld [vmem:[%s939 + $0x64] sm:$0xf]
      %v966 = vld [vmem:[%s939 + $0x68] sm:$0xf]
      %v967 = vld [vmem:[%s939 + $0x6c] sm:$0xf]
      %v968 = vld [vmem:[%s939 + $0x70] sm:$0xf]
      %v969 = vld [vmem:[%s939 + $0x74] sm:$0xf]
      %v970 = vld [vmem:[%s939 + $0x78] sm:$0xf]
      %v971 = vld [vmem:[%s939 + $0x7c] sm:$0xf]
      %v972 = vld [vmem:[%s939 + $0x80] sm:$0xf]
      %v973 = vld [vmem:[%s939 + $0x84] sm:$0xf]
      %v974 = vld [vmem:[%s939 + $0x88] sm:$0xf]
      %v975 = vld [vmem:[%s939 + $0x8c] sm:$0xf]
      %v976 = vld [vmem:[%s939 + $0x90] sm:$0xf]
      %v977 = vld [vmem:[%s939 + $0x94] sm:$0xf]
      %v978 = vld [vmem:[%s939 + $0x98] sm:$0xf]
      %v979 = vld [vmem:[%s939 + $0x9c] sm:$0xf]
      %v980 = vld [vmem:[%s939 + $0xa0] sm:$0xf]
      %v981 = vld [vmem:[%s939 + $0xa4] sm:$0xf]
      %v982 = vld [vmem:[%s939 + $0xa8] sm:$0xf]
      %v983 = vld [vmem:[%s939 + $0xac] sm:$0xf]
      %v984 = vld [vmem:[%s939 + $0xb0] sm:$0xf]
      %v985 = vld [vmem:[%s939 + $0xb4] sm:$0xf]
      %v986 = vld [vmem:[%s939 + $0xb8] sm:$0xf]
      %v987 = vld [vmem:[%s939 + $0xbc] sm:$0xf]
      %v988 = vld [vmem:[%s939 + $0xc0] sm:$0xf]
      %v989 = vld [vmem:[%s939 + $0xc4] sm:$0xf]
      %v990 = vld [vmem:[%s939 + $0xc8] sm:$0xf]
      %vm991 = vcmask 1046528
      %v992 = vrot.slane %v404, 1
      %v993 = vrot.slane %v408, 1
      %v994 = vsel %vm991, %v992, %v993
      %v995 = vrot.slane %v405, 1
      %v996 = vrot.slane %v409, 1
      %v997 = vsel %vm991, %v995, %v996
      %v998 = vrot.slane %v406, 1
      %v999 = vrot.slane %v410, 1
      %v1000 = vsel %vm991, %v998, %v999
      %v1001 = vrot.slane %v407, 1
      %v1002 = vrot.slane %v411, 1
      %v1003 = vsel %vm991, %v1001, %v1002
      %v1004 = vrot.slane %v412, 1
      %v1005 = vsel %vm991, %v993, %v1004
      %v1006 = vrot.slane %v413, 1
      %v1007 = vsel %vm991, %v996, %v1006
      %v1008 = vrot.slane %v414, 1
      %v1009 = vsel %vm991, %v999, %v1008
      %v1010 = vrot.slane %v415, 1
      %v1011 = vsel %vm991, %v1002, %v1010
      %v1012 = vrot.slane %v416, 1
      %v1013 = vsel %vm991, %v1004, %v1012
      %v1014 = vrot.slane %v417, 1
      %v1015 = vsel %vm991, %v1006, %v1014
      %v1016 = vrot.slane %v418, 1
      %v1017 = vsel %vm991, %v1008, %v1016
      %v1018 = vrot.slane %v419, 1
      %v1019 = vsel %vm991, %v1010, %v1018
      %v1020 = vrot.slane %v420, 1
      %v1021 = vsel %vm991, %v1012, %v1020
      %v1022 = vrot.slane %v421, 1
      %v1023 = vsel %vm991, %v1014, %v1022
      %v1024 = vrot.slane %v422, 1
      %v1025 = vsel %vm991, %v1016, %v1024
      %v1026 = vrot.slane %v423, 1
      %v1027 = vsel %vm991, %v1018, %v1026
      %v1028 = vrot.slane %v424, 1
      %v1029 = vsel %vm991, %v1020, %v1028
      %v1030 = vrot.slane %v425, 1
      %v1031 = vsel %vm991, %v1022, %v1030
      %v1032 = vrot.slane %v426, 1
      %v1033 = vsel %vm991, %v1024, %v1032
      %v1034 = vrot.slane %v427, 1
      %v1035 = vsel %vm991, %v1026, %v1034
      %v1102 = vunpack.c.l.b16 %v940
      %v1103 = vunpack.c.l.b16 %v941
      %v1104 = vunpack.c.l.b16 %v942
      %v1105 = vunpack.c.l.b16 %v943
      %v1106 = vunpack.c.l.b16 %v944
      %v1107 = vunpack.c.l.b16 %v945
      %v1108 = vunpack.c.l.b16 %v946
      %v1109 = vunpack.c.l.b16 %v947
      %v1110 = vunpack.c.l.b16 %v948
      %v1111 = vunpack.c.l.b16 %v949
      %v1112 = vunpack.c.l.b16 %v950
      %v1113 = vunpack.c.l.b16 %v951
      %v1114 = vunpack.c.l.b16 %v952
      %v1115 = vunpack.c.l.b16 %v953
      %v1116 = vunpack.c.l.b16 %v954
      %v1117 = vunpack.c.l.b16 %v955
      %v1118 = vunpack.c.l.b16 %v956
      %v1119 = vunpack.c.l.b16 %v957
      %v1120 = vunpack.c.l.b16 %v958
      %v1121 = vunpack.c.l.b16 %v959
      %v1122 = vunpack.c.l.b16 %v960
      %v1123 = vunpack.c.l.b16 %v961
      %v1124 = vunpack.c.l.b16 %v962
      %v1125 = vunpack.c.l.b16 %v963
      %v1126 = vunpack.c.l.b16 %v964
      %v1127 = vunpack.c.l.b16 %v965
      %v1128 = vunpack.c.l.b16 %v966
      %v1129 = vunpack.c.l.b16 %v967
      %v1130 = vunpack.c.l.b16 %v968
      %v1131 = vunpack.c.l.b16 %v969
      %v1132 = vunpack.c.l.b16 %v970
      %v1133 = vunpack.c.l.b16 %v971
      %v1134 = vunpack.c.l.b16 %v972
      %v1135 = vunpack.c.l.b16 %v973
      %v1136 = vunpack.c.l.b16 %v974
      %v1137 = vunpack.c.l.b16 %v975
      %v1138 = vunpack.c.l.b16 %v976
      %v1139 = vunpack.c.l.b16 %v977
      %v1140 = vunpack.c.l.b16 %v978
      %v1141 = vunpack.c.l.b16 %v979
      %v1142 = vunpack.c.l.b16 %v980
      %v1143 = vunpack.c.l.b16 %v981
      %v1144 = vunpack.c.l.b16 %v982
      %v1145 = vunpack.c.l.b16 %v983
      %v1146 = vunpack.c.l.b16 %v984
      %v1147 = vunpack.c.l.b16 %v985
      %v1148 = vunpack.c.l.b16 %v986
      %v1149 = vunpack.c.l.b16 %v987
      %v1150 = vunpack.c.l.b16 %v988
      %v1151 = vunpack.c.l.b16 %v989
      %v1152 = vunpack.c.l.b16 %v990
      %v1153 = vpack.c.b16 %v1103, %v1102
      %v1154 = vpack.c.b16 %v1105, %v1104
      %v1155 = vpack.c.b16 %v1107, %v1106
      %v1156 = vpack.c.b16 %v1109, %v1108
      %v1157 = vpack.c.b16 %v1111, %v1110
      %v1158 = vpack.c.b16 %v1113, %v1112
      %v1159 = vpack.c.b16 %v1115, %v1114
      %v1160 = vpack.c.b16 %v1117, %v1116
      %v1161 = vpack.c.b16 %v1119, %v1118
      %v1162 = vpack.c.b16 %v1121, %v1120
      %v1163 = vpack.c.b16 %v1123, %v1122
      %v1164 = vpack.c.b16 %v1125, %v1124
      %v1165 = vpack.c.b16 %v1127, %v1126
      %v1166 = vpack.c.b16 %v1129, %v1128
      %v1167 = vpack.c.b16 %v1131, %v1130
      %v1168 = vpack.c.b16 %v1133, %v1132
      %v1169 = vpack.c.b16 %v1135, %v1134
      %v1170 = vpack.c.b16 %v1137, %v1136
      %v1171 = vpack.c.b16 %v1139, %v1138
      %v1172 = vpack.c.b16 %v1141, %v1140
      %v1173 = vpack.c.b16 %v1143, %v1142
      %v1174 = vpack.c.b16 %v1145, %v1144
      %v1175 = vpack.c.b16 %v1147, %v1146
      %v1176 = vpack.c.b16 %v1149, %v1148
      %v1177 = vpack.c.b16 %v1151, %v1150
      %v1178 = vpack.c.b16 %v1152, %v1152
      %v1205 = vsel %vm773, %v1003, 0
      %v1208 = vsel %vm773, %v1011, 0
      %v1211 = vsel %vm773, %v1019, 0
      %v1214 = vsel %vm773, %v1027, 0
      %v1217 = vsel %vm773, %v1035, 0
      %v1220 = vsel %vm789, %v1178, 0
      %1222 = vmatprep.subr.bf16.mxu0 0
      %1223 = vmatpush1.bf16.msra.mxu0 %v1153
      %1224 = vmatprep.subr.bf16.mxu0 0
      %1225 = vmatpush1.bf16.msra.mxu0 %v1154
      %1226 = vmatprep.subr.bf16.mxu0 0
      %1227 = vmatpush1.bf16.msra.mxu0 %v1155
      %1228 = vmatprep.subr.bf16.mxu0 0
      %1229 = vmatpush1.bf16.msra.mxu0 %v1156
      %1230 = vmatprep.subr.bf16.mxu0 0
      %1231 = vmatpush1.bf16.msra.mxu0 %v1157
      %1232 = vmatprep.subr.bf16.mxu0 0
      %1233 = vmatpush1.bf16.msra.mxu0 %v1158
      %1234 = vmatprep.subr.bf16.mxu0 0
      %1235 = vmatpush1.bf16.msra.mxu0 %v1159
      %1236 = vmatprep.subr.bf16.mxu0 0
      %1237 = vmatpush1.bf16.msra.mxu0 %v1160
      %1238 = vmatprep.subr.bf16.mxu0 0
      %1239 = vmatpush1.bf16.msra.mxu0 %v1161
      %1240 = vmatprep.subr.bf16.mxu0 0
      %1241 = vmatpush1.bf16.msra.mxu0 %v1162
      %1242 = vmatprep.subr.bf16.mxu0 0
      %1243 = vmatpush1.bf16.msra.mxu0 %v1163
      %1244 = vmatprep.subr.bf16.mxu0 0
      %1245 = vmatpush1.bf16.msra.mxu0 %v1164
      %1246 = vmatprep.subr.bf16.mxu0 0
      %1247 = vmatpush1.bf16.msra.mxu0 %v1165
      %1248 = vmatprep.subr.bf16.mxu0 0
      %1249 = vmatpush1.bf16.msra.mxu0 %v1166
      %1250 = vmatprep.subr.bf16.mxu0 0
      %1251 = vmatpush1.bf16.msra.mxu0 %v1167
      %1252 = vmatprep.subr.bf16.mxu0 0
      %1253 = vmatpush1.bf16.msra.mxu0 %v1168
      %1254 = vmatprep.mubr.bf16.mxu0 %v997
      %1255 = vmatmul.mubr.bf16.gmra.mrb[0].mxu0 %v994
      %v1256 = vpop.f32.mrb[0].mxu0
      %v1257 = vadd.f32 0.0, %v1256
      %v1258 = vpop.f32.mrb[0].mxu0
      %v1259 = vpop.f32.mrb[0].mxu0
      %v1260 = vadd.f32 0.0, %v1259
      %v1261 = vpop.f32.mrb[0].mxu0
      %1262 = vmatprep.mubr.bf16.mxu0 %v1007
      %1263 = vmatmul.mubr.bf16.gmra.mrb[0].mxu0 %v1005
      %v1264 = vpop.f32.mrb[0].mxu0
      %v1265 = vadd.f32 0.0, %v1264
      %v1266 = vpop.f32.mrb[0].mxu0
      %v1267 = vpop.f32.mrb[0].mxu0
      %v1268 = vadd.f32 0.0, %v1267
      %v1269 = vpop.f32.mrb[0].mxu0
      %1270 = vmatprep.mubr.bf16.mxu0 %v1015
      %1271 = vmatmul.mubr.bf16.gmra.mrb[0].mxu0 %v1013
      %v1272 = vpop.f32.mrb[0].mxu0
      %v1273 = vadd.f32 0.0, %v1272
      %v1274 = vpop.f32.mrb[0].mxu0
      %v1275 = vpop.f32.mrb[0].mxu0
      %v1276 = vadd.f32 0.0, %v1275
      %v1277 = vpop.f32.mrb[0].mxu0
      %1278 = vmatprep.mubr.bf16.mxu0 %v1023
      %1279 = vmatmul.mubr.bf16.gmra.mrb[0].mxu0 %v1021
      %v1280 = vpop.f32.mrb[0].mxu0
      %v1281 = vadd.f32 0.0, %v1280
      %v1282 = vpop.f32.mrb[0].mxu0
      %v1283 = vpop.f32.mrb[0].mxu0
      %v1284 = vadd.f32 0.0, %v1283
      %v1285 = vpop.f32.mrb[0].mxu0
      %1286 = vmatprep.mubr.bf16.mxu0 %v1031
      %1287 = vmatmul.mubr.bf16.gmra.mrb[0].mxu0 %v1029
      %v1288 = vpop.f32.mrb[0].mxu0
      %v1289 = vadd.f32 0.0, %v1288
      %v1290 = vpop.f32.mrb[0].mxu0
      %v1291 = vpop.f32.mrb[0].mxu0
      %v1292 = vadd.f32 0.0, %v1291
      %v1293 = vpop.f32.mrb[0].mxu0
      %1294 = vdwg.mxu0
      %1295 = vmatprep.subr.bf16.mxu0 0
      %1296 = vmatpush1.bf16.msra.mxu0 %v1169
      %1297 = vmatprep.subr.bf16.mxu0 0
      %1298 = vmatpush1.bf16.msra.mxu0 %v1170
      %1299 = vmatprep.subr.bf16.mxu0 0
      %1300 = vmatpush1.bf16.msra.mxu0 %v1171
      %1301 = vmatprep.subr.bf16.mxu0 0
      %1302 = vmatpush1.bf16.msra.mxu0 %v1172
      %1303 = vmatprep.subr.bf16.mxu0 0
      %1304 = vmatpush1.bf16.msra.mxu0 %v1173
      %1305 = vmatprep.subr.bf16.mxu0 0
      %1306 = vmatpush1.bf16.msra.mxu0 %v1174
      %1307 = vmatprep.subr.bf16.mxu0 0
      %1308 = vmatpush1.bf16.msra.mxu0 %v1175
      %1309 = vmatprep.subr.bf16.mxu0 0
      %1310 = vmatpush1.bf16.msra.mxu0 %v1176
      %1311 = vmatprep.subr.bf16.mxu0 0
      %1312 = vmatpush1.bf16.msra.mxu0 %v1177
      %1313 = vmatprep.subr.bf16.mxu0 0
      %1314 = vmatpush1.bf16.msra.mxu0 %v1220
      %1315 = vmatprep.subr.bf16.mxu0 0
      %1316 = vmatpush1.bf16.msra.mxu0 0
      %1317 = vmatprep.subr.bf16.mxu0 0
      %1318 = vmatpush1.bf16.msra.mxu0 0
      %1319 = vmatprep.subr.bf16.mxu0 0
      %1320 = vmatpush1.bf16.msra.mxu0 0
      %1321 = vmatprep.subr.bf16.mxu0 0
      %1322 = vmatpush1.bf16.msra.mxu0 0
      %1323 = vmatprep.subr.bf16.mxu0 0
      %1324 = vmatpush1.bf16.msra.mxu0 0
      %1325 = vmatprep.subr.bf16.mxu0 0
      %1326 = vmatpush1.bf16.msra.mxu0 0
      %1327 = vmatprep.mubr.bf16.mxu0 %v1205
      %1328 = vmatmul.mubr.bf16.gmra.mrb[0].mxu0 %v1000
      %v1329 = vpop.f32.mrb[0].mxu0
      %v1330 = vadd.f32 %v1257, %v1329
      %v1331 = vpop.f32.mrb[0].mxu0
      %v1332 = vpop.f32.mrb[0].mxu0
      %v1333 = vadd.f32 %v1260, %v1332
      %v1334 = vpop.f32.mrb[0].mxu0
      %1335 = vmatprep.mubr.bf16.mxu0 %v1208
      %1336 = vmatmul.mubr.bf16.gmra.mrb[0].mxu0 %v1009
      %v1337 = vpop.f32.mrb[0].mxu0
      %v1338 = vadd.f32 %v1265, %v1337
      %v1339 = vpop.f32.mrb[0].mxu0
      %v1340 = vpop.f32.mrb[0].mxu0
      %v1341 = vadd.f32 %v1268, %v1340
      %v1342 = vpop.f32.mrb[0].mxu0
      %1343 = vmatprep.mubr.bf16.mxu0 %v1211
      %1344 = vmatmul.mubr.bf16.gmra.mrb[0].mxu0 %v1017
      %v1345 = vpop.f32.mrb[0].mxu0
      %v1346 = vadd.f32 %v1273, %v1345
      %v1347 = vpop.f32.mrb[0].mxu0
      %v1348 = vpop.f32.mrb[0].mxu0
      %v1349 = vadd.f32 %v1276, %v1348
      %v1350 = vpop.f32.mrb[0].mxu0
      %1351 = vmatprep.mubr.bf16.mxu0 %v1214
      %1352 = vmatmul.mubr.bf16.gmra.mrb[0].mxu0 %v1025
      %v1353 = vpop.f32.mrb[0].mxu0
      %v1354 = vadd.f32 %v1281, %v1353
      %v1355 = vpop.f32.mrb[0].mxu0
      %v1356 = vpop.f32.mrb[0].mxu0
      %v1357 = vadd.f32 %v1284, %v1356
      %v1358 = vpop.f32.mrb[0].mxu0
      %1359 = vmatprep.mubr.bf16.mxu0 %v1217
      %1360 = vmatmul.mubr.bf16.gmra.mrb[0].mxu0 %v1033
      %v1361 = vpop.f32.mrb[0].mxu0
      %v1362 = vadd.f32 %v1289, %v1361
      %v1363 = vpop.f32.mrb[0].mxu0
      %v1364 = vpop.f32.mrb[0].mxu0
      %v1365 = vadd.f32 %v1292, %v1364
      %v1366 = vpop.f32.mrb[0].mxu0
      %1367 = vdwg.mxu0
      %s1368 = scalar_lea.vmem %s1, 612
      %v1369 = vld [vmem:[%s1368] sm:$0xf]
      %v1370 = vld [vmem:[%s1368 + $0x4] sm:$0xf]
      %v1371 = vld [vmem:[%s1368 + $0x8] sm:$0xf]
      %v1372 = vld [vmem:[%s1368 + $0xc] sm:$0xf]
      %v1373 = vld [vmem:[%s1368 + $0x10] sm:$0xf]
      %v1374 = vld [vmem:[%s1368 + $0x14] sm:$0xf]
      %v1375 = vld [vmem:[%s1368 + $0x18] sm:$0xf]
      %v1376 = vld [vmem:[%s1368 + $0x1c] sm:$0xf]
      %v1377 = vld [vmem:[%s1368 + $0x20] sm:$0xf]
      %v1378 = vld [vmem:[%s1368 + $0x24] sm:$0xf]
      %v1379 = vld [vmem:[%s1368 + $0x28] sm:$0xf]
      %v1380 = vld [vmem:[%s1368 + $0x2c] sm:$0xf]
      %v1381 = vld [vmem:[%s1368 + $0x30] sm:$0xf]
      %v1382 = vld [vmem:[%s1368 + $0x34] sm:$0xf]
      %v1383 = vld [vmem:[%s1368 + $0x38] sm:$0xf]
      %v1384 = vld [vmem:[%s1368 + $0x3c] sm:$0xf]
      %v1385 = vld [vmem:[%s1368 + $0x40] sm:$0xf]
      %v1386 = vld [vmem:[%s1368 + $0x44] sm:$0xf]
      %v1387 = vld [vmem:[%s1368 + $0x48] sm:$0xf]
      %v1388 = vld [vmem:[%s1368 + $0x4c] sm:$0xf]
      %v1389 = vld [vmem:[%s1368 + $0x50] sm:$0xf]
      %v1390 = vld [vmem:[%s1368 + $0x54] sm:$0xf]
      %v1391 = vld [vmem:[%s1368 + $0x58] sm:$0xf]
      %v1392 = vld [vmem:[%s1368 + $0x5c] sm:$0xf]
      %v1393 = vld [vmem:[%s1368 + $0x60] sm:$0xf]
      %v1394 = vld [vmem:[%s1368 + $0x64] sm:$0xf]
      %v1395 = vld [vmem:[%s1368 + $0x68] sm:$0xf]
      %v1396 = vld [vmem:[%s1368 + $0x6c] sm:$0xf]
      %v1397 = vld [vmem:[%s1368 + $0x70] sm:$0xf]
      %v1398 = vld [vmem:[%s1368 + $0x74] sm:$0xf]
      %v1399 = vld [vmem:[%s1368 + $0x78] sm:$0xf]
      %v1400 = vld [vmem:[%s1368 + $0x7c] sm:$0xf]
      %v1401 = vld [vmem:[%s1368 + $0x80] sm:$0xf]
      %v1402 = vld [vmem:[%s1368 + $0x84] sm:$0xf]
      %v1403 = vld [vmem:[%s1368 + $0x88] sm:$0xf]
      %v1404 = vld [vmem:[%s1368 + $0x8c] sm:$0xf]
      %v1405 = vld [vmem:[%s1368 + $0x90] sm:$0xf]
      %v1406 = vld [vmem:[%s1368 + $0x94] sm:$0xf]
      %v1407 = vld [vmem:[%s1368 + $0x98] sm:$0xf]
      %v1408 = vld [vmem:[%s1368 + $0x9c] sm:$0xf]
      %v1409 = vld [vmem:[%s1368 + $0xa0] sm:$0xf]
      %v1410 = vld [vmem:[%s1368 + $0xa4] sm:$0xf]
      %v1411 = vld [vmem:[%s1368 + $0xa8] sm:$0xf]
      %v1412 = vld [vmem:[%s1368 + $0xac] sm:$0xf]
      %v1413 = vld [vmem:[%s1368 + $0xb0] sm:$0xf]
      %v1414 = vld [vmem:[%s1368 + $0xb4] sm:$0xf]
      %v1415 = vld [vmem:[%s1368 + $0xb8] sm:$0xf]
      %v1416 = vld [vmem:[%s1368 + $0xbc] sm:$0xf]
      %v1417 = vld [vmem:[%s1368 + $0xc0] sm:$0xf]
      %v1418 = vld [vmem:[%s1368 + $0xc4] sm:$0xf]
      %v1419 = vld [vmem:[%s1368 + $0xc8] sm:$0xf]
      %v1422 = vunpack.c.l.b16 %v231
      %v1423 = vunpack.c.h.b16 %v231
      %v1424 = vunpack.c.l.b16 %v232
      %v1425 = vunpack.c.h.b16 %v232
      %v1426 = vpack.c.b16 %v368, %v364
      %v1427 = vpack.c.b16 %v369, %v365
      %v1428 = vpack.c.b16 %v370, %v366
      %v1429 = vpack.c.b16 %v371, %v367
      %v1430 = vpack.c.b16 %v376, %v372
      %v1431 = vpack.c.b16 %v377, %v373
      %v1432 = vpack.c.b16 %v378, %v374
      %v1433 = vpack.c.b16 %v379, %v375
      %v1434 = vpack.c.b16 %v384, %v380
      %v1435 = vpack.c.b16 %v385, %v381
      %v1436 = vpack.c.b16 %v386, %v382
      %v1437 = vpack.c.b16 %v387, %v383
      %v1438 = vpack.c.b16 %v392, %v388
      %v1439 = vpack.c.b16 %v393, %v389
      %v1440 = vpack.c.b16 %v394, %v390
      %v1441 = vpack.c.b16 %v395, %v391
      %v1442 = vpack.c.b16 %v400, %v396
      %v1443 = vpack.c.b16 %v401, %v397
      %v1444 = vpack.c.b16 %v402, %v398
      %v1445 = vpack.c.b16 %v403, %v399
      %v1446 = vpack.c.b16 %v1422, %v1422
      %v1447 = vpack.c.b16 %v1423, %v1423
      %v1448 = vpack.c.b16 %v1424, %v1424
      %v1449 = vpack.c.b16 %v1425, %v1425
      %v1450 = vrot.slane %v1426, 1
      %v1451 = vrot.slane %v1430, 1
      %v1452 = vsel %vm991, %v1450, %v1451
      %v1453 = vrot.slane %v1427, 1
      %v1454 = vrot.slane %v1431, 1
      %v1455 = vsel %vm991, %v1453, %v1454
      %v1456 = vrot.slane %v1428, 1
      %v1457 = vrot.slane %v1432, 1
      %v1458 = vsel %vm991, %v1456, %v1457
      %v1459 = vrot.slane %v1429, 1
      %v1460 = vrot.slane %v1433, 1
      %v1461 = vsel %vm991, %v1459, %v1460
      %v1462 = vrot.slane %v1434, 1
      %v1463 = vsel %vm991, %v1451, %v1462
      %v1464 = vrot.slane %v1435, 1
      %v1465 = vsel %vm991, %v1454, %v1464
      %v1466 = vrot.slane %v1436, 1
      %v1467 = vsel %vm991, %v1457, %v1466
      %v1468 = vrot.slane %v1437, 1
      %v1469 = vsel %vm991, %v1460, %v1468
      %v1470 = vrot.slane %v1438, 1
      %v1471 = vsel %vm991, %v1462, %v1470
      %v1472 = vrot.slane %v1439, 1
      %v1473 = vsel %vm991, %v1464, %v1472
      %v1474 = vrot.slane %v1440, 1
      %v1475 = vsel %vm991, %v1466, %v1474
      %v1476 = vrot.slane %v1441, 1
      %v1477 = vsel %vm991, %v1468, %v1476
      %v1478 = vrot.slane %v1442, 1
      %v1479 = vsel %vm991, %v1470, %v1478
      %v1480 = vrot.slane %v1443, 1
      %v1481 = vsel %vm991, %v1472, %v1480
      %v1482 = vrot.slane %v1444, 1
      %v1483 = vsel %vm991, %v1474, %v1482
      %v1484 = vrot.slane %v1445, 1
      %v1485 = vsel %vm991, %v1476, %v1484
      %v1486 = vrot.slane %v1446, 1
      %v1487 = vsel %vm991, %v1478, %v1486
      %v1488 = vrot.slane %v1447, 1
      %v1489 = vsel %vm991, %v1480, %v1488
      %v1490 = vrot.slane %v1448, 1
      %v1491 = vsel %vm991, %v1482, %v1490
      %v1492 = vrot.slane %v1449, 1
      %v1493 = vsel %vm991, %v1484, %v1492
      %v1560 = vunpack.c.l.b16 %v1369
      %v1561 = vunpack.c.l.b16 %v1370
      %v1562 = vunpack.c.l.b16 %v1371
      %v1563 = vunpack.c.l.b16 %v1372
      %v1564 = vunpack.c.l.b16 %v1373
      %v1565 = vunpack.c.l.b16 %v1374
      %v1566 = vunpack.c.l.b16 %v1375
      %v1567 = vunpack.c.l.b16 %v1376
      %v1568 = vunpack.c.l.b16 %v1377
      %v1569 = vunpack.c.l.b16 %v1378
      %v1570 = vunpack.c.l.b16 %v1379
      %v1571 = vunpack.c.l.b16 %v1380
      %v1572 = vunpack.c.l.b16 %v1381
      %v1573 = vunpack.c.l.b16 %v1382
      %v1574 = vunpack.c.l.b16 %v1383
      %v1575 = vunpack.c.l.b16 %v1384
      %v1576 = vunpack.c.l.b16 %v1385
      %v1577 = vunpack.c.l.b16 %v1386
      %v1578 = vunpack.c.l.b16 %v1387
      %v1579 = vunpack.c.l.b16 %v1388
      %v1580 = vunpack.c.l.b16 %v1389
      %v1581 = vunpack.c.l.b16 %v1390
      %v1582 = vunpack.c.l.b16 %v1391
      %v1583 = vunpack.c.l.b16 %v1392
      %v1584 = vunpack.c.l.b16 %v1393
      %v1585 = vunpack.c.l.b16 %v1394
      %v1586 = vunpack.c.l.b16 %v1395
      %v1587 = vunpack.c.l.b16 %v1396
      %v1588 = vunpack.c.l.b16 %v1397
      %v1589 = vunpack.c.l.b16 %v1398
      %v1590 = vunpack.c.l.b16 %v1399
      %v1591 = vunpack.c.l.b16 %v1400
      %v1592 = vunpack.c.l.b16 %v1401
      %v1593 = vunpack.c.l.b16 %v1402
      %v1594 = vunpack.c.l.b16 %v1403
      %v1595 = vunpack.c.l.b16 %v1404
      %v1596 = vunpack.c.l.b16 %v1405
      %v1597 = vunpack.c.l.b16 %v1406
      %v1598 = vunpack.c.l.b16 %v1407
      %v1599 = vunpack.c.l.b16 %v1408
      %v1600 = vunpack.c.l.b16 %v1409
      %v1601 = vunpack.c.l.b16 %v1410
      %v1602 = vunpack.c.l.b16 %v1411
      %v1603 = vunpack.c.l.b16 %v1412
      %v1604 = vunpack.c.l.b16 %v1413
      %v1605 = vunpack.c.l.b16 %v1414
      %v1606 = vunpack.c.l.b16 %v1415
      %v1607 = vunpack.c.l.b16 %v1416
      %v1608 = vunpack.c.l.b16 %v1417
      %v1609 = vunpack.c.l.b16 %v1418
      %v1610 = vunpack.c.l.b16 %v1419
      %v1611 = vpack.c.b16 %v1561, %v1560
      %v1612 = vpack.c.b16 %v1563, %v1562
      %v1613 = vpack.c.b16 %v1565, %v1564
      %v1614 = vpack.c.b16 %v1567, %v1566
      %v1615 = vpack.c.b16 %v1569, %v1568
      %v1616 = vpack.c.b16 %v1571, %v1570
      %v1617 = vpack.c.b16 %v1573, %v1572
      %v1618 = vpack.c.b16 %v1575, %v1574
      %v1619 = vpack.c.b16 %v1577, %v1576
      %v1620 = vpack.c.b16 %v1579, %v1578
      %v1621 = vpack.c.b16 %v1581, %v1580
      %v1622 = vpack.c.b16 %v1583, %v1582
      %v1623 = vpack.c.b16 %v1585, %v1584
      %v1624 = vpack.c.b16 %v1587, %v1586
      %v1625 = vpack.c.b16 %v1589, %v1588
      %v1626 = vpack.c.b16 %v1591, %v1590
      %v1627 = vpack.c.b16 %v1593, %v1592
      %v1628 = vpack.c.b16 %v1595, %v1594
      %v1629 = vpack.c.b16 %v1597, %v1596
      %v1630 = vpack.c.b16 %v1599, %v1598
      %v1631 = vpack.c.b16 %v1601, %v1600
      %v1632 = vpack.c.b16 %v1603, %v1602
      %v1633 = vpack.c.b16 %v1605, %v1604
      %v1634 = vpack.c.b16 %v1607, %v1606
      %v1635 = vpack.c.b16 %v1609, %v1608
      %v1636 = vpack.c.b16 %v1610, %v1610
      %v1663 = vsel %vm773, %v1461, 0
      %v1666 = vsel %vm773, %v1469, 0
      %v1669 = vsel %vm773, %v1477, 0
      %v1672 = vsel %vm773, %v1485, 0
      %v1675 = vsel %vm773, %v1493, 0
      %v1678 = vsel %vm789, %v1636, 0
      %1680 = vmatprep.subr.bf16.mxu0 0
      %1681 = vmatpush1.bf16.msra.mxu0 %v1611
      %1682 = vmatprep.subr.bf16.mxu0 0
      %1683 = vmatpush1.bf16.msra.mxu0 %v1612
      %1684 = vmatprep.subr.bf16.mxu0 0
      %1685 = vmatpush1.bf16.msra.mxu0 %v1613
      %1686 = vmatprep.subr.bf16.mxu0 0
      %1687 = vmatpush1.bf16.msra.mxu0 %v1614
      %1688 = vmatprep.subr.bf16.mxu0 0
      %1689 = vmatpush1.bf16.msra.mxu0 %v1615
      %1690 = vmatprep.subr.bf16.mxu0 0
      %1691 = vmatpush1.bf16.msra.mxu0 %v1616
      %1692 = vmatprep.subr.bf16.mxu0 0
      %1693 = vmatpush1.bf16.msra.mxu0 %v1617
      %1694 = vmatprep.subr.bf16.mxu0 0
      %1695 = vmatpush1.bf16.msra.mxu0 %v1618
      %1696 = vmatprep.subr.bf16.mxu0 0
      %1697 = vmatpush1.bf16.msra.mxu0 %v1619
      %1698 = vmatprep.subr.bf16.mxu0 0
      %1699 = vmatpush1.bf16.msra.mxu0 %v1620
      %1700 = vmatprep.subr.bf16.mxu0 0
      %1701 = vmatpush1.bf16.msra.mxu0 %v1621
      %1702 = vmatprep.subr.bf16.mxu0 0
      %1703 = vmatpush1.bf16.msra.mxu0 %v1622
      %1704 = vmatprep.subr.bf16.mxu0 0
      %1705 = vmatpush1.bf16.msra.mxu0 %v1623
      %1706 = vmatprep.subr.bf16.mxu0 0
      %1707 = vmatpush1.bf16.msra.mxu0 %v1624
      %1708 = vmatprep.subr.bf16.mxu0 0
      %1709 = vmatpush1.bf16.msra.mxu0 %v1625
      %1710 = vmatprep.subr.bf16.mxu0 0
      %1711 = vmatpush1.bf16.msra.mxu0 %v1626
      %1712 = vmatprep.mubr.bf16.mxu0 %v1455
      %1713 = vmatmul.mubr.bf16.gmra.mrb[0].mxu0 %v1452
      %v1714 = vpop.f32.mrb[0].mxu0
      %v1715 = vadd.f32 0.0, %v1714
      %v1716 = vpop.f32.mrb[0].mxu0
      %v1717 = vpop.f32.mrb[0].mxu0
      %v1718 = vadd.f32 0.0, %v1717
      %v1719 = vpop.f32.mrb[0].mxu0
      %1720 = vmatprep.mubr.bf16.mxu0 %v1465
      %1721 = vmatmul.mubr.bf16.gmra.mrb[0].mxu0 %v1463
      %v1722 = vpop.f32.mrb[0].mxu0
      %v1723 = vadd.f32 0.0, %v1722
      %v1724 = vpop.f32.mrb[0].mxu0
      %v1725 = vpop.f32.mrb[0].mxu0
      %v1726 = vadd.f32 0.0, %v1725
      %v1727 = vpop.f32.mrb[0].mxu0
      %1728 = vmatprep.mubr.bf16.mxu0 %v1473
      %1729 = vmatmul.mubr.bf16.gmra.mrb[0].mxu0 %v1471
      %v1730 = vpop.f32.mrb[0].mxu0
      %v1731 = vadd.f32 0.0, %v1730
      %v1732 = vpop.f32.mrb[0].mxu0
      %v1733 = vpop.f32.mrb[0].mxu0
      %v1734 = vadd.f32 0.0, %v1733
      %v1735 = vpop.f32.mrb[0].mxu0
      %1736 = vmatprep.mubr.bf16.mxu0 %v1481
      %1737 = vmatmul.mubr.bf16.gmra.mrb[0].mxu0 %v1479
      %v1738 = vpop.f32.mrb[0].mxu0
      %v1739 = vadd.f32 0.0, %v1738
      %v1740 = vpop.f32.mrb[0].mxu0
      %v1741 = vpop.f32.mrb[0].mxu0
      %v1742 = vadd.f32 0.0, %v1741
      %v1743 = vpop.f32.mrb[0].mxu0
      %1744 = vmatprep.mubr.bf16.mxu0 %v1489
      %1745 = vmatmul.mubr.bf16.gmra.mrb[0].mxu0 %v1487
      %v1746 = vpop.f32.mrb[0].mxu0
      %v1747 = vadd.f32 0.0, %v1746
      %v1748 = vpop.f32.mrb[0].mxu0
      %v1749 = vpop.f32.mrb[0].mxu0
      %v1750 = vadd.f32 0.0, %v1749
      %v1751 = vpop.f32.mrb[0].mxu0
      %1752 = vdwg.mxu0
      %1753 = vmatprep.subr.bf16.mxu0 0
      %1754 = vmatpush1.bf16.msra.mxu0 %v1627
      %1755 = vmatprep.subr.bf16.mxu0 0
      %1756 = vmatpush1.bf16.msra.mxu0 %v1628
      %1757 = vmatprep.subr.bf16.mxu0 0
      %1758 = vmatpush1.bf16.msra.mxu0 %v1629
      %1759 = vmatprep.subr.bf16.mxu0 0
      %1760 = vmatpush1.bf16.msra.mxu0 %v1630
      %1761 = vmatprep.subr.bf16.mxu0 0
      %1762 = vmatpush1.bf16.msra.mxu0 %v1631
      %1763 = vmatprep.subr.bf16.mxu0 0
      %1764 = vmatpush1.bf16.msra.mxu0 %v1632
      %1765 = vmatprep.subr.bf16.mxu0 0
      %1766 = vmatpush1.bf16.msra.mxu0 %v1633
      %1767 = vmatprep.subr.bf16.mxu0 0
      %1768 = vmatpush1.bf16.msra.mxu0 %v1634
      %1769 = vmatprep.subr.bf16.mxu0 0
      %1770 = vmatpush1.bf16.msra.mxu0 %v1635
      %1771 = vmatprep.subr.bf16.mxu0 0
      %1772 = vmatpush1.bf16.msra.mxu0 %v1678
      %1773 = vmatprep.subr.bf16.mxu0 0
      %1774 = vmatpush1.bf16.msra.mxu0 0
      %1775 = vmatprep.subr.bf16.mxu0 0
      %1776 = vmatpush1.bf16.msra.mxu0 0
      %1777 = vmatprep.subr.bf16.mxu0 0
      %1778 = vmatpush1.bf16.msra.mxu0 0
      %1779 = vmatprep.subr.bf16.mxu0 0
      %1780 = vmatpush1.bf16.msra.mxu0 0
      %1781 = vmatprep.subr.bf16.mxu0 0
      %1782 = vmatpush1.bf16.msra.mxu0 0
      %1783 = vmatprep.subr.bf16.mxu0 0
      %1784 = vmatpush1.bf16.msra.mxu0 0
      %1785 = vmatprep.mubr.bf16.mxu0 %v1663
      %1786 = vmatmul.mubr.bf16.gmra.mrb[0].mxu0 %v1458
      %v1787 = vpop.f32.mrb[0].mxu0
      %v1788 = vadd.f32 %v1715, %v1787
      %v1789 = vpop.f32.mrb[0].mxu0
      %v1790 = vpop.f32.mrb[0].mxu0
      %v1791 = vadd.f32 %v1718, %v1790
      %v1792 = vpop.f32.mrb[0].mxu0
      %1793 = vmatprep.mubr.bf16.mxu0 %v1666
      %1794 = vmatmul.mubr.bf16.gmra.mrb[0].mxu0 %v1467
      %v1795 = vpop.f32.mrb[0].mxu0
      %v1796 = vadd.f32 %v1723, %v1795
      %v1797 = vpop.f32.mrb[0].mxu0
      %v1798 = vpop.f32.mrb[0].mxu0
      %v1799 = vadd.f32 %v1726, %v1798
      %v1800 = vpop.f32.mrb[0].mxu0
      %1801 = vmatprep.mubr.bf16.mxu0 %v1669
      %1802 = vmatmul.mubr.bf16.gmra.mrb[0].mxu0 %v1475
      %v1803 = vpop.f32.mrb[0].mxu0
      %v1804 = vadd.f32 %v1731, %v1803
      %v1805 = vpop.f32.mrb[0].mxu0
      %v1806 = vpop.f32.mrb[0].mxu0
      %v1807 = vadd.f32 %v1734, %v1806
      %v1808 = vpop.f32.mrb[0].mxu0
      %1809 = vmatprep.mubr.bf16.mxu0 %v1672
      %1810 = vmatmul.mubr.bf16.gmra.mrb[0].mxu0 %v1483
      %v1811 = vpop.f32.mrb[0].mxu0
      %v1812 = vadd.f32 %v1739, %v1811
      %v1813 = vpop.f32.mrb[0].mxu0
      %v1814 = vpop.f32.mrb[0].mxu0
      %v1815 = vadd.f32 %v1742, %v1814
      %v1816 = vpop.f32.mrb[0].mxu0
      %1817 = vmatprep.mubr.bf16.mxu0 %v1675
      %1818 = vmatmul.mubr.bf16.gmra.mrb[0].mxu0 %v1491
      %v1819 = vpop.f32.mrb[0].mxu0
      %v1820 = vadd.f32 %v1747, %v1819
      %v1821 = vpop.f32.mrb[0].mxu0
      %v1822 = vpop.f32.mrb[0].mxu0
      %v1823 = vadd.f32 %v1750, %v1822
      %v1824 = vpop.f32.mrb[0].mxu0
      %1825 = vdwg.mxu0
      %s1826 = scalar_lea.vmem %s1, 816
      %v1827 = vld [vmem:[%s1826] sm:$0xf]
      %v1828 = vld [vmem:[%s1826 + $0x4] sm:$0xf]
      %v1829 = vld [vmem:[%s1826 + $0x8] sm:$0xf]
      %v1830 = vld [vmem:[%s1826 + $0xc] sm:$0xf]
      %v1831 = vld [vmem:[%s1826 + $0x10] sm:$0xf]
      %v1832 = vld [vmem:[%s1826 + $0x14] sm:$0xf]
      %v1833 = vld [vmem:[%s1826 + $0x18] sm:$0xf]
      %v1834 = vld [vmem:[%s1826 + $0x1c] sm:$0xf]
      %v1835 = vld [vmem:[%s1826 + $0x20] sm:$0xf]
      %v1836 = vld [vmem:[%s1826 + $0x24] sm:$0xf]
      %v1837 = vld [vmem:[%s1826 + $0x28] sm:$0xf]
      %v1838 = vld [vmem:[%s1826 + $0x2c] sm:$0xf]
      %v1839 = vld [vmem:[%s1826 + $0x30] sm:$0xf]
      %v1840 = vld [vmem:[%s1826 + $0x34] sm:$0xf]
      %v1841 = vld [vmem:[%s1826 + $0x38] sm:$0xf]
      %v1842 = vld [vmem:[%s1826 + $0x3c] sm:$0xf]
      %v1843 = vld [vmem:[%s1826 + $0x40] sm:$0xf]
      %v1844 = vld [vmem:[%s1826 + $0x44] sm:$0xf]
      %v1845 = vld [vmem:[%s1826 + $0x48] sm:$0xf]
      %v1846 = vld [vmem:[%s1826 + $0x4c] sm:$0xf]
      %v1847 = vld [vmem:[%s1826 + $0x50] sm:$0xf]
      %v1848 = vld [vmem:[%s1826 + $0x54] sm:$0xf]
      %v1849 = vld [vmem:[%s1826 + $0x58] sm:$0xf]
      %v1850 = vld [vmem:[%s1826 + $0x5c] sm:$0xf]
      %v1851 = vld [vmem:[%s1826 + $0x60] sm:$0xf]
      %v1852 = vld [vmem:[%s1826 + $0x64] sm:$0xf]
      %v1853 = vld [vmem:[%s1826 + $0x68] sm:$0xf]
      %v1854 = vld [vmem:[%s1826 + $0x6c] sm:$0xf]
      %v1855 = vld [vmem:[%s1826 + $0x70] sm:$0xf]
      %v1856 = vld [vmem:[%s1826 + $0x74] sm:$0xf]
      %v1857 = vld [vmem:[%s1826 + $0x78] sm:$0xf]
      %v1858 = vld [vmem:[%s1826 + $0x7c] sm:$0xf]
      %v1859 = vld [vmem:[%s1826 + $0x80] sm:$0xf]
      %v1860 = vld [vmem:[%s1826 + $0x84] sm:$0xf]
      %v1861 = vld [vmem:[%s1826 + $0x88] sm:$0xf]
      %v1862 = vld [vmem:[%s1826 + $0x8c] sm:$0xf]
      %v1863 = vld [vmem:[%s1826 + $0x90] sm:$0xf]
      %v1864 = vld [vmem:[%s1826 + $0x94] sm:$0xf]
      %v1865 = vld [vmem:[%s1826 + $0x98] sm:$0xf]
      %v1866 = vld [vmem:[%s1826 + $0x9c] sm:$0xf]
      %v1867 = vld [vmem:[%s1826 + $0xa0] sm:$0xf]
      %v1868 = vld [vmem:[%s1826 + $0xa4] sm:$0xf]
      %v1869 = vld [vmem:[%s1826 + $0xa8] sm:$0xf]
      %v1870 = vld [vmem:[%s1826 + $0xac] sm:$0xf]
      %v1871 = vld [vmem:[%s1826 + $0xb0] sm:$0xf]
      %v1872 = vld [vmem:[%s1826 + $0xb4] sm:$0xf]
      %v1873 = vld [vmem:[%s1826 + $0xb8] sm:$0xf]
      %v1874 = vld [vmem:[%s1826 + $0xbc] sm:$0xf]
      %v1875 = vld [vmem:[%s1826 + $0xc0] sm:$0xf]
      %v1876 = vld [vmem:[%s1826 + $0xc4] sm:$0xf]
      %v1877 = vld [vmem:[%s1826 + $0xc8] sm:$0xf]
      %vm1878 = vsmask.f32 6400
      %v1880 = vshrl.u32 %v1426, 16
      %v1882 = vrot.slane %v1880, 1
      %v1883 = vshll.u32 %v1426, 16
      %v1885 = vrot.slane %v1883, 2
      %v1886 = vor.u32 %v1882, %v1885
      %v1888 = vshrl.u32 %v1430, 16
      %v1890 = vrot.slane %v1888, 1
      %v1891 = vshll.u32 %v1430, 16
      %v1893 = vrot.slane %v1891, 2
      %v1894 = vor.u32 %v1890, %v1893
      %v1895 = vsel %vm1878, %v1886, %v1894
      %v1897 = vshrl.u32 %v1427, 16
      %v1899 = vrot.slane %v1897, 1
      %v1900 = vshll.u32 %v1427, 16
      %v1902 = vrot.slane %v1900, 2
      %v1903 = vor.u32 %v1899, %v1902
      %v1905 = vshrl.u32 %v1431, 16
      %v1907 = vrot.slane %v1905, 1
      %v1908 = vshll.u32 %v1431, 16
      %v1910 = vrot.slane %v1908, 2
      %v1911 = vor.u32 %v1907, %v1910
      %v1912 = vsel %vm1878, %v1903, %v1911
      %v1914 = vshrl.u32 %v1428, 16
      %v1916 = vrot.slane %v1914, 1
      %v1917 = vshll.u32 %v1428, 16
      %v1919 = vrot.slane %v1917, 2
      %v1920 = vor.u32 %v1916, %v1919
      %v1922 = vshrl.u32 %v1432, 16
      %v1924 = vrot.slane %v1922, 1
      %v1925 = vshll.u32 %v1432, 16
      %v1927 = vrot.slane %v1925, 2
      %v1928 = vor.u32 %v1924, %v1927
      %v1929 = vsel %vm1878, %v1920, %v1928
      %v1931 = vshrl.u32 %v1429, 16
      %v1933 = vrot.slane %v1931, 1
      %v1934 = vshll.u32 %v1429, 16
      %v1936 = vrot.slane %v1934, 2
      %v1937 = vor.u32 %v1933, %v1936
      %v1939 = vshrl.u32 %v1433, 16
      %v1941 = vrot.slane %v1939, 1
      %v1942 = vshll.u32 %v1433, 16
      %v1944 = vrot.slane %v1942, 2
      %v1945 = vor.u32 %v1941, %v1944
      %v1946 = vsel %vm1878, %v1937, %v1945
      %v1948 = vshrl.u32 %v1434, 16
      %v1950 = vrot.slane %v1948, 1
      %v1951 = vshll.u32 %v1434, 16
      %v1953 = vrot.slane %v1951, 2
      %v1954 = vor.u32 %v1950, %v1953
      %v1955 = vsel %vm1878, %v1894, %v1954
      %v1957 = vshrl.u32 %v1435, 16
      %v1959 = vrot.slane %v1957, 1
      %v1960 = vshll.u32 %v1435, 16
      %v1962 = vrot.slane %v1960, 2
      %v1963 = vor.u32 %v1959, %v1962
      %v1964 = vsel %vm1878, %v1911, %v1963
      %v1966 = vshrl.u32 %v1436, 16
      %v1968 = vrot.slane %v1966, 1
      %v1969 = vshll.u32 %v1436, 16
      %v1971 = vrot.slane %v1969, 2
      %v1972 = vor.u32 %v1968, %v1971
      %v1973 = vsel %vm1878, %v1928, %v1972
      %v1975 = vshrl.u32 %v1437, 16
      %v1977 = vrot.slane %v1975, 1
      %v1978 = vshll.u32 %v1437, 16
      %v1980 = vrot.slane %v1978, 2
      %v1981 = vor.u32 %v1977, %v1980
      %v1982 = vsel %vm1878, %v1945, %v1981
      %v1984 = vshrl.u32 %v1438, 16
      %v1986 = vrot.slane %v1984, 1
      %v1987 = vshll.u32 %v1438, 16
      %v1989 = vrot.slane %v1987, 2
      %v1990 = vor.u32 %v1986, %v1989
      %v1991 = vsel %vm1878, %v1954, %v1990
      %v1993 = vshrl.u32 %v1439, 16
      %v1995 = vrot.slane %v1993, 1
      %v1996 = vshll.u32 %v1439, 16
      %v1998 = vrot.slane %v1996, 2
      %v1999 = vor.u32 %v1995, %v1998
      %v2000 = vsel %vm1878, %v1963, %v1999
      %v2002 = vshrl.u32 %v1440, 16
      %v2004 = vrot.slane %v2002, 1
      %v2005 = vshll.u32 %v1440, 16
      %v2007 = vrot.slane %v2005, 2
      %v2008 = vor.u32 %v2004, %v2007
      %v2009 = vsel %vm1878, %v1972, %v2008
      %v2011 = vshrl.u32 %v1441, 16
      %v2013 = vrot.slane %v2011, 1
      %v2014 = vshll.u32 %v1441, 16
      %v2016 = vrot.slane %v2014, 2
      %v2017 = vor.u32 %v2013, %v2016
      %v2018 = vsel %vm1878, %v1981, %v2017
      %v2020 = vshrl.u32 %v1442, 16
      %v2022 = vrot.slane %v2020, 1
      %v2023 = vshll.u32 %v1442, 16
      %v2025 = vrot.slane %v2023, 2
      %v2026 = vor.u32 %v2022, %v2025
      %v2027 = vsel %vm1878, %v1990, %v2026
      %v2029 = vshrl.u32 %v1443, 16
      %v2031 = vrot.slane %v2029, 1
      %v2032 = vshll.u32 %v1443, 16
      %v2034 = vrot.slane %v2032, 2
      %v2035 = vor.u32 %v2031, %v2034
      %v2036 = vsel %vm1878, %v1999, %v2035
      %v2038 = vshrl.u32 %v1444, 16
      %v2040 = vrot.slane %v2038, 1
      %v2041 = vshll.u32 %v1444, 16
      %v2043 = vrot.slane %v2041, 2
      %v2044 = vor.u32 %v2040, %v2043
      %v2045 = vsel %vm1878, %v2008, %v2044
      %v2047 = vshrl.u32 %v1445, 16
      %v2049 = vrot.slane %v2047, 1
      %v2050 = vshll.u32 %v1445, 16
      %v2052 = vrot.slane %v2050, 2
      %v2053 = vor.u32 %v2049, %v2052
      %v2054 = vsel %vm1878, %v2017, %v2053
      %v2056 = vshrl.u32 %v1446, 16
      %v2058 = vrot.slane %v2056, 1
      %v2059 = vshll.u32 %v1446, 16
      %v2061 = vrot.slane %v2059, 2
      %v2062 = vor.u32 %v2058, %v2061
      %v2063 = vsel %vm1878, %v2026, %v2062
      %v2065 = vshrl.u32 %v1447, 16
      %v2067 = vrot.slane %v2065, 1
      %v2068 = vshll.u32 %v1447, 16
      %v2070 = vrot.slane %v2068, 2
      %v2071 = vor.u32 %v2067, %v2070
      %v2072 = vsel %vm1878, %v2035, %v2071
      %v2074 = vshrl.u32 %v1448, 16
      %v2076 = vrot.slane %v2074, 1
      %v2077 = vshll.u32 %v1448, 16
      %v2079 = vrot.slane %v2077, 2
      %v2080 = vor.u32 %v2076, %v2079
      %v2081 = vsel %vm1878, %v2044, %v2080
      %v2083 = vshrl.u32 %v1449, 16
      %v2085 = vrot.slane %v2083, 1
      %v2086 = vshll.u32 %v1449, 16
      %v2088 = vrot.slane %v2086, 2
      %v2089 = vor.u32 %v2085, %v2088
      %v2090 = vsel %vm1878, %v2053, %v2089
      %v2157 = vunpack.c.l.b16 %v1827
      %v2158 = vunpack.c.l.b16 %v1828
      %v2159 = vunpack.c.l.b16 %v1829
      %v2160 = vunpack.c.l.b16 %v1830
      %v2161 = vunpack.c.l.b16 %v1831
      %v2162 = vunpack.c.l.b16 %v1832
      %v2163 = vunpack.c.l.b16 %v1833
      %v2164 = vunpack.c.l.b16 %v1834
      %v2165 = vunpack.c.l.b16 %v1835
      %v2166 = vunpack.c.l.b16 %v1836
      %v2167 = vunpack.c.l.b16 %v1837
      %v2168 = vunpack.c.l.b16 %v1838
      %v2169 = vunpack.c.l.b16 %v1839
      %v2170 = vunpack.c.l.b16 %v1840
      %v2171 = vunpack.c.l.b16 %v1841
      %v2172 = vunpack.c.l.b16 %v1842
      %v2173 = vunpack.c.l.b16 %v1843
      %v2174 = vunpack.c.l.b16 %v1844
      %v2175 = vunpack.c.l.b16 %v1845
      %v2176 = vunpack.c.l.b16 %v1846
      %v2177 = vunpack.c.l.b16 %v1847
      %v2178 = vunpack.c.l.b16 %v1848
      %v2179 = vunpack.c.l.b16 %v1849
      %v2180 = vunpack.c.l.b16 %v1850
      %v2181 = vunpack.c.l.b16 %v1851
      %v2182 = vunpack.c.l.b16 %v1852
      %v2183 = vunpack.c.l.b16 %v1853
      %v2184 = vunpack.c.l.b16 %v1854
      %v2185 = vunpack.c.l.b16 %v1855
      %v2186 = vunpack.c.l.b16 %v1856
      %v2187 = vunpack.c.l.b16 %v1857
      %v2188 = vunpack.c.l.b16 %v1858
      %v2189 = vunpack.c.l.b16 %v1859
      %v2190 = vunpack.c.l.b16 %v1860
      %v2191 = vunpack.c.l.b16 %v1861
      %v2192 = vunpack.c.l.b16 %v1862
      %v2193 = vunpack.c.l.b16 %v1863
      %v2194 = vunpack.c.l.b16 %v1864
      %v2195 = vunpack.c.l.b16 %v1865
      %v2196 = vunpack.c.l.b16 %v1866
      %v2197 = vunpack.c.l.b16 %v1867
      %v2198 = vunpack.c.l.b16 %v1868
      %v2199 = vunpack.c.l.b16 %v1869
      %v2200 = vunpack.c.l.b16 %v1870
      %v2201 = vunpack.c.l.b16 %v1871
      %v2202 = vunpack.c.l.b16 %v1872
      %v2203 = vunpack.c.l.b16 %v1873
      %v2204 = vunpack.c.l.b16 %v1874
      %v2205 = vunpack.c.l.b16 %v1875
      %v2206 = vunpack.c.l.b16 %v1876
      %v2207 = vunpack.c.l.b16 %v1877
      %v2208 = vpack.c.b16 %v2158, %v2157
      %v2209 = vpack.c.b16 %v2160, %v2159
      %v2210 = vpack.c.b16 %v2162, %v2161
      %v2211 = vpack.c.b16 %v2164, %v2163
      %v2212 = vpack.c.b16 %v2166, %v2165
      %v2213 = vpack.c.b16 %v2168, %v2167
      %v2214 = vpack.c.b16 %v2170, %v2169
      %v2215 = vpack.c.b16 %v2172, %v2171
      %v2216 = vpack.c.b16 %v2174, %v2173
      %v2217 = vpack.c.b16 %v2176, %v2175
      %v2218 = vpack.c.b16 %v2178, %v2177
      %v2219 = vpack.c.b16 %v2180, %v2179
      %v2220 = vpack.c.b16 %v2182, %v2181
      %v2221 = vpack.c.b16 %v2184, %v2183
      %v2222 = vpack.c.b16 %v2186, %v2185
      %v2223 = vpack.c.b16 %v2188, %v2187
      %v2224 = vpack.c.b16 %v2190, %v2189
      %v2225 = vpack.c.b16 %v2192, %v2191
      %v2226 = vpack.c.b16 %v2194, %v2193
      %v2227 = vpack.c.b16 %v2196, %v2195
      %v2228 = vpack.c.b16 %v2198, %v2197
      %v2229 = vpack.c.b16 %v2200, %v2199
      %v2230 = vpack.c.b16 %v2202, %v2201
      %v2231 = vpack.c.b16 %v2204, %v2203
      %v2232 = vpack.c.b16 %v2206, %v2205
      %v2233 = vpack.c.b16 %v2207, %v2207
      %v2260 = vsel %vm773, %v1946, 0
      %v2263 = vsel %vm773, %v1982, 0
      %v2266 = vsel %vm773, %v2018, 0
      %v2269 = vsel %vm773, %v2054, 0
      %v2272 = vsel %vm773, %v2090, 0
      %v2275 = vsel %vm789, %v2233, 0
      %2277 = vmatprep.subr.bf16.mxu0 0
      %2278 = vmatpush1.bf16.msra.mxu0 %v2208
      %2279 = vmatprep.subr.bf16.mxu0 0
      %2280 = vmatpush1.bf16.msra.mxu0 %v2209
      %2281 = vmatprep.subr.bf16.mxu0 0
      %2282 = vmatpush1.bf16.msra.mxu0 %v2210
      %2283 = vmatprep.subr.bf16.mxu0 0
      %2284 = vmatpush1.bf16.msra.mxu0 %v2211
      %2285 = vmatprep.subr.bf16.mxu0 0
      %2286 = vmatpush1.bf16.msra.mxu0 %v2212
      %2287 = vmatprep.subr.bf16.mxu0 0
      %2288 = vmatpush1.bf16.msra.mxu0 %v2213
      %2289 = vmatprep.subr.bf16.mxu0 0
      %2290 = vmatpush1.bf16.msra.mxu0 %v2214
      %2291 = vmatprep.subr.bf16.mxu0 0
      %2292 = vmatpush1.bf16.msra.mxu0 %v2215
      %2293 = vmatprep.subr.bf16.mxu0 0
      %2294 = vmatpush1.bf16.msra.mxu0 %v2216
      %2295 = vmatprep.subr.bf16.mxu0 0
      %2296 = vmatpush1.bf16.msra.mxu0 %v2217
      %2297 = vmatprep.subr.bf16.mxu0 0
      %2298 = vmatpush1.bf16.msra.mxu0 %v2218
      %2299 = vmatprep.subr.bf16.mxu0 0
      %2300 = vmatpush1.bf16.msra.mxu0 %v2219
      %2301 = vmatprep.subr.bf16.mxu0 0
      %2302 = vmatpush1.bf16.msra.mxu0 %v2220
      %2303 = vmatprep.subr.bf16.mxu0 0
      %2304 = vmatpush1.bf16.msra.mxu0 %v2221
      %2305 = vmatprep.subr.bf16.mxu0 0
      %2306 = vmatpush1.bf16.msra.mxu0 %v2222
      %2307 = vmatprep.subr.bf16.mxu0 0
      %2308 = vmatpush1.bf16.msra.mxu0 %v2223
      %2309 = vmatprep.mubr.bf16.mxu0 %v1912
      %2310 = vmatmul.mubr.bf16.gmra.mrb[0].mxu0 %v1895
      %v2311 = vpop.f32.mrb[0].mxu0
      %v2312 = vadd.f32 0.0, %v2311
      %v2313 = vpop.f32.mrb[0].mxu0
      %v2314 = vpop.f32.mrb[0].mxu0
      %v2315 = vadd.f32 0.0, %v2314
      %v2316 = vpop.f32.mrb[0].mxu0
      %2317 = vmatprep.mubr.bf16.mxu0 %v1964
      %2318 = vmatmul.mubr.bf16.gmra.mrb[0].mxu0 %v1955
      %v2319 = vpop.f32.mrb[0].mxu0
      %v2320 = vadd.f32 0.0, %v2319
      %v2321 = vpop.f32.mrb[0].mxu0
      %v2322 = vpop.f32.mrb[0].mxu0
      %v2323 = vadd.f32 0.0, %v2322
      %v2324 = vpop.f32.mrb[0].mxu0
      %2325 = vmatprep.mubr.bf16.mxu0 %v2000
      %2326 = vmatmul.mubr.bf16.gmra.mrb[0].mxu0 %v1991
      %v2327 = vpop.f32.mrb[0].mxu0
      %v2328 = vadd.f32 0.0, %v2327
      %v2329 = vpop.f32.mrb[0].mxu0
      %v2330 = vpop.f32.mrb[0].mxu0
      %v2331 = vadd.f32 0.0, %v2330
      %v2332 = vpop.f32.mrb[0].mxu0
      %2333 = vmatprep.mubr.bf16.mxu0 %v2036
      %2334 = vmatmul.mubr.bf16.gmra.mrb[0].mxu0 %v2027
      %v2335 = vpop.f32.mrb[0].mxu0
      %v2336 = vadd.f32 0.0, %v2335
      %v2337 = vpop.f32.mrb[0].mxu0
      %v2338 = vpop.f32.mrb[0].mxu0
      %v2339 = vadd.f32 0.0, %v2338
      %v2340 = vpop.f32.mrb[0].mxu0
      %2341 = vmatprep.mubr.bf16.mxu0 %v2072
      %2342 = vmatmul.mubr.bf16.gmra.mrb[0].mxu0 %v2063
      %v2343 = vpop.f32.mrb[0].mxu0
      %v2344 = vadd.f32 0.0, %v2343
      %v2345 = vpop.f32.mrb[0].mxu0
      %v2346 = vpop.f32.mrb[0].mxu0
      %v2347 = vadd.f32 0.0, %v2346
      %v2348 = vpop.f32.mrb[0].mxu0
      %2349 = vdwg.mxu0
      %2350 = vmatprep.subr.bf16.mxu0 0
      %2351 = vmatpush1.bf16.msra.mxu0 %v2224
      %2352 = vmatprep.subr.bf16.mxu0 0
      %2353 = vmatpush1.bf16.msra.mxu0 %v2225
      %2354 = vmatprep.subr.bf16.mxu0 0
      %2355 = vmatpush1.bf16.msra.mxu0 %v2226
      %2356 = vmatprep.subr.bf16.mxu0 0
      %2357 = vmatpush1.bf16.msra.mxu0 %v2227
      %2358 = vmatprep.subr.bf16.mxu0 0
      %2359 = vmatpush1.bf16.msra.mxu0 %v2228
      %2360 = vmatprep.subr.bf16.mxu0 0
      %2361 = vmatpush1.bf16.msra.mxu0 %v2229
      %2362 = vmatprep.subr.bf16.mxu0 0
      %2363 = vmatpush1.bf16.msra.mxu0 %v2230
      %2364 = vmatprep.subr.bf16.mxu0 0
      %2365 = vmatpush1.bf16.msra.mxu0 %v2231
      %2366 = vmatprep.subr.bf16.mxu0 0
      %2367 = vmatpush1.bf16.msra.mxu0 %v2232
      %2368 = vmatprep.subr.bf16.mxu0 0
      %2369 = vmatpush1.bf16.msra.mxu0 %v2275
      %2370 = vmatprep.subr.bf16.mxu0 0
      %2371 = vmatpush1.bf16.msra.mxu0 0
      %2372 = vmatprep.subr.bf16.mxu0 0
      %2373 = vmatpush1.bf16.msra.mxu0 0
      %2374 = vmatprep.subr.bf16.mxu0 0
      %2375 = vmatpush1.bf16.msra.mxu0 0
      %2376 = vmatprep.subr.bf16.mxu0 0
      %2377 = vmatpush1.bf16.msra.mxu0 0
      %2378 = vmatprep.subr.bf16.mxu0 0
      %2379 = vmatpush1.bf16.msra.mxu0 0
      %2380 = vmatprep.subr.bf16.mxu0 0
      %2381 = vmatpush1.bf16.msra.mxu0 0
      %2382 = vmatprep.mubr.bf16.mxu0 %v2260
      %2383 = vmatmul.mubr.bf16.gmra.mrb[0].mxu0 %v1929
      %v2384 = vpop.f32.mrb[0].mxu0
      %v2385 = vadd.f32 %v2312, %v2384
      %v2386 = vpop.f32.mrb[0].mxu0
      %v2387 = vpop.f32.mrb[0].mxu0
      %v2388 = vadd.f32 %v2315, %v2387
      %v2389 = vpop.f32.mrb[0].mxu0
      %2390 = vmatprep.mubr.bf16.mxu0 %v2263
      %2391 = vmatmul.mubr.bf16.gmra.mrb[0].mxu0 %v1973
      %v2392 = vpop.f32.mrb[0].mxu0
      %v2393 = vadd.f32 %v2320, %v2392
      %v2394 = vpop.f32.mrb[0].mxu0
      %v2395 = vpop.f32.mrb[0].mxu0
      %v2396 = vadd.f32 %v2323, %v2395
      %v2397 = vpop.f32.mrb[0].mxu0
      %2398 = vmatprep.mubr.bf16.mxu0 %v2266
      %2399 = vmatmul.mubr.bf16.gmra.mrb[0].mxu0 %v2009
      %v2400 = vpop.f32.mrb[0].mxu0
      %v2401 = vadd.f32 %v2328, %v2400
      %v2402 = vpop.f32.mrb[0].mxu0
      %v2403 = vpop.f32.mrb[0].mxu0
      %v2404 = vadd.f32 %v2331, %v2403
      %v2405 = vpop.f32.mrb[0].mxu0
      %2406 = vmatprep.mubr.bf16.mxu0 %v2269
      %2407 = vmatmul.mubr.bf16.gmra.mrb[0].mxu0 %v2045
      %v2408 = vpop.f32.mrb[0].mxu0
      %v2409 = vadd.f32 %v2336, %v2408
      %v2410 = vpop.f32.mrb[0].mxu0
      %v2411 = vpop.f32.mrb[0].mxu0
      %v2412 = vadd.f32 %v2339, %v2411
      %v2413 = vpop.f32.mrb[0].mxu0
      %2414 = vmatprep.mubr.bf16.mxu0 %v2272
      %2415 = vmatmul.mubr.bf16.gmra.mrb[0].mxu0 %v2081
      %v2416 = vpop.f32.mrb[0].mxu0
      %v2417 = vadd.f32 %v2344, %v2416
      %v2418 = vpop.f32.mrb[0].mxu0
      %v2419 = vpop.f32.mrb[0].mxu0
      %v2420 = vadd.f32 %v2347, %v2419
      %v2421 = vpop.f32.mrb[0].mxu0
      %2422 = vdwg.mxu0
      %s2423 = scalar_lea.vmem %s1, 1020
      %v2424 = vld [vmem:[%s2423] sm:$0xf]
      %v2425 = vld [vmem:[%s2423 + $0x4] sm:$0xf]
      %v2426 = vld [vmem:[%s2423 + $0x8] sm:$0xf]
      %v2427 = vld [vmem:[%s2423 + $0xc] sm:$0xf]
      %v2428 = vld [vmem:[%s2423 + $0x10] sm:$0xf]
      %v2429 = vld [vmem:[%s2423 + $0x14] sm:$0xf]
      %v2430 = vld [vmem:[%s2423 + $0x18] sm:$0xf]
      %v2431 = vld [vmem:[%s2423 + $0x1c] sm:$0xf]
      %v2432 = vld [vmem:[%s2423 + $0x20] sm:$0xf]
      %v2433 = vld [vmem:[%s2423 + $0x24] sm:$0xf]
      %v2434 = vld [vmem:[%s2423 + $0x28] sm:$0xf]
      %v2435 = vld [vmem:[%s2423 + $0x2c] sm:$0xf]
      %v2436 = vld [vmem:[%s2423 + $0x30] sm:$0xf]
      %v2437 = vld [vmem:[%s2423 + $0x34] sm:$0xf]
      %v2438 = vld [vmem:[%s2423 + $0x38] sm:$0xf]
      %v2439 = vld [vmem:[%s2423 + $0x3c] sm:$0xf]
      %v2440 = vld [vmem:[%s2423 + $0x40] sm:$0xf]
      %v2441 = vld [vmem:[%s2423 + $0x44] sm:$0xf]
      %v2442 = vld [vmem:[%s2423 + $0x48] sm:$0xf]
      %v2443 = vld [vmem:[%s2423 + $0x4c] sm:$0xf]
      %v2444 = vld [vmem:[%s2423 + $0x50] sm:$0xf]
      %v2445 = vld [vmem:[%s2423 + $0x54] sm:$0xf]
      %v2446 = vld [vmem:[%s2423 + $0x58] sm:$0xf]
      %v2447 = vld [vmem:[%s2423 + $0x5c] sm:$0xf]
      %v2448 = vld [vmem:[%s2423 + $0x60] sm:$0xf]
      %v2449 = vld [vmem:[%s2423 + $0x64] sm:$0xf]
      %v2450 = vld [vmem:[%s2423 + $0x68] sm:$0xf]
      %v2451 = vld [vmem:[%s2423 + $0x6c] sm:$0xf]
      %v2452 = vld [vmem:[%s2423 + $0x70] sm:$0xf]
      %v2453 = vld [vmem:[%s2423 + $0x74] sm:$0xf]
      %v2454 = vld [vmem:[%s2423 + $0x78] sm:$0xf]
      %v2455 = vld [vmem:[%s2423 + $0x7c] sm:$0xf]
      %v2456 = vld [vmem:[%s2423 + $0x80] sm:$0xf]
      %v2457 = vld [vmem:[%s2423 + $0x84] sm:$0xf]
      %v2458 = vld [vmem:[%s2423 + $0x88] sm:$0xf]
      %v2459 = vld [vmem:[%s2423 + $0x8c] sm:$0xf]
      %v2460 = vld [vmem:[%s2423 + $0x90] sm:$0xf]
      %v2461 = vld [vmem:[%s2423 + $0x94] sm:$0xf]
      %v2462 = vld [vmem:[%s2423 + $0x98] sm:$0xf]
      %v2463 = vld [vmem:[%s2423 + $0x9c] sm:$0xf]
      %v2464 = vld [vmem:[%s2423 + $0xa0] sm:$0xf]
      %v2465 = vld [vmem:[%s2423 + $0xa4] sm:$0xf]
      %v2466 = vld [vmem:[%s2423 + $0xa8] sm:$0xf]
      %v2467 = vld [vmem:[%s2423 + $0xac] sm:$0xf]
      %v2468 = vld [vmem:[%s2423 + $0xb0] sm:$0xf]
      %v2469 = vld [vmem:[%s2423 + $0xb4] sm:$0xf]
      %v2470 = vld [vmem:[%s2423 + $0xb8] sm:$0xf]
      %v2471 = vld [vmem:[%s2423 + $0xbc] sm:$0xf]
      %v2472 = vld [vmem:[%s2423 + $0xc0] sm:$0xf]
      %v2473 = vld [vmem:[%s2423 + $0xc4] sm:$0xf]
      %v2474 = vld [vmem:[%s2423 + $0xc8] sm:$0xf]
      %vm2475 = vcmask 1045504
      %v2476 = vrot.slane %v1426, 2
      %v2477 = vrot.slane %v1430, 2
      %v2478 = vsel %vm2475, %v2476, %v2477
      %v2479 = vrot.slane %v1427, 2
      %v2480 = vrot.slane %v1431, 2
      %v2481 = vsel %vm2475, %v2479, %v2480
      %v2482 = vrot.slane %v1428, 2
      %v2483 = vrot.slane %v1432, 2
      %v2484 = vsel %vm2475, %v2482, %v2483
      %v2485 = vrot.slane %v1429, 2
      %v2486 = vrot.slane %v1433, 2
      %v2487 = vsel %vm2475, %v2485, %v2486
      %v2488 = vrot.slane %v1434, 2
      %v2489 = vsel %vm2475, %v2477, %v2488
      %v2490 = vrot.slane %v1435, 2
      %v2491 = vsel %vm2475, %v2480, %v2490
      %v2492 = vrot.slane %v1436, 2
      %v2493 = vsel %vm2475, %v2483, %v2492
      %v2494 = vrot.slane %v1437, 2
      %v2495 = vsel %vm2475, %v2486, %v2494
      %v2496 = vrot.slane %v1438, 2
      %v2497 = vsel %vm2475, %v2488, %v2496
      %v2498 = vrot.slane %v1439, 2
      %v2499 = vsel %vm2475, %v2490, %v2498
      %v2500 = vrot.slane %v1440, 2
      %v2501 = vsel %vm2475, %v2492, %v2500
      %v2502 = vrot.slane %v1441, 2
      %v2503 = vsel %vm2475, %v2494, %v2502
      %v2504 = vrot.slane %v1442, 2
      %v2505 = vsel %vm2475, %v2496, %v2504
      %v2506 = vrot.slane %v1443, 2
      %v2507 = vsel %vm2475, %v2498, %v2506
      %v2508 = vrot.slane %v1444, 2
      %v2509 = vsel %vm2475, %v2500, %v2508
      %v2510 = vrot.slane %v1445, 2
      %v2511 = vsel %vm2475, %v2502, %v2510
      %v2512 = vrot.slane %v1446, 2
      %v2513 = vsel %vm2475, %v2504, %v2512
      %v2514 = vrot.slane %v1447, 2
      %v2515 = vsel %vm2475, %v2506, %v2514
      %v2516 = vrot.slane %v1448, 2
      %v2517 = vsel %vm2475, %v2508, %v2516
      %v2518 = vrot.slane %v1449, 2
      %v2519 = vsel %vm2475, %v2510, %v2518
      %v2586 = vunpack.c.l.b16 %v2424
      %v2587 = vunpack.c.l.b16 %v2425
      %v2588 = vunpack.c.l.b16 %v2426
      %v2589 = vunpack.c.l.b16 %v2427
      %v2590 = vunpack.c.l.b16 %v2428
      %v2591 = vunpack.c.l.b16 %v2429
      %v2592 = vunpack.c.l.b16 %v2430
      %v2593 = vunpack.c.l.b16 %v2431
      %v2594 = vunpack.c.l.b16 %v2432
      %v2595 = vunpack.c.l.b16 %v2433
      %v2596 = vunpack.c.l.b16 %v2434
      %v2597 = vunpack.c.l.b16 %v2435
      %v2598 = vunpack.c.l.b16 %v2436
      %v2599 = vunpack.c.l.b16 %v2437
      %v2600 = vunpack.c.l.b16 %v2438
      %v2601 = vunpack.c.l.b16 %v2439
      %v2602 = vunpack.c.l.b16 %v2440
      %v2603 = vunpack.c.l.b16 %v2441
      %v2604 = vunpack.c.l.b16 %v2442
      %v2605 = vunpack.c.l.b16 %v2443
      %v2606 = vunpack.c.l.b16 %v2444
      %v2607 = vunpack.c.l.b16 %v2445
      %v2608 = vunpack.c.l.b16 %v2446
      %v2609 = vunpack.c.l.b16 %v2447
      %v2610 = vunpack.c.l.b16 %v2448
      %v2611 = vunpack.c.l.b16 %v2449
      %v2612 = vunpack.c.l.b16 %v2450
      %v2613 = vunpack.c.l.b16 %v2451
      %v2614 = vunpack.c.l.b16 %v2452
      %v2615 = vunpack.c.l.b16 %v2453
      %v2616 = vunpack.c.l.b16 %v2454
      %v2617 = vunpack.c.l.b16 %v2455
      %v2618 = vunpack.c.l.b16 %v2456
      %v2619 = vunpack.c.l.b16 %v2457
      %v2620 = vunpack.c.l.b16 %v2458
      %v2621 = vunpack.c.l.b16 %v2459
      %v2622 = vunpack.c.l.b16 %v2460
      %v2623 = vunpack.c.l.b16 %v2461
      %v2624 = vunpack.c.l.b16 %v2462
      %v2625 = vunpack.c.l.b16 %v2463
      %v2626 = vunpack.c.l.b16 %v2464
      %v2627 = vunpack.c.l.b16 %v2465
      %v2628 = vunpack.c.l.b16 %v2466
      %v2629 = vunpack.c.l.b16 %v2467
      %v2630 = vunpack.c.l.b16 %v2468
      %v2631 = vunpack.c.l.b16 %v2469
      %v2632 = vunpack.c.l.b16 %v2470
      %v2633 = vunpack.c.l.b16 %v2471
      %v2634 = vunpack.c.l.b16 %v2472
      %v2635 = vunpack.c.l.b16 %v2473
      %v2636 = vunpack.c.l.b16 %v2474
      %v2637 = vpack.c.b16 %v2587, %v2586
      %v2638 = vpack.c.b16 %v2589, %v2588
      %v2639 = vpack.c.b16 %v2591, %v2590
      %v2640 = vpack.c.b16 %v2593, %v2592
      %v2641 = vpack.c.b16 %v2595, %v2594
      %v2642 = vpack.c.b16 %v2597, %v2596
      %v2643 = vpack.c.b16 %v2599, %v2598
      %v2644 = vpack.c.b16 %v2601, %v2600
      %v2645 = vpack.c.b16 %v2603, %v2602
      %v2646 = vpack.c.b16 %v2605, %v2604
      %v2647 = vpack.c.b16 %v2607, %v2606
      %v2648 = vpack.c.b16 %v2609, %v2608
      %v2649 = vpack.c.b16 %v2611, %v2610
      %v2650 = vpack.c.b16 %v2613, %v2612
      %v2651 = vpack.c.b16 %v2615, %v2614
      %v2652 = vpack.c.b16 %v2617, %v2616
      %v2653 = vpack.c.b16 %v2619, %v2618
      %v2654 = vpack.c.b16 %v2621, %v2620
      %v2655 = vpack.c.b16 %v2623, %v2622
      %v2656 = vpack.c.b16 %v2625, %v2624
      %v2657 = vpack.c.b16 %v2627, %v2626
      %v2658 = vpack.c.b16 %v2629, %v2628
      %v2659 = vpack.c.b16 %v2631, %v2630
      %v2660 = vpack.c.b16 %v2633, %v2632
      %v2661 = vpack.c.b16 %v2635, %v2634
      %v2662 = vpack.c.b16 %v2636, %v2636
      %v2689 = vsel %vm773, %v2487, 0
      %v2692 = vsel %vm773, %v2495, 0
      %v2695 = vsel %vm773, %v2503, 0
      %v2698 = vsel %vm773, %v2511, 0
      %v2701 = vsel %vm773, %v2519, 0
      %v2704 = vsel %vm789, %v2662, 0
      %2706 = vmatprep.subr.bf16.mxu0 0
      %2707 = vmatpush1.bf16.msra.mxu0 %v2637
      %2708 = vmatprep.subr.bf16.mxu0 0
      %2709 = vmatpush1.bf16.msra.mxu0 %v2638
      %2710 = vmatprep.subr.bf16.mxu0 0
      %2711 = vmatpush1.bf16.msra.mxu0 %v2639
      %2712 = vmatprep.subr.bf16.mxu0 0
      %2713 = vmatpush1.bf16.msra.mxu0 %v2640
      %2714 = vmatprep.subr.bf16.mxu0 0
      %2715 = vmatpush1.bf16.msra.mxu0 %v2641
      %2716 = vmatprep.subr.bf16.mxu0 0
      %2717 = vmatpush1.bf16.msra.mxu0 %v2642
      %2718 = vmatprep.subr.bf16.mxu0 0
      %2719 = vmatpush1.bf16.msra.mxu0 %v2643
      %2720 = vmatprep.subr.bf16.mxu0 0
      %2721 = vmatpush1.bf16.msra.mxu0 %v2644
      %2722 = vmatprep.subr.bf16.mxu0 0
      %2723 = vmatpush1.bf16.msra.mxu0 %v2645
      %2724 = vmatprep.subr.bf16.mxu0 0
      %2725 = vmatpush1.bf16.msra.mxu0 %v2646
      %2726 = vmatprep.subr.bf16.mxu0 0
      %2727 = vmatpush1.bf16.msra.mxu0 %v2647
      %2728 = vmatprep.subr.bf16.mxu0 0
      %2729 = vmatpush1.bf16.msra.mxu0 %v2648
      %2730 = vmatprep.subr.bf16.mxu0 0
      %2731 = vmatpush1.bf16.msra.mxu0 %v2649
      %2732 = vmatprep.subr.bf16.mxu0 0
      %2733 = vmatpush1.bf16.msra.mxu0 %v2650
      %2734 = vmatprep.subr.bf16.mxu0 0
      %2735 = vmatpush1.bf16.msra.mxu0 %v2651
      %2736 = vmatprep.subr.bf16.mxu0 0
      %2737 = vmatpush1.bf16.msra.mxu0 %v2652
      %2738 = vmatprep.mubr.bf16.mxu0 %v2481
      %2739 = vmatmul.mubr.bf16.gmra.mrb[0].mxu0 %v2478
      %v2740 = vpop.f32.mrb[0].mxu0
      %v2741 = vadd.f32 0.0, %v2740
      %v2742 = vpop.f32.mrb[0].mxu0
      %v2743 = vpop.f32.mrb[0].mxu0
      %v2744 = vadd.f32 0.0, %v2743
      %v2745 = vpop.f32.mrb[0].mxu0
      %2746 = vmatprep.mubr.bf16.mxu0 %v2491
      %2747 = vmatmul.mubr.bf16.gmra.mrb[0].mxu0 %v2489
      %v2748 = vpop.f32.mrb[0].mxu0
      %v2749 = vadd.f32 0.0, %v2748
      %v2750 = vpop.f32.mrb[0].mxu0
      %v2751 = vpop.f32.mrb[0].mxu0
      %v2752 = vadd.f32 0.0, %v2751
      %v2753 = vpop.f32.mrb[0].mxu0
      %2754 = vmatprep.mubr.bf16.mxu0 %v2499
      %2755 = vmatmul.mubr.bf16.gmra.mrb[0].mxu0 %v2497
      %v2756 = vpop.f32.mrb[0].mxu0
      %v2757 = vadd.f32 0.0, %v2756
      %v2758 = vpop.f32.mrb[0].mxu0
      %v2759 = vpop.f32.mrb[0].mxu0
      %v2760 = vadd.f32 0.0, %v2759
      %v2761 = vpop.f32.mrb[0].mxu0
      %2762 = vmatprep.mubr.bf16.mxu0 %v2507
      %2763 = vmatmul.mubr.bf16.gmra.mrb[0].mxu0 %v2505
      %v2764 = vpop.f32.mrb[0].mxu0
      %v2765 = vadd.f32 0.0, %v2764
      %v2766 = vpop.f32.mrb[0].mxu0
      %v2767 = vpop.f32.mrb[0].mxu0
      %v2768 = vadd.f32 0.0, %v2767
      %v2769 = vpop.f32.mrb[0].mxu0
      %2770 = vmatprep.mubr.bf16.mxu0 %v2515
      %2771 = vmatmul.mubr.bf16.gmra.mrb[0].mxu0 %v2513
      %v2772 = vpop.f32.mrb[0].mxu0
      %v2773 = vadd.f32 0.0, %v2772
      %v2774 = vpop.f32.mrb[0].mxu0
      %v2775 = vpop.f32.mrb[0].mxu0
      %v2776 = vadd.f32 0.0, %v2775
      %v2777 = vpop.f32.mrb[0].mxu0
      %2778 = vdwg.mxu0
      %2779 = vmatprep.subr.bf16.mxu0 0
      %2780 = vmatpush1.bf16.msra.mxu0 %v2653
      %2781 = vmatprep.subr.bf16.mxu0 0
      %2782 = vmatpush1.bf16.msra.mxu0 %v2654
      %2783 = vmatprep.subr.bf16.mxu0 0
      %2784 = vmatpush1.bf16.msra.mxu0 %v2655
      %2785 = vmatprep.subr.bf16.mxu0 0
      %2786 = vmatpush1.bf16.msra.mxu0 %v2656
      %2787 = vmatprep.subr.bf16.mxu0 0
      %2788 = vmatpush1.bf16.msra.mxu0 %v2657
      %2789 = vmatprep.subr.bf16.mxu0 0
      %2790 = vmatpush1.bf16.msra.mxu0 %v2658
      %2791 = vmatprep.subr.bf16.mxu0 0
      %2792 = vmatpush1.bf16.msra.mxu0 %v2659
      %2793 = vmatprep.subr.bf16.mxu0 0
      %2794 = vmatpush1.bf16.msra.mxu0 %v2660
      %2795 = vmatprep.subr.bf16.mxu0 0
      %2796 = vmatpush1.bf16.msra.mxu0 %v2661
      %2797 = vmatprep.subr.bf16.mxu0 0
      %2798 = vmatpush1.bf16.msra.mxu0 %v2704
      %2799 = vmatprep.subr.bf16.mxu0 0
      %2800 = vmatpush1.bf16.msra.mxu0 0
      %2801 = vmatprep.subr.bf16.mxu0 0
      %2802 = vmatpush1.bf16.msra.mxu0 0
      %2803 = vmatprep.subr.bf16.mxu0 0
      %2804 = vmatpush1.bf16.msra.mxu0 0
      %2805 = vmatprep.subr.bf16.mxu0 0
      %2806 = vmatpush1.bf16.msra.mxu0 0
      %2807 = vmatprep.subr.bf16.mxu0 0
      %2808 = vmatpush1.bf16.msra.mxu0 0
      %2809 = vmatprep.subr.bf16.mxu0 0
      %2810 = vmatpush1.bf16.msra.mxu0 0
      %2811 = vmatprep.mubr.bf16.mxu0 %v2689
      %2812 = vmatmul.mubr.bf16.gmra.mrb[0].mxu0 %v2484
      %v2813 = vpop.f32.mrb[0].mxu0
      %v2814 = vadd.f32 %v2741, %v2813
      %v2815 = vpop.f32.mrb[0].mxu0
      %v2816 = vpop.f32.mrb[0].mxu0
      %v2817 = vadd.f32 %v2744, %v2816
      %v2818 = vpop.f32.mrb[0].mxu0
      %2819 = vmatprep.mubr.bf16.mxu0 %v2692
      %2820 = vmatmul.mubr.bf16.gmra.mrb[0].mxu0 %v2493
      %v2821 = vpop.f32.mrb[0].mxu0
      %v2822 = vadd.f32 %v2749, %v2821
      %v2823 = vpop.f32.mrb[0].mxu0
      %v2824 = vpop.f32.mrb[0].mxu0
      %v2825 = vadd.f32 %v2752, %v2824
      %v2826 = vpop.f32.mrb[0].mxu0
      %2827 = vmatprep.mubr.bf16.mxu0 %v2695
      %2828 = vmatmul.mubr.bf16.gmra.mrb[0].mxu0 %v2501
      %v2829 = vpop.f32.mrb[0].mxu0
      %v2830 = vadd.f32 %v2757, %v2829
      %v2831 = vpop.f32.mrb[0].mxu0
      %v2832 = vpop.f32.mrb[0].mxu0
      %v2833 = vadd.f32 %v2760, %v2832
      %v2834 = vpop.f32.mrb[0].mxu0
      %2835 = vmatprep.mubr.bf16.mxu0 %v2698
      %2836 = vmatmul.mubr.bf16.gmra.mrb[0].mxu0 %v2509
      %v2837 = vpop.f32.mrb[0].mxu0
      %v2838 = vadd.f32 %v2765, %v2837
      %v2839 = vpop.f32.mrb[0].mxu0
      %v2840 = vpop.f32.mrb[0].mxu0
      %v2841 = vadd.f32 %v2768, %v2840
      %v2842 = vpop.f32.mrb[0].mxu0
      %2843 = vmatprep.mubr.bf16.mxu0 %v2701
      %2844 = vmatmul.mubr.bf16.gmra.mrb[0].mxu0 %v2517
      %v2845 = vpop.f32.mrb[0].mxu0
      %v2846 = vadd.f32 %v2773, %v2845
      %v2847 = vpop.f32.mrb[0].mxu0
      %v2848 = vpop.f32.mrb[0].mxu0
      %v2849 = vadd.f32 %v2776, %v2848
      %v2850 = vpop.f32.mrb[0].mxu0
      %2851 = vdwg.mxu0
      %s2852 = scalar_lea.vmem %s1, 1224
      %v2853 = vld [vmem:[%s2852] sm:$0xf]
      %v2854 = vld [vmem:[%s2852 + $0x4] sm:$0xf]
      %v2855 = vld [vmem:[%s2852 + $0x8] sm:$0xf]
      %v2856 = vld [vmem:[%s2852 + $0xc] sm:$0xf]
      %v2857 = vld [vmem:[%s2852 + $0x10] sm:$0xf]
      %v2858 = vld [vmem:[%s2852 + $0x14] sm:$0xf]
      %v2859 = vld [vmem:[%s2852 + $0x18] sm:$0xf]
      %v2860 = vld [vmem:[%s2852 + $0x1c] sm:$0xf]
      %v2861 = vld [vmem:[%s2852 + $0x20] sm:$0xf]
      %v2862 = vld [vmem:[%s2852 + $0x24] sm:$0xf]
      %v2863 = vld [vmem:[%s2852 + $0x28] sm:$0xf]
      %v2864 = vld [vmem:[%s2852 + $0x2c] sm:$0xf]
      %v2865 = vld [vmem:[%s2852 + $0x30] sm:$0xf]
      %v2866 = vld [vmem:[%s2852 + $0x34] sm:$0xf]
      %v2867 = vld [vmem:[%s2852 + $0x38] sm:$0xf]
      %v2868 = vld [vmem:[%s2852 + $0x3c] sm:$0xf]
      %v2869 = vld [vmem:[%s2852 + $0x40] sm:$0xf]
      %v2870 = vld [vmem:[%s2852 + $0x44] sm:$0xf]
      %v2871 = vld [vmem:[%s2852 + $0x48] sm:$0xf]
      %v2872 = vld [vmem:[%s2852 + $0x4c] sm:$0xf]
      %v2873 = vld [vmem:[%s2852 + $0x50] sm:$0xf]
      %v2874 = vld [vmem:[%s2852 + $0x54] sm:$0xf]
      %v2875 = vld [vmem:[%s2852 + $0x58] sm:$0xf]
      %v2876 = vld [vmem:[%s2852 + $0x5c] sm:$0xf]
      %v2877 = vld [vmem:[%s2852 + $0x60] sm:$0xf]
      %v2878 = vld [vmem:[%s2852 + $0x64] sm:$0xf]
      %v2879 = vld [vmem:[%s2852 + $0x68] sm:$0xf]
      %v2880 = vld [vmem:[%s2852 + $0x6c] sm:$0xf]
      %v2881 = vld [vmem:[%s2852 + $0x70] sm:$0xf]
      %v2882 = vld [vmem:[%s2852 + $0x74] sm:$0xf]
      %v2883 = vld [vmem:[%s2852 + $0x78] sm:$0xf]
      %v2884 = vld [vmem:[%s2852 + $0x7c] sm:$0xf]
      %v2885 = vld [vmem:[%s2852 + $0x80] sm:$0xf]
      %v2886 = vld [vmem:[%s2852 + $0x84] sm:$0xf]
      %v2887 = vld [vmem:[%s2852 + $0x88] sm:$0xf]
      %v2888 = vld [vmem:[%s2852 + $0x8c] sm:$0xf]
      %v2889 = vld [vmem:[%s2852 + $0x90] sm:$0xf]
      %v2890 = vld [vmem:[%s2852 + $0x94] sm:$0xf]
      %v2891 = vld [vmem:[%s2852 + $0x98] sm:$0xf]
      %v2892 = vld [vmem:[%s2852 + $0x9c] sm:$0xf]
      %v2893 = vld [vmem:[%s2852 + $0xa0] sm:$0xf]
      %v2894 = vld [vmem:[%s2852 + $0xa4] sm:$0xf]
      %v2895 = vld [vmem:[%s2852 + $0xa8] sm:$0xf]
      %v2896 = vld [vmem:[%s2852 + $0xac] sm:$0xf]
      %v2897 = vld [vmem:[%s2852 + $0xb0] sm:$0xf]
      %v2898 = vld [vmem:[%s2852 + $0xb4] sm:$0xf]
      %v2899 = vld [vmem:[%s2852 + $0xb8] sm:$0xf]
      %v2900 = vld [vmem:[%s2852 + $0xbc] sm:$0xf]
      %v2901 = vld [vmem:[%s2852 + $0xc0] sm:$0xf]
      %v2902 = vld [vmem:[%s2852 + $0xc4] sm:$0xf]
      %v2903 = vld [vmem:[%s2852 + $0xc8] sm:$0xf]
      %v2906 = vunpack.c.l.b16 %v233
      %v2907 = vunpack.c.h.b16 %v233
      %v2908 = vunpack.c.l.b16 %v234
      %v2909 = vunpack.c.h.b16 %v234
      %v2910 = vpack.c.b16 %v1422, %v400
      %v2911 = vpack.c.b16 %v1423, %v401
      %v2912 = vpack.c.b16 %v1424, %v402
      %v2913 = vpack.c.b16 %v1425, %v403
      %v2914 = vpack.c.b16 %v2906, %v2906
      %v2915 = vpack.c.b16 %v2907, %v2907
      %v2916 = vpack.c.b16 %v2908, %v2908
      %v2917 = vpack.c.b16 %v2909, %v2909
      %v2918 = vrot.slane %v408, 2
      %v2919 = vrot.slane %v412, 2
      %v2920 = vsel %vm2475, %v2918, %v2919
      %v2921 = vrot.slane %v409, 2
      %v2922 = vrot.slane %v413, 2
      %v2923 = vsel %vm2475, %v2921, %v2922
      %v2924 = vrot.slane %v410, 2
      %v2925 = vrot.slane %v414, 2
      %v2926 = vsel %vm2475, %v2924, %v2925
      %v2927 = vrot.slane %v411, 2
      %v2928 = vrot.slane %v415, 2
      %v2929 = vsel %vm2475, %v2927, %v2928
      %v2930 = vrot.slane %v416, 2
      %v2931 = vsel %vm2475, %v2919, %v2930
      %v2932 = vrot.slane %v417, 2
      %v2933 = vsel %vm2475, %v2922, %v2932
      %v2934 = vrot.slane %v418, 2
      %v2935 = vsel %vm2475, %v2925, %v2934
      %v2936 = vrot.slane %v419, 2
      %v2937 = vsel %vm2475, %v2928, %v2936
      %v2938 = vrot.slane %v420, 2
      %v2939 = vsel %vm2475, %v2930, %v2938
      %v2940 = vrot.slane %v421, 2
      %v2941 = vsel %vm2475, %v2932, %v2940
      %v2942 = vrot.slane %v422, 2
      %v2943 = vsel %vm2475, %v2934, %v2942
      %v2944 = vrot.slane %v423, 2
      %v2945 = vsel %vm2475, %v2936, %v2944
      %v2946 = vrot.slane %v2910, 2
      %v2947 = vsel %vm2475, %v2938, %v2946
      %v2948 = vrot.slane %v2911, 2
      %v2949 = vsel %vm2475, %v2940, %v2948
      %v2950 = vrot.slane %v2912, 2
      %v2951 = vsel %vm2475, %v2942, %v2950
      %v2952 = vrot.slane %v2913, 2
      %v2953 = vsel %vm2475, %v2944, %v2952
      %v2954 = vrot.slane %v2914, 2
      %v2955 = vsel %vm2475, %v2946, %v2954
      %v2956 = vrot.slane %v2915, 2
      %v2957 = vsel %vm2475, %v2948, %v2956
      %v2958 = vrot.slane %v2916, 2
      %v2959 = vsel %vm2475, %v2950, %v2958
      %v2960 = vrot.slane %v2917, 2
      %v2961 = vsel %vm2475, %v2952, %v2960
      %v3028 = vunpack.c.l.b16 %v2853
      %v3029 = vunpack.c.l.b16 %v2854
      %v3030 = vunpack.c.l.b16 %v2855
      %v3031 = vunpack.c.l.b16 %v2856
      %v3032 = vunpack.c.l.b16 %v2857
      %v3033 = vunpack.c.l.b16 %v2858
      %v3034 = vunpack.c.l.b16 %v2859
      %v3035 = vunpack.c.l.b16 %v2860
      %v3036 = vunpack.c.l.b16 %v2861
      %v3037 = vunpack.c.l.b16 %v2862
      %v3038 = vunpack.c.l.b16 %v2863
      %v3039 = vunpack.c.l.b16 %v2864
      %v3040 = vunpack.c.l.b16 %v2865
      %v3041 = vunpack.c.l.b16 %v2866
      %v3042 = vunpack.c.l.b16 %v2867
      %v3043 = vunpack.c.l.b16 %v2868
      %v3044 = vunpack.c.l.b16 %v2869
      %v3045 = vunpack.c.l.b16 %v2870
      %v3046 = vunpack.c.l.b16 %v2871
      %v3047 = vunpack.c.l.b16 %v2872
      %v3048 = vunpack.c.l.b16 %v2873
      %v3049 = vunpack.c.l.b16 %v2874
      %v3050 = vunpack.c.l.b16 %v2875
      %v3051 = vunpack.c.l.b16 %v2876
      %v3052 = vunpack.c.l.b16 %v2877
      %v3053 = vunpack.c.l.b16 %v2878
      %v3054 = vunpack.c.l.b16 %v2879
      %v3055 = vunpack.c.l.b16 %v2880
      %v3056 = vunpack.c.l.b16 %v2881
      %v3057 = vunpack.c.l.b16 %v2882
      %v3058 = vunpack.c.l.b16 %v2883
      %v3059 = vunpack.c.l.b16 %v2884
      %v3060 = vunpack.c.l.b16 %v2885
      %v3061 = vunpack.c.l.b16 %v2886
      %v3062 = vunpack.c.l.b16 %v2887
      %v3063 = vunpack.c.l.b16 %v2888
      %v3064 = vunpack.c.l.b16 %v2889
      %v3065 = vunpack.c.l.b16 %v2890
      %v3066 = vunpack.c.l.b16 %v2891
      %v3067 = vunpack.c.l.b16 %v2892
      %v3068 = vunpack.c.l.b16 %v2893
      %v3069 = vunpack.c.l.b16 %v2894
      %v3070 = vunpack.c.l.b16 %v2895
      %v3071 = vunpack.c.l.b16 %v2896
      %v3072 = vunpack.c.l.b16 %v2897
      %v3073 = vunpack.c.l.b16 %v2898
      %v3074 = vunpack.c.l.b16 %v2899
      %v3075 = vunpack.c.l.b16 %v2900
      %v3076 = vunpack.c.l.b16 %v2901
      %v3077 = vunpack.c.l.b16 %v2902
      %v3078 = vunpack.c.l.b16 %v2903
      %v3079 = vpack.c.b16 %v3029, %v3028
      %v3080 = vpack.c.b16 %v3031, %v3030
      %v3081 = vpack.c.b16 %v3033, %v3032
      %v3082 = vpack.c.b16 %v3035, %v3034
      %v3083 = vpack.c.b16 %v3037, %v3036
      %v3084 = vpack.c.b16 %v3039, %v3038
      %v3085 = vpack.c.b16 %v3041, %v3040
      %v3086 = vpack.c.b16 %v3043, %v3042
      %v3087 = vpack.c.b16 %v3045, %v3044
      %v3088 = vpack.c.b16 %v3047, %v3046
      %v3089 = vpack.c.b16 %v3049, %v3048
      %v3090 = vpack.c.b16 %v3051, %v3050
      %v3091 = vpack.c.b16 %v3053, %v3052
      %v3092 = vpack.c.b16 %v3055, %v3054
      %v3093 = vpack.c.b16 %v3057, %v3056
      %v3094 = vpack.c.b16 %v3059, %v3058
      %v3095 = vpack.c.b16 %v3061, %v3060
      %v3096 = vpack.c.b16 %v3063, %v3062
      %v3097 = vpack.c.b16 %v3065, %v3064
      %v3098 = vpack.c.b16 %v3067, %v3066
      %v3099 = vpack.c.b16 %v3069, %v3068
      %v3100 = vpack.c.b16 %v3071, %v3070
      %v3101 = vpack.c.b16 %v3073, %v3072
      %v3102 = vpack.c.b16 %v3075, %v3074
      %v3103 = vpack.c.b16 %v3077, %v3076
      %v3104 = vpack.c.b16 %v3078, %v3078
      %v3131 = vsel %vm773, %v2929, 0
      %v3134 = vsel %vm773, %v2937, 0
      %v3137 = vsel %vm773, %v2945, 0
      %v3140 = vsel %vm773, %v2953, 0
      %v3143 = vsel %vm773, %v2961, 0
      %v3146 = vsel %vm789, %v3104, 0
      %3148 = vmatprep.subr.bf16.mxu0 0
      %3149 = vmatpush1.bf16.msra.mxu0 %v3079
      %3150 = vmatprep.subr.bf16.mxu0 0
      %3151 = vmatpush1.bf16.msra.mxu0 %v3080
      %3152 = vmatprep.subr.bf16.mxu0 0
      %3153 = vmatpush1.bf16.msra.mxu0 %v3081
      %3154 = vmatprep.subr.bf16.mxu0 0
      %3155 = vmatpush1.bf16.msra.mxu0 %v3082
      %3156 = vmatprep.subr.bf16.mxu0 0
      %3157 = vmatpush1.bf16.msra.mxu0 %v3083
      %3158 = vmatprep.subr.bf16.mxu0 0
      %3159 = vmatpush1.bf16.msra.mxu0 %v3084
      %3160 = vmatprep.subr.bf16.mxu0 0
      %3161 = vmatpush1.bf16.msra.mxu0 %v3085
      %3162 = vmatprep.subr.bf16.mxu0 0
      %3163 = vmatpush1.bf16.msra.mxu0 %v3086
      %3164 = vmatprep.subr.bf16.mxu0 0
      %3165 = vmatpush1.bf16.msra.mxu0 %v3087
      %3166 = vmatprep.subr.bf16.mxu0 0
      %3167 = vmatpush1.bf16.msra.mxu0 %v3088
      %3168 = vmatprep.subr.bf16.mxu0 0
      %3169 = vmatpush1.bf16.msra.mxu0 %v3089
      %3170 = vmatprep.subr.bf16.mxu0 0
      %3171 = vmatpush1.bf16.msra.mxu0 %v3090
      %3172 = vmatprep.subr.bf16.mxu0 0
      %3173 = vmatpush1.bf16.msra.mxu0 %v3091
      %3174 = vmatprep.subr.bf16.mxu0 0
      %3175 = vmatpush1.bf16.msra.mxu0 %v3092
      %3176 = vmatprep.subr.bf16.mxu0 0
      %3177 = vmatpush1.bf16.msra.mxu0 %v3093
      %3178 = vmatprep.subr.bf16.mxu0 0
      %3179 = vmatpush1.bf16.msra.mxu0 %v3094
      %3180 = vmatprep.mubr.bf16.mxu0 %v2923
      %3181 = vmatmul.mubr.bf16.gmra.mrb[0].mxu0 %v2920
      %v3182 = vpop.f32.mrb[0].mxu0
      %v3183 = vadd.f32 0.0, %v3182
      %v3184 = vpop.f32.mrb[0].mxu0
      %v3185 = vpop.f32.mrb[0].mxu0
      %v3186 = vadd.f32 0.0, %v3185
      %v3187 = vpop.f32.mrb[0].mxu0
      %3188 = vmatprep.mubr.bf16.mxu0 %v2933
      %3189 = vmatmul.mubr.bf16.gmra.mrb[0].mxu0 %v2931
      %v3190 = vpop.f32.mrb[0].mxu0
      %v3191 = vadd.f32 0.0, %v3190
      %v3192 = vpop.f32.mrb[0].mxu0
      %v3193 = vpop.f32.mrb[0].mxu0
      %v3194 = vadd.f32 0.0, %v3193
      %v3195 = vpop.f32.mrb[0].mxu0
      %3196 = vmatprep.mubr.bf16.mxu0 %v2941
      %3197 = vmatmul.mubr.bf16.gmra.mrb[0].mxu0 %v2939
      %v3198 = vpop.f32.mrb[0].mxu0
      %v3199 = vadd.f32 0.0, %v3198
      %v3200 = vpop.f32.mrb[0].mxu0
      %v3201 = vpop.f32.mrb[0].mxu0
      %v3202 = vadd.f32 0.0, %v3201
      %v3203 = vpop.f32.mrb[0].mxu0
      %3204 = vmatprep.mubr.bf16.mxu0 %v2949
      %3205 = vmatmul.mubr.bf16.gmra.mrb[0].mxu0 %v2947
      %v3206 = vpop.f32.mrb[0].mxu0
      %v3207 = vadd.f32 0.0, %v3206
      %v3208 = vpop.f32.mrb[0].mxu0
      %v3209 = vpop.f32.mrb[0].mxu0
      %v3210 = vadd.f32 0.0, %v3209
      %v3211 = vpop.f32.mrb[0].mxu0
      %3212 = vmatprep.mubr.bf16.mxu0 %v2957
      %3213 = vmatmul.mubr.bf16.gmra.mrb[0].mxu0 %v2955
      %v3214 = vpop.f32.mrb[0].mxu0
      %v3215 = vadd.f32 0.0, %v3214
      %v3216 = vpop.f32.mrb[0].mxu0
      %v3217 = vpop.f32.mrb[0].mxu0
      %v3218 = vadd.f32 0.0, %v3217
      %v3219 = vpop.f32.mrb[0].mxu0
      %3220 = vdwg.mxu0
      %3221 = vmatprep.subr.bf16.mxu0 0
      %3222 = vmatpush1.bf16.msra.mxu0 %v3095
      %3223 = vmatprep.subr.bf16.mxu0 0
      %3224 = vmatpush1.bf16.msra.mxu0 %v3096
      %3225 = vmatprep.subr.bf16.mxu0 0
      %3226 = vmatpush1.bf16.msra.mxu0 %v3097
      %3227 = vmatprep.subr.bf16.mxu0 0
      %3228 = vmatpush1.bf16.msra.mxu0 %v3098
      %3229 = vmatprep.subr.bf16.mxu0 0
      %3230 = vmatpush1.bf16.msra.mxu0 %v3099
      %3231 = vmatprep.subr.bf16.mxu0 0
      %3232 = vmatpush1.bf16.msra.mxu0 %v3100
      %3233 = vmatprep.subr.bf16.mxu0 0
      %3234 = vmatpush1.bf16.msra.mxu0 %v3101
      %3235 = vmatprep.subr.bf16.mxu0 0
      %3236 = vmatpush1.bf16.msra.mxu0 %v3102
      %3237 = vmatprep.subr.bf16.mxu0 0
      %3238 = vmatpush1.bf16.msra.mxu0 %v3103
      %3239 = vmatprep.subr.bf16.mxu0 0
      %3240 = vmatpush1.bf16.msra.mxu0 %v3146
      %3241 = vmatprep.subr.bf16.mxu0 0
      %3242 = vmatpush1.bf16.msra.mxu0 0
      %3243 = vmatprep.subr.bf16.mxu0 0
      %3244 = vmatpush1.bf16.msra.mxu0 0
      %3245 = vmatprep.subr.bf16.mxu0 0
      %3246 = vmatpush1.bf16.msra.mxu0 0
      %3247 = vmatprep.subr.bf16.mxu0 0
      %3248 = vmatpush1.bf16.msra.mxu0 0
      %3249 = vmatprep.subr.bf16.mxu0 0
      %3250 = vmatpush1.bf16.msra.mxu0 0
      %3251 = vmatprep.subr.bf16.mxu0 0
      %3252 = vmatpush1.bf16.msra.mxu0 0
      %3253 = vmatprep.mubr.bf16.mxu0 %v3131
      %3254 = vmatmul.mubr.bf16.gmra.mrb[0].mxu0 %v2926
      %v3255 = vpop.f32.mrb[0].mxu0
      %v3256 = vadd.f32 %v3183, %v3255
      %v3257 = vpop.f32.mrb[0].mxu0
      %v3258 = vpop.f32.mrb[0].mxu0
      %v3259 = vadd.f32 %v3186, %v3258
      %v3260 = vpop.f32.mrb[0].mxu0
      %3261 = vmatprep.mubr.bf16.mxu0 %v3134
      %3262 = vmatmul.mubr.bf16.gmra.mrb[0].mxu0 %v2935
      %v3263 = vpop.f32.mrb[0].mxu0
      %v3264 = vadd.f32 %v3191, %v3263
      %v3265 = vpop.f32.mrb[0].mxu0
      %v3266 = vpop.f32.mrb[0].mxu0
      %v3267 = vadd.f32 %v3194, %v3266
      %v3268 = vpop.f32.mrb[0].mxu0
      %3269 = vmatprep.mubr.bf16.mxu0 %v3137
      %3270 = vmatmul.mubr.bf16.gmra.mrb[0].mxu0 %v2943
      %v3271 = vpop.f32.mrb[0].mxu0
      %v3272 = vadd.f32 %v3199, %v3271
      %v3273 = vpop.f32.mrb[0].mxu0
      %v3274 = vpop.f32.mrb[0].mxu0
      %v3275 = vadd.f32 %v3202, %v3274
      %v3276 = vpop.f32.mrb[0].mxu0
      %3277 = vmatprep.mubr.bf16.mxu0 %v3140
      %3278 = vmatmul.mubr.bf16.gmra.mrb[0].mxu0 %v2951
      %v3279 = vpop.f32.mrb[0].mxu0
      %v3280 = vadd.f32 %v3207, %v3279
      %v3281 = vpop.f32.mrb[0].mxu0
      %v3282 = vpop.f32.mrb[0].mxu0
      %v3283 = vadd.f32 %v3210, %v3282
      %v3284 = vpop.f32.mrb[0].mxu0
      %3285 = vmatprep.mubr.bf16.mxu0 %v3143
      %3286 = vmatmul.mubr.bf16.gmra.mrb[0].mxu0 %v2959
      %v3287 = vpop.f32.mrb[0].mxu0
      %v3288 = vadd.f32 %v3215, %v3287
      %v3289 = vpop.f32.mrb[0].mxu0
      %v3290 = vpop.f32.mrb[0].mxu0
      %v3291 = vadd.f32 %v3218, %v3290
      %v3292 = vpop.f32.mrb[0].mxu0
      %3293 = vdwg.mxu0
      %s3294 = scalar_lea.vmem %s1, 1428
      %v3295 = vld [vmem:[%s3294] sm:$0xf]
      %v3296 = vld [vmem:[%s3294 + $0x4] sm:$0xf]
      %v3297 = vld [vmem:[%s3294 + $0x8] sm:$0xf]
      %v3298 = vld [vmem:[%s3294 + $0xc] sm:$0xf]
      %v3299 = vld [vmem:[%s3294 + $0x10] sm:$0xf]
      %v3300 = vld [vmem:[%s3294 + $0x14] sm:$0xf]
      %v3301 = vld [vmem:[%s3294 + $0x18] sm:$0xf]
      %v3302 = vld [vmem:[%s3294 + $0x1c] sm:$0xf]
      %v3303 = vld [vmem:[%s3294 + $0x20] sm:$0xf]
      %v3304 = vld [vmem:[%s3294 + $0x24] sm:$0xf]
      %v3305 = vld [vmem:[%s3294 + $0x28] sm:$0xf]
      %v3306 = vld [vmem:[%s3294 + $0x2c] sm:$0xf]
      %v3307 = vld [vmem:[%s3294 + $0x30] sm:$0xf]
      %v3308 = vld [vmem:[%s3294 + $0x34] sm:$0xf]
      %v3309 = vld [vmem:[%s3294 + $0x38] sm:$0xf]
      %v3310 = vld [vmem:[%s3294 + $0x3c] sm:$0xf]
      %v3311 = vld [vmem:[%s3294 + $0x40] sm:$0xf]
      %v3312 = vld [vmem:[%s3294 + $0x44] sm:$0xf]
      %v3313 = vld [vmem:[%s3294 + $0x48] sm:$0xf]
      %v3314 = vld [vmem:[%s3294 + $0x4c] sm:$0xf]
      %v3315 = vld [vmem:[%s3294 + $0x50] sm:$0xf]
      %v3316 = vld [vmem:[%s3294 + $0x54] sm:$0xf]
      %v3317 = vld [vmem:[%s3294 + $0x58] sm:$0xf]
      %v3318 = vld [vmem:[%s3294 + $0x5c] sm:$0xf]
      %v3319 = vld [vmem:[%s3294 + $0x60] sm:$0xf]
      %v3320 = vld [vmem:[%s3294 + $0x64] sm:$0xf]
      %v3321 = vld [vmem:[%s3294 + $0x68] sm:$0xf]
      %v3322 = vld [vmem:[%s3294 + $0x6c] sm:$0xf]
      %v3323 = vld [vmem:[%s3294 + $0x70] sm:$0xf]
      %v3324 = vld [vmem:[%s3294 + $0x74] sm:$0xf]
      %v3325 = vld [vmem:[%s3294 + $0x78] sm:$0xf]
      %v3326 = vld [vmem:[%s3294 + $0x7c] sm:$0xf]
      %v3327 = vld [vmem:[%s3294 + $0x80] sm:$0xf]
      %v3328 = vld [vmem:[%s3294 + $0x84] sm:$0xf]
      %v3329 = vld [vmem:[%s3294 + $0x88] sm:$0xf]
      %v3330 = vld [vmem:[%s3294 + $0x8c] sm:$0xf]
      %v3331 = vld [vmem:[%s3294 + $0x90] sm:$0xf]
      %v3332 = vld [vmem:[%s3294 + $0x94] sm:$0xf]
      %v3333 = vld [vmem:[%s3294 + $0x98] sm:$0xf]
      %v3334 = vld [vmem:[%s3294 + $0x9c] sm:$0xf]
      %v3335 = vld [vmem:[%s3294 + $0xa0] sm:$0xf]
      %v3336 = vld [vmem:[%s3294 + $0xa4] sm:$0xf]
      %v3337 = vld [vmem:[%s3294 + $0xa8] sm:$0xf]
      %v3338 = vld [vmem:[%s3294 + $0xac] sm:$0xf]
      %v3339 = vld [vmem:[%s3294 + $0xb0] sm:$0xf]
      %v3340 = vld [vmem:[%s3294 + $0xb4] sm:$0xf]
      %v3341 = vld [vmem:[%s3294 + $0xb8] sm:$0xf]
      %v3342 = vld [vmem:[%s3294 + $0xbc] sm:$0xf]
      %v3343 = vld [vmem:[%s3294 + $0xc0] sm:$0xf]
      %v3344 = vld [vmem:[%s3294 + $0xc4] sm:$0xf]
      %v3345 = vld [vmem:[%s3294 + $0xc8] sm:$0xf]
      %vm3346 = vsmask.f32 5376
      %v3347 = vrot.slane %v477, 2
      %v3348 = vrot.slane %v437, 3
      %v3349 = vor.u32 %v3347, %v3348
      %v3350 = vrot.slane %v509, 2
      %v3351 = vrot.slane %v481, 3
      %v3352 = vor.u32 %v3350, %v3351
      %v3353 = vsel %vm3346, %v3349, %v3352
      %v3354 = vrot.slane %v485, 2
      %v3355 = vrot.slane %v449, 3
      %v3356 = vor.u32 %v3354, %v3355
      %v3357 = vrot.slane %v517, 2
      %v3358 = vrot.slane %v489, 3
      %v3359 = vor.u32 %v3357, %v3358
      %v3360 = vsel %vm3346, %v3356, %v3359
      %v3361 = vrot.slane %v493, 2
      %v3362 = vrot.slane %v461, 3
      %v3363 = vor.u32 %v3361, %v3362
      %v3364 = vrot.slane %v525, 2
      %v3365 = vrot.slane %v497, 3
      %v3366 = vor.u32 %v3364, %v3365
      %v3367 = vsel %vm3346, %v3363, %v3366
      %v3368 = vrot.slane %v501, 2
      %v3369 = vrot.slane %v473, 3
      %v3370 = vor.u32 %v3368, %v3369
      %v3371 = vrot.slane %v533, 2
      %v3372 = vrot.slane %v505, 3
      %v3373 = vor.u32 %v3371, %v3372
      %v3374 = vsel %vm3346, %v3370, %v3373
      %v3375 = vrot.slane %v541, 2
      %v3376 = vrot.slane %v513, 3
      %v3377 = vor.u32 %v3375, %v3376
      %v3378 = vsel %vm3346, %v3352, %v3377
      %v3379 = vrot.slane %v549, 2
      %v3380 = vrot.slane %v521, 3
      %v3381 = vor.u32 %v3379, %v3380
      %v3382 = vsel %vm3346, %v3359, %v3381
      %v3383 = vrot.slane %v557, 2
      %v3384 = vrot.slane %v529, 3
      %v3385 = vor.u32 %v3383, %v3384
      %v3386 = vsel %vm3346, %v3366, %v3385
      %v3387 = vrot.slane %v565, 2
      %v3388 = vrot.slane %v537, 3
      %v3389 = vor.u32 %v3387, %v3388
      %v3390 = vsel %vm3346, %v3373, %v3389
      %v3391 = vrot.slane %v573, 2
      %v3392 = vrot.slane %v545, 3
      %v3393 = vor.u32 %v3391, %v3392
      %v3394 = vsel %vm3346, %v3377, %v3393
      %v3395 = vrot.slane %v581, 2
      %v3396 = vrot.slane %v553, 3
      %v3397 = vor.u32 %v3395, %v3396
      %v3398 = vsel %vm3346, %v3381, %v3397
      %v3399 = vrot.slane %v589, 2
      %v3400 = vrot.slane %v561, 3
      %v3401 = vor.u32 %v3399, %v3400
      %v3402 = vsel %vm3346, %v3385, %v3401
      %v3403 = vrot.slane %v597, 2
      %v3404 = vrot.slane %v569, 3
      %v3405 = vor.u32 %v3403, %v3404
      %v3406 = vsel %vm3346, %v3389, %v3405
      %v3408 = vshrl.u32 %v2910, 16
      %v3410 = vrot.slane %v3408, 2
      %v3411 = vshll.u32 %v2910, 16
      %v3413 = vrot.slane %v3411, 3
      %v3414 = vor.u32 %v3410, %v3413
      %v3415 = vsel %vm3346, %v3393, %v3414
      %v3417 = vshrl.u32 %v2911, 16
      %v3419 = vrot.slane %v3417, 2
      %v3420 = vshll.u32 %v2911, 16
      %v3422 = vrot.slane %v3420, 3
      %v3423 = vor.u32 %v3419, %v3422
      %v3424 = vsel %vm3346, %v3397, %v3423
      %v3426 = vshrl.u32 %v2912, 16
      %v3428 = vrot.slane %v3426, 2
      %v3429 = vshll.u32 %v2912, 16
      %v3431 = vrot.slane %v3429, 3
      %v3432 = vor.u32 %v3428, %v3431
      %v3433 = vsel %vm3346, %v3401, %v3432
      %v3435 = vshrl.u32 %v2913, 16
      %v3437 = vrot.slane %v3435, 2
      %v3438 = vshll.u32 %v2913, 16
      %v3440 = vrot.slane %v3438, 3
      %v3441 = vor.u32 %v3437, %v3440
      %v3442 = vsel %vm3346, %v3405, %v3441
      %v3444 = vshrl.u32 %v2914, 16
      %v3446 = vrot.slane %v3444, 2
      %v3447 = vshll.u32 %v2914, 16
      %v3449 = vrot.slane %v3447, 3
      %v3450 = vor.u32 %v3446, %v3449
      %v3451 = vsel %vm3346, %v3414, %v3450
      %v3453 = vshrl.u32 %v2915, 16
      %v3455 = vrot.slane %v3453, 2
      %v3456 = vshll.u32 %v2915, 16
      %v3458 = vrot.slane %v3456, 3
      %v3459 = vor.u32 %v3455, %v3458
      %v3460 = vsel %vm3346, %v3423, %v3459
      %v3462 = vshrl.u32 %v2916, 16
      %v3464 = vrot.slane %v3462, 2
      %v3465 = vshll.u32 %v2916, 16
      %v3467 = vrot.slane %v3465, 3
      %v3468 = vor.u32 %v3464, %v3467
      %v3469 = vsel %vm3346, %v3432, %v3468
      %v3471 = vshrl.u32 %v2917, 16
      %v3473 = vrot.slane %v3471, 2
      %v3474 = vshll.u32 %v2917, 16
      %v3476 = vrot.slane %v3474, 3
      %v3477 = vor.u32 %v3473, %v3476
      %v3478 = vsel %vm3346, %v3441, %v3477
      %v3545 = vunpack.c.l.b16 %v3295
      %v3546 = vunpack.c.l.b16 %v3296
      %v3547 = vunpack.c.l.b16 %v3297
      %v3548 = vunpack.c.l.b16 %v3298
      %v3549 = vunpack.c.l.b16 %v3299
      %v3550 = vunpack.c.l.b16 %v3300
      %v3551 = vunpack.c.l.b16 %v3301
      %v3552 = vunpack.c.l.b16 %v3302
      %v3553 = vunpack.c.l.b16 %v3303
      %v3554 = vunpack.c.l.b16 %v3304
      %v3555 = vunpack.c.l.b16 %v3305
      %v3556 = vunpack.c.l.b16 %v3306
      %v3557 = vunpack.c.l.b16 %v3307
      %v3558 = vunpack.c.l.b16 %v3308
      %v3559 = vunpack.c.l.b16 %v3309
      %v3560 = vunpack.c.l.b16 %v3310
      %v3561 = vunpack.c.l.b16 %v3311
      %v3562 = vunpack.c.l.b16 %v3312
      %v3563 = vunpack.c.l.b16 %v3313
      %v3564 = vunpack.c.l.b16 %v3314
      %v3565 = vunpack.c.l.b16 %v3315
      %v3566 = vunpack.c.l.b16 %v3316
      %v3567 = vunpack.c.l.b16 %v3317
      %v3568 = vunpack.c.l.b16 %v3318
      %v3569 = vunpack.c.l.b16 %v3319
      %v3570 = vunpack.c.l.b16 %v3320
      %v3571 = vunpack.c.l.b16 %v3321
      %v3572 = vunpack.c.l.b16 %v3322
      %v3573 = vunpack.c.l.b16 %v3323
      %v3574 = vunpack.c.l.b16 %v3324
      %v3575 = vunpack.c.l.b16 %v3325
      %v3576 = vunpack.c.l.b16 %v3326
      %v3577 = vunpack.c.l.b16 %v3327
      %v3578 = vunpack.c.l.b16 %v3328
      %v3579 = vunpack.c.l.b16 %v3329
      %v3580 = vunpack.c.l.b16 %v3330
      %v3581 = vunpack.c.l.b16 %v3331
      %v3582 = vunpack.c.l.b16 %v3332
      %v3583 = vunpack.c.l.b16 %v3333
      %v3584 = vunpack.c.l.b16 %v3334
      %v3585 = vunpack.c.l.b16 %v3335
      %v3586 = vunpack.c.l.b16 %v3336
      %v3587 = vunpack.c.l.b16 %v3337
      %v3588 = vunpack.c.l.b16 %v3338
      %v3589 = vunpack.c.l.b16 %v3339
      %v3590 = vunpack.c.l.b16 %v3340
      %v3591 = vunpack.c.l.b16 %v3341
      %v3592 = vunpack.c.l.b16 %v3342
      %v3593 = vunpack.c.l.b16 %v3343
      %v3594 = vunpack.c.l.b16 %v3344
      %v3595 = vunpack.c.l.b16 %v3345
      %v3596 = vpack.c.b16 %v3546, %v3545
      %v3597 = vpack.c.b16 %v3548, %v3547
      %v3598 = vpack.c.b16 %v3550, %v3549
      %v3599 = vpack.c.b16 %v3552, %v3551
      %v3600 = vpack.c.b16 %v3554, %v3553
      %v3601 = vpack.c.b16 %v3556, %v3555
      %v3602 = vpack.c.b16 %v3558, %v3557
      %v3603 = vpack.c.b16 %v3560, %v3559
      %v3604 = vpack.c.b16 %v3562, %v3561
      %v3605 = vpack.c.b16 %v3564, %v3563
      %v3606 = vpack.c.b16 %v3566, %v3565
      %v3607 = vpack.c.b16 %v3568, %v3567
      %v3608 = vpack.c.b16 %v3570, %v3569
      %v3609 = vpack.c.b16 %v3572, %v3571
      %v3610 = vpack.c.b16 %v3574, %v3573
      %v3611 = vpack.c.b16 %v3576, %v3575
      %v3612 = vpack.c.b16 %v3578, %v3577
      %v3613 = vpack.c.b16 %v3580, %v3579
      %v3614 = vpack.c.b16 %v3582, %v3581
      %v3615 = vpack.c.b16 %v3584, %v3583
      %v3616 = vpack.c.b16 %v3586, %v3585
      %v3617 = vpack.c.b16 %v3588, %v3587
      %v3618 = vpack.c.b16 %v3590, %v3589
      %v3619 = vpack.c.b16 %v3592, %v3591
      %v3620 = vpack.c.b16 %v3594, %v3593
      %v3621 = vpack.c.b16 %v3595, %v3595
      %v3648 = vsel %vm773, %v3374, 0
      %v3651 = vsel %vm773, %v3390, 0
      %v3654 = vsel %vm773, %v3406, 0
      %v3657 = vsel %vm773, %v3442, 0
      %v3660 = vsel %vm773, %v3478, 0
      %v3663 = vsel %vm789, %v3621, 0
      %3665 = vmatprep.subr.bf16.mxu0 0
      %3666 = vmatpush1.bf16.msra.mxu0 %v3596
      %3667 = vmatprep.subr.bf16.mxu0 0
      %3668 = vmatpush1.bf16.msra.mxu0 %v3597
      %3669 = vmatprep.subr.bf16.mxu0 0
      %3670 = vmatpush1.bf16.msra.mxu0 %v3598
      %3671 = vmatprep.subr.bf16.mxu0 0
      %3672 = vmatpush1.bf16.msra.mxu0 %v3599
      %3673 = vmatprep.subr.bf16.mxu0 0
      %3674 = vmatpush1.bf16.msra.mxu0 %v3600
      %3675 = vmatprep.subr.bf16.mxu0 0
      %3676 = vmatpush1.bf16.msra.mxu0 %v3601
      %3677 = vmatprep.subr.bf16.mxu0 0
      %3678 = vmatpush1.bf16.msra.mxu0 %v3602
      %3679 = vmatprep.subr.bf16.mxu0 0
      %3680 = vmatpush1.bf16.msra.mxu0 %v3603
      %3681 = vmatprep.subr.bf16.mxu0 0
      %3682 = vmatpush1.bf16.msra.mxu0 %v3604
      %3683 = vmatprep.subr.bf16.mxu0 0
      %3684 = vmatpush1.bf16.msra.mxu0 %v3605
      %3685 = vmatprep.subr.bf16.mxu0 0
      %3686 = vmatpush1.bf16.msra.mxu0 %v3606
      %3687 = vmatprep.subr.bf16.mxu0 0
      %3688 = vmatpush1.bf16.msra.mxu0 %v3607
      %3689 = vmatprep.subr.bf16.mxu0 0
      %3690 = vmatpush1.bf16.msra.mxu0 %v3608
      %3691 = vmatprep.subr.bf16.mxu0 0
      %3692 = vmatpush1.bf16.msra.mxu0 %v3609
      %3693 = vmatprep.subr.bf16.mxu0 0
      %3694 = vmatpush1.bf16.msra.mxu0 %v3610
      %3695 = vmatprep.subr.bf16.mxu0 0
      %3696 = vmatpush1.bf16.msra.mxu0 %v3611
      %3697 = vmatprep.mubr.bf16.mxu0 %v3360
      %3698 = vmatmul.mubr.bf16.gmra.mrb[0].mxu0 %v3353
      %v3699 = vpop.f32.mrb[0].mxu0
      %v3700 = vadd.f32 0.0, %v3699
      %v3701 = vpop.f32.mrb[0].mxu0
      %v3702 = vpop.f32.mrb[0].mxu0
      %v3703 = vadd.f32 0.0, %v3702
      %v3704 = vpop.f32.mrb[0].mxu0
      %3705 = vmatprep.mubr.bf16.mxu0 %v3382
      %3706 = vmatmul.mubr.bf16.gmra.mrb[0].mxu0 %v3378
      %v3707 = vpop.f32.mrb[0].mxu0
      %v3708 = vadd.f32 0.0, %v3707
      %v3709 = vpop.f32.mrb[0].mxu0
      %v3710 = vpop.f32.mrb[0].mxu0
      %v3711 = vadd.f32 0.0, %v3710
      %v3712 = vpop.f32.mrb[0].mxu0
      %3713 = vmatprep.mubr.bf16.mxu0 %v3398
      %3714 = vmatmul.mubr.bf16.gmra.mrb[0].mxu0 %v3394
      %v3715 = vpop.f32.mrb[0].mxu0
      %v3716 = vadd.f32 0.0, %v3715
      %v3717 = vpop.f32.mrb[0].mxu0
      %v3718 = vpop.f32.mrb[0].mxu0
      %v3719 = vadd.f32 0.0, %v3718
      %v3720 = vpop.f32.mrb[0].mxu0
      %3721 = vmatprep.mubr.bf16.mxu0 %v3424
      %3722 = vmatmul.mubr.bf16.gmra.mrb[0].mxu0 %v3415
      %v3723 = vpop.f32.mrb[0].mxu0
      %v3724 = vadd.f32 0.0, %v3723
      %v3725 = vpop.f32.mrb[0].mxu0
      %v3726 = vpop.f32.mrb[0].mxu0
      %v3727 = vadd.f32 0.0, %v3726
      %v3728 = vpop.f32.mrb[0].mxu0
      %3729 = vmatprep.mubr.bf16.mxu0 %v3460
      %3730 = vmatmul.mubr.bf16.gmra.mrb[0].mxu0 %v3451
      %v3731 = vpop.f32.mrb[0].mxu0
      %v3732 = vadd.f32 0.0, %v3731
      %v3733 = vpop.f32.mrb[0].mxu0
      %v3734 = vpop.f32.mrb[0].mxu0
      %v3735 = vadd.f32 0.0, %v3734
      %v3736 = vpop.f32.mrb[0].mxu0
      %3737 = vdwg.mxu0
      %3738 = vmatprep.subr.bf16.mxu0 0
      %3739 = vmatpush1.bf16.msra.mxu0 %v3612
      %3740 = vmatprep.subr.bf16.mxu0 0
      %3741 = vmatpush1.bf16.msra.mxu0 %v3613
      %3742 = vmatprep.subr.bf16.mxu0 0
      %3743 = vmatpush1.bf16.msra.mxu0 %v3614
      %3744 = vmatprep.subr.bf16.mxu0 0
      %3745 = vmatpush1.bf16.msra.mxu0 %v3615
      %3746 = vmatprep.subr.bf16.mxu0 0
      %3747 = vmatpush1.bf16.msra.mxu0 %v3616
      %3748 = vmatprep.subr.bf16.mxu0 0
      %3749 = vmatpush1.bf16.msra.mxu0 %v3617
      %3750 = vmatprep.subr.bf16.mxu0 0
      %3751 = vmatpush1.bf16.msra.mxu0 %v3618
      %3752 = vmatprep.subr.bf16.mxu0 0
      %3753 = vmatpush1.bf16.msra.mxu0 %v3619
      %3754 = vmatprep.subr.bf16.mxu0 0
      %3755 = vmatpush1.bf16.msra.mxu0 %v3620
      %3756 = vmatprep.subr.bf16.mxu0 0
      %3757 = vmatpush1.bf16.msra.mxu0 %v3663
      %3758 = vmatprep.subr.bf16.mxu0 0
      %3759 = vmatpush1.bf16.msra.mxu0 0
      %3760 = vmatprep.subr.bf16.mxu0 0
      %3761 = vmatpush1.bf16.msra.mxu0 0
      %3762 = vmatprep.subr.bf16.mxu0 0
      %3763 = vmatpush1.bf16.msra.mxu0 0
      %3764 = vmatprep.subr.bf16.mxu0 0
      %3765 = vmatpush1.bf16.msra.mxu0 0
      %3766 = vmatprep.subr.bf16.mxu0 0
      %3767 = vmatpush1.bf16.msra.mxu0 0
      %3768 = vmatprep.subr.bf16.mxu0 0
      %3769 = vmatpush1.bf16.msra.mxu0 0
      %3770 = vmatprep.mubr.bf16.mxu0 %v3648
      %3771 = vmatmul.mubr.bf16.gmra.mrb[0].mxu0 %v3367
      %v3772 = vpop.f32.mrb[0].mxu0
      %v3773 = vadd.f32 %v3700, %v3772
      %v3774 = vpop.f32.mrb[0].mxu0
      %v3775 = vpop.f32.mrb[0].mxu0
      %v3776 = vadd.f32 %v3703, %v3775
      %v3777 = vpop.f32.mrb[0].mxu0
      %3778 = vmatprep.mubr.bf16.mxu0 %v3651
      %3779 = vmatmul.mubr.bf16.gmra.mrb[0].mxu0 %v3386
      %v3780 = vpop.f32.mrb[0].mxu0
      %v3781 = vadd.f32 %v3708, %v3780
      %v3782 = vpop.f32.mrb[0].mxu0
      %v3783 = vpop.f32.mrb[0].mxu0
      %v3784 = vadd.f32 %v3711, %v3783
      %v3785 = vpop.f32.mrb[0].mxu0
      %3786 = vmatprep.mubr.bf16.mxu0 %v3654
      %3787 = vmatmul.mubr.bf16.gmra.mrb[0].mxu0 %v3402
      %v3788 = vpop.f32.mrb[0].mxu0
      %v3789 = vadd.f32 %v3716, %v3788
      %v3790 = vpop.f32.mrb[0].mxu0
      %v3791 = vpop.f32.mrb[0].mxu0
      %v3792 = vadd.f32 %v3719, %v3791
      %v3793 = vpop.f32.mrb[0].mxu0
      %3794 = vmatprep.mubr.bf16.mxu0 %v3657
      %3795 = vmatmul.mubr.bf16.gmra.mrb[0].mxu0 %v3433
      %v3796 = vpop.f32.mrb[0].mxu0
      %v3797 = vadd.f32 %v3724, %v3796
      %v3798 = vpop.f32.mrb[0].mxu0
      %v3799 = vpop.f32.mrb[0].mxu0
      %v3800 = vadd.f32 %v3727, %v3799
      %v3801 = vpop.f32.mrb[0].mxu0
      %3802 = vmatprep.mubr.bf16.mxu0 %v3660
      %3803 = vmatmul.mubr.bf16.gmra.mrb[0].mxu0 %v3469
      %v3804 = vpop.f32.mrb[0].mxu0
      %v3805 = vadd.f32 %v3732, %v3804
      %v3806 = vpop.f32.mrb[0].mxu0
      %v3807 = vpop.f32.mrb[0].mxu0
      %v3808 = vadd.f32 %v3735, %v3807
      %v3809 = vpop.f32.mrb[0].mxu0
      %3810 = vdwg.mxu0
      %s3811 = scalar_lea.vmem %s1, 1632
      %v3812 = vld [vmem:[%s3811] sm:$0xf]
      %v3813 = vld [vmem:[%s3811 + $0x4] sm:$0xf]
      %v3814 = vld [vmem:[%s3811 + $0x8] sm:$0xf]
      %v3815 = vld [vmem:[%s3811 + $0xc] sm:$0xf]
      %v3816 = vld [vmem:[%s3811 + $0x10] sm:$0xf]
      %v3817 = vld [vmem:[%s3811 + $0x14] sm:$0xf]
      %v3818 = vld [vmem:[%s3811 + $0x18] sm:$0xf]
      %v3819 = vld [vmem:[%s3811 + $0x1c] sm:$0xf]
      %v3820 = vld [vmem:[%s3811 + $0x20] sm:$0xf]
      %v3821 = vld [vmem:[%s3811 + $0x24] sm:$0xf]
      %v3822 = vld [vmem:[%s3811 + $0x28] sm:$0xf]
      %v3823 = vld [vmem:[%s3811 + $0x2c] sm:$0xf]
      %v3824 = vld [vmem:[%s3811 + $0x30] sm:$0xf]
      %v3825 = vld [vmem:[%s3811 + $0x34] sm:$0xf]
      %v3826 = vld [vmem:[%s3811 + $0x38] sm:$0xf]
      %v3827 = vld [vmem:[%s3811 + $0x3c] sm:$0xf]
      %v3828 = vld [vmem:[%s3811 + $0x40] sm:$0xf]
      %v3829 = vld [vmem:[%s3811 + $0x44] sm:$0xf]
      %v3830 = vld [vmem:[%s3811 + $0x48] sm:$0xf]
      %v3831 = vld [vmem:[%s3811 + $0x4c] sm:$0xf]
      %v3832 = vld [vmem:[%s3811 + $0x50] sm:$0xf]
      %v3833 = vld [vmem:[%s3811 + $0x54] sm:$0xf]
      %v3834 = vld [vmem:[%s3811 + $0x58] sm:$0xf]
      %v3835 = vld [vmem:[%s3811 + $0x5c] sm:$0xf]
      %v3836 = vld [vmem:[%s3811 + $0x60] sm:$0xf]
      %v3837 = vld [vmem:[%s3811 + $0x64] sm:$0xf]
      %v3838 = vld [vmem:[%s3811 + $0x68] sm:$0xf]
      %v3839 = vld [vmem:[%s3811 + $0x6c] sm:$0xf]
      %v3840 = vld [vmem:[%s3811 + $0x70] sm:$0xf]
      %v3841 = vld [vmem:[%s3811 + $0x74] sm:$0xf]
      %v3842 = vld [vmem:[%s3811 + $0x78] sm:$0xf]
      %v3843 = vld [vmem:[%s3811 + $0x7c] sm:$0xf]
      %v3844 = vld [vmem:[%s3811 + $0x80] sm:$0xf]
      %v3845 = vld [vmem:[%s3811 + $0x84] sm:$0xf]
      %v3846 = vld [vmem:[%s3811 + $0x88] sm:$0xf]
      %v3847 = vld [vmem:[%s3811 + $0x8c] sm:$0xf]
      %v3848 = vld [vmem:[%s3811 + $0x90] sm:$0xf]
      %v3849 = vld [vmem:[%s3811 + $0x94] sm:$0xf]
      %v3850 = vld [vmem:[%s3811 + $0x98] sm:$0xf]
      %v3851 = vld [vmem:[%s3811 + $0x9c] sm:$0xf]
      %v3852 = vld [vmem:[%s3811 + $0xa0] sm:$0xf]
      %v3853 = vld [vmem:[%s3811 + $0xa4] sm:$0xf]
      %v3854 = vld [vmem:[%s3811 + $0xa8] sm:$0xf]
      %v3855 = vld [vmem:[%s3811 + $0xac] sm:$0xf]
      %v3856 = vld [vmem:[%s3811 + $0xb0] sm:$0xf]
      %v3857 = vld [vmem:[%s3811 + $0xb4] sm:$0xf]
      %v3858 = vld [vmem:[%s3811 + $0xb8] sm:$0xf]
      %v3859 = vld [vmem:[%s3811 + $0xbc] sm:$0xf]
      %v3860 = vld [vmem:[%s3811 + $0xc0] sm:$0xf]
      %v3861 = vld [vmem:[%s3811 + $0xc4] sm:$0xf]
      %v3862 = vld [vmem:[%s3811 + $0xc8] sm:$0xf]
      %vm3863 = vcmask 1044480
      %v3864 = vrot.slane %v408, 3
      %v3865 = vrot.slane %v412, 3
      %v3866 = vsel %vm3863, %v3864, %v3865
      %v3867 = vrot.slane %v409, 3
      %v3868 = vrot.slane %v413, 3
      %v3869 = vsel %vm3863, %v3867, %v3868
      %v3870 = vrot.slane %v410, 3
      %v3871 = vrot.slane %v414, 3
      %v3872 = vsel %vm3863, %v3870, %v3871
      %v3873 = vrot.slane %v411, 3
      %v3874 = vrot.slane %v415, 3
      %v3875 = vsel %vm3863, %v3873, %v3874
      %v3876 = vrot.slane %v416, 3
      %v3877 = vsel %vm3863, %v3865, %v3876
      %v3878 = vrot.slane %v417, 3
      %v3879 = vsel %vm3863, %v3868, %v3878
      %v3880 = vrot.slane %v418, 3
      %v3881 = vsel %vm3863, %v3871, %v3880
      %v3882 = vrot.slane %v419, 3
      %v3883 = vsel %vm3863, %v3874, %v3882
      %v3884 = vrot.slane %v420, 3
      %v3885 = vsel %vm3863, %v3876, %v3884
      %v3886 = vrot.slane %v421, 3
      %v3887 = vsel %vm3863, %v3878, %v3886
      %v3888 = vrot.slane %v422, 3
      %v3889 = vsel %vm3863, %v3880, %v3888
      %v3890 = vrot.slane %v423, 3
      %v3891 = vsel %vm3863, %v3882, %v3890
      %v3892 = vrot.slane %v2910, 3
      %v3893 = vsel %vm3863, %v3884, %v3892
      %v3894 = vrot.slane %v2911, 3
      %v3895 = vsel %vm3863, %v3886, %v3894
      %v3896 = vrot.slane %v2912, 3
      %v3897 = vsel %vm3863, %v3888, %v3896
      %v3898 = vrot.slane %v2913, 3
      %v3899 = vsel %vm3863, %v3890, %v3898
      %v3900 = vrot.slane %v2914, 3
      %v3901 = vsel %vm3863, %v3892, %v3900
      %v3902 = vrot.slane %v2915, 3
      %v3903 = vsel %vm3863, %v3894, %v3902
      %v3904 = vrot.slane %v2916, 3
      %v3905 = vsel %vm3863, %v3896, %v3904
      %v3906 = vrot.slane %v2917, 3
      %v3907 = vsel %vm3863, %v3898, %v3906
      %v3974 = vunpack.c.l.b16 %v3812
      %v3975 = vunpack.c.l.b16 %v3813
      %v3976 = vunpack.c.l.b16 %v3814
      %v3977 = vunpack.c.l.b16 %v3815
      %v3978 = vunpack.c.l.b16 %v3816
      %v3979 = vunpack.c.l.b16 %v3817
      %v3980 = vunpack.c.l.b16 %v3818
      %v3981 = vunpack.c.l.b16 %v3819
      %v3982 = vunpack.c.l.b16 %v3820
      %v3983 = vunpack.c.l.b16 %v3821
      %v3984 = vunpack.c.l.b16 %v3822
      %v3985 = vunpack.c.l.b16 %v3823
      %v3986 = vunpack.c.l.b16 %v3824
      %v3987 = vunpack.c.l.b16 %v3825
      %v3988 = vunpack.c.l.b16 %v3826
      %v3989 = vunpack.c.l.b16 %v3827
      %v3990 = vunpack.c.l.b16 %v3828
      %v3991 = vunpack.c.l.b16 %v3829
      %v3992 = vunpack.c.l.b16 %v3830
      %v3993 = vunpack.c.l.b16 %v3831
      %v3994 = vunpack.c.l.b16 %v3832
      %v3995 = vunpack.c.l.b16 %v3833
      %v3996 = vunpack.c.l.b16 %v3834
      %v3997 = vunpack.c.l.b16 %v3835
      %v3998 = vunpack.c.l.b16 %v3836
      %v3999 = vunpack.c.l.b16 %v3837
      %v4000 = vunpack.c.l.b16 %v3838
      %v4001 = vunpack.c.l.b16 %v3839
      %v4002 = vunpack.c.l.b16 %v3840
      %v4003 = vunpack.c.l.b16 %v3841
      %v4004 = vunpack.c.l.b16 %v3842
      %v4005 = vunpack.c.l.b16 %v3843
      %v4006 = vunpack.c.l.b16 %v3844
      %v4007 = vunpack.c.l.b16 %v3845
      %v4008 = vunpack.c.l.b16 %v3846
      %v4009 = vunpack.c.l.b16 %v3847
      %v4010 = vunpack.c.l.b16 %v3848
      %v4011 = vunpack.c.l.b16 %v3849
      %v4012 = vunpack.c.l.b16 %v3850
      %v4013 = vunpack.c.l.b16 %v3851
      %v4014 = vunpack.c.l.b16 %v3852
      %v4015 = vunpack.c.l.b16 %v3853
      %v4016 = vunpack.c.l.b16 %v3854
      %v4017 = vunpack.c.l.b16 %v3855
      %v4018 = vunpack.c.l.b16 %v3856
      %v4019 = vunpack.c.l.b16 %v3857
      %v4020 = vunpack.c.l.b16 %v3858
      %v4021 = vunpack.c.l.b16 %v3859
      %v4022 = vunpack.c.l.b16 %v3860
      %v4023 = vunpack.c.l.b16 %v3861
      %v4024 = vunpack.c.l.b16 %v3862
      %v4025 = vpack.c.b16 %v3975, %v3974
      %v4026 = vpack.c.b16 %v3977, %v3976
      %v4027 = vpack.c.b16 %v3979, %v3978
      %v4028 = vpack.c.b16 %v3981, %v3980
      %v4029 = vpack.c.b16 %v3983, %v3982
      %v4030 = vpack.c.b16 %v3985, %v3984
      %v4031 = vpack.c.b16 %v3987, %v3986
      %v4032 = vpack.c.b16 %v3989, %v3988
      %v4033 = vpack.c.b16 %v3991, %v3990
      %v4034 = vpack.c.b16 %v3993, %v3992
      %v4035 = vpack.c.b16 %v3995, %v3994
      %v4036 = vpack.c.b16 %v3997, %v3996
      %v4037 = vpack.c.b16 %v3999, %v3998
      %v4038 = vpack.c.b16 %v4001, %v4000
      %v4039 = vpack.c.b16 %v4003, %v4002
      %v4040 = vpack.c.b16 %v4005, %v4004
      %v4041 = vpack.c.b16 %v4007, %v4006
      %v4042 = vpack.c.b16 %v4009, %v4008
      %v4043 = vpack.c.b16 %v4011, %v4010
      %v4044 = vpack.c.b16 %v4013, %v4012
      %v4045 = vpack.c.b16 %v4015, %v4014
      %v4046 = vpack.c.b16 %v4017, %v4016
      %v4047 = vpack.c.b16 %v4019, %v4018
      %v4048 = vpack.c.b16 %v4021, %v4020
      %v4049 = vpack.c.b16 %v4023, %v4022
      %v4050 = vpack.c.b16 %v4024, %v4024
      %v4077 = vsel %vm773, %v3875, 0
      %v4080 = vsel %vm773, %v3883, 0
      %v4083 = vsel %vm773, %v3891, 0
      %v4086 = vsel %vm773, %v3899, 0
      %v4089 = vsel %vm773, %v3907, 0
      %v4092 = vsel %vm789, %v4050, 0
      %4094 = vmatprep.subr.bf16.mxu0 0
      %4095 = vmatpush1.bf16.msra.mxu0 %v4025
      %4096 = vmatprep.subr.bf16.mxu0 0
      %4097 = vmatpush1.bf16.msra.mxu0 %v4026
      %4098 = vmatprep.subr.bf16.mxu0 0
      %4099 = vmatpush1.bf16.msra.mxu0 %v4027
      %4100 = vmatprep.subr.bf16.mxu0 0
      %4101 = vmatpush1.bf16.msra.mxu0 %v4028
      %4102 = vmatprep.subr.bf16.mxu0 0
      %4103 = vmatpush1.bf16.msra.mxu0 %v4029
      %4104 = vmatprep.subr.bf16.mxu0 0
      %4105 = vmatpush1.bf16.msra.mxu0 %v4030
      %4106 = vmatprep.subr.bf16.mxu0 0
      %4107 = vmatpush1.bf16.msra.mxu0 %v4031
      %4108 = vmatprep.subr.bf16.mxu0 0
      %4109 = vmatpush1.bf16.msra.mxu0 %v4032
      %4110 = vmatprep.subr.bf16.mxu0 0
      %4111 = vmatpush1.bf16.msra.mxu0 %v4033
      %4112 = vmatprep.subr.bf16.mxu0 0
      %4113 = vmatpush1.bf16.msra.mxu0 %v4034
      %4114 = vmatprep.subr.bf16.mxu0 0
      %4115 = vmatpush1.bf16.msra.mxu0 %v4035
      %4116 = vmatprep.subr.bf16.mxu0 0
      %4117 = vmatpush1.bf16.msra.mxu0 %v4036
      %4118 = vmatprep.subr.bf16.mxu0 0
      %4119 = vmatpush1.bf16.msra.mxu0 %v4037
      %4120 = vmatprep.subr.bf16.mxu0 0
      %4121 = vmatpush1.bf16.msra.mxu0 %v4038
      %4122 = vmatprep.subr.bf16.mxu0 0
      %4123 = vmatpush1.bf16.msra.mxu0 %v4039
      %4124 = vmatprep.subr.bf16.mxu0 0
      %4125 = vmatpush1.bf16.msra.mxu0 %v4040
      %4126 = vmatprep.mubr.bf16.mxu0 %v3869
      %4127 = vmatmul.mubr.bf16.gmra.mrb[0].mxu0 %v3866
      %v4128 = vpop.f32.mrb[0].mxu0
      %v4129 = vadd.f32 0.0, %v4128
      %v4130 = vpop.f32.mrb[0].mxu0
      %v4131 = vpop.f32.mrb[0].mxu0
      %v4132 = vadd.f32 0.0, %v4131
      %v4133 = vpop.f32.mrb[0].mxu0
      %4134 = vmatprep.mubr.bf16.mxu0 %v3879
      %4135 = vmatmul.mubr.bf16.gmra.mrb[0].mxu0 %v3877
      %v4136 = vpop.f32.mrb[0].mxu0
      %v4137 = vadd.f32 0.0, %v4136
      %v4138 = vpop.f32.mrb[0].mxu0
      %v4139 = vpop.f32.mrb[0].mxu0
      %v4140 = vadd.f32 0.0, %v4139
      %v4141 = vpop.f32.mrb[0].mxu0
      %4142 = vmatprep.mubr.bf16.mxu0 %v3887
      %4143 = vmatmul.mubr.bf16.gmra.mrb[0].mxu0 %v3885
      %v4144 = vpop.f32.mrb[0].mxu0
      %v4145 = vadd.f32 0.0, %v4144
      %v4146 = vpop.f32.mrb[0].mxu0
      %v4147 = vpop.f32.mrb[0].mxu0
      %v4148 = vadd.f32 0.0, %v4147
      %v4149 = vpop.f32.mrb[0].mxu0
      %4150 = vmatprep.mubr.bf16.mxu0 %v3895
      %4151 = vmatmul.mubr.bf16.gmra.mrb[0].mxu0 %v3893
      %v4152 = vpop.f32.mrb[0].mxu0
      %v4153 = vadd.f32 0.0, %v4152
      %v4154 = vpop.f32.mrb[0].mxu0
      %v4155 = vpop.f32.mrb[0].mxu0
      %v4156 = vadd.f32 0.0, %v4155
      %v4157 = vpop.f32.mrb[0].mxu0
      %4158 = vmatprep.mubr.bf16.mxu0 %v3903
      %4159 = vmatmul.mubr.bf16.gmra.mrb[0].mxu0 %v3901
      %v4160 = vpop.f32.mrb[0].mxu0
      %v4161 = vadd.f32 0.0, %v4160
      %v4162 = vpop.f32.mrb[0].mxu0
      %v4163 = vpop.f32.mrb[0].mxu0
      %v4164 = vadd.f32 0.0, %v4163
      %v4165 = vpop.f32.mrb[0].mxu0
      %4166 = vdwg.mxu0
      %4167 = vmatprep.subr.bf16.mxu0 0
      %4168 = vmatpush1.bf16.msra.mxu0 %v4041
      %4169 = vmatprep.subr.bf16.mxu0 0
      %4170 = vmatpush1.bf16.msra.mxu0 %v4042
      %4171 = vmatprep.subr.bf16.mxu0 0
      %4172 = vmatpush1.bf16.msra.mxu0 %v4043
      %4173 = vmatprep.subr.bf16.mxu0 0
      %4174 = vmatpush1.bf16.msra.mxu0 %v4044
      %4175 = vmatprep.subr.bf16.mxu0 0
      %4176 = vmatpush1.bf16.msra.mxu0 %v4045
      %4177 = vmatprep.subr.bf16.mxu0 0
      %4178 = vmatpush1.bf16.msra.mxu0 %v4046
      %4179 = vmatprep.subr.bf16.mxu0 0
      %4180 = vmatpush1.bf16.msra.mxu0 %v4047
      %4181 = vmatprep.subr.bf16.mxu0 0
      %4182 = vmatpush1.bf16.msra.mxu0 %v4048
      %4183 = vmatprep.subr.bf16.mxu0 0
      %4184 = vmatpush1.bf16.msra.mxu0 %v4049
      %4185 = vmatprep.subr.bf16.mxu0 0
      %4186 = vmatpush1.bf16.msra.mxu0 %v4092
      %4187 = vmatprep.subr.bf16.mxu0 0
      %4188 = vmatpush1.bf16.msra.mxu0 0
      %4189 = vmatprep.subr.bf16.mxu0 0
      %4190 = vmatpush1.bf16.msra.mxu0 0
      %4191 = vmatprep.subr.bf16.mxu0 0
      %4192 = vmatpush1.bf16.msra.mxu0 0
      %4193 = vmatprep.subr.bf16.mxu0 0
      %4194 = vmatpush1.bf16.msra.mxu0 0
      %4195 = vmatprep.subr.bf16.mxu0 0
      %4196 = vmatpush1.bf16.msra.mxu0 0
      %4197 = vmatprep.subr.bf16.mxu0 0
      %4198 = vmatpush1.bf16.msra.mxu0 0
      %4199 = vmatprep.mubr.bf16.mxu0 %v4077
      %4200 = vmatmul.mubr.bf16.gmra.mrb[0].mxu0 %v3872
      %v4201 = vpop.f32.mrb[0].mxu0
      %v4202 = vadd.f32 %v4129, %v4201
      %v4203 = vpop.f32.mrb[0].mxu0
      %v4204 = vpop.f32.mrb[0].mxu0
      %v4205 = vadd.f32 %v4132, %v4204
      %v4206 = vpop.f32.mrb[0].mxu0
      %4207 = vmatprep.mubr.bf16.mxu0 %v4080
      %4208 = vmatmul.mubr.bf16.gmra.mrb[0].mxu0 %v3881
      %v4209 = vpop.f32.mrb[0].mxu0
      %v4210 = vadd.f32 %v4137, %v4209
      %v4211 = vpop.f32.mrb[0].mxu0
      %v4212 = vpop.f32.mrb[0].mxu0
      %v4213 = vadd.f32 %v4140, %v4212
      %v4214 = vpop.f32.mrb[0].mxu0
      %4215 = vmatprep.mubr.bf16.mxu0 %v4083
      %4216 = vmatmul.mubr.bf16.gmra.mrb[0].mxu0 %v3889
      %v4217 = vpop.f32.mrb[0].mxu0
      %v4218 = vadd.f32 %v4145, %v4217
      %v4219 = vpop.f32.mrb[0].mxu0
      %v4220 = vpop.f32.mrb[0].mxu0
      %v4221 = vadd.f32 %v4148, %v4220
      %v4222 = vpop.f32.mrb[0].mxu0
      %4223 = vmatprep.mubr.bf16.mxu0 %v4086
      %4224 = vmatmul.mubr.bf16.gmra.mrb[0].mxu0 %v3897
      %v4225 = vpop.f32.mrb[0].mxu0
      %v4226 = vadd.f32 %v4153, %v4225
      %v4227 = vpop.f32.mrb[0].mxu0
      %v4228 = vpop.f32.mrb[0].mxu0
      %v4229 = vadd.f32 %v4156, %v4228
      %v4230 = vpop.f32.mrb[0].mxu0
      %4231 = vmatprep.mubr.bf16.mxu0 %v4089
      %4232 = vmatmul.mubr.bf16.gmra.mrb[0].mxu0 %v3905
      %v4233 = vpop.f32.mrb[0].mxu0
      %v4234 = vadd.f32 %v4161, %v4233
      %v4235 = vpop.f32.mrb[0].mxu0
      %v4236 = vpop.f32.mrb[0].mxu0
      %v4237 = vadd.f32 %v4164, %v4236
      %v4238 = vpop.f32.mrb[0].mxu0
      %4239 = vdwg.mxu0
      %v4306 = vunpack.c.l.b16 %v235
      %v4307 = vunpack.c.l.b16 %v236
      %v4308 = vunpack.c.l.b16 %v237
      %v4309 = vunpack.c.l.b16 %v238
      %v4310 = vunpack.c.l.b16 %v239
      %v4311 = vunpack.c.l.b16 %v240
      %v4312 = vunpack.c.l.b16 %v241
      %v4313 = vunpack.c.l.b16 %v242
      %v4314 = vunpack.c.l.b16 %v243
      %v4315 = vunpack.c.l.b16 %v244
      %v4316 = vunpack.c.l.b16 %v245
      %v4317 = vunpack.c.l.b16 %v246
      %v4318 = vunpack.c.l.b16 %v247
      %v4319 = vunpack.c.l.b16 %v248
      %v4320 = vunpack.c.l.b16 %v249
      %v4321 = vunpack.c.l.b16 %v250
      %v4322 = vunpack.c.l.b16 %v251
      %v4323 = vunpack.c.l.b16 %v252
      %v4324 = vunpack.c.l.b16 %v253
      %v4325 = vunpack.c.l.b16 %v254
      %v4326 = vunpack.c.l.b16 %v255
      %v4327 = vunpack.c.l.b16 %v256
      %v4328 = vunpack.c.l.b16 %v257
      %v4329 = vunpack.c.l.b16 %v258
      %v4330 = vunpack.c.l.b16 %v259
      %v4331 = vunpack.c.l.b16 %v260
      %v4332 = vunpack.c.l.b16 %v261
      %v4333 = vunpack.c.l.b16 %v262
      %v4334 = vunpack.c.l.b16 %v263
      %v4335 = vunpack.c.l.b16 %v264
      %v4336 = vunpack.c.l.b16 %v265
      %v4337 = vunpack.c.l.b16 %v266
      %v4338 = vunpack.c.l.b16 %v267
      %v4339 = vunpack.c.l.b16 %v268
      %v4340 = vunpack.c.l.b16 %v269
      %v4341 = vunpack.c.l.b16 %v270
      %v4342 = vunpack.c.l.b16 %v271
      %v4343 = vunpack.c.l.b16 %v272
      %v4344 = vunpack.c.l.b16 %v273
      %v4345 = vunpack.c.l.b16 %v274
      %v4346 = vunpack.c.l.b16 %v275
      %v4347 = vunpack.c.l.b16 %v276
      %v4348 = vunpack.c.l.b16 %v277
      %v4349 = vunpack.c.l.b16 %v278
      %v4350 = vunpack.c.l.b16 %v279
      %v4351 = vunpack.c.l.b16 %v280
      %v4352 = vunpack.c.l.b16 %v281
      %v4353 = vunpack.c.l.b16 %v282
      %v4354 = vunpack.c.l.b16 %v283
      %v4355 = vunpack.c.l.b16 %v284
      %v4356 = vunpack.c.l.b16 %v285
      %v4357 = vpack.c.b16 %v4307, %v4306
      %v4358 = vpack.c.b16 %v4309, %v4308
      %v4359 = vpack.c.b16 %v4311, %v4310
      %v4360 = vpack.c.b16 %v4313, %v4312
      %v4361 = vpack.c.b16 %v4315, %v4314
      %v4362 = vpack.c.b16 %v4317, %v4316
      %v4363 = vpack.c.b16 %v4319, %v4318
      %v4364 = vpack.c.b16 %v4321, %v4320
      %v4365 = vpack.c.b16 %v4323, %v4322
      %v4366 = vpack.c.b16 %v4325, %v4324
      %v4367 = vpack.c.b16 %v4327, %v4326
      %v4368 = vpack.c.b16 %v4329, %v4328
      %v4369 = vpack.c.b16 %v4331, %v4330
      %v4370 = vpack.c.b16 %v4333, %v4332
      %v4371 = vpack.c.b16 %v4335, %v4334
      %v4372 = vpack.c.b16 %v4337, %v4336
      %v4373 = vpack.c.b16 %v4339, %v4338
      %v4374 = vpack.c.b16 %v4341, %v4340
      %v4375 = vpack.c.b16 %v4343, %v4342
      %v4376 = vpack.c.b16 %v4345, %v4344
      %v4377 = vpack.c.b16 %v4347, %v4346
      %v4378 = vpack.c.b16 %v4349, %v4348
      %v4379 = vpack.c.b16 %v4351, %v4350
      %v4380 = vpack.c.b16 %v4353, %v4352
      %v4381 = vpack.c.b16 %v4355, %v4354
      %v4382 = vpack.c.b16 %v4356, %v4356
      %v4408 = vsel %vm773, %v407, 0
      %v4410 = vsel %vm773, %v411, 0
      %v4412 = vsel %vm773, %v415, 0
      %v4414 = vsel %vm773, %v419, 0
      %v4416 = vsel %vm773, %v423, 0
      %v4419 = vsel %vm789, %v4382, 0
      %4421 = vmatprep.subr.bf16.mxu0 0
      %4422 = vmatpush1.bf16.msra.mxu0 %v4357
      %4423 = vmatprep.subr.bf16.mxu0 0
      %4424 = vmatpush1.bf16.msra.mxu0 %v4358
      %4425 = vmatprep.subr.bf16.mxu0 0
      %4426 = vmatpush1.bf16.msra.mxu0 %v4359
      %4427 = vmatprep.subr.bf16.mxu0 0
      %4428 = vmatpush1.bf16.msra.mxu0 %v4360
      %4429 = vmatprep.subr.bf16.mxu0 0
      %4430 = vmatpush1.bf16.msra.mxu0 %v4361
      %4431 = vmatprep.subr.bf16.mxu0 0
      %4432 = vmatpush1.bf16.msra.mxu0 %v4362
      %4433 = vmatprep.subr.bf16.mxu0 0
      %4434 = vmatpush1.bf16.msra.mxu0 %v4363
      %4435 = vmatprep.subr.bf16.mxu0 0
      %4436 = vmatpush1.bf16.msra.mxu0 %v4364
      %4437 = vmatprep.subr.bf16.mxu0 0
      %4438 = vmatpush1.bf16.msra.mxu0 %v4365
      %4439 = vmatprep.subr.bf16.mxu0 0
      %4440 = vmatpush1.bf16.msra.mxu0 %v4366
      %4441 = vmatprep.subr.bf16.mxu0 0
      %4442 = vmatpush1.bf16.msra.mxu0 %v4367
      %4443 = vmatprep.subr.bf16.mxu0 0
      %4444 = vmatpush1.bf16.msra.mxu0 %v4368
      %4445 = vmatprep.subr.bf16.mxu0 0
      %4446 = vmatpush1.bf16.msra.mxu0 %v4369
      %4447 = vmatprep.subr.bf16.mxu0 0
      %4448 = vmatpush1.bf16.msra.mxu0 %v4370
      %4449 = vmatprep.subr.bf16.mxu0 0
      %4450 = vmatpush1.bf16.msra.mxu0 %v4371
      %4451 = vmatprep.subr.bf16.mxu0 0
      %4452 = vmatpush1.bf16.msra.mxu0 %v4372
      %4453 = vmatprep.mubr.bf16.mxu0 %v405
      %4454 = vmatmul.mubr.bf16.gmra.mrb[0].mxu0 %v404
      %v4455 = vpop.f32.mrb[0].mxu0
      %v4456 = vadd.f32 %v901, %v4455
      %v4457 = vpop.f32.mrb[0].mxu0
      %v4458 = vpop.f32.mrb[0].mxu0
      %v4459 = vadd.f32 %v904, %v4458
      %v4460 = vpop.f32.mrb[0].mxu0
      %4461 = vmatprep.mubr.bf16.mxu0 %v409
      %4462 = vmatmul.mubr.bf16.gmra.mrb[0].mxu0 %v408
      %v4463 = vpop.f32.mrb[0].mxu0
      %v4464 = vadd.f32 %v909, %v4463
      %v4465 = vpop.f32.mrb[0].mxu0
      %v4466 = vpop.f32.mrb[0].mxu0
      %v4467 = vadd.f32 %v912, %v4466
      %v4468 = vpop.f32.mrb[0].mxu0
      %4469 = vmatprep.mubr.bf16.mxu0 %v413
      %4470 = vmatmul.mubr.bf16.gmra.mrb[0].mxu0 %v412
      %v4471 = vpop.f32.mrb[0].mxu0
      %v4472 = vadd.f32 %v917, %v4471
      %v4473 = vpop.f32.mrb[0].mxu0
      %v4474 = vpop.f32.mrb[0].mxu0
      %v4475 = vadd.f32 %v920, %v4474
      %v4476 = vpop.f32.mrb[0].mxu0
      %4477 = vmatprep.mubr.bf16.mxu0 %v417
      %4478 = vmatmul.mubr.bf16.gmra.mrb[0].mxu0 %v416
      %v4479 = vpop.f32.mrb[0].mxu0
      %v4480 = vadd.f32 %v925, %v4479
      %v4481 = vpop.f32.mrb[0].mxu0
      %v4482 = vpop.f32.mrb[0].mxu0
      %v4483 = vadd.f32 %v928, %v4482
      %v4484 = vpop.f32.mrb[0].mxu0
      %4485 = vmatprep.mubr.bf16.mxu0 %v421
      %4486 = vmatmul.mubr.bf16.gmra.mrb[0].mxu0 %v420
      %v4487 = vpop.f32.mrb[0].mxu0
      %v4488 = vadd.f32 %v933, %v4487
      %v4489 = vpop.f32.mrb[0].mxu0
      %v4490 = vpop.f32.mrb[0].mxu0
      %v4491 = vadd.f32 %v936, %v4490
      %v4492 = vpop.f32.mrb[0].mxu0
      %4493 = vdwg.mxu0
      %4494 = vmatprep.subr.bf16.mxu0 0
      %4495 = vmatpush1.bf16.msra.mxu0 %v4373
      %4496 = vmatprep.subr.bf16.mxu0 0
      %4497 = vmatpush1.bf16.msra.mxu0 %v4374
      %4498 = vmatprep.subr.bf16.mxu0 0
      %4499 = vmatpush1.bf16.msra.mxu0 %v4375
      %4500 = vmatprep.subr.bf16.mxu0 0
      %4501 = vmatpush1.bf16.msra.mxu0 %v4376
      %4502 = vmatprep.subr.bf16.mxu0 0
      %4503 = vmatpush1.bf16.msra.mxu0 %v4377
      %4504 = vmatprep.subr.bf16.mxu0 0
      %4505 = vmatpush1.bf16.msra.mxu0 %v4378
      %4506 = vmatprep.subr.bf16.mxu0 0
      %4507 = vmatpush1.bf16.msra.mxu0 %v4379
      %4508 = vmatprep.subr.bf16.mxu0 0
      %4509 = vmatpush1.bf16.msra.mxu0 %v4380
      %4510 = vmatprep.subr.bf16.mxu0 0
      %4511 = vmatpush1.bf16.msra.mxu0 %v4381
      %4512 = vmatprep.subr.bf16.mxu0 0
      %4513 = vmatpush1.bf16.msra.mxu0 %v4419
      %4514 = vmatprep.subr.bf16.mxu0 0
      %4515 = vmatpush1.bf16.msra.mxu0 0
      %4516 = vmatprep.subr.bf16.mxu0 0
      %4517 = vmatpush1.bf16.msra.mxu0 0
      %4518 = vmatprep.subr.bf16.mxu0 0
      %4519 = vmatpush1.bf16.msra.mxu0 0
      %4520 = vmatprep.subr.bf16.mxu0 0
      %4521 = vmatpush1.bf16.msra.mxu0 0
      %4522 = vmatprep.subr.bf16.mxu0 0
      %4523 = vmatpush1.bf16.msra.mxu0 0
      %4524 = vmatprep.subr.bf16.mxu0 0
      %4525 = vmatpush1.bf16.msra.mxu0 0
      %4526 = vmatprep.mubr.bf16.mxu0 %v4408
      %4527 = vmatmul.mubr.bf16.gmra.mrb[0].mxu0 %v406
      %v4528 = vpop.f32.mrb[0].mxu0
      %v4529 = vadd.f32 %v4456, %v4528
      %v4530 = vpop.f32.mrb[0].mxu0
      %v4531 = vpop.f32.mrb[0].mxu0
      %v4532 = vadd.f32 %v4459, %v4531
      %v4533 = vpop.f32.mrb[0].mxu0
      %4534 = vmatprep.mubr.bf16.mxu0 %v4410
      %4535 = vmatmul.mubr.bf16.gmra.mrb[0].mxu0 %v410
      %v4536 = vpop.f32.mrb[0].mxu0
      %v4537 = vadd.f32 %v4464, %v4536
      %v4538 = vpop.f32.mrb[0].mxu0
      %v4539 = vpop.f32.mrb[0].mxu0
      %v4540 = vadd.f32 %v4467, %v4539
      %v4541 = vpop.f32.mrb[0].mxu0
      %4542 = vmatprep.mubr.bf16.mxu0 %v4412
      %4543 = vmatmul.mubr.bf16.gmra.mrb[0].mxu0 %v414
      %v4544 = vpop.f32.mrb[0].mxu0
      %v4545 = vadd.f32 %v4472, %v4544
      %v4546 = vpop.f32.mrb[0].mxu0
      %v4547 = vpop.f32.mrb[0].mxu0
      %v4548 = vadd.f32 %v4475, %v4547
      %v4549 = vpop.f32.mrb[0].mxu0
      %4550 = vmatprep.mubr.bf16.mxu0 %v4414
      %4551 = vmatmul.mubr.bf16.gmra.mrb[0].mxu0 %v418
      %v4552 = vpop.f32.mrb[0].mxu0
      %v4553 = vadd.f32 %v4480, %v4552
      %v4554 = vpop.f32.mrb[0].mxu0
      %v4555 = vpop.f32.mrb[0].mxu0
      %v4556 = vadd.f32 %v4483, %v4555
      %v4557 = vpop.f32.mrb[0].mxu0
      %4558 = vmatprep.mubr.bf16.mxu0 %v4416
      %4559 = vmatmul.mubr.bf16.gmra.mrb[0].mxu0 %v422
      %v4560 = vpop.f32.mrb[0].mxu0
      %v4561 = vadd.f32 %v4488, %v4560
      %v4562 = vpop.f32.mrb[0].mxu0
      %v4563 = vpop.f32.mrb[0].mxu0
      %v4564 = vadd.f32 %v4491, %v4563
      %v4565 = vpop.f32.mrb[0].mxu0
      %4566 = vdwg.mxu0
      %v4567 = vadd.f32 %v4529, %v1330
      %v4568 = vadd.f32 %v4532, %v1333
      %v4569 = vadd.f32 %v4537, %v1338
      %v4570 = vadd.f32 %v4540, %v1341
      %v4571 = vadd.f32 %v4545, %v1346
      %v4572 = vadd.f32 %v4548, %v1349
      %v4573 = vadd.f32 %v4553, %v1354
      %v4574 = vadd.f32 %v4556, %v1357
      %v4575 = vadd.f32 %v4561, %v1362
      %v4576 = vadd.f32 %v4564, %v1365
      %v4577 = vadd.f32 %v4567, %v1788
      %v4578 = vadd.f32 %v4568, %v1791
      %v4579 = vadd.f32 %v4569, %v1796
      %v4580 = vadd.f32 %v4570, %v1799
      %v4581 = vadd.f32 %v4571, %v1804
      %v4582 = vadd.f32 %v4572, %v1807
      %v4583 = vadd.f32 %v4573, %v1812
      %v4584 = vadd.f32 %v4574, %v1815
      %v4585 = vadd.f32 %v4575, %v1820
      %v4586 = vadd.f32 %v4576, %v1823
      %v4587 = vadd.f32 %v4577, %v2385
      %v4588 = vadd.f32 %v4578, %v2388
      %v4589 = vadd.f32 %v4579, %v2393
      %v4590 = vadd.f32 %v4580, %v2396
      %v4591 = vadd.f32 %v4581, %v2401
      %v4592 = vadd.f32 %v4582, %v2404
      %v4593 = vadd.f32 %v4583, %v2409
      %v4594 = vadd.f32 %v4584, %v2412
      %v4595 = vadd.f32 %v4585, %v2417
      %v4596 = vadd.f32 %v4586, %v2420
      %v4597 = vadd.f32 %v4587, %v2814
      %v4598 = vadd.f32 %v4588, %v2817
      %v4599 = vadd.f32 %v4589, %v2822
      %v4600 = vadd.f32 %v4590, %v2825
      %v4601 = vadd.f32 %v4591, %v2830
      %v4602 = vadd.f32 %v4592, %v2833
      %v4603 = vadd.f32 %v4593, %v2838
      %v4604 = vadd.f32 %v4594, %v2841
      %v4605 = vadd.f32 %v4595, %v2846
      %v4606 = vadd.f32 %v4596, %v2849
      %v4607 = vadd.f32 %v4597, %v3256
      %v4608 = vadd.f32 %v4598, %v3259
      %v4609 = vadd.f32 %v4599, %v3264
      %v4610 = vadd.f32 %v4600, %v3267
      %v4611 = vadd.f32 %v4601, %v3272
      %v4612 = vadd.f32 %v4602, %v3275
      %v4613 = vadd.f32 %v4603, %v3280
      %v4614 = vadd.f32 %v4604, %v3283
      %v4615 = vadd.f32 %v4605, %v3288
      %v4616 = vadd.f32 %v4606, %v3291
      %v4617 = vadd.f32 %v4607, %v3773
      %v4618 = vadd.f32 %v4608, %v3776
      %v4619 = vadd.f32 %v4609, %v3781
      %v4620 = vadd.f32 %v4610, %v3784
      %v4621 = vadd.f32 %v4611, %v3789
      %v4622 = vadd.f32 %v4612, %v3792
      %v4623 = vadd.f32 %v4613, %v3797
      %v4624 = vadd.f32 %v4614, %v3800
      %v4625 = vadd.f32 %v4615, %v3805
      %v4626 = vadd.f32 %v4616, %v3808
      %v4627 = vadd.f32 %v4617, %v4202
      %v4628 = vadd.f32 %v4618, %v4205
      %v4629 = vadd.f32 %v4619, %v4210
      %v4630 = vadd.f32 %v4620, %v4213
      %v4631 = vadd.f32 %v4621, %v4218
      %v4632 = vadd.f32 %v4622, %v4221
      %v4633 = vadd.f32 %v4623, %v4226
      %v4634 = vadd.f32 %v4624, %v4229
      %v4635 = vadd.f32 %v4625, %v4234
      %v4636 = vadd.f32 %v4626, %v4237
      %v4637 = vld [vmem:[%s2] sm:$0x1]
      %v4639 = vlaneseq
      %v4640 = vshrl.u32 %v4639, 7
      %v4641 = vsub.s32 0, %v4640
      %v4642 = vrot.slane %v4637, %v4641
      %v4644 = vadd.f32 %v4627, %v4642
      %v4645 = vadd.f32 %v4628, %v4642
      %v4646 = vadd.f32 %v4629, %v4642
      %v4647 = vadd.f32 %v4630, %v4642
      %v4648 = vadd.f32 %v4631, %v4642
      %v4649 = vadd.f32 %v4632, %v4642
      %v4650 = vadd.f32 %v4633, %v4642
      %v4651 = vadd.f32 %v4634, %v4642
      %v4652 = vadd.f32 %v4635, %v4642
      %v4653 = vadd.f32 %v4636, %v4642
      %v4664 = vcombine.high %v4644, %v4644
      %v4666 = vunpack.c.l.s4 1983009808
      %v4667 = vunpack.c.0.s8 %v4666
      %v4668 = vlaneseq
      %v4669 = vshrl.u32 %v4668, 7
      %v4670 = vsub.s32 %v4667, %v4669
      %v4671 = vrot.slane %v4644, %v4670
      %v4673 = vunpack.c.l.s4 1983009808
      %v4674 = vunpack.c.0.s8 %v4673
      %v4675 = vlaneseq
      %v4676 = vshrl.u32 %v4675, 7
      %v4677 = vsub.s32 %v4674, %v4676
      %v4678 = vrot.slane %v4664, %v4677
      %v4679 = vcombine.high %v4671, %v4671
      %v4680 = vcombine.high %v4678, %v4678
      %v4681 = vcombine.high %v4645, %v4645
      %v4683 = vunpack.c.l.s4 1983009808
      %v4684 = vunpack.c.0.s8 %v4683
      %v4685 = vlaneseq
      %v4686 = vshrl.u32 %v4685, 7
      %v4687 = vsub.s32 %v4684, %v4686
      %v4688 = vrot.slane %v4645, %v4687
      %v4690 = vunpack.c.l.s4 1983009808
      %v4691 = vunpack.c.0.s8 %v4690
      %v4692 = vlaneseq
      %v4693 = vshrl.u32 %v4692, 7
      %v4694 = vsub.s32 %v4691, %v4693
      %v4695 = vrot.slane %v4681, %v4694
      %v4696 = vcombine.high %v4688, %v4688
      %v4697 = vcombine.high %v4695, %v4695
      %v4698 = vcombine.high %v4646, %v4646
      %v4700 = vunpack.c.l.s4 1983009808
      %v4701 = vunpack.c.0.s8 %v4700
      %v4702 = vlaneseq
      %v4703 = vshrl.u32 %v4702, 7
      %v4704 = vsub.s32 %v4701, %v4703
      %v4705 = vrot.slane %v4646, %v4704
      %v4707 = vunpack.c.l.s4 1983009808
      %v4708 = vunpack.c.0.s8 %v4707
      %v4709 = vlaneseq
      %v4710 = vshrl.u32 %v4709, 7
      %v4711 = vsub.s32 %v4708, %v4710
      %v4712 = vrot.slane %v4698, %v4711
      %v4713 = vcombine.high %v4712, %v4712
      %v4714 = vcombine.high %v4647, %v4647
      %v4716 = vunpack.c.l.s4 1983009808
      %v4717 = vunpack.c.0.s8 %v4716
      %v4718 = vlaneseq
      %v4719 = vshrl.u32 %v4718, 7
      %v4720 = vsub.s32 %v4717, %v4719
      %v4721 = vrot.slane %v4647, %v4720
      %v4723 = vunpack.c.l.s4 1983009808
      %v4724 = vunpack.c.0.s8 %v4723
      %v4725 = vlaneseq
      %v4726 = vshrl.u32 %v4725, 7
      %v4727 = vsub.s32 %v4724, %v4726
      %v4728 = vrot.slane %v4714, %v4727
      %v4729 = vcombine.high %v4721, %v4721
      %v4730 = vcombine.high %v4728, %v4728
      %v4731 = vcombine.high %v4648, %v4648
      %v4733 = vunpack.c.l.s4 1983009808
      %v4734 = vunpack.c.0.s8 %v4733
      %v4735 = vlaneseq
      %v4736 = vshrl.u32 %v4735, 7
      %v4737 = vsub.s32 %v4734, %v4736
      %v4738 = vrot.slane %v4648, %v4737
      %v4740 = vunpack.c.l.s4 1983009808
      %v4741 = vunpack.c.0.s8 %v4740
      %v4742 = vlaneseq
      %v4743 = vshrl.u32 %v4742, 7
      %v4744 = vsub.s32 %v4741, %v4743
      %v4745 = vrot.slane %v4731, %v4744
      %v4746 = vcombine.high %v4738, %v4738
      %v4747 = vcombine.high %v4649, %v4649
      %v4749 = vunpack.c.l.s4 1983009808
      %v4750 = vunpack.c.0.s8 %v4749
      %v4751 = vlaneseq
      %v4752 = vshrl.u32 %v4751, 7
      %v4753 = vsub.s32 %v4750, %v4752
      %v4754 = vrot.slane %v4649, %v4753
      %v4756 = vunpack.c.l.s4 1983009808
      %v4757 = vunpack.c.0.s8 %v4756
      %v4758 = vlaneseq
      %v4759 = vshrl.u32 %v4758, 7
      %v4760 = vsub.s32 %v4757, %v4759
      %v4761 = vrot.slane %v4747, %v4760
      %v4762 = vcombine.high %v4754, %v4754
      %v4763 = vcombine.high %v4761, %v4761
      %v4764 = vcombine.high %v4650, %v4650
      %v4766 = vunpack.c.l.s4 1983009808
      %v4767 = vunpack.c.0.s8 %v4766
      %v4768 = vlaneseq
      %v4769 = vshrl.u32 %v4768, 7
      %v4770 = vsub.s32 %v4767, %v4769
      %v4771 = vrot.slane %v4650, %v4770
      %v4773 = vunpack.c.l.s4 1983009808
      %v4774 = vunpack.c.0.s8 %v4773
      %v4775 = vlaneseq
      %v4776 = vshrl.u32 %v4775, 7
      %v4777 = vsub.s32 %v4774, %v4776
      %v4778 = vrot.slane %v4764, %v4777
      %v4779 = vcombine.high %v4771, %v4771
      %v4780 = vcombine.high %v4778, %v4778
      %v4781 = vcombine.high %v4651, %v4651
      %v4783 = vunpack.c.l.s4 1983009808
      %v4784 = vunpack.c.0.s8 %v4783
      %v4785 = vlaneseq
      %v4786 = vshrl.u32 %v4785, 7
      %v4787 = vsub.s32 %v4784, %v4786
      %v4788 = vrot.slane %v4651, %v4787
      %v4790 = vunpack.c.l.s4 1983009808
      %v4791 = vunpack.c.0.s8 %v4790
      %v4792 = vlaneseq
      %v4793 = vshrl.u32 %v4792, 7
      %v4794 = vsub.s32 %v4791, %v4793
      %v4795 = vrot.slane %v4781, %v4794
      %v4796 = vcombine.high %v4795, %v4795
      %v4797 = vcombine.high %v4652, %v4652
      %v4799 = vunpack.c.l.s4 1983009808
      %v4800 = vunpack.c.0.s8 %v4799
      %v4801 = vlaneseq
      %v4802 = vshrl.u32 %v4801, 7
      %v4803 = vsub.s32 %v4800, %v4802
      %v4804 = vrot.slane %v4652, %v4803
      %v4806 = vunpack.c.l.s4 1983009808
      %v4807 = vunpack.c.0.s8 %v4806
      %v4808 = vlaneseq
      %v4809 = vshrl.u32 %v4808, 7
      %v4810 = vsub.s32 %v4807, %v4809
      %v4811 = vrot.slane %v4797, %v4810
      %v4812 = vcombine.high %v4804, %v4804
      %v4813 = vcombine.high %v4811, %v4811
      %v4814 = vcombine.high %v4653, %v4653
      %v4816 = vunpack.c.l.s4 1983009808
      %v4817 = vunpack.c.0.s8 %v4816
      %v4818 = vlaneseq
      %v4819 = vshrl.u32 %v4818, 7
      %v4820 = vsub.s32 %v4817, %v4819
      %v4821 = vrot.slane %v4653, %v4820
      %v4823 = vunpack.c.l.s4 1983009808
      %v4824 = vunpack.c.0.s8 %v4823
      %v4825 = vlaneseq
      %v4826 = vshrl.u32 %v4825, 7
      %v4827 = vsub.s32 %v4824, %v4826
      %v4828 = vrot.slane %v4814, %v4827
      %v4829 = vcombine.high %v4821, %v4821
      %v4830 = vcombine.low %v4671, %v4679
      %v4831 = vcombine.low %v4678, %v4680
      %v4833 = vunpack.c.l.s4 1983009808
      %v4834 = vunpack.c.0.s8 %v4833
      %v4835 = vlaneseq
      %v4836 = vshrl.u32 %v4835, 7
      %v4837 = vsub.s32 %v4834, %v4836
      %v4838 = vrot.slane %v4830, %v4837
      %v4840 = vunpack.c.l.s4 1983009808
      %v4841 = vunpack.c.0.s8 %v4840
      %v4842 = vlaneseq
      %v4843 = vshrl.u32 %v4842, 7
      %v4844 = vsub.s32 %v4841, %v4843
      %v4845 = vrot.slane %v4831, %v4844
      %v4846 = vcombine.low %v4838, %v4845
      %v4847 = vcombine.low %v4696, %v4695
      %v4848 = vcombine.low %v4697, %v4705
      %v4850 = vunpack.c.l.s4 1983009808
      %v4851 = vunpack.c.0.s8 %v4850
      %v4852 = vlaneseq
      %v4853 = vshrl.u32 %v4852, 7
      %v4854 = vsub.s32 %v4851, %v4853
      %v4855 = vrot.slane %v4847, %v4854
      %v4857 = vunpack.c.l.s4 1983009808
      %v4858 = vunpack.c.0.s8 %v4857
      %v4859 = vlaneseq
      %v4860 = vshrl.u32 %v4859, 7
      %v4861 = vsub.s32 %v4858, %v4860
      %v4862 = vrot.slane %v4848, %v4861
      %v4863 = vcombine.low %v4855, %v4862
      %v4864 = vcombine.low %v4712, %v4713
      %v4865 = vcombine.low %v4721, %v4729
      %v4867 = vunpack.c.l.s4 1983009808
      %v4868 = vunpack.c.0.s8 %v4867
      %v4869 = vlaneseq
      %v4870 = vshrl.u32 %v4869, 7
      %v4871 = vsub.s32 %v4868, %v4870
      %v4872 = vrot.slane %v4864, %v4871
      %v4874 = vunpack.c.l.s4 1983009808
      %v4875 = vunpack.c.0.s8 %v4874
      %v4876 = vlaneseq
      %v4877 = vshrl.u32 %v4876, 7
      %v4878 = vsub.s32 %v4875, %v4877
      %v4879 = vrot.slane %v4865, %v4878
      %v4880 = vcombine.low %v4872, %v4879
      %v4881 = vcombine.low %v4730, %v4738
      %v4882 = vcombine.low %v4746, %v4745
      %v4884 = vunpack.c.l.s4 1983009808
      %v4885 = vunpack.c.0.s8 %v4884
      %v4886 = vlaneseq
      %v4887 = vshrl.u32 %v4886, 7
      %v4888 = vsub.s32 %v4885, %v4887
      %v4889 = vrot.slane %v4881, %v4888
      %v4891 = vunpack.c.l.s4 1983009808
      %v4892 = vunpack.c.0.s8 %v4891
      %v4893 = vlaneseq
      %v4894 = vshrl.u32 %v4893, 7
      %v4895 = vsub.s32 %v4892, %v4894
      %v4896 = vrot.slane %v4882, %v4895
      %v4897 = vcombine.low %v4889, %v4896
      %v4898 = vcombine.low %v4754, %v4762
      %v4899 = vcombine.low %v4761, %v4763
      %v4901 = vunpack.c.l.s4 1983009808
      %v4902 = vunpack.c.0.s8 %v4901
      %v4903 = vlaneseq
      %v4904 = vshrl.u32 %v4903, 7
      %v4905 = vsub.s32 %v4902, %v4904
      %v4906 = vrot.slane %v4898, %v4905
      %v4908 = vunpack.c.l.s4 1983009808
      %v4909 = vunpack.c.0.s8 %v4908
      %v4910 = vlaneseq
      %v4911 = vshrl.u32 %v4910, 7
      %v4912 = vsub.s32 %v4909, %v4911
      %v4913 = vrot.slane %v4899, %v4912
      %v4914 = vcombine.low %v4906, %v4913
      %v4915 = vcombine.low %v4779, %v4778
      %v4916 = vcombine.low %v4780, %v4788
      %v4918 = vunpack.c.l.s4 1983009808
      %v4919 = vunpack.c.0.s8 %v4918
      %v4920 = vlaneseq
      %v4921 = vshrl.u32 %v4920, 7
      %v4922 = vsub.s32 %v4919, %v4921
      %v4923 = vrot.slane %v4915, %v4922
      %v4925 = vunpack.c.l.s4 1983009808
      %v4926 = vunpack.c.0.s8 %v4925
      %v4927 = vlaneseq
      %v4928 = vshrl.u32 %v4927, 7
      %v4929 = vsub.s32 %v4926, %v4928
      %v4930 = vrot.slane %v4916, %v4929
      %v4931 = vcombine.low %v4923, %v4930
      %v4932 = vcombine.low %v4795, %v4796
      %v4933 = vcombine.low %v4804, %v4812
      %v4935 = vunpack.c.l.s4 1983009808
      %v4936 = vunpack.c.0.s8 %v4935
      %v4937 = vlaneseq
      %v4938 = vshrl.u32 %v4937, 7
      %v4939 = vsub.s32 %v4936, %v4938
      %v4940 = vrot.slane %v4932, %v4939
      %v4942 = vunpack.c.l.s4 1983009808
      %v4943 = vunpack.c.0.s8 %v4942
      %v4944 = vlaneseq
      %v4945 = vshrl.u32 %v4944, 7
      %v4946 = vsub.s32 %v4943, %v4945
      %v4947 = vrot.slane %v4933, %v4946
      %v4948 = vcombine.low %v4940, %v4947
      %v4949 = vcombine.low %v4813, %v4821
      %v4950 = vcombine.low %v4829, %v4828
      %v4952 = vunpack.c.l.s4 1983009808
      %v4953 = vunpack.c.0.s8 %v4952
      %v4954 = vlaneseq
      %v4955 = vshrl.u32 %v4954, 7
      %v4956 = vsub.s32 %v4953, %v4955
      %v4957 = vrot.slane %v4949, %v4956
      %v4959 = vunpack.c.l.s4 1983009808
      %v4960 = vunpack.c.0.s8 %v4959
      %v4961 = vlaneseq
      %v4962 = vshrl.u32 %v4961, 7
      %v4963 = vsub.s32 %v4960, %v4962
      %v4964 = vrot.slane %v4950, %v4963
      %v4965 = vcombine.low %v4957, %v4964
      %v4974 = vpack.c.bf16 %v4846, %v4846
      %v4975 = vpack.c.bf16 %v4863, %v4863
      %v4976 = vpack.c.bf16 %v4880, %v4880
      %v4977 = vpack.c.bf16 %v4897, %v4897
      %v4978 = vpack.c.bf16 %v4914, %v4914
      %v4979 = vpack.c.bf16 %v4931, %v4931
      %v4980 = vpack.c.bf16 %v4948, %v4948
      %v4981 = vpack.c.bf16 %v4965, %v4965
      %vm4982 = vcmask 60416
      %4983 = vst.msk [vmem:[%s206] sm:$0xf] %vm4982, %v4974
      %4984 = vst.msk [vmem:[%s206 + $0x4] sm:$0xf] %vm4982, %v4975
      %4985 = vst.msk [vmem:[%s206 + $0x8] sm:$0xf] %vm4982, %v4976
      %4986 = vst.msk [vmem:[%s206 + $0xc] sm:$0xf] %vm4982, %v4977
      %4987 = vst.msk [vmem:[%s206 + $0x10] sm:$0xf] %vm4982, %v4978
      %4988 = vst.msk [vmem:[%s206 + $0x14] sm:$0xf] %vm4982, %v4979
      %4989 = vst.msk [vmem:[%s206 + $0x18] sm:$0xf] %vm4982, %v4980
      %4990 = vst.msk [vmem:[%s206 + $0x1c] sm:$0xf] %vm4982, %v4981
      %s4991 = smul.u32 8, %s19
      %p4992 = scmp.lt.s32.totalorder %s18, 1
      %s4993 = scalar_select %p4992, %s18, 1
      %p4994 = scmp.lt.s32.totalorder %s4991, 7
      %s4995 = scalar_select %p4994, %s4991, 7
      %s4996 = smul.addr %s4993, 8
      %s4997 = sadd.s32 %s4995, %s4996
      %s4998 = smul.addr %s4997, 4
      %s4999 = scalar_lea.vmem %s3, %s4998
      // Predicated region
      $region33: #{dfnet_forward.11} parent=31 // pred_check
        %p5000 = pneg %p116
      $region34: #{dfnet_forward.11} parent=31 // pred_check_branch
        %5002 = sbr.rel (%p5000) target = $region36
      $region35: #{dfnet_forward.11} parent=31 // pred_region
        %s5003 = smul.u32 8, %s19
      $region36: #{dfnet_forward.11} parent=31 // pred_fallthru
        _
    $region32: #{dfnet_forward.11} parent=5 // pred_fallthru
      _
    %p5004 = scmp.le.s32.totalorder 2, %s9
    // Predicated region
    $region37: #{dfnet_forward.11} parent=5 // pred_check
      %p5005 = pneg %p5004
    $region38: #{dfnet_forward.11} parent=5 // pred_check_branch
      %5007 = sbr.rel (%p5005) target = $region40
    $region39: #{dfnet_forward.11} parent=5 // pred_region
      %s5008 = ssub.s32 %s9, 2
      // Predicated region
      $region41: #{dfnet_forward.11} parent=39 // pred_check
        %p5009 = pneg %p122
      $region42: #{dfnet_forward.11} parent=39 // pred_check_branch
        %5011 = sbr.rel (%p5009) target = $region44
      $region43: #{dfnet_forward.11} parent=39 // pred_region
        %s5012 = smul.u32 8, %s21
        %p5013 = scmp.lt.s32.totalorder %s20, 1
        %s5014 = scalar_select %p5013, %s20, 1
        %p5015 = scmp.lt.s32.totalorder %s5012, 7
        %s5016 = scalar_select %p5015, %s5012, 7
        %s5017 = smul.addr %s5014, 8
        %s5018 = sadd.s32 %s5016, %s5017
        %s5019 = smul.addr %s5018, 4
        %s5020 = scalar_lea.vmem %s3, %s5019
      $region44: #{dfnet_forward.11} parent=39 // pred_fallthru
        _
    $region40: #{dfnet_forward.11} parent=5 // pred_fallthru
      _
  $region6: #{dfnet_forward.11} parent=0 // loop_footer
    %s13 = sadd.s32 1, %s9
  $region7: #{dfnet_forward.11} parent=0 // loop_footer_branch
    %8 = sbr.rel target = $region3
  $region8: #{dfnet_forward.11} parent=0 // loop_exit
    _

// kernel: dfnet_forward.14
$region0: #{dfnet_forward.14}
  #allocation0 [shape = 'u32[]', space=smem, size = 0x4, offset = 0x4, fixed_abs, tag = 'smem constant byte address 0x4 - core index']
  #allocation1 [shape = 'u32[144,128]{1,0:T(1,128)}', space=vmem, size = 0x12000, scoped, tag = 'internal scratch']
  %s0 = inlined_call_operand.vmem [shape: bf16[2,1,64,108], index: 0, kind: input, shape index: {}]
  %s1 = inlined_call_operand.vmem [shape: bf16[108,4], index: 1, kind: input, shape index: {}]
  %s2 = inlined_call_operand.vmem [shape: f32[1,4], index: 2, kind: input, shape index: {}]
  %s3 = inlined_call_operand.vmem [shape: bf16[2,8,8,4], index: 3, kind: output, shape index: {}]
  %s4 = sld [smem:[#allocation0]]
  $region45: #{dfnet_forward.14} parent=0
    _
  %s6 = ssub.s32 1, %s4
  %s7 = scalar_select 0, %s6, %s4
  loop: start=0, step=1, limit=4
  $region2: #{dfnet_forward.14} parent=0 // loop_pre_header
    _
  $region3: #{dfnet_forward.14} parent=0 // loop_header
    %s9 = sphi 0, %s13
    %p10 = scmp.ge.s32.totalorder %s9, 4
    %s16 = sphi 0, %s28
    %s17 = sphi 0, %s24
    %s18 = sphi 0, %s16
    %s19 = sphi 0, %s17
    %s20 = sphi 0, %s18
    %s21 = sphi 0, %s19
    %s33 = sphi 0, %s35
    %s36 = sphi 0, %s33
    %s37 = sphi 0, %s36
    %s53 = sphi 0, %s37
    %s57 = sphi 0, %s57
    %s59 = sphi 0, %s57
    %s60 = sphi 0, %s59
    %s74 = sphi 0, %s60
    %s78 = sphi 0, %s78
    %s80 = sphi 0, %s78
    %s81 = sphi 0, %s80
    %s95 = sphi 0, %s81
    %s103 = sphi 0, %s105
    %s106 = sphi 0, %s103
    %s107 = sphi 0, %s106
    %s123 = sphi 0, %s107
  $region4: #{dfnet_forward.14} parent=0 // loop_header_branch
    %12 = sbr.rel (%p10) target = $region8
  $region5: #{dfnet_forward.14} parent=0 // loop_body
    %s14 = ssub.s32 %s9, 1
    %s15 = ssub.s32 %s9, 2
    %s22 = sadd.s32 1, %s17
    %p23 = scmp.ge.s32.totalorder %s22, 1
    %s24 = scalar_select %p23, 0, %s22
    %s25 = sadd.s32 1, %s16
    %s26 = scalar_select %p23, %s25, %s16
    %p27 = scmp.ge.s32.totalorder %s26, 2
    %s28 = scalar_select %p27, 0, %s26
    %s29 = ssub.s32 %s16, %s28
    %s30 = ssub.s32 %s17, %s24
    %s31 = sor.u32 %s29, %s30
    %p32 = scmp.eq.s32.totalorder %s31, 0
    %s34 = sadd.s32 %s33, 1
    %s35 = scalar_select %p32, %s33, %s34
    %p38 = pneg %p32
    %p39 = scmp.eq.s32.totalorder %s9, 1
    %p40 = por %p38, %p39
    %p41 = scmp.ne.s32.totalorder %s33, %s36
    %p42 = scmp.eq.s32.totalorder %s9, 0
    %p43 = por %p41, %p42
    %p44 = scmp.ne.s32.totalorder %s33, %s36
    %p45 = scmp.eq.s32.totalorder %s14, 1
    %p46 = por %p44, %p45
    %p47 = scmp.ne.s32.totalorder %s36, %s37
    %p48 = scmp.eq.s32.totalorder %s14, 0
    %p49 = por %p47, %p48
    %p50 = scmp.ne.s32.totalorder %s36, %s37
    %p51 = scmp.eq.s32.totalorder %s15, 1
    %p52 = por %p50, %p51
    %p54 = scmp.ne.s32.totalorder %s37, %s53
    %p55 = scmp.eq.s32.totalorder %s15, 0
    %p56 = por %p54, %p55
    %s58 = sadd.s32 %s57, 1
    %p61 = scmp.eq.s32.totalorder %s9, 1
    %p62 = scmp.ne.s32.totalorder %s57, %s59
    %p63 = scmp.eq.s32.totalorder %s9, 0
    %p64 = por %p62, %p63
    %p65 = scmp.ne.s32.totalorder %s57, %s59
    %p66 = scmp.eq.s32.totalorder %s14, 1
    %p67 = por %p65, %p66
    %p68 = scmp.ne.s32.totalorder %s59, %s60
    %p69 = scmp.eq.s32.totalorder %s14, 0
    %p70 = por %p68, %p69
    %p71 = scmp.ne.s32.totalorder %s59, %s60
    %p72 = scmp.eq.s32.totalorder %s15, 1
    %p73 = por %p71, %p72
    %p75 = scmp.ne.s32.totalorder %s60, %s74
    %p76 = scmp.eq.s32.totalorder %s15, 0
    %p77 = por %p75, %p76
    %s79 = sadd.s32 %s78, 1
    %p82 = scmp.eq.s32.totalorder %s9, 1
    %p83 = scmp.ne.s32.totalorder %s78, %s80
    %p84 = scmp.eq.s32.totalorder %s9, 0
    %p85 = por %p83, %p84
    %p86 = scmp.ne.s32.totalorder %s78, %s80
    %p87 = scmp.eq.s32.totalorder %s14, 1
    %p88 = por %p86, %p87
    %p89 = scmp.ne.s32.totalorder %s80, %s81
    %p90 = scmp.eq.s32.totalorder %s14, 0
    %p91 = por %p89, %p90
    %p92 = scmp.ne.s32.totalorder %s80, %s81
    %p93 = scmp.eq.s32.totalorder %s15, 1
    %p94 = por %p92, %p93
    %p96 = scmp.ne.s32.totalorder %s81, %s95
    %p97 = scmp.eq.s32.totalorder %s15, 0
    %p98 = por %p96, %p97
    %s99 = ssub.s32 %s16, %s28
    %s100 = ssub.s32 %s17, %s24
    %s101 = sor.u32 %s99, %s100
    %p102 = scmp.eq.s32.totalorder %s101, 0
    %s104 = sadd.s32 %s103, 1
    %s105 = scalar_select %p102, %s103, %s104
    %p108 = pneg %p102
    %p109 = scmp.eq.s32.totalorder %s9, 1
    %p110 = por %p108, %p109
    %p111 = scmp.ne.s32.totalorder %s103, %s106
    %p112 = scmp.eq.s32.totalorder %s9, 0
    %p113 = por %p111, %p112
    %p114 = scmp.ne.s32.totalorder %s103, %s106
    %p115 = scmp.eq.s32.totalorder %s14, 1
    %p116 = por %p114, %p115
    %p117 = scmp.ne.s32.totalorder %s106, %s107
    %p118 = scmp.eq.s32.totalorder %s14, 0
    %p119 = por %p117, %p118
    %p120 = scmp.ne.s32.totalorder %s106, %s107
    %p121 = scmp.eq.s32.totalorder %s15, 1
    %p122 = por %p120, %p121
    %p124 = scmp.ne.s32.totalorder %s107, %s123
    %p125 = scmp.eq.s32.totalorder %s15, 0
    %p126 = por %p124, %p125
    %p127 = scmp.le.s32.totalorder 1, %s9
    %p128 = scmp.lt.s32.totalorder %s9, 3
    %p129 = pnand %p127, %p128
    %p130 = pneg %p129
    // Predicated region
    $region9: #{dfnet_forward.14} parent=5 // pred_check
      _
    $region10: #{dfnet_forward.14} parent=5 // pred_check_branch
      %132 = sbr.rel (%p129) target = $region12
    $region11: #{dfnet_forward.14} parent=5 // pred_region
      %s133 = ssub.s32 %s9, 1
      // Predicated region
      $region13: #{dfnet_forward.14} parent=11 // pred_check
        %p134 = pneg %p70
      $region14: #{dfnet_forward.14} parent=11 // pred_check_branch
        %136 = sbr.rel (%p134) target = $region16
      $region15: #{dfnet_forward.14} parent=11 // pred_region
        _
      $region16: #{dfnet_forward.14} parent=11 // pred_fallthru
        _
      // Predicated region
      $region17: #{dfnet_forward.14} parent=11 // pred_check
        %p137 = pneg %p91
      $region18: #{dfnet_forward.14} parent=11 // pred_check_branch
        %139 = sbr.rel (%p137) target = $region20
      $region19: #{dfnet_forward.14} parent=11 // pred_region
        _
      $region20: #{dfnet_forward.14} parent=11 // pred_fallthru
        _
    $region12: #{dfnet_forward.14} parent=5 // pred_fallthru
      _
    %p140 = scmp.lt.s32.totalorder %s9, 2
    // Predicated region
    $region21: #{dfnet_forward.14} parent=5 // pred_check
      %p141 = pneg %p140
    $region22: #{dfnet_forward.14} parent=5 // pred_check_branch
      %143 = sbr.rel (%p141) target = $region24
    $region23: #{dfnet_forward.14} parent=5 // pred_region
      // Predicated region
      $region25: #{dfnet_forward.14} parent=23 // pred_check
        %p144 = pneg %p43
      $region26: #{dfnet_forward.14} parent=23 // pred_check_branch
        %146 = sbr.rel (%p144) target = $region28
      $region27: #{dfnet_forward.14} parent=23 // pred_region
        %p147 = scmp.lt.s32.totalorder %s16, 1
        %s148 = scalar_select %p147, %s16, 1
        %p149 = scmp.lt.s32.totalorder %s17, 0
        %s150 = scalar_select %p149, %s17, 0
        %s151 = smul.addr %s150, 8
        %s152 = smul.addr %s148, 8
        %s153 = sadd.s32 %s151, %s152
        %s154 = smul.addr %s153, 4
        %s155 = scalar_lea.vmem %s0, %s154
      $region28: #{dfnet_forward.14} parent=23 // pred_fallthru
        _
    $region24: #{dfnet_forward.14} parent=5 // pred_fallthru
      _
    %p156 = scmp.le.s32.totalorder 1, %s9
    %p157 = scmp.lt.s32.totalorder %s9, 3
    %p158 = pnand %p156, %p157
    %p159 = pneg %p158
    // Predicated region
    $region29: #{dfnet_forward.14} parent=5 // pred_check
      _
    $region30: #{dfnet_forward.14} parent=5 // pred_check_branch
      %161 = sbr.rel (%p158) target = $region32
    $region31: #{dfnet_forward.14} parent=5 // pred_region
      %s162 = ssub.s32 %s9, 1
      %p163 = scmp.lt.s32.totalorder %s18, 1
      %s164 = scalar_select %p163, %s18, 1
      %p165 = scmp.lt.s32.totalorder %s19, 0
      %s166 = scalar_select %p165, %s19, 0
      %s167 = smul.addr %s166, 8
      %s168 = smul.addr %s164, 8
      %s169 = sadd.s32 %s167, %s168
      %s170 = smul.addr %s169, 4
      %s171 = scalar_lea.vmem %s0, %s170
      %p172 = pneg %p49
      %p173 = pneg %p46
      %p174 = pneg %p70
      %p175 = pneg %p67
      %p176 = pneg %p91
      %p177 = pneg %p88
      %p178 = pneg %p119
      %p179 = pneg %p116
      %s180 = smul.u32 8, %s19
      %p181 = scmp.lt.s32.totalorder %s18, 1
      %s182 = scalar_select %p181, %s18, 1
      %p183 = scmp.lt.s32.totalorder %s180, 7
      %s184 = scalar_select %p183, %s180, 7
      %s185 = smul.addr %s182, 8
      %s186 = sadd.s32 %s184, %s185
      %s187 = smul.addr %s186, 4
      %s188 = scalar_lea.vmem %s3, %s187
      %p189 = scmp.lt.s32.totalorder %s18, 1
      %s190 = scalar_select %p189, %s18, 1
      %p191 = scmp.lt.s32.totalorder %s19, 0
      %s192 = scalar_select %p191, %s19, 0
      %s193 = smul.addr %s192, 8
      %s194 = smul.addr %s190, 8
      %s195 = sadd.s32 %s193, %s194
      %s196 = smul.addr %s195, 4
      %s197 = scalar_lea.vmem %s0, %s196
      %s198 = smul.u32 8, %s19
      %p199 = scmp.lt.s32.totalorder %s18, 1
      %s200 = scalar_select %p199, %s18, 1
      %p201 = scmp.lt.s32.totalorder %s198, 7
      %s202 = scalar_select %p201, %s198, 7
      %s203 = smul.addr %s200, 8
      %s204 = sadd.s32 %s202, %s203
      %s205 = smul.addr %s204, 4
      %s206 = scalar_lea.vmem %s3, %s205
      %s207 = smul.u32 8, %s19
      %v209 = vld [vmem:[%s197] sm:$0xf]
      %v210 = vld [vmem:[%s197 + $0x4] sm:$0xf]
      %v211 = vld [vmem:[%s197 + $0x8] sm:$0xf]
      %v212 = vld [vmem:[%s197 + $0xc] sm:$0xf]
      %v213 = vld [vmem:[%s197 + $0x10] sm:$0xf]
      %v214 = vld [vmem:[%s197 + $0x14] sm:$0xf]
      %v215 = vld [vmem:[%s197 + $0x18] sm:$0xf]
      %v216 = vld [vmem:[%s197 + $0x1c] sm:$0xf]
      %v217 = vld [vmem:[%s1] sm:$0xf]
      %v218 = vld [vmem:[%s1 + $0x4] sm:$0xf]
      %v219 = vld [vmem:[%s1 + $0x8] sm:$0xf]
      %v220 = vld [vmem:[%s1 + $0xc] sm:$0xf]
      %v221 = vld [vmem:[%s1 + $0x10] sm:$0xf]
      %v222 = vld [vmem:[%s1 + $0x14] sm:$0xf]
      %v223 = vld [vmem:[%s1 + $0x18] sm:$0xf]
      %v224 = vld [vmem:[%s1 + $0x1c] sm:$0xf]
      %v225 = vld [vmem:[%s1 + $0x20] sm:$0xf]
      %v226 = vld [vmem:[%s1 + $0x24] sm:$0xf]
      %v227 = vld [vmem:[%s1 + $0x28] sm:$0xf]
      %v228 = vld [vmem:[%s1 + $0x2c] sm:$0xf]
      %v229 = vld [vmem:[%s1 + $0x30] sm:$0xf]
      %v230 = vld [vmem:[%s1 + $0x34] sm:$0x3]
      %v231 = vld [vmem:[%s2] sm:$0x1]
      %v233 = vlaneseq
      %v234 = vshrl.u32 %v233, 7
      %v235 = vsub.s32 0, %v234
      %v236 = vrot.slane %v231, %v235
      %v246 = vunpack.c.l.b16 %v209
      %v247 = vunpack.c.l.b16 %v210
      %v248 = vunpack.c.l.b16 %v211
      %v249 = vunpack.c.l.b16 %v212
      %v250 = vunpack.c.l.b16 %v213
      %v251 = vunpack.c.l.b16 %v214
      %v252 = vunpack.c.l.b16 %v215
      %v253 = vunpack.c.l.b16 %v216
      %v254 = vpack.c.b16 %v247, %v246
      %v255 = vpack.c.b16 %v249, %v248
      %v256 = vpack.c.b16 %v251, %v250
      %v257 = vpack.c.b16 %v253, %v252
      %v272 = vunpack.c.l.b16 %v217
      %v273 = vunpack.c.l.b16 %v218
      %v274 = vunpack.c.l.b16 %v219
      %v275 = vunpack.c.l.b16 %v220
      %v276 = vunpack.c.l.b16 %v221
      %v277 = vunpack.c.l.b16 %v222
      %v278 = vunpack.c.l.b16 %v223
      %v279 = vunpack.c.l.b16 %v224
      %v280 = vunpack.c.l.b16 %v225
      %v281 = vunpack.c.l.b16 %v226
      %v282 = vunpack.c.l.b16 %v227
      %v283 = vunpack.c.l.b16 %v228
      %v284 = vunpack.c.l.b16 %v229
      %v285 = vunpack.c.l.b16 %v230
      %v286 = vpack.c.b16 %v273, %v272
      %v287 = vpack.c.b16 %v275, %v274
      %v288 = vpack.c.b16 %v277, %v276
      %v289 = vpack.c.b16 %v279, %v278
      %v290 = vpack.c.b16 %v281, %v280
      %v291 = vpack.c.b16 %v283, %v282
      %v292 = vpack.c.b16 %v285, %v284
      %vm299 = vcmask 883712
      %v301 = vsel %vm299, %v254, 0
      %v304 = vsel %vm299, %v255, 0
      %v307 = vsel %vm299, %v256, 0
      %v310 = vsel %vm299, %v257, 0
      %vm312 = vcmask 1045504
      %v314 = vsel %vm312, %v292, 0
      %316 = vmatprep.subr.bf16.mxu0 0
      %317 = vmatpush1.bf16.msra.mxu0 %v286
      %318 = vmatprep.subr.bf16.mxu0 0
      %319 = vmatpush1.bf16.msra.mxu0 %v287
      %320 = vmatprep.subr.bf16.mxu0 0
      %321 = vmatpush1.bf16.msra.mxu0 %v288
      %322 = vmatprep.subr.bf16.mxu0 0
      %323 = vmatpush1.bf16.msra.mxu0 %v289
      %324 = vmatprep.subr.bf16.mxu0 0
      %325 = vmatpush1.bf16.msra.mxu0 %v290
      %326 = vmatprep.subr.bf16.mxu0 0
      %327 = vmatpush1.bf16.msra.mxu0 %v291
      %328 = vmatprep.subr.bf16.mxu0 0
      %329 = vmatpush1.bf16.msra.mxu0 %v314
      %330 = vmatprep.subr.bf16.mxu0 0
      %331 = vmatpush1.bf16.msra.mxu0 0
      %332 = vmatprep.subr.bf16.mxu0 0
      %333 = vmatpush1.bf16.msra.mxu0 0
      %334 = vmatprep.subr.bf16.mxu0 0
      %335 = vmatpush1.bf16.msra.mxu0 0
      %336 = vmatprep.subr.bf16.mxu0 0
      %337 = vmatpush1.bf16.msra.mxu0 0
      %338 = vmatprep.subr.bf16.mxu0 0
      %339 = vmatpush1.bf16.msra.mxu0 0
      %340 = vmatprep.subr.bf16.mxu0 0
      %341 = vmatpush1.bf16.msra.mxu0 0
      %342 = vmatprep.subr.bf16.mxu0 0
      %343 = vmatpush1.bf16.msra.mxu0 0
      %344 = vmatprep.subr.bf16.mxu0 0
      %345 = vmatpush1.bf16.msra.mxu0 0
      %346 = vmatprep.subr.bf16.mxu0 0
      %347 = vmatpush1.bf16.msra.mxu0 0
      %348 = vmatprep.mubr.bf16.mxu0 0
      %349 = vmatmul.mubr.bf16.gmra.mrb[0].mxu0 %v301
      %v350 = vpop.f32.mrb[0].mxu0
      %v351 = vadd.f32 %v236, %v350
      %v352 = vpop.f32.mrb[0].mxu0
      %v353 = vpop.f32.mrb[0].mxu0
      %v354 = vadd.f32 %v236, %v353
      %v355 = vpop.f32.mrb[0].mxu0
      %356 = vmatprep.mubr.bf16.mxu0 0
      %357 = vmatmul.mubr.bf16.gmra.mrb[0].mxu0 %v304
      %v358 = vpop.f32.mrb[0].mxu0
      %v359 = vadd.f32 %v236, %v358
      %v360 = vpop.f32.mrb[0].mxu0
      %v361 = vpop.f32.mrb[0].mxu0
      %v362 = vadd.f32 %v236, %v361
      %v363 = vpop.f32.mrb[0].mxu0
      %364 = vmatprep.mubr.bf16.mxu0 0
      %365 = vmatmul.mubr.bf16.gmra.mrb[0].mxu0 %v307
      %v366 = vpop.f32.mrb[0].mxu0
      %v367 = vadd.f32 %v236, %v366
      %v368 = vpop.f32.mrb[0].mxu0
      %v369 = vpop.f32.mrb[0].mxu0
      %v370 = vadd.f32 %v236, %v369
      %v371 = vpop.f32.mrb[0].mxu0
      %372 = vmatprep.mubr.bf16.mxu0 0
      %373 = vmatmul.mubr.bf16.gmra.mrb[0].mxu0 %v310
      %v374 = vpop.f32.mrb[0].mxu0
      %v375 = vadd.f32 %v236, %v374
      %v376 = vpop.f32.mrb[0].mxu0
      %v377 = vpop.f32.mrb[0].mxu0
      %v378 = vadd.f32 %v236, %v377
      %v379 = vpop.f32.mrb[0].mxu0
      %380 = vdwg.mxu0
      %v381 = vmax.f32 %v351, 0.0
      %v382 = vmax.f32 %v354, 0.0
      %v383 = vmax.f32 %v359, 0.0
      %v384 = vmax.f32 %v362, 0.0
      %v385 = vmax.f32 %v367, 0.0
      %v386 = vmax.f32 %v370, 0.0
      %v387 = vmax.f32 %v375, 0.0
      %v388 = vmax.f32 %v378, 0.0
      %v389 = vpack.c.bf16 %v381, %v381
      %v390 = vpack.c.bf16 %v382, %v382
      %v391 = vpack.c.bf16 %v383, %v383
      %v392 = vpack.c.bf16 %v384, %v384
      %v393 = vpack.c.bf16 %v385, %v385
      %v394 = vpack.c.bf16 %v386, %v386
      %v395 = vpack.c.bf16 %v387, %v387
      %v396 = vpack.c.bf16 %v388, %v388
      %vm397 = vcmask 27648
      %398 = vst.msk [vmem:[%s206] sm:$0xf] %vm397, %v389
      %399 = vst.msk [vmem:[%s206 + $0x4] sm:$0xf] %vm397, %v390
      %400 = vst.msk [vmem:[%s206 + $0x8] sm:$0xf] %vm397, %v391
      %401 = vst.msk [vmem:[%s206 + $0xc] sm:$0xf] %vm397, %v392
      %402 = vst.msk [vmem:[%s206 + $0x10] sm:$0xf] %vm397, %v393
      %403 = vst.msk [vmem:[%s206 + $0x14] sm:$0xf] %vm397, %v394
      %404 = vst.msk [vmem:[%s206 + $0x18] sm:$0xf] %vm397, %v395
      %405 = vst.msk [vmem:[%s206 + $0x1c] sm:$0xf] %vm397, %v396
      %s406 = smul.u32 8, %s19
      %p407 = scmp.lt.s32.totalorder %s18, 1
      %s408 = scalar_select %p407, %s18, 1
      %p409 = scmp.lt.s32.totalorder %s406, 7
      %s410 = scalar_select %p409, %s406, 7
      %s411 = smul.addr %s408, 8
      %s412 = sadd.s32 %s410, %s411
      %s413 = smul.addr %s412, 4
      %s414 = scalar_lea.vmem %s3, %s413
      // Predicated region
      $region33: #{dfnet_forward.14} parent=31 // pred_check
        %p415 = pneg %p116
      $region34: #{dfnet_forward.14} parent=31 // pred_check_branch
        %417 = sbr.rel (%p415) target = $region36
      $region35: #{dfnet_forward.14} parent=31 // pred_region
        %s418 = smul.u32 8, %s19
      $region36: #{dfnet_forward.14} parent=31 // pred_fallthru
        _
    $region32: #{dfnet_forward.14} parent=5 // pred_fallthru
      _
    %p419 = scmp.le.s32.totalorder 2, %s9
    // Predicated region
    $region37: #{dfnet_forward.14} parent=5 // pred_check
      %p420 = pneg %p419
    $region38: #{dfnet_forward.14} parent=5 // pred_check_branch
      %422 = sbr.rel (%p420) target = $region40
    $region39: #{dfnet_forward.14} parent=5 // pred_region
      %s423 = ssub.s32 %s9, 2
      // Predicated region
      $region41: #{dfnet_forward.14} parent=39 // pred_check
        %p424 = pneg %p122
      $region42: #{dfnet_forward.14} parent=39 // pred_check_branch
        %426 = sbr.rel (%p424) target = $region44
      $region43: #{dfnet_forward.14} parent=39 // pred_region
        %s427 = smul.u32 8, %s21
        %p428 = scmp.lt.s32.totalorder %s20, 1
        %s429 = scalar_select %p428, %s20, 1
        %p430 = scmp.lt.s32.totalorder %s427, 7
        %s431 = scalar_select %p430, %s427, 7
        %s432 = smul.addr %s429, 8
        %s433 = sadd.s32 %s431, %s432
        %s434 = smul.addr %s433, 4
        %s435 = scalar_lea.vmem %s3, %s434
      $region44: #{dfnet_forward.14} parent=39 // pred_fallthru
        _
    $region40: #{dfnet_forward.14} parent=5 // pred_fallthru
      _
  $region6: #{dfnet_forward.14} parent=0 // loop_footer
    %s13 = sadd.s32 1, %s9
  $region7: #{dfnet_forward.14} parent=0 // loop_footer_branch
    %8 = sbr.rel target = $region3
  $region8: #{dfnet_forward.14} parent=0 // loop_exit
    _

// kernel: dfnet_forward.15
$region0: #{dfnet_forward.15}
  #allocation0 [shape = 'u32[]', space=smem, size = 0x4, offset = 0x4, fixed_abs, tag = 'smem constant byte address 0x4 - core index']
  #allocation1 [shape = 'u32[144,128]{1,0:T(1,128)}', space=vmem, size = 0x12000, scoped, tag = 'internal scratch']
  %s0 = inlined_call_operand.vmem [shape: bf16[2,1,64,16], index: 0, kind: input, shape index: {}]
  %s1 = inlined_call_operand.vmem [shape: bf16[16,8], index: 1, kind: input, shape index: {}]
  %s2 = inlined_call_operand.vmem [shape: f32[1,8], index: 2, kind: input, shape index: {}]
  %s3 = inlined_call_operand.vmem [shape: bf16[2,8,8,8], index: 3, kind: input, shape index: {}]
  %s4 = inlined_call_operand.vmem [shape: bf16[2,8,8,8], index: 4, kind: output, shape index: {}]
  %s5 = sld [smem:[#allocation0]]
  $region49: #{dfnet_forward.15} parent=0
    _
  %s7 = ssub.s32 1, %s5
  %s8 = scalar_select 0, %s7, %s5
  loop: start=0, step=1, limit=4
  $region2: #{dfnet_forward.15} parent=0 // loop_pre_header
    _
  $region3: #{dfnet_forward.15} parent=0 // loop_header
    %s10 = sphi 0, %s14
    %p11 = scmp.ge.s32.totalorder %s10, 4
    %s17 = sphi 0, %s29
    %s18 = sphi 0, %s25
    %s19 = sphi 0, %s17
    %s20 = sphi 0, %s18
    %s21 = sphi 0, %s19
    %s22 = sphi 0, %s20
    %s34 = sphi 0, %s36
    %s37 = sphi 0, %s34
    %s38 = sphi 0, %s37
    %s54 = sphi 0, %s38
    %s58 = sphi 0, %s58
    %s60 = sphi 0, %s58
    %s61 = sphi 0, %s60
    %s75 = sphi 0, %s61
    %s79 = sphi 0, %s79
    %s81 = sphi 0, %s79
    %s82 = sphi 0, %s81
    %s96 = sphi 0, %s82
    %s104 = sphi 0, %s106
    %s107 = sphi 0, %s104
    %s108 = sphi 0, %s107
    %s124 = sphi 0, %s108
    %s132 = sphi 0, %s134
    %s135 = sphi 0, %s132
    %s136 = sphi 0, %s135
    %s152 = sphi 0, %s136
  $region4: #{dfnet_forward.15} parent=0 // loop_header_branch
    %13 = sbr.rel (%p11) target = $region8
  $region5: #{dfnet_forward.15} parent=0 // loop_body
    %s15 = ssub.s32 %s10, 1
    %s16 = ssub.s32 %s10, 2
    %s23 = sadd.s32 1, %s18
    %p24 = scmp.ge.s32.totalorder %s23, 1
    %s25 = scalar_select %p24, 0, %s23
    %s26 = sadd.s32 1, %s17
    %s27 = scalar_select %p24, %s26, %s17
    %p28 = scmp.ge.s32.totalorder %s27, 2
    %s29 = scalar_select %p28, 0, %s27
    %s30 = ssub.s32 %s17, %s29
    %s31 = ssub.s32 %s18, %s25
    %s32 = sor.u32 %s30, %s31
    %p33 = scmp.eq.s32.totalorder %s32, 0
    %s35 = sadd.s32 %s34, 1
    %s36 = scalar_select %p33, %s34, %s35
    %p39 = pneg %p33
    %p40 = scmp.eq.s32.totalorder %s10, 1
    %p41 = por %p39, %p40
    %p42 = scmp.ne.s32.totalorder %s34, %s37
    %p43 = scmp.eq.s32.totalorder %s10, 0
    %p44 = por %p42, %p43
    %p45 = scmp.ne.s32.totalorder %s34, %s37
    %p46 = scmp.eq.s32.totalorder %s15, 1
    %p47 = por %p45, %p46
    %p48 = scmp.ne.s32.totalorder %s37, %s38
    %p49 = scmp.eq.s32.totalorder %s15, 0
    %p50 = por %p48, %p49
    %p51 = scmp.ne.s32.totalorder %s37, %s38
    %p52 = scmp.eq.s32.totalorder %s16, 1
    %p53 = por %p51, %p52
    %p55 = scmp.ne.s32.totalorder %s38, %s54
    %p56 = scmp.eq.s32.totalorder %s16, 0
    %p57 = por %p55, %p56
    %s59 = sadd.s32 %s58, 1
    %p62 = scmp.eq.s32.totalorder %s10, 1
    %p63 = scmp.ne.s32.totalorder %s58, %s60
    %p64 = scmp.eq.s32.totalorder %s10, 0
    %p65 = por %p63, %p64
    %p66 = scmp.ne.s32.totalorder %s58, %s60
    %p67 = scmp.eq.s32.totalorder %s15, 1
    %p68 = por %p66, %p67
    %p69 = scmp.ne.s32.totalorder %s60, %s61
    %p70 = scmp.eq.s32.totalorder %s15, 0
    %p71 = por %p69, %p70
    %p72 = scmp.ne.s32.totalorder %s60, %s61
    %p73 = scmp.eq.s32.totalorder %s16, 1
    %p74 = por %p72, %p73
    %p76 = scmp.ne.s32.totalorder %s61, %s75
    %p77 = scmp.eq.s32.totalorder %s16, 0
    %p78 = por %p76, %p77
    %s80 = sadd.s32 %s79, 1
    %p83 = scmp.eq.s32.totalorder %s10, 1
    %p84 = scmp.ne.s32.totalorder %s79, %s81
    %p85 = scmp.eq.s32.totalorder %s10, 0
    %p86 = por %p84, %p85
    %p87 = scmp.ne.s32.totalorder %s79, %s81
    %p88 = scmp.eq.s32.totalorder %s15, 1
    %p89 = por %p87, %p88
    %p90 = scmp.ne.s32.totalorder %s81, %s82
    %p91 = scmp.eq.s32.totalorder %s15, 0
    %p92 = por %p90, %p91
    %p93 = scmp.ne.s32.totalorder %s81, %s82
    %p94 = scmp.eq.s32.totalorder %s16, 1
    %p95 = por %p93, %p94
    %p97 = scmp.ne.s32.totalorder %s82, %s96
    %p98 = scmp.eq.s32.totalorder %s16, 0
    %p99 = por %p97, %p98
    %s100 = ssub.s32 %s17, %s29
    %s101 = ssub.s32 %s18, %s25
    %s102 = sor.u32 %s100, %s101
    %p103 = scmp.eq.s32.totalorder %s102, 0
    %s105 = sadd.s32 %s104, 1
    %s106 = scalar_select %p103, %s104, %s105
    %p109 = pneg %p103
    %p110 = scmp.eq.s32.totalorder %s10, 1
    %p111 = por %p109, %p110
    %p112 = scmp.ne.s32.totalorder %s104, %s107
    %p113 = scmp.eq.s32.totalorder %s10, 0
    %p114 = por %p112, %p113
    %p115 = scmp.ne.s32.totalorder %s104, %s107
    %p116 = scmp.eq.s32.totalorder %s15, 1
    %p117 = por %p115, %p116
    %p118 = scmp.ne.s32.totalorder %s107, %s108
    %p119 = scmp.eq.s32.totalorder %s15, 0
    %p120 = por %p118, %p119
    %p121 = scmp.ne.s32.totalorder %s107, %s108
    %p122 = scmp.eq.s32.totalorder %s16, 1
    %p123 = por %p121, %p122
    %p125 = scmp.ne.s32.totalorder %s108, %s124
    %p126 = scmp.eq.s32.totalorder %s16, 0
    %p127 = por %p125, %p126
    %s128 = ssub.s32 %s17, %s29
    %s129 = ssub.s32 %s18, %s25
    %s130 = sor.u32 %s128, %s129
    %p131 = scmp.eq.s32.totalorder %s130, 0
    %s133 = sadd.s32 %s132, 1
    %s134 = scalar_select %p131, %s132, %s133
    %p137 = pneg %p131
    %p138 = scmp.eq.s32.totalorder %s10, 1
    %p139 = por %p137, %p138
    %p140 = scmp.ne.s32.totalorder %s132, %s135
    %p141 = scmp.eq.s32.totalorder %s10, 0
    %p142 = por %p140, %p141
    %p143 = scmp.ne.s32.totalorder %s132, %s135
    %p144 = scmp.eq.s32.totalorder %s15, 1
    %p145 = por %p143, %p144
    %p146 = scmp.ne.s32.totalorder %s135, %s136
    %p147 = scmp.eq.s32.totalorder %s15, 0
    %p148 = por %p146, %p147
    %p149 = scmp.ne.s32.totalorder %s135, %s136
    %p150 = scmp.eq.s32.totalorder %s16, 1
    %p151 = por %p149, %p150
    %p153 = scmp.ne.s32.totalorder %s136, %s152
    %p154 = scmp.eq.s32.totalorder %s16, 0
    %p155 = por %p153, %p154
    %p156 = scmp.le.s32.totalorder 1, %s10
    %p157 = scmp.lt.s32.totalorder %s10, 3
    %p158 = pnand %p156, %p157
    %p159 = pneg %p158
    // Predicated region
    $region9: #{dfnet_forward.15} parent=5 // pred_check
      _
    $region10: #{dfnet_forward.15} parent=5 // pred_check_branch
      %161 = sbr.rel (%p158) target = $region12
    $region11: #{dfnet_forward.15} parent=5 // pred_region
      %s162 = ssub.s32 %s10, 1
      // Predicated region
      $region13: #{dfnet_forward.15} parent=11 // pred_check
        %p163 = pneg %p71
      $region14: #{dfnet_forward.15} parent=11 // pred_check_branch
        %165 = sbr.rel (%p163) target = $region16
      $region15: #{dfnet_forward.15} parent=11 // pred_region
        _
      $region16: #{dfnet_forward.15} parent=11 // pred_fallthru
        _
      // Predicated region
      $region17: #{dfnet_forward.15} parent=11 // pred_check
        %p166 = pneg %p92
      $region18: #{dfnet_forward.15} parent=11 // pred_check_branch
        %168 = sbr.rel (%p166) target = $region20
      $region19: #{dfnet_forward.15} parent=11 // pred_region
        _
      $region20: #{dfnet_forward.15} parent=11 // pred_fallthru
        _
    $region12: #{dfnet_forward.15} parent=5 // pred_fallthru
      _
    %p169 = scmp.lt.s32.totalorder %s10, 2
    // Predicated region
    $region21: #{dfnet_forward.15} parent=5 // pred_check
      %p170 = pneg %p169
    $region22: #{dfnet_forward.15} parent=5 // pred_check_branch
      %172 = sbr.rel (%p170) target = $region24
    $region23: #{dfnet_forward.15} parent=5 // pred_region
      // Predicated region
      $region25: #{dfnet_forward.15} parent=23 // pred_check
        %p173 = pneg %p44
      $region26: #{dfnet_forward.15} parent=23 // pred_check_branch
        %175 = sbr.rel (%p173) target = $region28
      $region27: #{dfnet_forward.15} parent=23 // pred_region
        %p176 = scmp.lt.s32.totalorder %s17, 1
        %s177 = scalar_select %p176, %s17, 1
        %p178 = scmp.lt.s32.totalorder %s18, 0
        %s179 = scalar_select %p178, %s18, 0
        %s180 = smul.addr %s179, 8
        %s181 = smul.addr %s177, 8
        %s182 = sadd.s32 %s180, %s181
        %s183 = smul.addr %s182, 4
        %s184 = scalar_lea.vmem %s0, %s183
      $region28: #{dfnet_forward.15} parent=23 // pred_fallthru
        _
      // Predicated region
      $region29: #{dfnet_forward.15} parent=23 // pred_check
        %p185 = pneg %p114
      $region30: #{dfnet_forward.15} parent=23 // pred_check_branch
        %187 = sbr.rel (%p185) target = $region32
      $region31: #{dfnet_forward.15} parent=23 // pred_region
        %s188 = smul.u32 8, %s18
        %p189 = scmp.lt.s32.totalorder %s17, 1
        %s190 = scalar_select %p189, %s17, 1
        %p191 = scmp.lt.s32.totalorder %s188, 7
        %s192 = scalar_select %p191, %s188, 7
        %s193 = smul.addr %s190, 8
        %s194 = sadd.s32 %s192, %s193
        %s195 = smul.addr %s194, 4
        %s196 = scalar_lea.vmem %s3, %s195
        %s197 = smul.u32 8, %s18
      $region32: #{dfnet_forward.15} parent=23 // pred_fallthru
        _
    $region24: #{dfnet_forward.15} parent=5 // pred_fallthru
      _
    %p198 = scmp.le.s32.totalorder 1, %s10
    %p199 = scmp.lt.s32.totalorder %s10, 3
    %p200 = pnand %p198, %p199
    %p201 = pneg %p200
    // Predicated region
    $region33: #{dfnet_forward.15} parent=5 // pred_check
      _
    $region34: #{dfnet_forward.15} parent=5 // pred_check_branch
      %203 = sbr.rel (%p200) target = $region36
    $region35: #{dfnet_forward.15} parent=5 // pred_region
      %s204 = ssub.s32 %s10, 1
      %p205 = scmp.lt.s32.totalorder %s19, 1
      %s206 = scalar_select %p205, %s19, 1
      %p207 = scmp.lt.s32.totalorder %s20, 0
      %s208 = scalar_select %p207, %s20, 0
      %s209 = smul.addr %s208, 8
      %s210 = smul.addr %s206, 8
      %s211 = sadd.s32 %s209, %s210
      %s212 = smul.addr %s211, 4
      %s213 = scalar_lea.vmem %s0, %s212
      %p214 = pneg %p50
      %p215 = pneg %p47
      %p216 = pneg %p71
      %p217 = pneg %p68
      %p218 = pneg %p92
      %p219 = pneg %p89
      %s220 = smul.u32 8, %s20
      %p221 = scmp.lt.s32.totalorder %s19, 1
      %s222 = scalar_select %p221, %s19, 1
      %p223 = scmp.lt.s32.totalorder %s220, 7
      %s224 = scalar_select %p223, %s220, 7
      %s225 = smul.addr %s222, 8
      %s226 = sadd.s32 %s224, %s225
      %s227 = smul.addr %s226, 4
      %s228 = scalar_lea.vmem %s3, %s227
      %p229 = pneg %p120
      %p230 = pneg %p117
      %p231 = pneg %p148
      %p232 = pneg %p145
      %s233 = smul.u32 8, %s20
      %p234 = scmp.lt.s32.totalorder %s19, 1
      %s235 = scalar_select %p234, %s19, 1
      %p236 = scmp.lt.s32.totalorder %s233, 7
      %s237 = scalar_select %p236, %s233, 7
      %s238 = smul.addr %s235, 8
      %s239 = sadd.s32 %s237, %s238
      %s240 = smul.addr %s239, 4
      %s241 = scalar_lea.vmem %s4, %s240
      %p242 = scmp.lt.s32.totalorder %s19, 1
      %s243 = scalar_select %p242, %s19, 1
      %p244 = scmp.lt.s32.totalorder %s20, 0
      %s245 = scalar_select %p244, %s20, 0
      %s246 = smul.addr %s245, 8
      %s247 = smul.addr %s243, 8
      %s248 = sadd.s32 %s246, %s247
      %s249 = smul.addr %s248, 4
      %s250 = scalar_lea.vmem %s0, %s249
      %s251 = smul.u32 8, %s20
      %p252 = scmp.lt.s32.totalorder %s19, 1
      %s253 = scalar_select %p252, %s19, 1
      %p254 = scmp.lt.s32.totalorder %s251, 7
      %s255 = scalar_select %p254, %s251, 7
      %s256 = smul.addr %s253, 8
      %s257 = sadd.s32 %s255, %s256
      %s258 = smul.addr %s257, 4
      %s259 = scalar_lea.vmem %s3, %s258
      %s260 = smul.u32 8, %s20
      %s261 = smul.u32 8, %s20
      %p262 = scmp.lt.s32.totalorder %s19, 1
      %s263 = scalar_select %p262, %s19, 1
      %p264 = scmp.lt.s32.totalorder %s261, 7
      %s265 = scalar_select %p264, %s261, 7
      %s266 = smul.addr %s263, 8
      %s267 = sadd.s32 %s265, %s266
      %s268 = smul.addr %s267, 4
      %s269 = scalar_lea.vmem %s4, %s268
      %s270 = smul.u32 8, %s20
      %v272 = vld [vmem:[%s250] sm:$0xf]
      %v273 = vld [vmem:[%s250 + $0x4] sm:$0xf]
      %v274 = vld [vmem:[%s250 + $0x8] sm:$0xf]
      %v275 = vld [vmem:[%s250 + $0xc] sm:$0xf]
      %v276 = vld [vmem:[%s250 + $0x10] sm:$0xf]
      %v277 = vld [vmem:[%s250 + $0x14] sm:$0xf]
      %v278 = vld [vmem:[%s250 + $0x18] sm:$0xf]
      %v279 = vld [vmem:[%s250 + $0x1c] sm:$0xf]
      %v280 = vld [vmem:[%s1] sm:$0xf]
      %v281 = vld [vmem:[%s1 + $0x4] sm:$0xf]
      %v282 = vld [vmem:[%s2] sm:$0x1]
      %v284 = vlaneseq
      %v285 = vshrl.u32 %v284, 7
      %v286 = vsub.s32 0, %v285
      %v287 = vrot.slane %v282, %v286
      %v297 = vunpack.c.l.b16 %v272
      %v298 = vunpack.c.l.b16 %v273
      %v299 = vunpack.c.l.b16 %v274
      %v300 = vunpack.c.l.b16 %v275
      %v301 = vunpack.c.l.b16 %v276
      %v302 = vunpack.c.l.b16 %v277
      %v303 = vunpack.c.l.b16 %v278
      %v304 = vunpack.c.l.b16 %v279
      %v305 = vpack.c.b16 %v298, %v297
      %v306 = vpack.c.b16 %v300, %v299
      %v307 = vpack.c.b16 %v302, %v301
      %v308 = vpack.c.b16 %v304, %v303
      %v311 = vunpack.c.l.b16 %v280
      %v312 = vunpack.c.l.b16 %v281
      %v313 = vpack.c.b16 %v312, %v311
      %vm315 = vcmask 130048
      %v317 = vsel %vm315, %v305, 0
      %v320 = vsel %vm315, %v306, 0
      %v323 = vsel %vm315, %v307, 0
      %v326 = vsel %vm315, %v308, 0
      %328 = vmatprep.subr.bf16.mxu0 0
      %329 = vmatpush1.bf16.msra.mxu0 %v313
      %330 = vmatprep.subr.bf16.mxu0 0
      %331 = vmatpush1.bf16.msra.mxu0 0
      %332 = vmatprep.subr.bf16.mxu0 0
      %333 = vmatpush1.bf16.msra.mxu0 0
      %334 = vmatprep.subr.bf16.mxu0 0
      %335 = vmatpush1.bf16.msra.mxu0 0
      %336 = vmatprep.subr.bf16.mxu0 0
      %337 = vmatpush1.bf16.msra.mxu0 0
      %338 = vmatprep.subr.bf16.mxu0 0
      %339 = vmatpush1.bf16.msra.mxu0 0
      %340 = vmatprep.subr.bf16.mxu0 0
      %341 = vmatpush1.bf16.msra.mxu0 0
      %342 = vmatprep.subr.bf16.mxu0 0
      %343 = vmatpush1.bf16.msra.mxu0 0
      %344 = vmatprep.subr.bf16.mxu0 0
      %345 = vmatpush1.bf16.msra.mxu0 0
      %346 = vmatprep.subr.bf16.mxu0 0
      %347 = vmatpush1.bf16.msra.mxu0 0
      %348 = vmatprep.subr.bf16.mxu0 0
      %349 = vmatpush1.bf16.msra.mxu0 0
      %350 = vmatprep.subr.bf16.mxu0 0
      %351 = vmatpush1.bf16.msra.mxu0 0
      %352 = vmatprep.subr.bf16.mxu0 0
      %353 = vmatpush1.bf16.msra.mxu0 0
      %354 = vmatprep.subr.bf16.mxu0 0
      %355 = vmatpush1.bf16.msra.mxu0 0
      %356 = vmatprep.subr.bf16.mxu0 0
      %357 = vmatpush1.bf16.msra.mxu0 0
      %358 = vmatprep.subr.bf16.mxu0 0
      %359 = vmatpush1.bf16.msra.mxu0 0
      %360 = vmatprep.mubr.bf16.mxu0 0
      %361 = vmatmul.mubr.bf16.gmra.mrb[0].mxu0 %v317
      %v362 = vpop.f32.mrb[0].mxu0
      %v363 = vadd.f32 %v287, %v362
      %v364 = vpop.f32.mrb[0].mxu0
      %v365 = vpop.f32.mrb[0].mxu0
      %v366 = vadd.f32 %v287, %v365
      %v367 = vpop.f32.mrb[0].mxu0
      %368 = vmatprep.mubr.bf16.mxu0 0
      %369 = vmatmul.mubr.bf16.gmra.mrb[0].mxu0 %v320
      %v370 = vpop.f32.mrb[0].mxu0
      %v371 = vadd.f32 %v287, %v370
      %v372 = vpop.f32.mrb[0].mxu0
      %v373 = vpop.f32.mrb[0].mxu0
      %v374 = vadd.f32 %v287, %v373
      %v375 = vpop.f32.mrb[0].mxu0
      %376 = vmatprep.mubr.bf16.mxu0 0
      %377 = vmatmul.mubr.bf16.gmra.mrb[0].mxu0 %v323
      %v378 = vpop.f32.mrb[0].mxu0
      %v379 = vadd.f32 %v287, %v378
      %v380 = vpop.f32.mrb[0].mxu0
      %v381 = vpop.f32.mrb[0].mxu0
      %v382 = vadd.f32 %v287, %v381
      %v383 = vpop.f32.mrb[0].mxu0
      %384 = vmatprep.mubr.bf16.mxu0 0
      %385 = vmatmul.mubr.bf16.gmra.mrb[0].mxu0 %v326
      %v386 = vpop.f32.mrb[0].mxu0
      %v387 = vadd.f32 %v287, %v386
      %v388 = vpop.f32.mrb[0].mxu0
      %v389 = vpop.f32.mrb[0].mxu0
      %v390 = vadd.f32 %v287, %v389
      %v391 = vpop.f32.mrb[0].mxu0
      %392 = vdwg.mxu0
      %v393 = vld [vmem:[%s259] sm:$0xf]
      %v394 = vld [vmem:[%s259 + $0x4] sm:$0xf]
      %v395 = vld [vmem:[%s259 + $0x8] sm:$0xf]
      %v396 = vld [vmem:[%s259 + $0xc] sm:$0xf]
      %v397 = vld [vmem:[%s259 + $0x10] sm:$0xf]
      %v398 = vld [vmem:[%s259 + $0x14] sm:$0xf]
      %v399 = vld [vmem:[%s259 + $0x18] sm:$0xf]
      %v400 = vld [vmem:[%s259 + $0x1c] sm:$0xf]
      %v401 = vunpack.c.l.bf16 %v393
      %v402 = vunpack.c.l.bf16 %v394
      %v403 = vunpack.c.l.bf16 %v395
      %v404 = vunpack.c.l.bf16 %v396
      %v405 = vunpack.c.l.bf16 %v397
      %v406 = vunpack.c.l.bf16 %v398
      %v407 = vunpack.c.l.bf16 %v399
      %v408 = vunpack.c.l.bf16 %v400
      %v409 = vadd.f32 %v363, %v401
      %v410 = vadd.f32 %v366, %v402
      %v411 = vadd.f32 %v371, %v403
      %v412 = vadd.f32 %v374, %v404
      %v413 = vadd.f32 %v379, %v405
      %v414 = vadd.f32 %v382, %v406
      %v415 = vadd.f32 %v387, %v407
      %v416 = vadd.f32 %v390, %v408
      %v417 = vpack.c.bf16 %v409, %v409
      %v418 = vpack.c.bf16 %v410, %v410
      %v419 = vpack.c.bf16 %v411, %v411
      %v420 = vpack.c.bf16 %v412, %v412
      %v421 = vpack.c.bf16 %v413, %v413
      %v422 = vpack.c.bf16 %v414, %v414
      %v423 = vpack.c.bf16 %v415, %v415
      %v424 = vpack.c.bf16 %v416, %v416
      %vm425 = vcmask 60416
      %426 = vst.msk [vmem:[%s269] sm:$0xf] %vm425, %v417
      %427 = vst.msk [vmem:[%s269 + $0x4] sm:$0xf] %vm425, %v418
      %428 = vst.msk [vmem:[%s269 + $0x8] sm:$0xf] %vm425, %v419
      %429 = vst.msk [vmem:[%s269 + $0xc] sm:$0xf] %vm425, %v420
      %430 = vst.msk [vmem:[%s269 + $0x10] sm:$0xf] %vm425, %v421
      %431 = vst.msk [vmem:[%s269 + $0x14] sm:$0xf] %vm425, %v422
      %432 = vst.msk [vmem:[%s269 + $0x18] sm:$0xf] %vm425, %v423
      %433 = vst.msk [vmem:[%s269 + $0x1c] sm:$0xf] %vm425, %v424
      %s434 = smul.u32 8, %s20
      %p435 = scmp.lt.s32.totalorder %s19, 1
      %s436 = scalar_select %p435, %s19, 1
      %p437 = scmp.lt.s32.totalorder %s434, 7
      %s438 = scalar_select %p437, %s434, 7
      %s439 = smul.addr %s436, 8
      %s440 = sadd.s32 %s438, %s439
      %s441 = smul.addr %s440, 4
      %s442 = scalar_lea.vmem %s4, %s441
      // Predicated region
      $region37: #{dfnet_forward.15} parent=35 // pred_check
        %p443 = pneg %p145
      $region38: #{dfnet_forward.15} parent=35 // pred_check_branch
        %445 = sbr.rel (%p443) target = $region40
      $region39: #{dfnet_forward.15} parent=35 // pred_region
        %s446 = smul.u32 8, %s20
      $region40: #{dfnet_forward.15} parent=35 // pred_fallthru
        _
    $region36: #{dfnet_forward.15} parent=5 // pred_fallthru
      _
    %p447 = scmp.le.s32.totalorder 2, %s10
    // Predicated region
    $region41: #{dfnet_forward.15} parent=5 // pred_check
      %p448 = pneg %p447
    $region42: #{dfnet_forward.15} parent=5 // pred_check_branch
      %450 = sbr.rel (%p448) target = $region44
    $region43: #{dfnet_forward.15} parent=5 // pred_region
      %s451 = ssub.s32 %s10, 2
      // Predicated region
      $region45: #{dfnet_forward.15} parent=43 // pred_check
        %p452 = pneg %p151
      $region46: #{dfnet_forward.15} parent=43 // pred_check_branch
        %454 = sbr.rel (%p452) target = $region48
      $region47: #{dfnet_forward.15} parent=43 // pred_region
        %s455 = smul.u32 8, %s22
        %p456 = scmp.lt.s32.totalorder %s21, 1
        %s457 = scalar_select %p456, %s21, 1
        %p458 = scmp.lt.s32.totalorder %s455, 7
        %s459 = scalar_select %p458, %s455, 7
        %s460 = smul.addr %s457, 8
        %s461 = sadd.s32 %s459, %s460
        %s462 = smul.addr %s461, 4
        %s463 = scalar_lea.vmem %s4, %s462
      $region48: #{dfnet_forward.15} parent=43 // pred_fallthru
        _
    $region44: #{dfnet_forward.15} parent=5 // pred_fallthru
      _
  $region6: #{dfnet_forward.15} parent=0 // loop_footer
    %s14 = sadd.s32 1, %s10
  $region7: #{dfnet_forward.15} parent=0 // loop_footer_branch
    %9 = sbr.rel target = $region3
  $region8: #{dfnet_forward.15} parent=0 // loop_exit
    _

// kernel: dfnet_forward.19
$region0: #{dfnet_forward.19}
  #allocation0 [shape = 'u32[]', space=smem, size = 0x4, offset = 0x4, fixed_abs, tag = 'smem constant byte address 0x4 - core index']
  #allocation1 [shape = 'u32[144,128]{1,0:T(1,128)}', space=vmem, size = 0x12000, scoped, tag = 'internal scratch']
  %s0 = inlined_call_operand.vmem [shape: bf16[2,1,64,16], index: 0, kind: input, shape index: {}]
  %s1 = inlined_call_operand.vmem [shape: bf16[16,8], index: 1, kind: input, shape index: {}]
  %s2 = inlined_call_operand.vmem [shape: f32[1,8], index: 2, kind: input, shape index: {}]
  %s3 = inlined_call_operand.vmem [shape: bf16[2,8,8,8], index: 3, kind: output, shape index: {}]
  %s4 = sld [smem:[#allocation0]]
  $region45: #{dfnet_forward.19} parent=0
    _
  %s6 = ssub.s32 1, %s4
  %s7 = scalar_select 0, %s6, %s4
  loop: start=0, step=1, limit=4
  $region2: #{dfnet_forward.19} parent=0 // loop_pre_header
    _
  $region3: #{dfnet_forward.19} parent=0 // loop_header
    %s9 = sphi 0, %s13
    %p10 = scmp.ge.s32.totalorder %s9, 4
    %s16 = sphi 0, %s28
    %s17 = sphi 0, %s24
    %s18 = sphi 0, %s16
    %s19 = sphi 0, %s17
    %s20 = sphi 0, %s18
    %s21 = sphi 0, %s19
    %s33 = sphi 0, %s35
    %s36 = sphi 0, %s33
    %s37 = sphi 0, %s36
    %s53 = sphi 0, %s37
    %s57 = sphi 0, %s57
    %s59 = sphi 0, %s57
    %s60 = sphi 0, %s59
    %s74 = sphi 0, %s60
    %s78 = sphi 0, %s78
    %s80 = sphi 0, %s78
    %s81 = sphi 0, %s80
    %s95 = sphi 0, %s81
    %s103 = sphi 0, %s105
    %s106 = sphi 0, %s103
    %s107 = sphi 0, %s106
    %s123 = sphi 0, %s107
  $region4: #{dfnet_forward.19} parent=0 // loop_header_branch
    %12 = sbr.rel (%p10) target = $region8
  $region5: #{dfnet_forward.19} parent=0 // loop_body
    %s14 = ssub.s32 %s9, 1
    %s15 = ssub.s32 %s9, 2
    %s22 = sadd.s32 1, %s17
    %p23 = scmp.ge.s32.totalorder %s22, 1
    %s24 = scalar_select %p23, 0, %s22
    %s25 = sadd.s32 1, %s16
    %s26 = scalar_select %p23, %s25, %s16
    %p27 = scmp.ge.s32.totalorder %s26, 2
    %s28 = scalar_select %p27, 0, %s26
    %s29 = ssub.s32 %s16, %s28
    %s30 = ssub.s32 %s17, %s24
    %s31 = sor.u32 %s29, %s30
    %p32 = scmp.eq.s32.totalorder %s31, 0
    %s34 = sadd.s32 %s33, 1
    %s35 = scalar_select %p32, %s33, %s34
    %p38 = pneg %p32
    %p39 = scmp.eq.s32.totalorder %s9, 1
    %p40 = por %p38, %p39
    %p41 = scmp.ne.s32.totalorder %s33, %s36
    %p42 = scmp.eq.s32.totalorder %s9, 0
    %p43 = por %p41, %p42
    %p44 = scmp.ne.s32.totalorder %s33, %s36
    %p45 = scmp.eq.s32.totalorder %s14, 1
    %p46 = por %p44, %p45
    %p47 = scmp.ne.s32.totalorder %s36, %s37
    %p48 = scmp.eq.s32.totalorder %s14, 0
    %p49 = por %p47, %p48
    %p50 = scmp.ne.s32.totalorder %s36, %s37
    %p51 = scmp.eq.s32.totalorder %s15, 1
    %p52 = por %p50, %p51
    %p54 = scmp.ne.s32.totalorder %s37, %s53
    %p55 = scmp.eq.s32.totalorder %s15, 0
    %p56 = por %p54, %p55
    %s58 = sadd.s32 %s57, 1
    %p61 = scmp.eq.s32.totalorder %s9, 1
    %p62 = scmp.ne.s32.totalorder %s57, %s59
    %p63 = scmp.eq.s32.totalorder %s9, 0
    %p64 = por %p62, %p63
    %p65 = scmp.ne.s32.totalorder %s57, %s59
    %p66 = scmp.eq.s32.totalorder %s14, 1
    %p67 = por %p65, %p66
    %p68 = scmp.ne.s32.totalorder %s59, %s60
    %p69 = scmp.eq.s32.totalorder %s14, 0
    %p70 = por %p68, %p69
    %p71 = scmp.ne.s32.totalorder %s59, %s60
    %p72 = scmp.eq.s32.totalorder %s15, 1
    %p73 = por %p71, %p72
    %p75 = scmp.ne.s32.totalorder %s60, %s74
    %p76 = scmp.eq.s32.totalorder %s15, 0
    %p77 = por %p75, %p76
    %s79 = sadd.s32 %s78, 1
    %p82 = scmp.eq.s32.totalorder %s9, 1
    %p83 = scmp.ne.s32.totalorder %s78, %s80
    %p84 = scmp.eq.s32.totalorder %s9, 0
    %p85 = por %p83, %p84
    %p86 = scmp.ne.s32.totalorder %s78, %s80
    %p87 = scmp.eq.s32.totalorder %s14, 1
    %p88 = por %p86, %p87
    %p89 = scmp.ne.s32.totalorder %s80, %s81
    %p90 = scmp.eq.s32.totalorder %s14, 0
    %p91 = por %p89, %p90
    %p92 = scmp.ne.s32.totalorder %s80, %s81
    %p93 = scmp.eq.s32.totalorder %s15, 1
    %p94 = por %p92, %p93
    %p96 = scmp.ne.s32.totalorder %s81, %s95
    %p97 = scmp.eq.s32.totalorder %s15, 0
    %p98 = por %p96, %p97
    %s99 = ssub.s32 %s16, %s28
    %s100 = ssub.s32 %s17, %s24
    %s101 = sor.u32 %s99, %s100
    %p102 = scmp.eq.s32.totalorder %s101, 0
    %s104 = sadd.s32 %s103, 1
    %s105 = scalar_select %p102, %s103, %s104
    %p108 = pneg %p102
    %p109 = scmp.eq.s32.totalorder %s9, 1
    %p110 = por %p108, %p109
    %p111 = scmp.ne.s32.totalorder %s103, %s106
    %p112 = scmp.eq.s32.totalorder %s9, 0
    %p113 = por %p111, %p112
    %p114 = scmp.ne.s32.totalorder %s103, %s106
    %p115 = scmp.eq.s32.totalorder %s14, 1
    %p116 = por %p114, %p115
    %p117 = scmp.ne.s32.totalorder %s106, %s107
    %p118 = scmp.eq.s32.totalorder %s14, 0
    %p119 = por %p117, %p118
    %p120 = scmp.ne.s32.totalorder %s106, %s107
    %p121 = scmp.eq.s32.totalorder %s15, 1
    %p122 = por %p120, %p121
    %p124 = scmp.ne.s32.totalorder %s107, %s123
    %p125 = scmp.eq.s32.totalorder %s15, 0
    %p126 = por %p124, %p125
    %p127 = scmp.le.s32.totalorder 1, %s9
    %p128 = scmp.lt.s32.totalorder %s9, 3
    %p129 = pnand %p127, %p128
    %p130 = pneg %p129
    // Predicated region
    $region9: #{dfnet_forward.19} parent=5 // pred_check
      _
    $region10: #{dfnet_forward.19} parent=5 // pred_check_branch
      %132 = sbr.rel (%p129) target = $region12
    $region11: #{dfnet_forward.19} parent=5 // pred_region
      %s133 = ssub.s32 %s9, 1
      // Predicated region
      $region13: #{dfnet_forward.19} parent=11 // pred_check
        %p134 = pneg %p70
      $region14: #{dfnet_forward.19} parent=11 // pred_check_branch
        %136 = sbr.rel (%p134) target = $region16
      $region15: #{dfnet_forward.19} parent=11 // pred_region
        _
      $region16: #{dfnet_forward.19} parent=11 // pred_fallthru
        _
      // Predicated region
      $region17: #{dfnet_forward.19} parent=11 // pred_check
        %p137 = pneg %p91
      $region18: #{dfnet_forward.19} parent=11 // pred_check_branch
        %139 = sbr.rel (%p137) target = $region20
      $region19: #{dfnet_forward.19} parent=11 // pred_region
        _
      $region20: #{dfnet_forward.19} parent=11 // pred_fallthru
        _
    $region12: #{dfnet_forward.19} parent=5 // pred_fallthru
      _
    %p140 = scmp.lt.s32.totalorder %s9, 2
    // Predicated region
    $region21: #{dfnet_forward.19} parent=5 // pred_check
      %p141 = pneg %p140
    $region22: #{dfnet_forward.19} parent=5 // pred_check_branch
      %143 = sbr.rel (%p141) target = $region24
    $region23: #{dfnet_forward.19} parent=5 // pred_region
      // Predicated region
      $region25: #{dfnet_forward.19} parent=23 // pred_check
        %p144 = pneg %p43
      $region26: #{dfnet_forward.19} parent=23 // pred_check_branch
        %146 = sbr.rel (%p144) target = $region28
      $region27: #{dfnet_forward.19} parent=23 // pred_region
        %p147 = scmp.lt.s32.totalorder %s16, 1
        %s148 = scalar_select %p147, %s16, 1
        %p149 = scmp.lt.s32.totalorder %s17, 0
        %s150 = scalar_select %p149, %s17, 0
        %s151 = smul.addr %s150, 8
        %s152 = smul.addr %s148, 8
        %s153 = sadd.s32 %s151, %s152
        %s154 = smul.addr %s153, 4
        %s155 = scalar_lea.vmem %s0, %s154
      $region28: #{dfnet_forward.19} parent=23 // pred_fallthru
        _
    $region24: #{dfnet_forward.19} parent=5 // pred_fallthru
      _
    %p156 = scmp.le.s32.totalorder 1, %s9
    %p157 = scmp.lt.s32.totalorder %s9, 3
    %p158 = pnand %p156, %p157
    %p159 = pneg %p158
    // Predicated region
    $region29: #{dfnet_forward.19} parent=5 // pred_check
      _
    $region30: #{dfnet_forward.19} parent=5 // pred_check_branch
      %161 = sbr.rel (%p158) target = $region32
    $region31: #{dfnet_forward.19} parent=5 // pred_region
      %s162 = ssub.s32 %s9, 1
      %p163 = scmp.lt.s32.totalorder %s18, 1
      %s164 = scalar_select %p163, %s18, 1
      %p165 = scmp.lt.s32.totalorder %s19, 0
      %s166 = scalar_select %p165, %s19, 0
      %s167 = smul.addr %s166, 8
      %s168 = smul.addr %s164, 8
      %s169 = sadd.s32 %s167, %s168
      %s170 = smul.addr %s169, 4
      %s171 = scalar_lea.vmem %s0, %s170
      %p172 = pneg %p49
      %p173 = pneg %p46
      %p174 = pneg %p70
      %p175 = pneg %p67
      %p176 = pneg %p91
      %p177 = pneg %p88
      %p178 = pneg %p119
      %p179 = pneg %p116
      %s180 = smul.u32 8, %s19
      %p181 = scmp.lt.s32.totalorder %s18, 1
      %s182 = scalar_select %p181, %s18, 1
      %p183 = scmp.lt.s32.totalorder %s180, 7
      %s184 = scalar_select %p183, %s180, 7
      %s185 = smul.addr %s182, 8
      %s186 = sadd.s32 %s184, %s185
      %s187 = smul.addr %s186, 4
      %s188 = scalar_lea.vmem %s3, %s187
      %p189 = scmp.lt.s32.totalorder %s18, 1
      %s190 = scalar_select %p189, %s18, 1
      %p191 = scmp.lt.s32.totalorder %s19, 0
      %s192 = scalar_select %p191, %s19, 0
      %s193 = smul.addr %s192, 8
      %s194 = smul.addr %s190, 8
      %s195 = sadd.s32 %s193, %s194
      %s196 = smul.addr %s195, 4
      %s197 = scalar_lea.vmem %s0, %s196
      %s198 = smul.u32 8, %s19
      %p199 = scmp.lt.s32.totalorder %s18, 1
      %s200 = scalar_select %p199, %s18, 1
      %p201 = scmp.lt.s32.totalorder %s198, 7
      %s202 = scalar_select %p201, %s198, 7
      %s203 = smul.addr %s200, 8
      %s204 = sadd.s32 %s202, %s203
      %s205 = smul.addr %s204, 4
      %s206 = scalar_lea.vmem %s3, %s205
      %s207 = smul.u32 8, %s19
      %v209 = vld [vmem:[%s197] sm:$0xf]
      %v210 = vld [vmem:[%s197 + $0x4] sm:$0xf]
      %v211 = vld [vmem:[%s197 + $0x8] sm:$0xf]
      %v212 = vld [vmem:[%s197 + $0xc] sm:$0xf]
      %v213 = vld [vmem:[%s197 + $0x10] sm:$0xf]
      %v214 = vld [vmem:[%s197 + $0x14] sm:$0xf]
      %v215 = vld [vmem:[%s197 + $0x18] sm:$0xf]
      %v216 = vld [vmem:[%s197 + $0x1c] sm:$0xf]
      %v217 = vld [vmem:[%s1] sm:$0xf]
      %v218 = vld [vmem:[%s1 + $0x4] sm:$0xf]
      %v219 = vld [vmem:[%s2] sm:$0x1]
      %v221 = vlaneseq
      %v222 = vshrl.u32 %v221, 7
      %v223 = vsub.s32 0, %v222
      %v224 = vrot.slane %v219, %v223
      %v234 = vunpack.c.l.b16 %v209
      %v235 = vunpack.c.l.b16 %v210
      %v236 = vunpack.c.l.b16 %v211
      %v237 = vunpack.c.l.b16 %v212
      %v238 = vunpack.c.l.b16 %v213
      %v239 = vunpack.c.l.b16 %v214
      %v240 = vunpack.c.l.b16 %v215
      %v241 = vunpack.c.l.b16 %v216
      %v242 = vpack.c.b16 %v235, %v234
      %v243 = vpack.c.b16 %v237, %v236
      %v244 = vpack.c.b16 %v239, %v238
      %v245 = vpack.c.b16 %v241, %v240
      %v248 = vunpack.c.l.b16 %v217
      %v249 = vunpack.c.l.b16 %v218
      %v250 = vpack.c.b16 %v249, %v248
      %vm252 = vcmask 130048
      %v254 = vsel %vm252, %v242, 0
      %v257 = vsel %vm252, %v243, 0
      %v260 = vsel %vm252, %v244, 0
      %v263 = vsel %vm252, %v245, 0
      %265 = vmatprep.subr.bf16.mxu0 0
      %266 = vmatpush1.bf16.msra.mxu0 %v250
      %267 = vmatprep.subr.bf16.mxu0 0
      %268 = vmatpush1.bf16.msra.mxu0 0
      %269 = vmatprep.subr.bf16.mxu0 0
      %270 = vmatpush1.bf16.msra.mxu0 0
      %271 = vmatprep.subr.bf16.mxu0 0
      %272 = vmatpush1.bf16.msra.mxu0 0
      %273 = vmatprep.subr.bf16.mxu0 0
      %274 = vmatpush1.bf16.msra.mxu0 0
      %275 = vmatprep.subr.bf16.mxu0 0
      %276 = vmatpush1.bf16.msra.mxu0 0
      %277 = vmatprep.subr.bf16.mxu0 0
      %278 = vmatpush1.bf16.msra.mxu0 0
      %279 = vmatprep.subr.bf16.mxu0 0
      %280 = vmatpush1.bf16.msra.mxu0 0
      %281 = vmatprep.subr.bf16.mxu0 0
      %282 = vmatpush1.bf16.msra.mxu0 0
      %283 = vmatprep.subr.bf16.mxu0 0
      %284 = vmatpush1.bf16.msra.mxu0 0
      %285 = vmatprep.subr.bf16.mxu0 0
      %286 = vmatpush1.bf16.msra.mxu0 0
      %287 = vmatprep.subr.bf16.mxu0 0
      %288 = vmatpush1.bf16.msra.mxu0 0
      %289 = vmatprep.subr.bf16.mxu0 0
      %290 = vmatpush1.bf16.msra.mxu0 0
      %291 = vmatprep.subr.bf16.mxu0 0
      %292 = vmatpush1.bf16.msra.mxu0 0
      %293 = vmatprep.subr.bf16.mxu0 0
      %294 = vmatpush1.bf16.msra.mxu0 0
      %295 = vmatprep.subr.bf16.mxu0 0
      %296 = vmatpush1.bf16.msra.mxu0 0
      %297 = vmatprep.mubr.bf16.mxu0 0
      %298 = vmatmul.mubr.bf16.gmra.mrb[0].mxu0 %v254
      %v299 = vpop.f32.mrb[0].mxu0
      %v300 = vadd.f32 %v224, %v299
      %v301 = vpop.f32.mrb[0].mxu0
      %v302 = vpop.f32.mrb[0].mxu0
      %v303 = vadd.f32 %v224, %v302
      %v304 = vpop.f32.mrb[0].mxu0
      %305 = vmatprep.mubr.bf16.mxu0 0
      %306 = vmatmul.mubr.bf16.gmra.mrb[0].mxu0 %v257
      %v307 = vpop.f32.mrb[0].mxu0
      %v308 = vadd.f32 %v224, %v307
      %v309 = vpop.f32.mrb[0].mxu0
      %v310 = vpop.f32.mrb[0].mxu0
      %v311 = vadd.f32 %v224, %v310
      %v312 = vpop.f32.mrb[0].mxu0
      %313 = vmatprep.mubr.bf16.mxu0 0
      %314 = vmatmul.mubr.bf16.gmra.mrb[0].mxu0 %v260
      %v315 = vpop.f32.mrb[0].mxu0
      %v316 = vadd.f32 %v224, %v315
      %v317 = vpop.f32.mrb[0].mxu0
      %v318 = vpop.f32.mrb[0].mxu0
      %v319 = vadd.f32 %v224, %v318
      %v320 = vpop.f32.mrb[0].mxu0
      %321 = vmatprep.mubr.bf16.mxu0 0
      %322 = vmatmul.mubr.bf16.gmra.mrb[0].mxu0 %v263
      %v323 = vpop.f32.mrb[0].mxu0
      %v324 = vadd.f32 %v224, %v323
      %v325 = vpop.f32.mrb[0].mxu0
      %v326 = vpop.f32.mrb[0].mxu0
      %v327 = vadd.f32 %v224, %v326
      %v328 = vpop.f32.mrb[0].mxu0
      %329 = vdwg.mxu0
      %v330 = vpack.c.bf16 %v300, %v300
      %v331 = vpack.c.bf16 %v303, %v303
      %v332 = vpack.c.bf16 %v308, %v308
      %v333 = vpack.c.bf16 %v311, %v311
      %v334 = vpack.c.bf16 %v316, %v316
      %v335 = vpack.c.bf16 %v319, %v319
      %v336 = vpack.c.bf16 %v324, %v324
      %v337 = vpack.c.bf16 %v327, %v327
      %vm338 = vcmask 60416
      %339 = vst.msk [vmem:[%s206] sm:$0xf] %vm338, %v330
      %340 = vst.msk [vmem:[%s206 + $0x4] sm:$0xf] %vm338, %v331
      %341 = vst.msk [vmem:[%s206 + $0x8] sm:$0xf] %vm338, %v332
      %342 = vst.msk [vmem:[%s206 + $0xc] sm:$0xf] %vm338, %v333
      %343 = vst.msk [vmem:[%s206 + $0x10] sm:$0xf] %vm338, %v334
      %344 = vst.msk [vmem:[%s206 + $0x14] sm:$0xf] %vm338, %v335
      %345 = vst.msk [vmem:[%s206 + $0x18] sm:$0xf] %vm338, %v336
      %346 = vst.msk [vmem:[%s206 + $0x1c] sm:$0xf] %vm338, %v337
      %s347 = smul.u32 8, %s19
      %p348 = scmp.lt.s32.totalorder %s18, 1
      %s349 = scalar_select %p348, %s18, 1
      %p350 = scmp.lt.s32.totalorder %s347, 7
      %s351 = scalar_select %p350, %s347, 7
      %s352 = smul.addr %s349, 8
      %s353 = sadd.s32 %s351, %s352
      %s354 = smul.addr %s353, 4
      %s355 = scalar_lea.vmem %s3, %s354
      // Predicated region
      $region33: #{dfnet_forward.19} parent=31 // pred_check
        %p356 = pneg %p116
      $region34: #{dfnet_forward.19} parent=31 // pred_check_branch
        %358 = sbr.rel (%p356) target = $region36
      $region35: #{dfnet_forward.19} parent=31 // pred_region
        %s359 = smul.u32 8, %s19
      $region36: #{dfnet_forward.19} parent=31 // pred_fallthru
        _
    $region32: #{dfnet_forward.19} parent=5 // pred_fallthru
      _
    %p360 = scmp.le.s32.totalorder 2, %s9
    // Predicated region
    $region37: #{dfnet_forward.19} parent=5 // pred_check
      %p361 = pneg %p360
    $region38: #{dfnet_forward.19} parent=5 // pred_check_branch
      %363 = sbr.rel (%p361) target = $region40
    $region39: #{dfnet_forward.19} parent=5 // pred_region
      %s364 = ssub.s32 %s9, 2
      // Predicated region
      $region41: #{dfnet_forward.19} parent=39 // pred_check
        %p365 = pneg %p122
      $region42: #{dfnet_forward.19} parent=39 // pred_check_branch
        %367 = sbr.rel (%p365) target = $region44
      $region43: #{dfnet_forward.19} parent=39 // pred_region
        %s368 = smul.u32 8, %s21
        %p369 = scmp.lt.s32.totalorder %s20, 1
        %s370 = scalar_select %p369, %s20, 1
        %p371 = scmp.lt.s32.totalorder %s368, 7
        %s372 = scalar_select %p371, %s368, 7
        %s373 = smul.addr %s370, 8
        %s374 = sadd.s32 %s372, %s373
        %s375 = smul.addr %s374, 4
        %s376 = scalar_lea.vmem %s3, %s375
      $region44: #{dfnet_forward.19} parent=39 // pred_fallthru
        _
    $region40: #{dfnet_forward.19} parent=5 // pred_fallthru
      _
  $region6: #{dfnet_forward.19} parent=0 // loop_footer
    %s13 = sadd.s32 1, %s9
  $region7: #{dfnet_forward.19} parent=0 // loop_footer_branch
    %8 = sbr.rel target = $region3
  $region8: #{dfnet_forward.19} parent=0 // loop_exit
    _

// kernel: dfnet_forward.20
$region0: #{dfnet_forward.20}
  #allocation0 [shape = 'u32[]', space=smem, size = 0x4, offset = 0x4, fixed_abs, tag = 'smem constant byte address 0x4 - core index']
  #allocation1 [shape = 'u32[144,128]{1,0:T(1,128)}', space=vmem, size = 0x12000, scoped, tag = 'internal scratch']
  %s0 = inlined_call_operand.vmem [shape: bf16[2,1,64,72], index: 0, kind: input, shape index: {}]
  %s1 = inlined_call_operand.vmem [shape: bf16[72,8], index: 1, kind: input, shape index: {}]
  %s2 = inlined_call_operand.vmem [shape: f32[1,8], index: 2, kind: input, shape index: {}]
  %s3 = inlined_call_operand.vmem [shape: bf16[2,8,8,8], index: 3, kind: input, shape index: {}]
  %s4 = inlined_call_operand.vmem [shape: bf16[2,8,8,8], index: 4, kind: output, shape index: {}]
  %s5 = sld [smem:[#allocation0]]
  $region49: #{dfnet_forward.20} parent=0
    _
  %s7 = ssub.s32 1, %s5
  %s8 = scalar_select 0, %s7, %s5
  loop: start=0, step=1, limit=4
  $region2: #{dfnet_forward.20} parent=0 // loop_pre_header
    _
  $region3: #{dfnet_forward.20} parent=0 // loop_header
    %s10 = sphi 0, %s14
    %p11 = scmp.ge.s32.totalorder %s10, 4
    %s17 = sphi 0, %s29
    %s18 = sphi 0, %s25
    %s19 = sphi 0, %s17
    %s20 = sphi 0, %s18
    %s21 = sphi 0, %s19
    %s22 = sphi 0, %s20
    %s34 = sphi 0, %s36
    %s37 = sphi 0, %s34
    %s38 = sphi 0, %s37
    %s54 = sphi 0, %s38
    %s58 = sphi 0, %s58
    %s60 = sphi 0, %s58
    %s61 = sphi 0, %s60
    %s75 = sphi 0, %s61
    %s79 = sphi 0, %s79
    %s81 = sphi 0, %s79
    %s82 = sphi 0, %s81
    %s96 = sphi 0, %s82
    %s104 = sphi 0, %s106
    %s107 = sphi 0, %s104
    %s108 = sphi 0, %s107
    %s124 = sphi 0, %s108
    %s132 = sphi 0, %s134
    %s135 = sphi 0, %s132
    %s136 = sphi 0, %s135
    %s152 = sphi 0, %s136
  $region4: #{dfnet_forward.20} parent=0 // loop_header_branch
    %13 = sbr.rel (%p11) target = $region8
  $region5: #{dfnet_forward.20} parent=0 // loop_body
    %s15 = ssub.s32 %s10, 1
    %s16 = ssub.s32 %s10, 2
    %s23 = sadd.s32 1, %s18
    %p24 = scmp.ge.s32.totalorder %s23, 1
    %s25 = scalar_select %p24, 0, %s23
    %s26 = sadd.s32 1, %s17
    %s27 = scalar_select %p24, %s26, %s17
    %p28 = scmp.ge.s32.totalorder %s27, 2
    %s29 = scalar_select %p28, 0, %s27
    %s30 = ssub.s32 %s17, %s29
    %s31 = ssub.s32 %s18, %s25
    %s32 = sor.u32 %s30, %s31
    %p33 = scmp.eq.s32.totalorder %s32, 0
    %s35 = sadd.s32 %s34, 1
    %s36 = scalar_select %p33, %s34, %s35
    %p39 = pneg %p33
    %p40 = scmp.eq.s32.totalorder %s10, 1
    %p41 = por %p39, %p40
    %p42 = scmp.ne.s32.totalorder %s34, %s37
    %p43 = scmp.eq.s32.totalorder %s10, 0
    %p44 = por %p42, %p43
    %p45 = scmp.ne.s32.totalorder %s34, %s37
    %p46 = scmp.eq.s32.totalorder %s15, 1
    %p47 = por %p45, %p46
    %p48 = scmp.ne.s32.totalorder %s37, %s38
    %p49 = scmp.eq.s32.totalorder %s15, 0
    %p50 = por %p48, %p49
    %p51 = scmp.ne.s32.totalorder %s37, %s38
    %p52 = scmp.eq.s32.totalorder %s16, 1
    %p53 = por %p51, %p52
    %p55 = scmp.ne.s32.totalorder %s38, %s54
    %p56 = scmp.eq.s32.totalorder %s16, 0
    %p57 = por %p55, %p56
    %s59 = sadd.s32 %s58, 1
    %p62 = scmp.eq.s32.totalorder %s10, 1
    %p63 = scmp.ne.s32.totalorder %s58, %s60
    %p64 = scmp.eq.s32.totalorder %s10, 0
    %p65 = por %p63, %p64
    %p66 = scmp.ne.s32.totalorder %s58, %s60
    %p67 = scmp.eq.s32.totalorder %s15, 1
    %p68 = por %p66, %p67
    %p69 = scmp.ne.s32.totalorder %s60, %s61
    %p70 = scmp.eq.s32.totalorder %s15, 0
    %p71 = por %p69, %p70
    %p72 = scmp.ne.s32.totalorder %s60, %s61
    %p73 = scmp.eq.s32.totalorder %s16, 1
    %p74 = por %p72, %p73
    %p76 = scmp.ne.s32.totalorder %s61, %s75
    %p77 = scmp.eq.s32.totalorder %s16, 0
    %p78 = por %p76, %p77
    %s80 = sadd.s32 %s79, 1
    %p83 = scmp.eq.s32.totalorder %s10, 1
    %p84 = scmp.ne.s32.totalorder %s79, %s81
    %p85 = scmp.eq.s32.totalorder %s10, 0
    %p86 = por %p84, %p85
    %p87 = scmp.ne.s32.totalorder %s79, %s81
    %p88 = scmp.eq.s32.totalorder %s15, 1
    %p89 = por %p87, %p88
    %p90 = scmp.ne.s32.totalorder %s81, %s82
    %p91 = scmp.eq.s32.totalorder %s15, 0
    %p92 = por %p90, %p91
    %p93 = scmp.ne.s32.totalorder %s81, %s82
    %p94 = scmp.eq.s32.totalorder %s16, 1
    %p95 = por %p93, %p94
    %p97 = scmp.ne.s32.totalorder %s82, %s96
    %p98 = scmp.eq.s32.totalorder %s16, 0
    %p99 = por %p97, %p98
    %s100 = ssub.s32 %s17, %s29
    %s101 = ssub.s32 %s18, %s25
    %s102 = sor.u32 %s100, %s101
    %p103 = scmp.eq.s32.totalorder %s102, 0
    %s105 = sadd.s32 %s104, 1
    %s106 = scalar_select %p103, %s104, %s105
    %p109 = pneg %p103
    %p110 = scmp.eq.s32.totalorder %s10, 1
    %p111 = por %p109, %p110
    %p112 = scmp.ne.s32.totalorder %s104, %s107
    %p113 = scmp.eq.s32.totalorder %s10, 0
    %p114 = por %p112, %p113
    %p115 = scmp.ne.s32.totalorder %s104, %s107
    %p116 = scmp.eq.s32.totalorder %s15, 1
    %p117 = por %p115, %p116
    %p118 = scmp.ne.s32.totalorder %s107, %s108
    %p119 = scmp.eq.s32.totalorder %s15, 0
    %p120 = por %p118, %p119
    %p121 = scmp.ne.s32.totalorder %s107, %s108
    %p122 = scmp.eq.s32.totalorder %s16, 1
    %p123 = por %p121, %p122
    %p125 = scmp.ne.s32.totalorder %s108, %s124
    %p126 = scmp.eq.s32.totalorder %s16, 0
    %p127 = por %p125, %p126
    %s128 = ssub.s32 %s17, %s29
    %s129 = ssub.s32 %s18, %s25
    %s130 = sor.u32 %s128, %s129
    %p131 = scmp.eq.s32.totalorder %s130, 0
    %s133 = sadd.s32 %s132, 1
    %s134 = scalar_select %p131, %s132, %s133
    %p137 = pneg %p131
    %p138 = scmp.eq.s32.totalorder %s10, 1
    %p139 = por %p137, %p138
    %p140 = scmp.ne.s32.totalorder %s132, %s135
    %p141 = scmp.eq.s32.totalorder %s10, 0
    %p142 = por %p140, %p141
    %p143 = scmp.ne.s32.totalorder %s132, %s135
    %p144 = scmp.eq.s32.totalorder %s15, 1
    %p145 = por %p143, %p144
    %p146 = scmp.ne.s32.totalorder %s135, %s136
    %p147 = scmp.eq.s32.totalorder %s15, 0
    %p148 = por %p146, %p147
    %p149 = scmp.ne.s32.totalorder %s135, %s136
    %p150 = scmp.eq.s32.totalorder %s16, 1
    %p151 = por %p149, %p150
    %p153 = scmp.ne.s32.totalorder %s136, %s152
    %p154 = scmp.eq.s32.totalorder %s16, 0
    %p155 = por %p153, %p154
    %p156 = scmp.le.s32.totalorder 1, %s10
    %p157 = scmp.lt.s32.totalorder %s10, 3
    %p158 = pnand %p156, %p157
    %p159 = pneg %p158
    // Predicated region
    $region9: #{dfnet_forward.20} parent=5 // pred_check
      _
    $region10: #{dfnet_forward.20} parent=5 // pred_check_branch
      %161 = sbr.rel (%p158) target = $region12
    $region11: #{dfnet_forward.20} parent=5 // pred_region
      %s162 = ssub.s32 %s10, 1
      // Predicated region
      $region13: #{dfnet_forward.20} parent=11 // pred_check
        %p163 = pneg %p71
      $region14: #{dfnet_forward.20} parent=11 // pred_check_branch
        %165 = sbr.rel (%p163) target = $region16
      $region15: #{dfnet_forward.20} parent=11 // pred_region
        _
      $region16: #{dfnet_forward.20} parent=11 // pred_fallthru
        _
      // Predicated region
      $region17: #{dfnet_forward.20} parent=11 // pred_check
        %p166 = pneg %p92
      $region18: #{dfnet_forward.20} parent=11 // pred_check_branch
        %168 = sbr.rel (%p166) target = $region20
      $region19: #{dfnet_forward.20} parent=11 // pred_region
        _
      $region20: #{dfnet_forward.20} parent=11 // pred_fallthru
        _
    $region12: #{dfnet_forward.20} parent=5 // pred_fallthru
      _
    %p169 = scmp.lt.s32.totalorder %s10, 2
    // Predicated region
    $region21: #{dfnet_forward.20} parent=5 // pred_check
      %p170 = pneg %p169
    $region22: #{dfnet_forward.20} parent=5 // pred_check_branch
      %172 = sbr.rel (%p170) target = $region24
    $region23: #{dfnet_forward.20} parent=5 // pred_region
      // Predicated region
      $region25: #{dfnet_forward.20} parent=23 // pred_check
        %p173 = pneg %p44
      $region26: #{dfnet_forward.20} parent=23 // pred_check_branch
        %175 = sbr.rel (%p173) target = $region28
      $region27: #{dfnet_forward.20} parent=23 // pred_region
        %p176 = scmp.lt.s32.totalorder %s17, 1
        %s177 = scalar_select %p176, %s17, 1
        %p178 = scmp.lt.s32.totalorder %s18, 0
        %s179 = scalar_select %p178, %s18, 0
        %s180 = smul.addr %s179, 8
        %s181 = smul.addr %s177, 8
        %s182 = sadd.s32 %s180, %s181
        %s183 = smul.addr %s182, 4
        %s184 = scalar_lea.vmem %s0, %s183
      $region28: #{dfnet_forward.20} parent=23 // pred_fallthru
        _
      // Predicated region
      $region29: #{dfnet_forward.20} parent=23 // pred_check
        %p185 = pneg %p114
      $region30: #{dfnet_forward.20} parent=23 // pred_check_branch
        %187 = sbr.rel (%p185) target = $region32
      $region31: #{dfnet_forward.20} parent=23 // pred_region
        %s188 = smul.u32 8, %s18
        %p189 = scmp.lt.s32.totalorder %s17, 1
        %s190 = scalar_select %p189, %s17, 1
        %p191 = scmp.lt.s32.totalorder %s188, 7
        %s192 = scalar_select %p191, %s188, 7
        %s193 = smul.addr %s190, 8
        %s194 = sadd.s32 %s192, %s193
        %s195 = smul.addr %s194, 4
        %s196 = scalar_lea.vmem %s3, %s195
        %s197 = smul.u32 8, %s18
      $region32: #{dfnet_forward.20} parent=23 // pred_fallthru
        _
    $region24: #{dfnet_forward.20} parent=5 // pred_fallthru
      _
    %p198 = scmp.le.s32.totalorder 1, %s10
    %p199 = scmp.lt.s32.totalorder %s10, 3
    %p200 = pnand %p198, %p199
    %p201 = pneg %p200
    // Predicated region
    $region33: #{dfnet_forward.20} parent=5 // pred_check
      _
    $region34: #{dfnet_forward.20} parent=5 // pred_check_branch
      %203 = sbr.rel (%p200) target = $region36
    $region35: #{dfnet_forward.20} parent=5 // pred_region
      %s204 = ssub.s32 %s10, 1
      %p205 = scmp.lt.s32.totalorder %s19, 1
      %s206 = scalar_select %p205, %s19, 1
      %p207 = scmp.lt.s32.totalorder %s20, 0
      %s208 = scalar_select %p207, %s20, 0
      %s209 = smul.addr %s208, 8
      %s210 = smul.addr %s206, 8
      %s211 = sadd.s32 %s209, %s210
      %s212 = smul.addr %s211, 4
      %s213 = scalar_lea.vmem %s0, %s212
      %p214 = pneg %p50
      %p215 = pneg %p47
      %p216 = pneg %p71
      %p217 = pneg %p68
      %p218 = pneg %p92
      %p219 = pneg %p89
      %s220 = smul.u32 8, %s20
      %p221 = scmp.lt.s32.totalorder %s19, 1
      %s222 = scalar_select %p221, %s19, 1
      %p223 = scmp.lt.s32.totalorder %s220, 7
      %s224 = scalar_select %p223, %s220, 7
      %s225 = smul.addr %s222, 8
      %s226 = sadd.s32 %s224, %s225
      %s227 = smul.addr %s226, 4
      %s228 = scalar_lea.vmem %s3, %s227
      %p229 = pneg %p120
      %p230 = pneg %p117
      %p231 = pneg %p148
      %p232 = pneg %p145
      %s233 = smul.u32 8, %s20
      %p234 = scmp.lt.s32.totalorder %s19, 1
      %s235 = scalar_select %p234, %s19, 1
      %p236 = scmp.lt.s32.totalorder %s233, 7
      %s237 = scalar_select %p236, %s233, 7
      %s238 = smul.addr %s235, 8
      %s239 = sadd.s32 %s237, %s238
      %s240 = smul.addr %s239, 4
      %s241 = scalar_lea.vmem %s4, %s240
      %p242 = scmp.lt.s32.totalorder %s19, 1
      %s243 = scalar_select %p242, %s19, 1
      %p244 = scmp.lt.s32.totalorder %s20, 0
      %s245 = scalar_select %p244, %s20, 0
      %s246 = smul.addr %s245, 8
      %s247 = smul.addr %s243, 8
      %s248 = sadd.s32 %s246, %s247
      %s249 = smul.addr %s248, 4
      %s250 = scalar_lea.vmem %s0, %s249
      %s251 = smul.u32 8, %s20
      %p252 = scmp.lt.s32.totalorder %s19, 1
      %s253 = scalar_select %p252, %s19, 1
      %p254 = scmp.lt.s32.totalorder %s251, 7
      %s255 = scalar_select %p254, %s251, 7
      %s256 = smul.addr %s253, 8
      %s257 = sadd.s32 %s255, %s256
      %s258 = smul.addr %s257, 4
      %s259 = scalar_lea.vmem %s3, %s258
      %s260 = smul.u32 8, %s20
      %s261 = smul.u32 8, %s20
      %p262 = scmp.lt.s32.totalorder %s19, 1
      %s263 = scalar_select %p262, %s19, 1
      %p264 = scmp.lt.s32.totalorder %s261, 7
      %s265 = scalar_select %p264, %s261, 7
      %s266 = smul.addr %s263, 8
      %s267 = sadd.s32 %s265, %s266
      %s268 = smul.addr %s267, 4
      %s269 = scalar_lea.vmem %s4, %s268
      %s270 = smul.u32 8, %s20
      %v272 = vld [vmem:[%s250] sm:$0xf]
      %v273 = vld [vmem:[%s250 + $0x4] sm:$0xf]
      %v274 = vld [vmem:[%s250 + $0x8] sm:$0xf]
      %v275 = vld [vmem:[%s250 + $0xc] sm:$0xf]
      %v276 = vld [vmem:[%s250 + $0x10] sm:$0xf]
      %v277 = vld [vmem:[%s250 + $0x14] sm:$0xf]
      %v278 = vld [vmem:[%s250 + $0x18] sm:$0xf]
      %v279 = vld [vmem:[%s250 + $0x1c] sm:$0xf]
      %v280 = vld [vmem:[%s1] sm:$0xf]
      %v281 = vld [vmem:[%s1 + $0x4] sm:$0xf]
      %v282 = vld [vmem:[%s1 + $0x8] sm:$0xf]
      %v283 = vld [vmem:[%s1 + $0xc] sm:$0xf]
      %v284 = vld [vmem:[%s1 + $0x10] sm:$0xf]
      %v285 = vld [vmem:[%s1 + $0x14] sm:$0xf]
      %v286 = vld [vmem:[%s1 + $0x18] sm:$0xf]
      %v287 = vld [vmem:[%s1 + $0x1c] sm:$0xf]
      %v288 = vld [vmem:[%s1 + $0x20] sm:$0xf]
      %v289 = vld [vmem:[%s2] sm:$0x1]
      %v291 = vlaneseq
      %v292 = vshrl.u32 %v291, 7
      %v293 = vsub.s32 0, %v292
      %v294 = vrot.slane %v289, %v293
      %v304 = vunpack.c.l.b16 %v272
      %v305 = vunpack.c.l.b16 %v273
      %v306 = vunpack.c.l.b16 %v274
      %v307 = vunpack.c.l.b16 %v275
      %v308 = vunpack.c.l.b16 %v276
      %v309 = vunpack.c.l.b16 %v277
      %v310 = vunpack.c.l.b16 %v278
      %v311 = vunpack.c.l.b16 %v279
      %v312 = vpack.c.b16 %v305, %v304
      %v313 = vpack.c.b16 %v307, %v306
      %v314 = vpack.c.b16 %v309, %v308
      %v315 = vpack.c.b16 %v311, %v310
      %v325 = vunpack.c.l.b16 %v280
      %v326 = vunpack.c.l.b16 %v281
      %v327 = vunpack.c.l.b16 %v282
      %v328 = vunpack.c.l.b16 %v283
      %v329 = vunpack.c.l.b16 %v284
      %v330 = vunpack.c.l.b16 %v285
      %v331 = vunpack.c.l.b16 %v286
      %v332 = vunpack.c.l.b16 %v287
      %v333 = vunpack.c.l.b16 %v288
      %v334 = vpack.c.b16 %v326, %v325
      %v335 = vpack.c.b16 %v328, %v327
      %v336 = vpack.c.b16 %v330, %v329
      %v337 = vpack.c.b16 %v332, %v331
      %v338 = vpack.c.b16 %v333, %v333
      %vm343 = vcmask 588800
      %v345 = vsel %vm343, %v312, 0
      %v348 = vsel %vm343, %v313, 0
      %v351 = vsel %vm343, %v314, 0
      %v354 = vsel %vm343, %v315, 0
      %vm356 = vcmask 1043456
      %v358 = vsel %vm356, %v338, 0
      %360 = vmatprep.subr.bf16.mxu0 0
      %361 = vmatpush1.bf16.msra.mxu0 %v334
      %362 = vmatprep.subr.bf16.mxu0 0
      %363 = vmatpush1.bf16.msra.mxu0 %v335
      %364 = vmatprep.subr.bf16.mxu0 0
      %365 = vmatpush1.bf16.msra.mxu0 %v336
      %366 = vmatprep.subr.bf16.mxu0 0
      %367 = vmatpush1.bf16.msra.mxu0 %v337
      %368 = vmatprep.subr.bf16.mxu0 0
      %369 = vmatpush1.bf16.msra.mxu0 %v358
      %370 = vmatprep.subr.bf16.mxu0 0
      %371 = vmatpush1.bf16.msra.mxu0 0
      %372 = vmatprep.subr.bf16.mxu0 0
      %373 = vmatpush1.bf16.msra.mxu0 0
      %374 = vmatprep.subr.bf16.mxu0 0
      %375 = vmatpush1.bf16.msra.mxu0 0
      %376 = vmatprep.subr.bf16.mxu0 0
      %377 = vmatpush1.bf16.msra.mxu0 0
      %378 = vmatprep.subr.bf16.mxu0 0
      %379 = vmatpush1.bf16.msra.mxu0 0
      %380 = vmatprep.subr.bf16.mxu0 0
      %381 = vmatpush1.bf16.msra.mxu0 0
      %382 = vmatprep.subr.bf16.mxu0 0
      %383 = vmatpush1.bf16.msra.mxu0 0
      %384 = vmatprep.subr.bf16.mxu0 0
      %385 = vmatpush1.bf16.msra.mxu0 0
      %386 = vmatprep.subr.bf16.mxu0 0
      %387 = vmatpush1.bf16.msra.mxu0 0
      %388 = vmatprep.subr.bf16.mxu0 0
      %389 = vmatpush1.bf16.msra.mxu0 0
      %390 = vmatprep.subr.bf16.mxu0 0
      %391 = vmatpush1.bf16.msra.mxu0 0
      %392 = vmatprep.mubr.bf16.mxu0 0
      %393 = vmatmul.mubr.bf16.gmra.mrb[0].mxu0 %v345
      %v394 = vpop.f32.mrb[0].mxu0
      %v395 = vadd.f32 %v294, %v394
      %v396 = vpop.f32.mrb[0].mxu0
      %v397 = vpop.f32.mrb[0].mxu0
      %v398 = vadd.f32 %v294, %v397
      %v399 = vpop.f32.mrb[0].mxu0
      %400 = vmatprep.mubr.bf16.mxu0 0
      %401 = vmatmul.mubr.bf16.gmra.mrb[0].mxu0 %v348
      %v402 = vpop.f32.mrb[0].mxu0
      %v403 = vadd.f32 %v294, %v402
      %v404 = vpop.f32.mrb[0].mxu0
      %v405 = vpop.f32.mrb[0].mxu0
      %v406 = vadd.f32 %v294, %v405
      %v407 = vpop.f32.mrb[0].mxu0
      %408 = vmatprep.mubr.bf16.mxu0 0
      %409 = vmatmul.mubr.bf16.gmra.mrb[0].mxu0 %v351
      %v410 = vpop.f32.mrb[0].mxu0
      %v411 = vadd.f32 %v294, %v410
      %v412 = vpop.f32.mrb[0].mxu0
      %v413 = vpop.f32.mrb[0].mxu0
      %v414 = vadd.f32 %v294, %v413
      %v415 = vpop.f32.mrb[0].mxu0
      %416 = vmatprep.mubr.bf16.mxu0 0
      %417 = vmatmul.mubr.bf16.gmra.mrb[0].mxu0 %v354
      %v418 = vpop.f32.mrb[0].mxu0
      %v419 = vadd.f32 %v294, %v418
      %v420 = vpop.f32.mrb[0].mxu0
      %v421 = vpop.f32.mrb[0].mxu0
      %v422 = vadd.f32 %v294, %v421
      %v423 = vpop.f32.mrb[0].mxu0
      %424 = vdwg.mxu0
      %v425 = vld [vmem:[%s259] sm:$0xf]
      %v426 = vld [vmem:[%s259 + $0x4] sm:$0xf]
      %v427 = vld [vmem:[%s259 + $0x8] sm:$0xf]
      %v428 = vld [vmem:[%s259 + $0xc] sm:$0xf]
      %v429 = vld [vmem:[%s259 + $0x10] sm:$0xf]
      %v430 = vld [vmem:[%s259 + $0x14] sm:$0xf]
      %v431 = vld [vmem:[%s259 + $0x18] sm:$0xf]
      %v432 = vld [vmem:[%s259 + $0x1c] sm:$0xf]
      %v433 = vunpack.c.l.bf16 %v425
      %v434 = vunpack.c.l.bf16 %v426
      %v435 = vunpack.c.l.bf16 %v427
      %v436 = vunpack.c.l.bf16 %v428
      %v437 = vunpack.c.l.bf16 %v429
      %v438 = vunpack.c.l.bf16 %v430
      %v439 = vunpack.c.l.bf16 %v431
      %v440 = vunpack.c.l.bf16 %v432
      %v441 = vadd.f32 %v395, %v433
      %v442 = vadd.f32 %v398, %v434
      %v443 = vadd.f32 %v403, %v435
      %v444 = vadd.f32 %v406, %v436
      %v445 = vadd.f32 %v411, %v437
      %v446 = vadd.f32 %v414, %v438
      %v447 = vadd.f32 %v419, %v439
      %v448 = vadd.f32 %v422, %v440
      %v449 = vpack.c.bf16 %v441, %v441
      %v450 = vpack.c.bf16 %v442, %v442
      %v451 = vpack.c.bf16 %v443, %v443
      %v452 = vpack.c.bf16 %v444, %v444
      %v453 = vpack.c.bf16 %v445, %v445
      %v454 = vpack.c.bf16 %v446, %v446
      %v455 = vpack.c.bf16 %v447, %v447
      %v456 = vpack.c.bf16 %v448, %v448
      %vm457 = vcmask 60416
      %458 = vst.msk [vmem:[%s269] sm:$0xf] %vm457, %v449
      %459 = vst.msk [vmem:[%s269 + $0x4] sm:$0xf] %vm457, %v450
      %460 = vst.msk [vmem:[%s269 + $0x8] sm:$0xf] %vm457, %v451
      %461 = vst.msk [vmem:[%s269 + $0xc] sm:$0xf] %vm457, %v452
      %462 = vst.msk [vmem:[%s269 + $0x10] sm:$0xf] %vm457, %v453
      %463 = vst.msk [vmem:[%s269 + $0x14] sm:$0xf] %vm457, %v454
      %464 = vst.msk [vmem:[%s269 + $0x18] sm:$0xf] %vm457, %v455
      %465 = vst.msk [vmem:[%s269 + $0x1c] sm:$0xf] %vm457, %v456
      %s466 = smul.u32 8, %s20
      %p467 = scmp.lt.s32.totalorder %s19, 1
      %s468 = scalar_select %p467, %s19, 1
      %p469 = scmp.lt.s32.totalorder %s466, 7
      %s470 = scalar_select %p469, %s466, 7
      %s471 = smul.addr %s468, 8
      %s472 = sadd.s32 %s470, %s471
      %s473 = smul.addr %s472, 4
      %s474 = scalar_lea.vmem %s4, %s473
      // Predicated region
      $region37: #{dfnet_forward.20} parent=35 // pred_check
        %p475 = pneg %p145
      $region38: #{dfnet_forward.20} parent=35 // pred_check_branch
        %477 = sbr.rel (%p475) target = $region40
      $region39: #{dfnet_forward.20} parent=35 // pred_region
        %s478 = smul.u32 8, %s20
      $region40: #{dfnet_forward.20} parent=35 // pred_fallthru
        _
    $region36: #{dfnet_forward.20} parent=5 // pred_fallthru
      _
    %p479 = scmp.le.s32.totalorder 2, %s10
    // Predicated region
    $region41: #{dfnet_forward.20} parent=5 // pred_check
      %p480 = pneg %p479
    $region42: #{dfnet_forward.20} parent=5 // pred_check_branch
      %482 = sbr.rel (%p480) target = $region44
    $region43: #{dfnet_forward.20} parent=5 // pred_region
      %s483 = ssub.s32 %s10, 2
      // Predicated region
      $region45: #{dfnet_forward.20} parent=43 // pred_check
        %p484 = pneg %p151
      $region46: #{dfnet_forward.20} parent=43 // pred_check_branch
        %486 = sbr.rel (%p484) target = $region48
      $region47: #{dfnet_forward.20} parent=43 // pred_region
        %s487 = smul.u32 8, %s22
        %p488 = scmp.lt.s32.totalorder %s21, 1
        %s489 = scalar_select %p488, %s21, 1
        %p490 = scmp.lt.s32.totalorder %s487, 7
        %s491 = scalar_select %p490, %s487, 7
        %s492 = smul.addr %s489, 8
        %s493 = sadd.s32 %s491, %s492
        %s494 = smul.addr %s493, 4
        %s495 = scalar_lea.vmem %s4, %s494
      $region48: #{dfnet_forward.20} parent=43 // pred_fallthru
        _
    $region44: #{dfnet_forward.20} parent=5 // pred_fallthru
      _
  $region6: #{dfnet_forward.20} parent=0 // loop_footer
    %s14 = sadd.s32 1, %s10
  $region7: #{dfnet_forward.20} parent=0 // loop_footer_branch
    %9 = sbr.rel target = $region3
  $region8: #{dfnet_forward.20} parent=0 // loop_exit
    _

// kernel: dfnet_forward.21
$region0: #{dfnet_forward.21}
  #allocation0 [shape = 'u32[]', space=smem, size = 0x4, offset = 0x4, fixed_abs, tag = 'smem constant byte address 0x4 - core index']
  #allocation1 [shape = 'u32[144,128]{1,0:T(1,128)}', space=vmem, size = 0x12000, scoped, tag = 'internal scratch']
  %s0 = inlined_call_operand.vmem [shape: bf16[2,1,64,72], index: 0, kind: input, shape index: {}]
  %s1 = inlined_call_operand.vmem [shape: bf16[72,150], index: 1, kind: input, shape index: {}]
  %s2 = inlined_call_operand.vmem [shape: f32[1,150], index: 2, kind: input, shape index: {}]
  %s3 = inlined_call_operand.hbm [shape: f32[2,8,8,150], index: 3, kind: output, shape index: {}]
  %s4 = sld [smem:[#allocation0]]
  $region45: #{dfnet_forward.21} parent=0
    _
  %s6 = ssub.s32 1, %s4
  %s7 = scalar_select 0, %s6, %s4
  $region1: #{dfnet_forward.21} parent=0
    #allocation2 [shape = 'u8[131072]{0}', space=vmem, size = 0x20000, scoped, tag = 'output window, operand 0']
    #allocation3 [shape = 's32[2]{0}', space=sflag, size = 0x8, scoped, tag = 'scoped memory for dfnet_forward.21']
    %8 = vsyncpa [#allocation3], 0
    %s9 = scalar_lea.sflag [#allocation3], 1
    %10 = vsyncpa %s9, 0
    loop: start=0, step=1, limit=4
    $region2: #{dfnet_forward.21} parent=1 // loop_pre_header
      _
    $region3: #{dfnet_forward.21} parent=1 // loop_header
      %s12 = sphi 0, %s16
      %p13 = scmp.ge.s32.totalorder %s12, 4
      %s19 = sphi 0, %s31
      %s20 = sphi 0, %s27
      %s21 = sphi 0, %s19
      %s22 = sphi 0, %s20
      %s23 = sphi 0, %s21
      %s24 = sphi 0, %s22
      %s36 = sphi 0, %s38
      %s39 = sphi 0, %s36
      %s40 = sphi 0, %s39
      %s56 = sphi 0, %s40
      %s60 = sphi 0, %s60
      %s62 = sphi 0, %s60
      %s63 = sphi 0, %s62
      %s77 = sphi 0, %s63
      %s81 = sphi 0, %s81
      %s83 = sphi 0, %s81
      %s84 = sphi 0, %s83
      %s98 = sphi 0, %s84
      %s106 = sphi 0, %s108
      %s109 = sphi 0, %s106
      %s110 = sphi 0, %s109
      %s126 = sphi 0, %s110
    $region4: #{dfnet_forward.21} parent=1 // loop_header_branch
      %15 = sbr.rel (%p13) target = $region8
    $region5: #{dfnet_forward.21} parent=1 // loop_body
      %s17 = ssub.s32 %s12, 1
      %s18 = ssub.s32 %s12, 2
      %s25 = sadd.s32 1, %s20
      %p26 = scmp.ge.s32.totalorder %s25, 1
      %s27 = scalar_select %p26, 0, %s25
      %s28 = sadd.s32 1, %s19
      %s29 = scalar_select %p26, %s28, %s19
      %p30 = scmp.ge.s32.totalorder %s29, 2
      %s31 = scalar_select %p30, 0, %s29
      %s32 = ssub.s32 %s19, %s31
      %s33 = ssub.s32 %s20, %s27
      %s34 = sor.u32 %s32, %s33
      %p35 = scmp.eq.s32.totalorder %s34, 0
      %s37 = sadd.s32 %s36, 1
      %s38 = scalar_select %p35, %s36, %s37
      %p41 = pneg %p35
      %p42 = scmp.eq.s32.totalorder %s12, 1
      %p43 = por %p41, %p42
      %p44 = scmp.ne.s32.totalorder %s36, %s39
      %p45 = scmp.eq.s32.totalorder %s12, 0
      %p46 = por %p44, %p45
      %p47 = scmp.ne.s32.totalorder %s36, %s39
      %p48 = scmp.eq.s32.totalorder %s17, 1
      %p49 = por %p47, %p48
      %p50 = scmp.ne.s32.totalorder %s39, %s40
      %p51 = scmp.eq.s32.totalorder %s17, 0
      %p52 = por %p50, %p51
      %p53 = scmp.ne.s32.totalorder %s39, %s40
      %p54 = scmp.eq.s32.totalorder %s18, 1
      %p55 = por %p53, %p54
      %p57 = scmp.ne.s32.totalorder %s40, %s56
      %p58 = scmp.eq.s32.totalorder %s18, 0
      %p59 = por %p57, %p58
      %s61 = sadd.s32 %s60, 1
      %p64 = scmp.eq.s32.totalorder %s12, 1
      %p65 = scmp.ne.s32.totalorder %s60, %s62
      %p66 = scmp.eq.s32.totalorder %s12, 0
      %p67 = por %p65, %p66
      %p68 = scmp.ne.s32.totalorder %s60, %s62
      %p69 = scmp.eq.s32.totalorder %s17, 1
      %p70 = por %p68, %p69
      %p71 = scmp.ne.s32.totalorder %s62, %s63
      %p72 = scmp.eq.s32.totalorder %s17, 0
      %p73 = por %p71, %p72
      %p74 = scmp.ne.s32.totalorder %s62, %s63
      %p75 = scmp.eq.s32.totalorder %s18, 1
      %p76 = por %p74, %p75
      %p78 = scmp.ne.s32.totalorder %s63, %s77
      %p79 = scmp.eq.s32.totalorder %s18, 0
      %p80 = por %p78, %p79
      %s82 = sadd.s32 %s81, 1
      %p85 = scmp.eq.s32.totalorder %s12, 1
      %p86 = scmp.ne.s32.totalorder %s81, %s83
      %p87 = scmp.eq.s32.totalorder %s12, 0
      %p88 = por %p86, %p87
      %p89 = scmp.ne.s32.totalorder %s81, %s83
      %p90 = scmp.eq.s32.totalorder %s17, 1
      %p91 = por %p89, %p90
      %p92 = scmp.ne.s32.totalorder %s83, %s84
      %p93 = scmp.eq.s32.totalorder %s17, 0
      %p94 = por %p92, %p93
      %p95 = scmp.ne.s32.totalorder %s83, %s84
      %p96 = scmp.eq.s32.totalorder %s18, 1
      %p97 = por %p95, %p96
      %p99 = scmp.ne.s32.totalorder %s84, %s98
      %p100 = scmp.eq.s32.totalorder %s18, 0
      %p101 = por %p99, %p100
      %s102 = ssub.s32 %s19, %s31
      %s103 = ssub.s32 %s20, %s27
      %s104 = sor.u32 %s102, %s103
      %p105 = scmp.eq.s32.totalorder %s104, 0
      %s107 = sadd.s32 %s106, 1
      %s108 = scalar_select %p105, %s106, %s107
      %p111 = pneg %p105
      %p112 = scmp.eq.s32.totalorder %s12, 1
      %p113 = por %p111, %p112
      %p114 = scmp.ne.s32.totalorder %s106, %s109
      %p115 = scmp.eq.s32.totalorder %s12, 0
      %p116 = por %p114, %p115
      %p117 = scmp.ne.s32.totalorder %s106, %s109
      %p118 = scmp.eq.s32.totalorder %s17, 1
      %p119 = por %p117, %p118
      %p120 = scmp.ne.s32.totalorder %s109, %s110
      %p121 = scmp.eq.s32.totalorder %s17, 0
      %p122 = por %p120, %p121
      %p123 = scmp.ne.s32.totalorder %s109, %s110
      %p124 = scmp.eq.s32.totalorder %s18, 1
      %p125 = por %p123, %p124
      %p127 = scmp.ne.s32.totalorder %s110, %s126
      %p128 = scmp.eq.s32.totalorder %s18, 0
      %p129 = por %p127, %p128
      %p130 = scmp.le.s32.totalorder 1, %s12
      %p131 = scmp.lt.s32.totalorder %s12, 3
      %p132 = pnand %p130, %p131
      %p133 = pneg %p132
      // Predicated region
      $region9: #{dfnet_forward.21} parent=5 // pred_check
        _
      $region10: #{dfnet_forward.21} parent=5 // pred_check_branch
        %135 = sbr.rel (%p132) target = $region12
      $region11: #{dfnet_forward.21} parent=5 // pred_region
        %s136 = ssub.s32 %s12, 1
        // Predicated region
        $region13: #{dfnet_forward.21} parent=11 // pred_check
          %p137 = pneg %p73
        $region14: #{dfnet_forward.21} parent=11 // pred_check_branch
          %139 = sbr.rel (%p137) target = $region16
        $region15: #{dfnet_forward.21} parent=11 // pred_region
          _
        $region16: #{dfnet_forward.21} parent=11 // pred_fallthru
          _
        // Predicated region
        $region17: #{dfnet_forward.21} parent=11 // pred_check
          %p140 = pneg %p94
        $region18: #{dfnet_forward.21} parent=11 // pred_check_branch
          %142 = sbr.rel (%p140) target = $region20
        $region19: #{dfnet_forward.21} parent=11 // pred_region
          _
        $region20: #{dfnet_forward.21} parent=11 // pred_fallthru
          _
      $region12: #{dfnet_forward.21} parent=5 // pred_fallthru
        _
      %p143 = scmp.lt.s32.totalorder %s12, 2
      // Predicated region
      $region21: #{dfnet_forward.21} parent=5 // pred_check
        %p144 = pneg %p143
      $region22: #{dfnet_forward.21} parent=5 // pred_check_branch
        %146 = sbr.rel (%p144) target = $region24
      $region23: #{dfnet_forward.21} parent=5 // pred_region
        // Predicated region
        $region25: #{dfnet_forward.21} parent=23 // pred_check
          %p147 = pneg %p46
        $region26: #{dfnet_forward.21} parent=23 // pred_check_branch
          %149 = sbr.rel (%p147) target = $region28
        $region27: #{dfnet_forward.21} parent=23 // pred_region
          %p150 = scmp.lt.s32.totalorder %s19, 1
          %s151 = scalar_select %p150, %s19, 1
          %p152 = scmp.lt.s32.totalorder %s20, 0
          %s153 = scalar_select %p152, %s20, 0
          %s154 = smul.addr %s153, 8
          %s155 = smul.addr %s151, 8
          %s156 = sadd.s32 %s154, %s155
          %s157 = smul.addr %s156, 4
          %s158 = scalar_lea.vmem %s0, %s157
        $region28: #{dfnet_forward.21} parent=23 // pred_fallthru
          _
      $region24: #{dfnet_forward.21} parent=5 // pred_fallthru
        _
      %p159 = scmp.le.s32.totalorder 1, %s12
      %p160 = scmp.lt.s32.totalorder %s12, 3
      %p161 = pnand %p159, %p160
      %p162 = pneg %p161
      // Predicated region
      $region29: #{dfnet_forward.21} parent=5 // pred_check
        _
      $region30: #{dfnet_forward.21} parent=5 // pred_check_branch
        %164 = sbr.rel (%p161) target = $region32
      $region31: #{dfnet_forward.21} parent=5 // pred_region
        %s165 = ssub.s32 %s12, 1
        %p166 = scmp.lt.s32.totalorder %s21, 1
        %s167 = scalar_select %p166, %s21, 1
        %p168 = scmp.lt.s32.totalorder %s22, 0
        %s169 = scalar_select %p168, %s22, 0
        %s170 = smul.addr %s169, 8
        %s171 = smul.addr %s167, 8
        %s172 = sadd.s32 %s170, %s171
        %s173 = smul.addr %s172, 4
        %s174 = scalar_lea.vmem %s0, %s173
        %p175 = pneg %p52
        %p176 = pneg %p49
        %p177 = pneg %p73
        %p178 = pneg %p70
        %p179 = pneg %p94
        %p180 = pneg %p91
        %p181 = pneg %p122
        %p182 = pneg %p119
        %s183 = sand.u32 %s109, 1
        %s184 = scalar_lea.sflag [#allocation3], %s183
        %s185 = sand.u32 %s109, 1
        %s186 = smul.addr %s185, 128
        %s187 = scalar_lea.vmem [#allocation2], %s186
        %p188 = scmp.lt.s32.totalorder %s21, 1
        %s189 = scalar_select %p188, %s21, 1
        %p190 = scmp.lt.s32.totalorder %s22, 0
        %s191 = scalar_select %p190, %s22, 0
        %s192 = smul.addr %s191, 8
        %s193 = smul.addr %s189, 8
        %s194 = sadd.s32 %s192, %s193
        %s195 = smul.addr %s194, 4
        %s196 = scalar_lea.vmem %s0, %s195
        %s197 = smul.u32 8, %s22
        %v199 = vld [vmem:[%s196] sm:$0xf]
        %v200 = vld [vmem:[%s196 + $0x4] sm:$0xf]
        %v201 = vld [vmem:[%s196 + $0x8] sm:$0xf]
        %v202 = vld [vmem:[%s196 + $0xc] sm:$0xf]
        %v203 = vld [vmem:[%s196 + $0x10] sm:$0xf]
        %v204 = vld [vmem:[%s196 + $0x14] sm:$0xf]
        %v205 = vld [vmem:[%s196 + $0x18] sm:$0xf]
        %v206 = vld [vmem:[%s196 + $0x1c] sm:$0xf]
        %v207 = vld [vmem:[%s1] sm:$0xff]
        %v208 = vld [vmem:[%s1 + $0x8] sm:$0xff]
        %v209 = vld [vmem:[%s1 + $0x10] sm:$0xff]
        %v210 = vld [vmem:[%s1 + $0x18] sm:$0xff]
        %v211 = vld [vmem:[%s1 + $0x20] sm:$0xff]
        %v212 = vld [vmem:[%s1 + $0x28] sm:$0xff]
        %v213 = vld [vmem:[%s1 + $0x30] sm:$0xff]
        %v214 = vld [vmem:[%s1 + $0x38] sm:$0xff]
        %v215 = vld [vmem:[%s1 + $0x40] sm:$0xff]
        %v216 = vld [vmem:[%s2] sm:$0x3]
        %v218 = vlaneseq
        %v219 = vshrl.u32 %v218, 7
        %v220 = vsub.s32 0, %v219
        %v221 = vrot.slane %v216, %v220
        %v222 = vlaneseq
        %v223 = vshrl.u32 %v222, 7
        %v224 = vsub.s32 1, %v223
        %v225 = vrot.slane %v216, %v224
        %v236 = vunpack.c.l.b16 %v199
        %v237 = vunpack.c.l.b16 %v200
        %v238 = vunpack.c.l.b16 %v201
        %v239 = vunpack.c.l.b16 %v202
        %v240 = vunpack.c.l.b16 %v203
        %v241 = vunpack.c.l.b16 %v204
        %v242 = vunpack.c.l.b16 %v205
        %v243 = vunpack.c.l.b16 %v206
        %v244 = vpack.c.b16 %v237, %v236
        %v245 = vpack.c.b16 %v239, %v238
        %v246 = vpack.c.b16 %v241, %v240
        %v247 = vpack.c.b16 %v243, %v242
        %v257 = vunpack.c.l.b16 %v207
        %v258 = vunpack.c.h.b16 %v207
        %v259 = vunpack.c.l.b16 %v208
        %v260 = vunpack.c.h.b16 %v208
        %v261 = vunpack.c.l.b16 %v209
        %v262 = vunpack.c.h.b16 %v209
        %v263 = vunpack.c.l.b16 %v210
        %v264 = vunpack.c.h.b16 %v210
        %v265 = vunpack.c.l.b16 %v211
        %v266 = vunpack.c.h.b16 %v211
        %v267 = vunpack.c.l.b16 %v212
        %v268 = vunpack.c.h.b16 %v212
        %v269 = vunpack.c.l.b16 %v213
        %v270 = vunpack.c.h.b16 %v213
        %v271 = vunpack.c.l.b16 %v214
        %v272 = vunpack.c.h.b16 %v214
        %v273 = vunpack.c.l.b16 %v215
        %v274 = vunpack.c.h.b16 %v215
        %v275 = vpack.c.b16 %v259, %v257
        %v276 = vpack.c.b16 %v260, %v258
        %v277 = vpack.c.b16 %v263, %v261
        %v278 = vpack.c.b16 %v264, %v262
        %v279 = vpack.c.b16 %v267, %v265
        %v280 = vpack.c.b16 %v268, %v266
        %v281 = vpack.c.b16 %v271, %v269
        %v282 = vpack.c.b16 %v272, %v270
        %v283 = vpack.c.b16 %v273, %v273
        %v284 = vpack.c.b16 %v274, %v274
        %vm293 = vcmask 588800
        %v295 = vsel %vm293, %v244, 0
        %v298 = vsel %vm293, %v245, 0
        %v301 = vsel %vm293, %v246, 0
        %v304 = vsel %vm293, %v247, 0
        %vm306 = vcmask 1043456
        %v308 = vsel %vm306, %v283, 0
        %v311 = vsel %vm306, %v284, 0
        %313 = vmatprep.subr.bf16.mxu0 %v276
        %314 = vmatpush1.bf16.msra.mxu0 %v275
        %315 = vmatprep.subr.bf16.mxu0 %v278
        %316 = vmatpush1.bf16.msra.mxu0 %v277
        %317 = vmatprep.subr.bf16.mxu0 %v280
        %318 = vmatpush1.bf16.msra.mxu0 %v279
        %319 = vmatprep.subr.bf16.mxu0 %v282
        %320 = vmatpush1.bf16.msra.mxu0 %v281
        %321 = vmatprep.subr.bf16.mxu0 %v311
        %322 = vmatpush1.bf16.msra.mxu0 %v308
        %323 = vmatprep.subr.bf16.mxu0 0
        %324 = vmatpush1.bf16.msra.mxu0 0
        %325 = vmatprep.subr.bf16.mxu0 0
        %326 = vmatpush1.bf16.msra.mxu0 0
        %327 = vmatprep.subr.bf16.mxu0 0
        %328 = vmatpush1.bf16.msra.mxu0 0
        %329 = vmatprep.subr.bf16.mxu0 0
        %330 = vmatpush1.bf16.msra.mxu0 0
        %331 = vmatprep.subr.bf16.mxu0 0
        %332 = vmatpush1.bf16.msra.mxu0 0
        %333 = vmatprep.subr.bf16.mxu0 0
        %334 = vmatpush1.bf16.msra.mxu0 0
        %335 = vmatprep.subr.bf16.mxu0 0
        %336 = vmatpush1.bf16.msra.mxu0 0
        %337 = vmatprep.subr.bf16.mxu0 0
        %338 = vmatpush1.bf16.msra.mxu0 0
        %339 = vmatprep.subr.bf16.mxu0 0
        %340 = vmatpush1.bf16.msra.mxu0 0
        %341 = vmatprep.subr.bf16.mxu0 0
        %342 = vmatpush1.bf16.msra.mxu0 0
        %343 = vmatprep.subr.bf16.mxu0 0
        %344 = vmatpush1.bf16.msra.mxu0 0
        %345 = vmatprep.mubr.bf16.mxu0 0
        %346 = vmatmul.mubr.bf16.gmra.mrb[0].mxu0 %v295
        %v347 = vpop.f32.mrb[0].mxu0
        %v348 = vadd.f32 %v221, %v347
        %v349 = vpop.f32.mrb[0].mxu0
        %v350 = vadd.f32 %v225, %v349
        %v351 = vpop.f32.mrb[0].mxu0
        %v352 = vadd.f32 %v221, %v351
        %v353 = vpop.f32.mrb[0].mxu0
        %v354 = vadd.f32 %v225, %v353
        %355 = vmatprep.mubr.bf16.mxu0 0
        %356 = vmatmul.mubr.bf16.gmra.mrb[0].mxu0 %v298
        %v357 = vpop.f32.mrb[0].mxu0
        %v358 = vadd.f32 %v221, %v357
        %v359 = vpop.f32.mrb[0].mxu0
        %v360 = vadd.f32 %v225, %v359
        %v361 = vpop.f32.mrb[0].mxu0
        %v362 = vadd.f32 %v221, %v361
        %v363 = vpop.f32.mrb[0].mxu0
        %v364 = vadd.f32 %v225, %v363
        %365 = vmatprep.mubr.bf16.mxu0 0
        %366 = vmatmul.mubr.bf16.gmra.mrb[0].mxu0 %v301
        %v367 = vpop.f32.mrb[0].mxu0
        %v368 = vadd.f32 %v221, %v367
        %v369 = vpop.f32.mrb[0].mxu0
        %v370 = vadd.f32 %v225, %v369
        %v371 = vpop.f32.mrb[0].mxu0
        %v372 = vadd.f32 %v221, %v371
        %v373 = vpop.f32.mrb[0].mxu0
        %v374 = vadd.f32 %v225, %v373
        %375 = vmatprep.mubr.bf16.mxu0 0
        %376 = vmatmul.mubr.bf16.gmra.mrb[0].mxu0 %v304
        %v377 = vpop.f32.mrb[0].mxu0
        %v378 = vadd.f32 %v221, %v377
        %v379 = vpop.f32.mrb[0].mxu0
        %v380 = vadd.f32 %v225, %v379
        %v381 = vpop.f32.mrb[0].mxu0
        %v382 = vadd.f32 %v221, %v381
        %v383 = vpop.f32.mrb[0].mxu0
        %v384 = vadd.f32 %v225, %v383
        %385 = vdwg.mxu0
        %386 = vst [vmem:[%s187] sm:$0xff] %v348
        %vm387 = vcmask 179200
        %388 = vst.msk [vmem:[%s187 + $0x8] sm:$0xff] %vm387, %v350
        %389 = vst [vmem:[%s187 + $0x10] sm:$0xff] %v352
        %390 = vst.msk [vmem:[%s187 + $0x18] sm:$0xff] %vm387, %v354
        %391 = vst [vmem:[%s187 + $0x20] sm:$0xff] %v358
        %392 = vst.msk [vmem:[%s187 + $0x28] sm:$0xff] %vm387, %v360
        %393 = vst [vmem:[%s187 + $0x30] sm:$0xff] %v362
        %394 = vst.msk [vmem:[%s187 + $0x38] sm:$0xff] %vm387, %v364
        %395 = vst [vmem:[%s187 + $0x40] sm:$0xff] %v368
        %396 = vst.msk [vmem:[%s187 + $0x48] sm:$0xff] %vm387, %v370
        %397 = vst [vmem:[%s187 + $0x50] sm:$0xff] %v372
        %398 = vst.msk [vmem:[%s187 + $0x58] sm:$0xff] %vm387, %v374
        %399 = vst [vmem:[%s187 + $0x60] sm:$0xff] %v378
        %400 = vst.msk [vmem:[%s187 + $0x68] sm:$0xff] %vm387, %v380
        %401 = vst [vmem:[%s187 + $0x70] sm:$0xff] %v382
        %402 = vst.msk [vmem:[%s187 + $0x78] sm:$0xff] %vm387, %v384
        %s403 = sand.u32 %s109, 1
        %s404 = scalar_lea.sflag [#allocation3], %s403
        %s405 = sand.u32 %s109, 1
        %s406 = smul.addr %s405, 128
        %s407 = scalar_lea.vmem [#allocation2], %s406
        // Predicated region
        $region33: #{dfnet_forward.21} parent=31 // pred_check
          %p408 = pneg %p119
        $region34: #{dfnet_forward.21} parent=31 // pred_check_branch
          %410 = sbr.rel (%p408) target = $region36
        $region35: #{dfnet_forward.21} parent=31 // pred_region
          %s411 = smul.u32 8, %s22
          %s413 = ssub.s32 2048, 2048
          %414 = vsyncadd %s404, %s413
          %s415 = smul.addr %s411, 2
          %s416 = smul.addr %s21, 16
          %s417 = sadd.s32 %s415, %s416
          %s418 = smul.addr %s417, 128
          %s419 = scalar_lea.hbm %s3, %s418
          %s420 = sshll.u32 %s407, 4
          %s421 = int_to_ptr.vmem [resolvable:$true] %s420
          %426 = dma.vmem_to_hbm [thread:$0]  %s421, 2048, %s419, %s404, 256, 256, 16
        $region36: #{dfnet_forward.21} parent=31 // pred_fallthru
          _
      $region32: #{dfnet_forward.21} parent=5 // pred_fallthru
        _
      %p427 = scmp.le.s32.totalorder 2, %s12
      // Predicated region
      $region37: #{dfnet_forward.21} parent=5 // pred_check
        %p428 = pneg %p427
      $region38: #{dfnet_forward.21} parent=5 // pred_check_branch
        %430 = sbr.rel (%p428) target = $region40
      $region39: #{dfnet_forward.21} parent=5 // pred_region
        %s431 = ssub.s32 %s12, 2
        // Predicated region
        $region41: #{dfnet_forward.21} parent=39 // pred_check
          %p432 = pneg %p125
        $region42: #{dfnet_forward.21} parent=39 // pred_check_branch
          %434 = sbr.rel (%p432) target = $region44
        $region43: #{dfnet_forward.21} parent=39 // pred_region
          %s435 = sand.u32 %s110, 1
          %s436 = scalar_lea.sflag [#allocation3], %s435
          %s437 = sand.u32 %s110, 1
          %s438 = smul.addr %s437, 128
          %s439 = scalar_lea.vmem [#allocation2], %s438
          %440 = dma.done %s436, 2048
        $region44: #{dfnet_forward.21} parent=39 // pred_fallthru
          _
      $region40: #{dfnet_forward.21} parent=5 // pred_fallthru
        _
    $region6: #{dfnet_forward.21} parent=1 // loop_footer
      %s16 = sadd.s32 1, %s12
    $region7: #{dfnet_forward.21} parent=1 // loop_footer_branch
      %11 = sbr.rel target = $region3
    $region8: #{dfnet_forward.21} parent=1 // loop_exit
      _
    %441 = vsyncpa [#allocation3], 1
    %s442 = scalar_lea.sflag [#allocation3], 1
    %443 = vsyncpa %s442, 1

</llo_original>
